<compile_context>
chip_gen: v6e
topology: v6e:2x2x1
jax: 0.10.0
libtpu: 0.0.40
codegen_flags: <defaults>
</compile_context>

<pallas_src>
import numpy as np

import jax
import jax.numpy as jnp
from jax import lax
from jax.experimental import pallas as pl
from jax.experimental.pallas import tpu as pltpu

K1 = 9        # conv1 kernel size
K2 = 5        # conv2 kernel size
C_MID = 36    # conv1 output channels
PAD1 = K1 // 2   # 4
PAD2 = K2 // 2   # 2


def _round_up(a, m):
    return (a + m - 1) // m * m


def pack_snet_params(w1, b1, w2, b2):
    """One-time weight repack (hoisted out of the per-call path).

    w1: (36, Cin, 9, 9) OIHW -> (36, 81*Cin), column order (kh, kw, ci)
    w2: (1, 36, 5, 5)   OIHW -> (25, 36),     row order (kh, kw)
    """
    c_out, c_in = w1.shape[0], w1.shape[1]
    w1k = jnp.transpose(w1, (0, 2, 3, 1)).reshape(c_out, K1 * K1 * c_in).astype(jnp.float32)
    b1k = b1.reshape(c_out, 1).astype(jnp.float32)
    w2k = jnp.transpose(w2[0], (1, 2, 0)).reshape(K2 * K2, c_out).astype(jnp.float32)
    b2k = b2.reshape(1, 1).astype(jnp.float32)
    return w1k, b1k, w2k, b2k


@jax.jit
def snet_forward(x, w1k, b1k, w2k, b2k):
    """x: NCHW (B, Cin, H, W); packed weights from pack_snet_params. Returns (B, 1, H, W)."""
    B, Cin, H, W = x.shape
    Hp, Wp = H + 2 * PAD1, W + 2 * PAD1          # conv1-padded grid (24 x 24)
    S = Hp * Wp                                  # 576
    NCOL = B * S                                 # 1152 = 9 * 128 (lane-dense)
    KK = K1 * K1 * Cin                           # 324

    max_off1 = (K1 - 1) * Wp + (K1 - 1)          # largest conv1 tap shift (200)
    XCOLS = NCOL + _round_up(max_off1, 128)      # zero tail so shifted reads stay in-bounds

    center2 = PAD2 * Wp + PAD2                   # conv2 center offset in flat index (50)
    LPAD = _round_up(center2, 128)               # lane-aligned zero border for G (128)
    GCOLS = LPAD + NCOL + LPAD                   # 1408

    # --- glue: zero-padded, channel-major, flattened (lane-dense) input (~22 KiB) ---
    xp = jnp.pad(x.astype(jnp.float32),
                 ((0, 0), (0, 0), (PAD1, PAD1), (PAD1, PAD1)))        # (B, Cin, Hp, Wp)
    xpf = jnp.transpose(xp, (1, 0, 2, 3)).reshape(Cin, NCOL)          # (Cin, B*Hp*Wp)
    xpf = jnp.pad(xpf, ((0, 0), (0, XCOLS - NCOL)))                   # zero tail

    # compile-time constant 0/1 mask of "real" output columns (q%Wp < W and q//Wp < H)
    q = np.arange(NCOL) % S
    mask = ((q // Wp < H) & (q % Wp < W)).astype(np.float32).reshape(1, NCOL)
    mask = jnp.asarray(mask)

    def kernel(xp_ref, w1_ref, b1_ref, w2_ref, b2_ref, mask_ref, o_ref,
               xs_ref, gbuf_ref):
        # ---- in-kernel im2col: 81 static shifted, lane-dense slab copies ----
        # xs row (t*Cin + ci) = padded input channel ci shifted by off_t = kh*Wp + kw.
        for t in range(K1 * K1):
            kh, kw = t // K1, t % K1
            off = kh * Wp + kw
            xs_ref[t * Cin:(t + 1) * Cin, :] = xp_ref[:, off:off + NCOL]

        # ---- conv1: one MXU matmul + bias + ReLU  (channels on sublanes) ----
        hid = jnp.dot(w1_ref[...], xs_ref[...],
                      preferred_element_type=jnp.float32)              # (36, NCOL)
        hid = jnp.maximum(hid + b1_ref[...], 0.0)

        # ---- conv2 channel contraction on the MXU ----
        g = jnp.dot(w2_ref[...], hid,
                    preferred_element_type=jnp.float32)                # (25, NCOL)
        # zero the columns that are conv1 padding / garbage (they must act as
        # conv2's zero padding and also kill roll-over across rows/batches).
        g = g * mask_ref[...]

        # ---- place masked G in a zero-bordered scratch (lane-aligned interior,
        #      only the two border strips are zeroed -- no double write) ----
        gbuf_ref[:, 0:LPAD] = jnp.zeros((K2 * K2, LPAD), jnp.float32)
        gbuf_ref[:, LPAD + NCOL:] = jnp.zeros((K2 * K2, GCOLS - LPAD - NCOL), jnp.float32)
        gbuf_ref[:, LPAD:LPAD + NCOL] = g

        # ---- conv2 spatial part: 25 lane-dense shifted adds ----
        acc = jnp.zeros((1, NCOL), jnp.float32)
        for t in range(K2 * K2):
            kh, kw = t // K2, t % K2
            start = LPAD - center2 + kh * Wp + kw
            acc = acc + gbuf_ref[t:t + 1, start:start + NCOL]

        o_ref[...] = acc + b2_ref[...]                                 # lane-dense store

    out = pl.pallas_call(
        kernel,
        out_shape=jax.ShapeDtypeStruct((1, NCOL), jnp.float32),
        in_specs=[pl.BlockSpec(memory_space=pltpu.MemorySpace.VMEM)] * 6,
        out_specs=pl.BlockSpec(memory_space=pltpu.MemorySpace.VMEM),
        scratch_shapes=[
            pltpu.VMEM((KK, NCOL), jnp.float32),      # im2col stack (~1.4 MiB)
            pltpu.VMEM((K2 * K2, GCOLS), jnp.float32) # zero-bordered G (~138 KiB)
        ],
    )(xpf, w1k, b1k, w2k, b2k, mask)

    # glue: flattened padded grid -> NCHW heatmap
    heat = out.reshape(B, Hp, Wp)[:, :H, :W]
    return heat[:, None, :, :]


def snet_ref(x, w1, b1, w2, b2):
    """Pure-JAX reference (matches PyTorch cross-correlation semantics)."""
    dn = ("NCHW", "OIHW", "NCHW")
    y = lax.conv_general_dilated(x, w1, (1, 1), ((4, 4), (4, 4)), dimension_numbers=dn)
    y = jax.nn.relu(y + b1.reshape(1, -1, 1, 1))
    z = lax.conv_general_dilated(y, w2, (1, 1), ((2, 2), (2, 2)), dimension_numbers=dn)
    return z + b2.reshape(1, -1, 1, 1)


if __name__ == "__main__":
    B, Cin, H, W = 2, 4, 16, 16

    key = jax.random.PRNGKey(0)
    k1, k2, kx = jax.random.split(key, 3)
    x = jax.random.normal(kx, (B, Cin, H, W), jnp.float32)

    # First config mirrors SNet.__init__ defaults (weight_std=1e-7, outputs ~1e-7);
    # second uses a larger std so structural errors are visible above fp noise.
    configs = [
        (1e-7, 1e-4, 1e-8),
        (5e-2, 3e-2, 6e-2),
    ]
    for std, rtol, atol in configs:
        w1 = std * jax.random.normal(k1, (C_MID, Cin, K1, K1), jnp.float32)
        b1 = jnp.full((C_MID,), 0.1, jnp.float32)
        w2 = std * jax.random.normal(k2, (1, C_MID, K2, K2), jnp.float32)
        b2 = jnp.zeros((1,), jnp.float32)

        packed = pack_snet_params(w1, b1, w2, b2)   # hoisted, runs once per weight set
        out = jax.block_until_ready(snet_forward(x, *packed))
        assert out.shape == (B, 1, H, W), out.shape

        ref = snet_ref(x, w1, b1, w2, b2)
        max_err = float(jnp.max(jnp.abs(out - ref)))
        assert jnp.allclose(out, ref, rtol=rtol, atol=atol), (std, max_err)

    print("KERNEL_OK")
</pallas_src>

<mosaic_0001>
module attributes {stable_mosaic.version = 11 : i64} {
  func.func @kernel(%arg0: memref<4x1408xf32, #tpu.memory_space<vmem>>, %arg1: memref<36x324xf32, #tpu.memory_space<vmem>>, %arg2: memref<36x1xf32, #tpu.memory_space<vmem>>, %arg3: memref<25x36xf32, #tpu.memory_space<vmem>>, %arg4: memref<1x1xf32, #tpu.memory_space<vmem>>, %arg5: memref<1x1152xf32, #tpu.memory_space<vmem>>, %arg6: memref<1x1152xf32, #tpu.memory_space<vmem>>, %arg7: memref<324x1152xf32, #tpu.memory_space<vmem>>, %arg8: memref<25x1408xf32, #tpu.memory_space<vmem>>) attributes {dimension_semantics = [], scalar_prefetch = 0 : i64, scratch_operands = 2 : i64, tpu.core_type = #tpu.core_type<tc>} {
    %c0 = arith.constant 0 : index
    %c0_0 = arith.constant 0 : index
    %0 = vector.load %arg0[%c0, %c0_0] : memref<4x1408xf32, #tpu.memory_space<vmem>>, vector<4x1152xf32>
    %c0_1 = arith.constant 0 : index
    %c0_2 = arith.constant 0 : index
    %1 = vector.load %arg7[%c0_1, %c0_2] : memref<324x1152xf32, #tpu.memory_space<vmem>>, vector<4x1152xf32>
    tpu.vector_store %arg7[%c0_1, %c0_2], %0 {strides = array<i32>} : memref<324x1152xf32, #tpu.memory_space<vmem>>, vector<4x1152xf32>,
    %c0_3 = arith.constant 0 : index
    %c1 = arith.constant 1 : index
    %2 = vector.load %arg0[%c0_3, %c1] : memref<4x1408xf32, #tpu.memory_space<vmem>>, vector<4x1152xf32>
    %c4 = arith.constant 4 : index
    %c0_4 = arith.constant 0 : index
    %3 = vector.load %arg7[%c4, %c0_4] : memref<324x1152xf32, #tpu.memory_space<vmem>>, vector<4x1152xf32>
    tpu.vector_store %arg7[%c4, %c0_4], %2 {strides = array<i32>} : memref<324x1152xf32, #tpu.memory_space<vmem>>, vector<4x1152xf32>,
    %c0_5 = arith.constant 0 : index
    %c2 = arith.constant 2 : index
    %4 = vector.load %arg0[%c0_5, %c2] : memref<4x1408xf32, #tpu.memory_space<vmem>>, vector<4x1152xf32>
    %c8 = arith.constant 8 : index
    %c0_6 = arith.constant 0 : index
    %5 = vector.load %arg7[%c8, %c0_6] : memref<324x1152xf32, #tpu.memory_space<vmem>>, vector<4x1152xf32>
    tpu.vector_store %arg7[%c8, %c0_6], %4 {strides = array<i32>} : memref<324x1152xf32, #tpu.memory_space<vmem>>, vector<4x1152xf32>,
    %c0_7 = arith.constant 0 : index
    %c3 = arith.constant 3 : index
    %6 = vector.load %arg0[%c0_7, %c3] : memref<4x1408xf32, #tpu.memory_space<vmem>>, vector<4x1152xf32>
    %c12 = arith.constant 12 : index
    %c0_8 = arith.constant 0 : index
    %7 = vector.load %arg7[%c12, %c0_8] : memref<324x1152xf32, #tpu.memory_space<vmem>>, vector<4x1152xf32>
    tpu.vector_store %arg7[%c12, %c0_8], %6 {strides = array<i32>} : memref<324x1152xf32, #tpu.memory_space<vmem>>, vector<4x1152xf32>,
    %c0_9 = arith.constant 0 : index
    %c4_10 = arith.constant 4 : index
    %8 = vector.load %arg0[%c0_9, %c4_10] : memref<4x1408xf32, #tpu.memory_space<vmem>>, vector<4x1152xf32>
    %c16 = arith.constant 16 : index
    %c0_11 = arith.constant 0 : index
    %9 = vector.load %arg7[%c16, %c0_11] : memref<324x1152xf32, #tpu.memory_space<vmem>>, vector<4x1152xf32>
    tpu.vector_store %arg7[%c16, %c0_11], %8 {strides = array<i32>} : memref<324x1152xf32, #tpu.memory_space<vmem>>, vector<4x1152xf32>,
    %c0_12 = arith.constant 0 : index
    %c5 = arith.constant 5 : index
    %10 = vector.load %arg0[%c0_12, %c5] : memref<4x1408xf32, #tpu.memory_space<vmem>>, vector<4x1152xf32>
    %c20 = arith.constant 20 : index
    %c0_13 = arith.constant 0 : index
    %11 = vector.load %arg7[%c20, %c0_13] : memref<324x1152xf32, #tpu.memory_space<vmem>>, vector<4x1152xf32>
    tpu.vector_store %arg7[%c20, %c0_13], %10 {strides = array<i32>} : memref<324x1152xf32, #tpu.memory_space<vmem>>, vector<4x1152xf32>,
    %c0_14 = arith.constant 0 : index
    %c6 = arith.constant 6 : index
    %12 = vector.load %arg0[%c0_14, %c6] : memref<4x1408xf32, #tpu.memory_space<vmem>>, vector<4x1152xf32>
    %c24 = arith.constant 24 : index
    %c0_15 = arith.constant 0 : index
    %13 = vector.load %arg7[%c24, %c0_15] : memref<324x1152xf32, #tpu.memory_space<vmem>>, vector<4x1152xf32>
    tpu.vector_store %arg7[%c24, %c0_15], %12 {strides = array<i32>} : memref<324x1152xf32, #tpu.memory_space<vmem>>, vector<4x1152xf32>,
    %c0_16 = arith.constant 0 : index
    %c7 = arith.constant 7 : index
    %14 = vector.load %arg0[%c0_16, %c7] : memref<4x1408xf32, #tpu.memory_space<vmem>>, vector<4x1152xf32>
    %c28 = arith.constant 28 : index
    %c0_17 = arith.constant 0 : index
    %15 = vector.load %arg7[%c28, %c0_17] : memref<324x1152xf32, #tpu.memory_space<vmem>>, vector<4x1152xf32>
    tpu.vector_store %arg7[%c28, %c0_17], %14 {strides = array<i32>} : memref<324x1152xf32, #tpu.memory_space<vmem>>, vector<4x1152xf32>,
    %c0_18 = arith.constant 0 : index
    %c8_19 = arith.constant 8 : index
    %16 = vector.load %arg0[%c0_18, %c8_19] : memref<4x1408xf32, #tpu.memory_space<vmem>>, vector<4x1152xf32>
    %c32 = arith.constant 32 : index
    %c0_20 = arith.constant 0 : index
    %17 = vector.load %arg7[%c32, %c0_20] : memref<324x1152xf32, #tpu.memory_space<vmem>>, vector<4x1152xf32>
    tpu.vector_store %arg7[%c32, %c0_20], %16 {strides = array<i32>} : memref<324x1152xf32, #tpu.memory_space<vmem>>, vector<4x1152xf32>,
    %c0_21 = arith.constant 0 : index
    %c24_22 = arith.constant 24 : index
    %18 = vector.load %arg0[%c0_21, %c24_22] : memref<4x1408xf32, #tpu.memory_space<vmem>>, vector<4x1152xf32>
    %c36 = arith.constant 36 : index
    %c0_23 = arith.constant 0 : index
    %19 = vector.load %arg7[%c36, %c0_23] : memref<324x1152xf32, #tpu.memory_space<vmem>>, vector<4x1152xf32>
    tpu.vector_store %arg7[%c36, %c0_23], %18 {strides = array<i32>} : memref<324x1152xf32, #tpu.memory_space<vmem>>, vector<4x1152xf32>,
    %c0_24 = arith.constant 0 : index
    %c25 = arith.constant 25 : index
    %20 = vector.load %arg0[%c0_24, %c25] : memref<4x1408xf32, #tpu.memory_space<vmem>>, vector<4x1152xf32>
    %c40 = arith.constant 40 : index
    %c0_25 = arith.constant 0 : index
    %21 = vector.load %arg7[%c40, %c0_25] : memref<324x1152xf32, #tpu.memory_space<vmem>>, vector<4x1152xf32>
    tpu.vector_store %arg7[%c40, %c0_25], %20 {strides = array<i32>} : memref<324x1152xf32, #tpu.memory_space<vmem>>, vector<4x1152xf32>,
    %c0_26 = arith.constant 0 : index
    %c26 = arith.constant 26 : index
    %22 = vector.load %arg0[%c0_26, %c26] : memref<4x1408xf32, #tpu.memory_space<vmem>>, vector<4x1152xf32>
    %c44 = arith.constant 44 : index
    %c0_27 = arith.constant 0 : index
    %23 = vector.load %arg7[%c44, %c0_27] : memref<324x1152xf32, #tpu.memory_space<vmem>>, vector<4x1152xf32>
    tpu.vector_store %arg7[%c44, %c0_27], %22 {strides = array<i32>} : memref<324x1152xf32, #tpu.memory_space<vmem>>, vector<4x1152xf32>,
    %c0_28 = arith.constant 0 : index
    %c27 = arith.constant 27 : index
    %24 = vector.load %arg0[%c0_28, %c27] : memref<4x1408xf32, #tpu.memory_space<vmem>>, vector<4x1152xf32>
    %c48 = arith.constant 48 : index
    %c0_29 = arith.constant 0 : index
    %25 = vector.load %arg7[%c48, %c0_29] : memref<324x1152xf32, #tpu.memory_space<vmem>>, vector<4x1152xf32>
    tpu.vector_store %arg7[%c48, %c0_29], %24 {strides = array<i32>} : memref<324x1152xf32, #tpu.memory_space<vmem>>, vector<4x1152xf32>,
    %c0_30 = arith.constant 0 : index
    %c28_31 = arith.constant 28 : index
    %26 = vector.load %arg0[%c0_30, %c28_31] : memref<4x1408xf32, #tpu.memory_space<vmem>>, vector<4x1152xf32>
    %c52 = arith.constant 52 : index
    %c0_32 = arith.constant 0 : index
    %27 = vector.load %arg7[%c52, %c0_32] : memref<324x1152xf32, #tpu.memory_space<vmem>>, vector<4x1152xf32>
    tpu.vector_store %arg7[%c52, %c0_32], %26 {strides = array<i32>} : memref<324x1152xf32, #tpu.memory_space<vmem>>, vector<4x1152xf32>,
    %c0_33 = arith.constant 0 : index
    %c29 = arith.constant 29 : index
    %28 = vector.load %arg0[%c0_33, %c29] : memref<4x1408xf32, #tpu.memory_space<vmem>>, vector<4x1152xf32>
    %c56 = arith.constant 56 : index
    %c0_34 = arith.constant 0 : index
    %29 = vector.load %arg7[%c56, %c0_34] : memref<324x1152xf32, #tpu.memory_space<vmem>>, vector<4x1152xf32>
    tpu.vector_store %arg7[%c56, %c0_34], %28 {strides = array<i32>} : memref<324x1152xf32, #tpu.memory_space<vmem>>, vector<4x1152xf32>,
    %c0_35 = arith.constant 0 : index
    %c30 = arith.constant 30 : index
    %30 = vector.load %arg0[%c0_35, %c30] : memref<4x1408xf32, #tpu.memory_space<vmem>>, vector<4x1152xf32>
    %c60 = arith.constant 60 : index
    %c0_36 = arith.constant 0 : index
    %31 = vector.load %arg7[%c60, %c0_36] : memref<324x1152xf32, #tpu.memory_space<vmem>>, vector<4x1152xf32>
    tpu.vector_store %arg7[%c60, %c0_36], %30 {strides = array<i32>} : memref<324x1152xf32, #tpu.memory_space<vmem>>, vector<4x1152xf32>,
    %c0_37 = arith.constant 0 : index
    %c31 = arith.constant 31 : index
    %32 = vector.load %arg0[%c0_37, %c31] : memref<4x1408xf32, #tpu.memory_space<vmem>>, vector<4x1152xf32>
    %c64 = arith.constant 64 : index
    %c0_38 = arith.constant 0 : index
    %33 = vector.load %arg7[%c64, %c0_38] : memref<324x1152xf32, #tpu.memory_space<vmem>>, vector<4x1152xf32>
    tpu.vector_store %arg7[%c64, %c0_38], %32 {strides = array<i32>} : memref<324x1152xf32, #tpu.memory_space<vmem>>, vector<4x1152xf32>,
    %c0_39 = arith.constant 0 : index
    %c32_40 = arith.constant 32 : index
    %34 = vector.load %arg0[%c0_39, %c32_40] : memref<4x1408xf32, #tpu.memory_space<vmem>>, vector<4x1152xf32>
    %c68 = arith.constant 68 : index
    %c0_41 = arith.constant 0 : index
    %35 = vector.load %arg7[%c68, %c0_41] : memref<324x1152xf32, #tpu.memory_space<vmem>>, vector<4x1152xf32>
    tpu.vector_store %arg7[%c68, %c0_41], %34 {strides = array<i32>} : memref<324x1152xf32, #tpu.memory_space<vmem>>, vector<4x1152xf32>,
    %c0_42 = arith.constant 0 : index
    %c48_43 = arith.constant 48 : index
    %36 = vector.load %arg0[%c0_42, %c48_43] : memref<4x1408xf32, #tpu.memory_space<vmem>>, vector<4x1152xf32>
    %c72 = arith.constant 72 : index
    %c0_44 = arith.constant 0 : index
    %37 = vector.load %arg7[%c72, %c0_44] : memref<324x1152xf32, #tpu.memory_space<vmem>>, vector<4x1152xf32>
    tpu.vector_store %arg7[%c72, %c0_44], %36 {strides = array<i32>} : memref<324x1152xf32, #tpu.memory_space<vmem>>, vector<4x1152xf32>,
    %c0_45 = arith.constant 0 : index
    %c49 = arith.constant 49 : index
    %38 = vector.load %arg0[%c0_45, %c49] : memref<4x1408xf32, #tpu.memory_space<vmem>>, vector<4x1152xf32>
    %c76 = arith.constant 76 : index
    %c0_46 = arith.constant 0 : index
    %39 = vector.load %arg7[%c76, %c0_46] : memref<324x1152xf32, #tpu.memory_space<vmem>>, vector<4x1152xf32>
    tpu.vector_store %arg7[%c76, %c0_46], %38 {strides = array<i32>} : memref<324x1152xf32, #tpu.memory_space<vmem>>, vector<4x1152xf32>,
    %c0_47 = arith.constant 0 : index
    %c50 = arith.constant 50 : index
    %40 = vector.load %arg0[%c0_47, %c50] : memref<4x1408xf32, #tpu.memory_space<vmem>>, vector<4x1152xf32>
    %c80 = arith.constant 80 : index
    %c0_48 = arith.constant 0 : index
    %41 = vector.load %arg7[%c80, %c0_48] : memref<324x1152xf32, #tpu.memory_space<vmem>>, vector<4x1152xf32>
    tpu.vector_store %arg7[%c80, %c0_48], %40 {strides = array<i32>} : memref<324x1152xf32, #tpu.memory_space<vmem>>, vector<4x1152xf32>,
    %c0_49 = arith.constant 0 : index
    %c51 = arith.constant 51 : index
    %42 = vector.load %arg0[%c0_49, %c51] : memref<4x1408xf32, #tpu.memory_space<vmem>>, vector<4x1152xf32>
    %c84 = arith.constant 84 : index
    %c0_50 = arith.constant 0 : index
    %43 = vector.load %arg7[%c84, %c0_50] : memref<324x1152xf32, #tpu.memory_space<vmem>>, vector<4x1152xf32>
    tpu.vector_store %arg7[%c84, %c0_50], %42 {strides = array<i32>} : memref<324x1152xf32, #tpu.memory_space<vmem>>, vector<4x1152xf32>,
    %c0_51 = arith.constant 0 : index
    %c52_52 = arith.constant 52 : index
    %44 = vector.load %arg0[%c0_51, %c52_52] : memref<4x1408xf32, #tpu.memory_space<vmem>>, vector<4x1152xf32>
    %c88 = arith.constant 88 : index
    %c0_53 = arith.constant 0 : index
    %45 = vector.load %arg7[%c88, %c0_53] : memref<324x1152xf32, #tpu.memory_space<vmem>>, vector<4x1152xf32>
    tpu.vector_store %arg7[%c88, %c0_53], %44 {strides = array<i32>} : memref<324x1152xf32, #tpu.memory_space<vmem>>, vector<4x1152xf32>,
    %c0_54 = arith.constant 0 : index
    %c53 = arith.constant 53 : index
    %46 = vector.load %arg0[%c0_54, %c53] : memref<4x1408xf32, #tpu.memory_space<vmem>>, vector<4x1152xf32>
    %c92 = arith.constant 92 : index
    %c0_55 = arith.constant 0 : index
    %47 = vector.load %arg7[%c92, %c0_55] : memref<324x1152xf32, #tpu.memory_space<vmem>>, vector<4x1152xf32>
    tpu.vector_store %arg7[%c92, %c0_55], %46 {strides = array<i32>} : memref<324x1152xf32, #tpu.memory_space<vmem>>, vector<4x1152xf32>,
    %c0_56 = arith.constant 0 : index
    %c54 = arith.constant 54 : index
    %48 = vector.load %arg0[%c0_56, %c54] : memref<4x1408xf32, #tpu.memory_space<vmem>>, vector<4x1152xf32>
    %c96 = arith.constant 96 : index
    %c0_57 = arith.constant 0 : index
    %49 = vector.load %arg7[%c96, %c0_57] : memref<324x1152xf32, #tpu.memory_space<vmem>>, vector<4x1152xf32>
    tpu.vector_store %arg7[%c96, %c0_57], %48 {strides = array<i32>} : memref<324x1152xf32, #tpu.memory_space<vmem>>, vector<4x1152xf32>,
    %c0_58 = arith.constant 0 : index
    %c55 = arith.constant 55 : index
    %50 = vector.load %arg0[%c0_58, %c55] : memref<4x1408xf32, #tpu.memory_space<vmem>>, vector<4x1152xf32>
    %c100 = arith.constant 100 : index
    %c0_59 = arith.constant 0 : index
    %51 = vector.load %arg7[%c100, %c0_59] : memref<324x1152xf32, #tpu.memory_space<vmem>>, vector<4x1152xf32>
    tpu.vector_store %arg7[%c100, %c0_59], %50 {strides = array<i32>} : memref<324x1152xf32, #tpu.memory_space<vmem>>, vector<4x1152xf32>,
    %c0_60 = arith.constant 0 : index
    %c56_61 = arith.constant 56 : index
    %52 = vector.load %arg0[%c0_60, %c56_61] : memref<4x1408xf32, #tpu.memory_space<vmem>>, vector<4x1152xf32>
    %c104 = arith.constant 104 : index
    %c0_62 = arith.constant 0 : index
    %53 = vector.load %arg7[%c104, %c0_62] : memref<324x1152xf32, #tpu.memory_space<vmem>>, vector<4x1152xf32>
    tpu.vector_store %arg7[%c104, %c0_62], %52 {strides = array<i32>} : memref<324x1152xf32, #tpu.memory_space<vmem>>, vector<4x1152xf32>,
    %c0_63 = arith.constant 0 : index
    %c72_64 = arith.constant 72 : index
    %54 = vector.load %arg0[%c0_63, %c72_64] : memref<4x1408xf32, #tpu.memory_space<vmem>>, vector<4x1152xf32>
    %c108 = arith.constant 108 : index
    %c0_65 = arith.constant 0 : index
    %55 = vector.load %arg7[%c108, %c0_65] : memref<324x1152xf32, #tpu.memory_space<vmem>>, vector<4x1152xf32>
    tpu.vector_store %arg7[%c108, %c0_65], %54 {strides = array<i32>} : memref<324x1152xf32, #tpu.memory_space<vmem>>, vector<4x1152xf32>,
    %c0_66 = arith.constant 0 : index
    %c73 = arith.constant 73 : index
    %56 = vector.load %arg0[%c0_66, %c73] : memref<4x1408xf32, #tpu.memory_space<vmem>>, vector<4x1152xf32>
    %c112 = arith.constant 112 : index
    %c0_67 = arith.constant 0 : index
    %57 = vector.load %arg7[%c112, %c0_67] : memref<324x1152xf32, #tpu.memory_space<vmem>>, vector<4x1152xf32>
    tpu.vector_store %arg7[%c112, %c0_67], %56 {strides = array<i32>} : memref<324x1152xf32, #tpu.memory_space<vmem>>, vector<4x1152xf32>,
    %c0_68 = arith.constant 0 : index
    %c74 = arith.constant 74 : index
    %58 = vector.load %arg0[%c0_68, %c74] : memref<4x1408xf32, #tpu.memory_space<vmem>>, vector<4x1152xf32>
    %c116 = arith.constant 116 : index
    %c0_69 = arith.constant 0 : index
    %59 = vector.load %arg7[%c116, %c0_69] : memref<324x1152xf32, #tpu.memory_space<vmem>>, vector<4x1152xf32>
    tpu.vector_store %arg7[%c116, %c0_69], %58 {strides = array<i32>} : memref<324x1152xf32, #tpu.memory_space<vmem>>, vector<4x1152xf32>,
    %c0_70 = arith.constant 0 : index
    %c75 = arith.constant 75 : index
    %60 = vector.load %arg0[%c0_70, %c75] : memref<4x1408xf32, #tpu.memory_space<vmem>>, vector<4x1152xf32>
    %c120 = arith.constant 120 : index
    %c0_71 = arith.constant 0 : index
    %61 = vector.load %arg7[%c120, %c0_71] : memref<324x1152xf32, #tpu.memory_space<vmem>>, vector<4x1152xf32>
    tpu.vector_store %arg7[%c120, %c0_71], %60 {strides = array<i32>} : memref<324x1152xf32, #tpu.memory_space<vmem>>, vector<4x1152xf32>,
    %c0_72 = arith.constant 0 : index
    %c76_73 = arith.constant 76 : index
    %62 = vector.load %arg0[%c0_72, %c76_73] : memref<4x1408xf32, #tpu.memory_space<vmem>>, vector<4x1152xf32>
    %c124 = arith.constant 124 : index
    %c0_74 = arith.constant 0 : index
    %63 = vector.load %arg7[%c124, %c0_74] : memref<324x1152xf32, #tpu.memory_space<vmem>>, vector<4x1152xf32>
    tpu.vector_store %arg7[%c124, %c0_74], %62 {strides = array<i32>} : memref<324x1152xf32, #tpu.memory_space<vmem>>, vector<4x1152xf32>,
    %c0_75 = arith.constant 0 : index
    %c77 = arith.constant 77 : index
    %64 = vector.load %arg0[%c0_75, %c77] : memref<4x1408xf32, #tpu.memory_space<vmem>>, vector<4x1152xf32>
    %c128 = arith.constant 128 : index
    %c0_76 = arith.constant 0 : index
    %65 = vector.load %arg7[%c128, %c0_76] : memref<324x1152xf32, #tpu.memory_space<vmem>>, vector<4x1152xf32>
    tpu.vector_store %arg7[%c128, %c0_76], %64 {strides = array<i32>} : memref<324x1152xf32, #tpu.memory_space<vmem>>, vector<4x1152xf32>,
    %c0_77 = arith.constant 0 : index
    %c78 = arith.constant 78 : index
    %66 = vector.load %arg0[%c0_77, %c78] : memref<4x1408xf32, #tpu.memory_space<vmem>>, vector<4x1152xf32>
    %c132 = arith.constant 132 : index
    %c0_78 = arith.constant 0 : index
    %67 = vector.load %arg7[%c132, %c0_78] : memref<324x1152xf32, #tpu.memory_space<vmem>>, vector<4x1152xf32>
    tpu.vector_store %arg7[%c132, %c0_78], %66 {strides = array<i32>} : memref<324x1152xf32, #tpu.memory_space<vmem>>, vector<4x1152xf32>,
    %c0_79 = arith.constant 0 : index
    %c79 = arith.constant 79 : index
    %68 = vector.load %arg0[%c0_79, %c79] : memref<4x1408xf32, #tpu.memory_space<vmem>>, vector<4x1152xf32>
    %c136 = arith.constant 136 : index
    %c0_80 = arith.constant 0 : index
    %69 = vector.load %arg7[%c136, %c0_80] : memref<324x1152xf32, #tpu.memory_space<vmem>>, vector<4x1152xf32>
    tpu.vector_store %arg7[%c136, %c0_80], %68 {strides = array<i32>} : memref<324x1152xf32, #tpu.memory_space<vmem>>, vector<4x1152xf32>,
    %c0_81 = arith.constant 0 : index
    %c80_82 = arith.constant 80 : index
    %70 = vector.load %arg0[%c0_81, %c80_82] : memref<4x1408xf32, #tpu.memory_space<vmem>>, vector<4x1152xf32>
    %c140 = arith.constant 140 : index
    %c0_83 = arith.constant 0 : index
    %71 = vector.load %arg7[%c140, %c0_83] : memref<324x1152xf32, #tpu.memory_space<vmem>>, vector<4x1152xf32>
    tpu.vector_store %arg7[%c140, %c0_83], %70 {strides = array<i32>} : memref<324x1152xf32, #tpu.memory_space<vmem>>, vector<4x1152xf32>,
    %c0_84 = arith.constant 0 : index
    %c96_85 = arith.constant 96 : index
    %72 = vector.load %arg0[%c0_84, %c96_85] : memref<4x1408xf32, #tpu.memory_space<vmem>>, vector<4x1152xf32>
    %c144 = arith.constant 144 : index
    %c0_86 = arith.constant 0 : index
    %73 = vector.load %arg7[%c144, %c0_86] : memref<324x1152xf32, #tpu.memory_space<vmem>>, vector<4x1152xf32>
    tpu.vector_store %arg7[%c144, %c0_86], %72 {strides = array<i32>} : memref<324x1152xf32, #tpu.memory_space<vmem>>, vector<4x1152xf32>,
    %c0_87 = arith.constant 0 : index
    %c97 = arith.constant 97 : index
    %74 = vector.load %arg0[%c0_87, %c97] : memref<4x1408xf32, #tpu.memory_space<vmem>>, vector<4x1152xf32>
    %c148 = arith.constant 148 : index
    %c0_88 = arith.constant 0 : index
    %75 = vector.load %arg7[%c148, %c0_88] : memref<324x1152xf32, #tpu.memory_space<vmem>>, vector<4x1152xf32>
    tpu.vector_store %arg7[%c148, %c0_88], %74 {strides = array<i32>} : memref<324x1152xf32, #tpu.memory_space<vmem>>, vector<4x1152xf32>,
    %c0_89 = arith.constant 0 : index
    %c98 = arith.constant 98 : index
    %76 = vector.load %arg0[%c0_89, %c98] : memref<4x1408xf32, #tpu.memory_space<vmem>>, vector<4x1152xf32>
    %c152 = arith.constant 152 : index
    %c0_90 = arith.constant 0 : index
    %77 = vector.load %arg7[%c152, %c0_90] : memref<324x1152xf32, #tpu.memory_space<vmem>>, vector<4x1152xf32>
    tpu.vector_store %arg7[%c152, %c0_90], %76 {strides = array<i32>} : memref<324x1152xf32, #tpu.memory_space<vmem>>, vector<4x1152xf32>,
    %c0_91 = arith.constant 0 : index
    %c99 = arith.constant 99 : index
    %78 = vector.load %arg0[%c0_91, %c99] : memref<4x1408xf32, #tpu.memory_space<vmem>>, vector<4x1152xf32>
    %c156 = arith.constant 156 : index
    %c0_92 = arith.constant 0 : index
    %79 = vector.load %arg7[%c156, %c0_92] : memref<324x1152xf32, #tpu.memory_space<vmem>>, vector<4x1152xf32>
    tpu.vector_store %arg7[%c156, %c0_92], %78 {strides = array<i32>} : memref<324x1152xf32, #tpu.memory_space<vmem>>, vector<4x1152xf32>,
    %c0_93 = arith.constant 0 : index
    %c100_94 = arith.constant 100 : index
    %80 = vector.load %arg0[%c0_93, %c100_94] : memref<4x1408xf32, #tpu.memory_space<vmem>>, vector<4x1152xf32>
    %c160 = arith.constant 160 : index
    %c0_95 = arith.constant 0 : index
    %81 = vector.load %arg7[%c160, %c0_95] : memref<324x1152xf32, #tpu.memory_space<vmem>>, vector<4x1152xf32>
    tpu.vector_store %arg7[%c160, %c0_95], %80 {strides = array<i32>} : memref<324x1152xf32, #tpu.memory_space<vmem>>, vector<4x1152xf32>,
    %c0_96 = arith.constant 0 : index
    %c101 = arith.constant 101 : index
    %82 = vector.load %arg0[%c0_96, %c101] : memref<4x1408xf32, #tpu.memory_space<vmem>>, vector<4x1152xf32>
    %c164 = arith.constant 164 : index
    %c0_97 = arith.constant 0 : index
    %83 = vector.load %arg7[%c164, %c0_97] : memref<324x1152xf32, #tpu.memory_space<vmem>>, vector<4x1152xf32>
    tpu.vector_store %arg7[%c164, %c0_97], %82 {strides = array<i32>} : memref<324x1152xf32, #tpu.memory_space<vmem>>, vector<4x1152xf32>,
    %c0_98 = arith.constant 0 : index
    %c102 = arith.constant 102 : index
    %84 = vector.load %arg0[%c0_98, %c102] : memref<4x1408xf32, #tpu.memory_space<vmem>>, vector<4x1152xf32>
    %c168 = arith.constant 168 : index
    %c0_99 = arith.constant 0 : index
    %85 = vector.load %arg7[%c168, %c0_99] : memref<324x1152xf32, #tpu.memory_space<vmem>>, vector<4x1152xf32>
    tpu.vector_store %arg7[%c168, %c0_99], %84 {strides = array<i32>} : memref<324x1152xf32, #tpu.memory_space<vmem>>, vector<4x1152xf32>,
    %c0_100 = arith.constant 0 : index
    %c103 = arith.constant 103 : index
    %86 = vector.load %arg0[%c0_100, %c103] : memref<4x1408xf32, #tpu.memory_space<vmem>>, vector<4x1152xf32>
    %c172 = arith.constant 172 : index
    %c0_101 = arith.constant 0 : index
    %87 = vector.load %arg7[%c172, %c0_101] : memref<324x1152xf32, #tpu.memory_space<vmem>>, vector<4x1152xf32>
    tpu.vector_store %arg7[%c172, %c0_101], %86 {strides = array<i32>} : memref<324x1152xf32, #tpu.memory_space<vmem>>, vector<4x1152xf32>,
    %c0_102 = arith.constant 0 : index
    %c104_103 = arith.constant 104 : index
    %88 = vector.load %arg0[%c0_102, %c104_103] : memref<4x1408xf32, #tpu.memory_space<vmem>>, vector<4x1152xf32>
    %c176 = arith.constant 176 : index
    %c0_104 = arith.constant 0 : index
    %89 = vector.load %arg7[%c176, %c0_104] : memref<324x1152xf32, #tpu.memory_space<vmem>>, vector<4x1152xf32>
    tpu.vector_store %arg7[%c176, %c0_104], %88 {strides = array<i32>} : memref<324x1152xf32, #tpu.memory_space<vmem>>, vector<4x1152xf32>,
    %c0_105 = arith.constant 0 : index
    %c120_106 = arith.constant 120 : index
    %90 = vector.load %arg0[%c0_105, %c120_106] : memref<4x1408xf32, #tpu.memory_space<vmem>>, vector<4x1152xf32>
    %c180 = arith.constant 180 : index
    %c0_107 = arith.constant 0 : index
    %91 = vector.load %arg7[%c180, %c0_107] : memref<324x1152xf32, #tpu.memory_space<vmem>>, vector<4x1152xf32>
    tpu.vector_store %arg7[%c180, %c0_107], %90 {strides = array<i32>} : memref<324x1152xf32, #tpu.memory_space<vmem>>, vector<4x1152xf32>,
    %c0_108 = arith.constant 0 : index
    %c121 = arith.constant 121 : index
    %92 = vector.load %arg0[%c0_108, %c121] : memref<4x1408xf32, #tpu.memory_space<vmem>>, vector<4x1152xf32>
    %c184 = arith.constant 184 : index
    %c0_109 = arith.constant 0 : index
    %93 = vector.load %arg7[%c184, %c0_109] : memref<324x1152xf32, #tpu.memory_space<vmem>>, vector<4x1152xf32>
    tpu.vector_store %arg7[%c184, %c0_109], %92 {strides = array<i32>} : memref<324x1152xf32, #tpu.memory_space<vmem>>, vector<4x1152xf32>,
    %c0_110 = arith.constant 0 : index
    %c122 = arith.constant 122 : index
    %94 = vector.load %arg0[%c0_110, %c122] : memref<4x1408xf32, #tpu.memory_space<vmem>>, vector<4x1152xf32>
    %c188 = arith.constant 188 : index
    %c0_111 = arith.constant 0 : index
    %95 = vector.load %arg7[%c188, %c0_111] : memref<324x1152xf32, #tpu.memory_space<vmem>>, vector<4x1152xf32>
    tpu.vector_store %arg7[%c188, %c0_111], %94 {strides = array<i32>} : memref<324x1152xf32, #tpu.memory_space<vmem>>, vector<4x1152xf32>,
    %c0_112 = arith.constant 0 : index
    %c123 = arith.constant 123 : index
    %96 = vector.load %arg0[%c0_112, %c123] : memref<4x1408xf32, #tpu.memory_space<vmem>>, vector<4x1152xf32>
    %c192 = arith.constant 192 : index
    %c0_113 = arith.constant 0 : index
    %97 = vector.load %arg7[%c192, %c0_113] : memref<324x1152xf32, #tpu.memory_space<vmem>>, vector<4x1152xf32>
    tpu.vector_store %arg7[%c192, %c0_113], %96 {strides = array<i32>} : memref<324x1152xf32, #tpu.memory_space<vmem>>, vector<4x1152xf32>,
    %c0_114 = arith.constant 0 : index
    %c124_115 = arith.constant 124 : index
    %98 = vector.load %arg0[%c0_114, %c124_115] : memref<4x1408xf32, #tpu.memory_space<vmem>>, vector<4x1152xf32>
    %c196 = arith.constant 196 : index
    %c0_116 = arith.constant 0 : index
    %99 = vector.load %arg7[%c196, %c0_116] : memref<324x1152xf32, #tpu.memory_space<vmem>>, vector<4x1152xf32>
    tpu.vector_store %arg7[%c196, %c0_116], %98 {strides = array<i32>} : memref<324x1152xf32, #tpu.memory_space<vmem>>, vector<4x1152xf32>,
    %c0_117 = arith.constant 0 : index
    %c125 = arith.constant 125 : index
    %100 = vector.load %arg0[%c0_117, %c125] : memref<4x1408xf32, #tpu.memory_space<vmem>>, vector<4x1152xf32>
    %c200 = arith.constant 200 : index
    %c0_118 = arith.constant 0 : index
    %101 = vector.load %arg7[%c200, %c0_118] : memref<324x1152xf32, #tpu.memory_space<vmem>>, vector<4x1152xf32>
    tpu.vector_store %arg7[%c200, %c0_118], %100 {strides = array<i32>} : memref<324x1152xf32, #tpu.memory_space<vmem>>, vector<4x1152xf32>,
    %c0_119 = arith.constant 0 : index
    %c126 = arith.constant 126 : index
    %102 = vector.load %arg0[%c0_119, %c126] : memref<4x1408xf32, #tpu.memory_space<vmem>>, vector<4x1152xf32>
    %c204 = arith.constant 204 : index
    %c0_120 = arith.constant 0 : index
    %103 = vector.load %arg7[%c204, %c0_120] : memref<324x1152xf32, #tpu.memory_space<vmem>>, vector<4x1152xf32>
    tpu.vector_store %arg7[%c204, %c0_120], %102 {strides = array<i32>} : memref<324x1152xf32, #tpu.memory_space<vmem>>, vector<4x1152xf32>,
    %c0_121 = arith.constant 0 : index
    %c127 = arith.constant 127 : index
    %104 = vector.load %arg0[%c0_121, %c127] : memref<4x1408xf32, #tpu.memory_space<vmem>>, vector<4x1152xf32>
    %c208 = arith.constant 208 : index
    %c0_122 = arith.constant 0 : index
    %105 = vector.load %arg7[%c208, %c0_122] : memref<324x1152xf32, #tpu.memory_space<vmem>>, vector<4x1152xf32>
    tpu.vector_store %arg7[%c208, %c0_122], %104 {strides = array<i32>} : memref<324x1152xf32, #tpu.memory_space<vmem>>, vector<4x1152xf32>,
    %c0_123 = arith.constant 0 : index
    %c128_124 = arith.constant 128 : index
    %106 = vector.load %arg0[%c0_123, %c128_124] : memref<4x1408xf32, #tpu.memory_space<vmem>>, vector<4x1152xf32>
    %c212 = arith.constant 212 : index
    %c0_125 = arith.constant 0 : index
    %107 = vector.load %arg7[%c212, %c0_125] : memref<324x1152xf32, #tpu.memory_space<vmem>>, vector<4x1152xf32>
    tpu.vector_store %arg7[%c212, %c0_125], %106 {strides = array<i32>} : memref<324x1152xf32, #tpu.memory_space<vmem>>, vector<4x1152xf32>,
    %c0_126 = arith.constant 0 : index
    %c144_127 = arith.constant 144 : index
    %108 = vector.load %arg0[%c0_126, %c144_127] : memref<4x1408xf32, #tpu.memory_space<vmem>>, vector<4x1152xf32>
    %c216 = arith.constant 216 : index
    %c0_128 = arith.constant 0 : index
    %109 = vector.load %arg7[%c216, %c0_128] : memref<324x1152xf32, #tpu.memory_space<vmem>>, vector<4x1152xf32>
    tpu.vector_store %arg7[%c216, %c0_128], %108 {strides = array<i32>} : memref<324x1152xf32, #tpu.memory_space<vmem>>, vector<4x1152xf32>,
    %c0_129 = arith.constant 0 : index
    %c145 = arith.constant 145 : index
    %110 = vector.load %arg0[%c0_129, %c145] : memref<4x1408xf32, #tpu.memory_space<vmem>>, vector<4x1152xf32>
    %c220 = arith.constant 220 : index
    %c0_130 = arith.constant 0 : index
    %111 = vector.load %arg7[%c220, %c0_130] : memref<324x1152xf32, #tpu.memory_space<vmem>>, vector<4x1152xf32>
    tpu.vector_store %arg7[%c220, %c0_130], %110 {strides = array<i32>} : memref<324x1152xf32, #tpu.memory_space<vmem>>, vector<4x1152xf32>,
    %c0_131 = arith.constant 0 : index
    %c146 = arith.constant 146 : index
    %112 = vector.load %arg0[%c0_131, %c146] : memref<4x1408xf32, #tpu.memory_space<vmem>>, vector<4x1152xf32>
    %c224 = arith.constant 224 : index
    %c0_132 = arith.constant 0 : index
    %113 = vector.load %arg7[%c224, %c0_132] : memref<324x1152xf32, #tpu.memory_space<vmem>>, vector<4x1152xf32>
    tpu.vector_store %arg7[%c224, %c0_132], %112 {strides = array<i32>} : memref<324x1152xf32, #tpu.memory_space<vmem>>, vector<4x1152xf32>,
    %c0_133 = arith.constant 0 : index
    %c147 = arith.constant 147 : index
    %114 = vector.load %arg0[%c0_133, %c147] : memref<4x1408xf32, #tpu.memory_space<vmem>>, vector<4x1152xf32>
    %c228 = arith.constant 228 : index
    %c0_134 = arith.constant 0 : index
    %115 = vector.load %arg7[%c228, %c0_134] : memref<324x1152xf32, #tpu.memory_space<vmem>>, vector<4x1152xf32>
    tpu.vector_store %arg7[%c228, %c0_134], %114 {strides = array<i32>} : memref<324x1152xf32, #tpu.memory_space<vmem>>, vector<4x1152xf32>,
    %c0_135 = arith.constant 0 : index
    %c148_136 = arith.constant 148 : index
    %116 = vector.load %arg0[%c0_135, %c148_136] : memref<4x1408xf32, #tpu.memory_space<vmem>>, vector<4x1152xf32>
    %c232 = arith.constant 232 : index
    %c0_137 = arith.constant 0 : index
    %117 = vector.load %arg7[%c232, %c0_137] : memref<324x1152xf32, #tpu.memory_space<vmem>>, vector<4x1152xf32>
    tpu.vector_store %arg7[%c232, %c0_137], %116 {strides = array<i32>} : memref<324x1152xf32, #tpu.memory_space<vmem>>, vector<4x1152xf32>,
    %c0_138 = arith.constant 0 : index
    %c149 = arith.constant 149 : index
    %118 = vector.load %arg0[%c0_138, %c149] : memref<4x1408xf32, #tpu.memory_space<vmem>>, vector<4x1152xf32>
    %c236 = arith.constant 236 : index
    %c0_139 = arith.constant 0 : index
    %119 = vector.load %arg7[%c236, %c0_139] : memref<324x1152xf32, #tpu.memory_space<vmem>>, vector<4x1152xf32>
    tpu.vector_store %arg7[%c236, %c0_139], %118 {strides = array<i32>} : memref<324x1152xf32, #tpu.memory_space<vmem>>, vector<4x1152xf32>,
    %c0_140 = arith.constant 0 : index
    %c150 = arith.constant 150 : index
    %120 = vector.load %arg0[%c0_140, %c150] : memref<4x1408xf32, #tpu.memory_space<vmem>>, vector<4x1152xf32>
    %c240 = arith.constant 240 : index
    %c0_141 = arith.constant 0 : index
    %121 = vector.load %arg7[%c240, %c0_141] : memref<324x1152xf32, #tpu.memory_space<vmem>>, vector<4x1152xf32>
    tpu.vector_store %arg7[%c240, %c0_141], %120 {strides = array<i32>} : memref<324x1152xf32, #tpu.memory_space<vmem>>, vector<4x1152xf32>,
    %c0_142 = arith.constant 0 : index
    %c151 = arith.constant 151 : index
    %122 = vector.load %arg0[%c0_142, %c151] : memref<4x1408xf32, #tpu.memory_space<vmem>>, vector<4x1152xf32>
    %c244 = arith.constant 244 : index
    %c0_143 = arith.constant 0 : index
    %123 = vector.load %arg7[%c244, %c0_143] : memref<324x1152xf32, #tpu.memory_space<vmem>>, vector<4x1152xf32>
    tpu.vector_store %arg7[%c244, %c0_143], %122 {strides = array<i32>} : memref<324x1152xf32, #tpu.memory_space<vmem>>, vector<4x1152xf32>,
    %c0_144 = arith.constant 0 : index
    %c152_145 = arith.constant 152 : index
    %124 = vector.load %arg0[%c0_144, %c152_145] : memref<4x1408xf32, #tpu.memory_space<vmem>>, vector<4x1152xf32>
    %c248 = arith.constant 248 : index
    %c0_146 = arith.constant 0 : index
    %125 = vector.load %arg7[%c248, %c0_146] : memref<324x1152xf32, #tpu.memory_space<vmem>>, vector<4x1152xf32>
    tpu.vector_store %arg7[%c248, %c0_146], %124 {strides = array<i32>} : memref<324x1152xf32, #tpu.memory_space<vmem>>, vector<4x1152xf32>,
    %c0_147 = arith.constant 0 : index
    %c168_148 = arith.constant 168 : index
    %126 = vector.load %arg0[%c0_147, %c168_148] : memref<4x1408xf32, #tpu.memory_space<vmem>>, vector<4x1152xf32>
    %c252 = arith.constant 252 : index
    %c0_149 = arith.constant 0 : index
    %127 = vector.load %arg7[%c252, %c0_149] : memref<324x1152xf32, #tpu.memory_space<vmem>>, vector<4x1152xf32>
    tpu.vector_store %arg7[%c252, %c0_149], %126 {strides = array<i32>} : memref<324x1152xf32, #tpu.memory_space<vmem>>, vector<4x1152xf32>,
    %c0_150 = arith.constant 0 : index
    %c169 = arith.constant 169 : index
    %128 = vector.load %arg0[%c0_150, %c169] : memref<4x1408xf32, #tpu.memory_space<vmem>>, vector<4x1152xf32>
    %c256 = arith.constant 256 : index
    %c0_151 = arith.constant 0 : index
    %129 = vector.load %arg7[%c256, %c0_151] : memref<324x1152xf32, #tpu.memory_space<vmem>>, vector<4x1152xf32>
    tpu.vector_store %arg7[%c256, %c0_151], %128 {strides = array<i32>} : memref<324x1152xf32, #tpu.memory_space<vmem>>, vector<4x1152xf32>,
    %c0_152 = arith.constant 0 : index
    %c170 = arith.constant 170 : index
    %130 = vector.load %arg0[%c0_152, %c170] : memref<4x1408xf32, #tpu.memory_space<vmem>>, vector<4x1152xf32>
    %c260 = arith.constant 260 : index
    %c0_153 = arith.constant 0 : index
    %131 = vector.load %arg7[%c260, %c0_153] : memref<324x1152xf32, #tpu.memory_space<vmem>>, vector<4x1152xf32>
    tpu.vector_store %arg7[%c260, %c0_153], %130 {strides = array<i32>} : memref<324x1152xf32, #tpu.memory_space<vmem>>, vector<4x1152xf32>,
    %c0_154 = arith.constant 0 : index
    %c171 = arith.constant 171 : index
    %132 = vector.load %arg0[%c0_154, %c171] : memref<4x1408xf32, #tpu.memory_space<vmem>>, vector<4x1152xf32>
    %c264 = arith.constant 264 : index
    %c0_155 = arith.constant 0 : index
    %133 = vector.load %arg7[%c264, %c0_155] : memref<324x1152xf32, #tpu.memory_space<vmem>>, vector<4x1152xf32>
    tpu.vector_store %arg7[%c264, %c0_155], %132 {strides = array<i32>} : memref<324x1152xf32, #tpu.memory_space<vmem>>, vector<4x1152xf32>,
    %c0_156 = arith.constant 0 : index
    %c172_157 = arith.constant 172 : index
    %134 = vector.load %arg0[%c0_156, %c172_157] : memref<4x1408xf32, #tpu.memory_space<vmem>>, vector<4x1152xf32>
    %c268 = arith.constant 268 : index
    %c0_158 = arith.constant 0 : index
    %135 = vector.load %arg7[%c268, %c0_158] : memref<324x1152xf32, #tpu.memory_space<vmem>>, vector<4x1152xf32>
    tpu.vector_store %arg7[%c268, %c0_158], %134 {strides = array<i32>} : memref<324x1152xf32, #tpu.memory_space<vmem>>, vector<4x1152xf32>,
    %c0_159 = arith.constant 0 : index
    %c173 = arith.constant 173 : index
    %136 = vector.load %arg0[%c0_159, %c173] : memref<4x1408xf32, #tpu.memory_space<vmem>>, vector<4x1152xf32>
    %c272 = arith.constant 272 : index
    %c0_160 = arith.constant 0 : index
    %137 = vector.load %arg7[%c272, %c0_160] : memref<324x1152xf32, #tpu.memory_space<vmem>>, vector<4x1152xf32>
    tpu.vector_store %arg7[%c272, %c0_160], %136 {strides = array<i32>} : memref<324x1152xf32, #tpu.memory_space<vmem>>, vector<4x1152xf32>,
    %c0_161 = arith.constant 0 : index
    %c174 = arith.constant 174 : index
    %138 = vector.load %arg0[%c0_161, %c174] : memref<4x1408xf32, #tpu.memory_space<vmem>>, vector<4x1152xf32>
    %c276 = arith.constant 276 : index
    %c0_162 = arith.constant 0 : index
    %139 = vector.load %arg7[%c276, %c0_162] : memref<324x1152xf32, #tpu.memory_space<vmem>>, vector<4x1152xf32>
    tpu.vector_store %arg7[%c276, %c0_162], %138 {strides = array<i32>} : memref<324x1152xf32, #tpu.memory_space<vmem>>, vector<4x1152xf32>,
    %c0_163 = arith.constant 0 : index
    %c175 = arith.constant 175 : index
    %140 = vector.load %arg0[%c0_163, %c175] : memref<4x1408xf32, #tpu.memory_space<vmem>>, vector<4x1152xf32>
    %c280 = arith.constant 280 : index
    %c0_164 = arith.constant 0 : index
    %141 = vector.load %arg7[%c280, %c0_164] : memref<324x1152xf32, #tpu.memory_space<vmem>>, vector<4x1152xf32>
    tpu.vector_store %arg7[%c280, %c0_164], %140 {strides = array<i32>} : memref<324x1152xf32, #tpu.memory_space<vmem>>, vector<4x1152xf32>,
    %c0_165 = arith.constant 0 : index
    %c176_166 = arith.constant 176 : index
    %142 = vector.load %arg0[%c0_165, %c176_166] : memref<4x1408xf32, #tpu.memory_space<vmem>>, vector<4x1152xf32>
    %c284 = arith.constant 284 : index
    %c0_167 = arith.constant 0 : index
    %143 = vector.load %arg7[%c284, %c0_167] : memref<324x1152xf32, #tpu.memory_space<vmem>>, vector<4x1152xf32>
    tpu.vector_store %arg7[%c284, %c0_167], %142 {strides = array<i32>} : memref<324x1152xf32, #tpu.memory_space<vmem>>, vector<4x1152xf32>,
    %c0_168 = arith.constant 0 : index
    %c192_169 = arith.constant 192 : index
    %144 = vector.load %arg0[%c0_168, %c192_169] : memref<4x1408xf32, #tpu.memory_space<vmem>>, vector<4x1152xf32>
    %c288 = arith.constant 288 : index
    %c0_170 = arith.constant 0 : index
    %145 = vector.load %arg7[%c288, %c0_170] : memref<324x1152xf32, #tpu.memory_space<vmem>>, vector<4x1152xf32>
    tpu.vector_store %arg7[%c288, %c0_170], %144 {strides = array<i32>} : memref<324x1152xf32, #tpu.memory_space<vmem>>, vector<4x1152xf32>,
    %c0_171 = arith.constant 0 : index
    %c193 = arith.constant 193 : index
    %146 = vector.load %arg0[%c0_171, %c193] : memref<4x1408xf32, #tpu.memory_space<vmem>>, vector<4x1152xf32>
    %c292 = arith.constant 292 : index
    %c0_172 = arith.constant 0 : index
    %147 = vector.load %arg7[%c292, %c0_172] : memref<324x1152xf32, #tpu.memory_space<vmem>>, vector<4x1152xf32>
    tpu.vector_store %arg7[%c292, %c0_172], %146 {strides = array<i32>} : memref<324x1152xf32, #tpu.memory_space<vmem>>, vector<4x1152xf32>,
    %c0_173 = arith.constant 0 : index
    %c194 = arith.constant 194 : index
    %148 = vector.load %arg0[%c0_173, %c194] : memref<4x1408xf32, #tpu.memory_space<vmem>>, vector<4x1152xf32>
    %c296 = arith.constant 296 : index
    %c0_174 = arith.constant 0 : index
    %149 = vector.load %arg7[%c296, %c0_174] : memref<324x1152xf32, #tpu.memory_space<vmem>>, vector<4x1152xf32>
    tpu.vector_store %arg7[%c296, %c0_174], %148 {strides = array<i32>} : memref<324x1152xf32, #tpu.memory_space<vmem>>, vector<4x1152xf32>,
    %c0_175 = arith.constant 0 : index
    %c195 = arith.constant 195 : index
    %150 = vector.load %arg0[%c0_175, %c195] : memref<4x1408xf32, #tpu.memory_space<vmem>>, vector<4x1152xf32>
    %c300 = arith.constant 300 : index
    %c0_176 = arith.constant 0 : index
    %151 = vector.load %arg7[%c300, %c0_176] : memref<324x1152xf32, #tpu.memory_space<vmem>>, vector<4x1152xf32>
    tpu.vector_store %arg7[%c300, %c0_176], %150 {strides = array<i32>} : memref<324x1152xf32, #tpu.memory_space<vmem>>, vector<4x1152xf32>,
    %c0_177 = arith.constant 0 : index
    %c196_178 = arith.constant 196 : index
    %152 = vector.load %arg0[%c0_177, %c196_178] : memref<4x1408xf32, #tpu.memory_space<vmem>>, vector<4x1152xf32>
    %c304 = arith.constant 304 : index
    %c0_179 = arith.constant 0 : index
    %153 = vector.load %arg7[%c304, %c0_179] : memref<324x1152xf32, #tpu.memory_space<vmem>>, vector<4x1152xf32>
    tpu.vector_store %arg7[%c304, %c0_179], %152 {strides = array<i32>} : memref<324x1152xf32, #tpu.memory_space<vmem>>, vector<4x1152xf32>,
    %c0_180 = arith.constant 0 : index
    %c197 = arith.constant 197 : index
    %154 = vector.load %arg0[%c0_180, %c197] : memref<4x1408xf32, #tpu.memory_space<vmem>>, vector<4x1152xf32>
    %c308 = arith.constant 308 : index
    %c0_181 = arith.constant 0 : index
    %155 = vector.load %arg7[%c308, %c0_181] : memref<324x1152xf32, #tpu.memory_space<vmem>>, vector<4x1152xf32>
    tpu.vector_store %arg7[%c308, %c0_181], %154 {strides = array<i32>} : memref<324x1152xf32, #tpu.memory_space<vmem>>, vector<4x1152xf32>,
    %c0_182 = arith.constant 0 : index
    %c198 = arith.constant 198 : index
    %156 = vector.load %arg0[%c0_182, %c198] : memref<4x1408xf32, #tpu.memory_space<vmem>>, vector<4x1152xf32>
    %c312 = arith.constant 312 : index
    %c0_183 = arith.constant 0 : index
    %157 = vector.load %arg7[%c312, %c0_183] : memref<324x1152xf32, #tpu.memory_space<vmem>>, vector<4x1152xf32>
    tpu.vector_store %arg7[%c312, %c0_183], %156 {strides = array<i32>} : memref<324x1152xf32, #tpu.memory_space<vmem>>, vector<4x1152xf32>,
    %c0_184 = arith.constant 0 : index
    %c199 = arith.constant 199 : index
    %158 = vector.load %arg0[%c0_184, %c199] : memref<4x1408xf32, #tpu.memory_space<vmem>>, vector<4x1152xf32>
    %c316 = arith.constant 316 : index
    %c0_185 = arith.constant 0 : index
    %159 = vector.load %arg7[%c316, %c0_185] : memref<324x1152xf32, #tpu.memory_space<vmem>>, vector<4x1152xf32>
    tpu.vector_store %arg7[%c316, %c0_185], %158 {strides = array<i32>} : memref<324x1152xf32, #tpu.memory_space<vmem>>, vector<4x1152xf32>,
    %c0_186 = arith.constant 0 : index
    %c200_187 = arith.constant 200 : index
    %160 = vector.load %arg0[%c0_186, %c200_187] : memref<4x1408xf32, #tpu.memory_space<vmem>>, vector<4x1152xf32>
    %c320 = arith.constant 320 : index
    %c0_188 = arith.constant 0 : index
    %161 = vector.load %arg7[%c320, %c0_188] : memref<324x1152xf32, #tpu.memory_space<vmem>>, vector<4x1152xf32>
    tpu.vector_store %arg7[%c320, %c0_188], %160 {strides = array<i32>} : memref<324x1152xf32, #tpu.memory_space<vmem>>, vector<4x1152xf32>,
    %c0_189 = arith.constant 0 : index
    %c0_190 = arith.constant 0 : index
    %162 = vector.load %arg1[%c0_189, %c0_190] : memref<36x324xf32, #tpu.memory_space<vmem>>, vector<36x324xf32>
    %c0_191 = arith.constant 0 : index
    %c0_192 = arith.constant 0 : index
    %163 = vector.load %arg7[%c0_191, %c0_192] : memref<324x1152xf32, #tpu.memory_space<vmem>>, vector<324x1152xf32>
    %cst = arith.constant dense<0.000000e+00> : vector<36x1152xf32>
    %164 = tpu.matmul %162, %163, %cst {dimension_numbers = #tpu.dot_dimension_numbers<[1], [0], [0], [1], [0, 0, 1, 1], [], []>} : vector<36x324xf32>, vector<324x1152xf32>, vector<36x1152xf32> -> vector<36x1152xf32>
    %c0_193 = arith.constant 0 : index
    %c0_194 = arith.constant 0 : index
    %165 = vector.load %arg2[%c0_193, %c0_194] : memref<36x1xf32, #tpu.memory_space<vmem>>, vector<36x1xf32>
    %166 = vector.broadcast %165 : vector<36x1xf32> to vector<36x1152xf32>
    %167 = arith.addf %164, %166 : vector<36x1152xf32>
    %cst_195 = arith.constant 0.000000e+00 : f32
    %168 = vector.broadcast %cst_195 : f32 to vector<36x1152xf32>
    %169 = arith.maximumf %167, %168 : vector<36x1152xf32>
    %c0_196 = arith.constant 0 : index
    %c0_197 = arith.constant 0 : index
    %170 = vector.load %arg3[%c0_196, %c0_197] : memref<25x36xf32, #tpu.memory_space<vmem>>, vector<25x36xf32>
    %cst_198 = arith.constant dense<0.000000e+00> : vector<25x1152xf32>
    %171 = tpu.matmul %170, %169, %cst_198 {dimension_numbers = #tpu.dot_dimension_numbers<[1], [0], [0], [1], [0, 0, 1, 1], [], []>} : vector<25x36xf32>, vector<36x1152xf32>, vector<25x1152xf32> -> vector<25x1152xf32>
    %c0_199 = arith.constant 0 : index
    %c0_200 = arith.constant 0 : index
    %172 = vector.load %arg5[%c0_199, %c0_200] : memref<1x1152xf32, #tpu.memory_space<vmem>>, vector<1x1152xf32>
    %173 = vector.broadcast %172 : vector<1x1152xf32> to vector<25x1152xf32>
    %174 = arith.mulf %171, %173 : vector<25x1152xf32>
    %cst_201 = arith.constant 0.000000e+00 : f32
    %175 = vector.broadcast %cst_201 : f32 to vector<25x128xf32>
    %c0_202 = arith.constant 0 : index
    %c0_203 = arith.constant 0 : index
    %176 = vector.load %arg8[%c0_202, %c0_203] : memref<25x1408xf32, #tpu.memory_space<vmem>>, vector<25x128xf32>
    tpu.vector_store %arg8[%c0_202, %c0_203], %175 {strides = array<i32>} : memref<25x1408xf32, #tpu.memory_space<vmem>>, vector<25x128xf32>,
    %cst_204 = arith.constant 0.000000e+00 : f32
    %177 = vector.broadcast %cst_204 : f32 to vector<25x128xf32>
    %c0_205 = arith.constant 0 : index
    %c1280 = arith.constant 1280 : index
    %178 = vector.load %arg8[%c0_205, %c1280] : memref<25x1408xf32, #tpu.memory_space<vmem>>, vector<25x128xf32>
    tpu.vector_store %arg8[%c0_205, %c1280], %177 {strides = array<i32>} : memref<25x1408xf32, #tpu.memory_space<vmem>>, vector<25x128xf32>,
    %c0_206 = arith.constant 0 : index
    %c128_207 = arith.constant 128 : index
    %179 = vector.load %arg8[%c0_206, %c128_207] : memref<25x1408xf32, #tpu.memory_space<vmem>>, vector<25x1152xf32>
    tpu.vector_store %arg8[%c0_206, %c128_207], %174 {strides = array<i32>} : memref<25x1408xf32, #tpu.memory_space<vmem>>, vector<25x1152xf32>,
    %cst_208 = arith.constant 0.000000e+00 : f32
    %180 = vector.broadcast %cst_208 : f32 to vector<1x1152xf32>
    %c0_209 = arith.constant 0 : index
    %c78_210 = arith.constant 78 : index
    %181 = vector.load %arg8[%c0_209, %c78_210] : memref<25x1408xf32, #tpu.memory_space<vmem>>, vector<1x1152xf32>
    %182 = arith.addf %180, %181 : vector<1x1152xf32>
    %c1_211 = arith.constant 1 : index
    %c79_212 = arith.constant 79 : index
    %183 = vector.load %arg8[%c1_211, %c79_212] : memref<25x1408xf32, #tpu.memory_space<vmem>>, vector<1x1152xf32>
    %184 = arith.addf %182, %183 : vector<1x1152xf32>
    %c2_213 = arith.constant 2 : index
    %c80_214 = arith.constant 80 : index
    %185 = vector.load %arg8[%c2_213, %c80_214] : memref<25x1408xf32, #tpu.memory_space<vmem>>, vector<1x1152xf32>
    %186 = arith.addf %184, %185 : vector<1x1152xf32>
    %c3_215 = arith.constant 3 : index
    %c81 = arith.constant 81 : index
    %187 = vector.load %arg8[%c3_215, %c81] : memref<25x1408xf32, #tpu.memory_space<vmem>>, vector<1x1152xf32>
    %188 = arith.addf %186, %187 : vector<1x1152xf32>
    %c4_216 = arith.constant 4 : index
    %c82 = arith.constant 82 : index
    %189 = vector.load %arg8[%c4_216, %c82] : memref<25x1408xf32, #tpu.memory_space<vmem>>, vector<1x1152xf32>
    %190 = arith.addf %188, %189 : vector<1x1152xf32>
    %c5_217 = arith.constant 5 : index
    %c102_218 = arith.constant 102 : index
    %191 = vector.load %arg8[%c5_217, %c102_218] : memref<25x1408xf32, #tpu.memory_space<vmem>>, vector<1x1152xf32>
    %192 = arith.addf %190, %191 : vector<1x1152xf32>
    %c6_219 = arith.constant 6 : index
    %c103_220 = arith.constant 103 : index
    %193 = vector.load %arg8[%c6_219, %c103_220] : memref<25x1408xf32, #tpu.memory_space<vmem>>, vector<1x1152xf32>
    %194 = arith.addf %192, %193 : vector<1x1152xf32>
    %c7_221 = arith.constant 7 : index
    %c104_222 = arith.constant 104 : index
    %195 = vector.load %arg8[%c7_221, %c104_222] : memref<25x1408xf32, #tpu.memory_space<vmem>>, vector<1x1152xf32>
    %196 = arith.addf %194, %195 : vector<1x1152xf32>
    %c8_223 = arith.constant 8 : index
    %c105 = arith.constant 105 : index
    %197 = vector.load %arg8[%c8_223, %c105] : memref<25x1408xf32, #tpu.memory_space<vmem>>, vector<1x1152xf32>
    %198 = arith.addf %196, %197 : vector<1x1152xf32>
    %c9 = arith.constant 9 : index
    %c106 = arith.constant 106 : index
    %199 = vector.load %arg8[%c9, %c106] : memref<25x1408xf32, #tpu.memory_space<vmem>>, vector<1x1152xf32>
    %200 = arith.addf %198, %199 : vector<1x1152xf32>
    %c10 = arith.constant 10 : index
    %c126_224 = arith.constant 126 : index
    %201 = vector.load %arg8[%c10, %c126_224] : memref<25x1408xf32, #tpu.memory_space<vmem>>, vector<1x1152xf32>
    %202 = arith.addf %200, %201 : vector<1x1152xf32>
    %c11 = arith.constant 11 : index
    %c127_225 = arith.constant 127 : index
    %203 = vector.load %arg8[%c11, %c127_225] : memref<25x1408xf32, #tpu.memory_space<vmem>>, vector<1x1152xf32>
    %204 = arith.addf %202, %203 : vector<1x1152xf32>
    %c12_226 = arith.constant 12 : index
    %c128_227 = arith.constant 128 : index
    %205 = vector.load %arg8[%c12_226, %c128_227] : memref<25x1408xf32, #tpu.memory_space<vmem>>, vector<1x1152xf32>
    %206 = arith.addf %204, %205 : vector<1x1152xf32>
    %c13 = arith.constant 13 : index
    %c129 = arith.constant 129 : index
    %207 = vector.load %arg8[%c13, %c129] : memref<25x1408xf32, #tpu.memory_space<vmem>>, vector<1x1152xf32>
    %208 = arith.addf %206, %207 : vector<1x1152xf32>
    %c14 = arith.constant 14 : index
    %c130 = arith.constant 130 : index
    %209 = vector.load %arg8[%c14, %c130] : memref<25x1408xf32, #tpu.memory_space<vmem>>, vector<1x1152xf32>
    %210 = arith.addf %208, %209 : vector<1x1152xf32>
    %c15 = arith.constant 15 : index
    %c150_228 = arith.constant 150 : index
    %211 = vector.load %arg8[%c15, %c150_228] : memref<25x1408xf32, #tpu.memory_space<vmem>>, vector<1x1152xf32>
    %212 = arith.addf %210, %211 : vector<1x1152xf32>
    %c16_229 = arith.constant 16 : index
    %c151_230 = arith.constant 151 : index
    %213 = vector.load %arg8[%c16_229, %c151_230] : memref<25x1408xf32, #tpu.memory_space<vmem>>, vector<1x1152xf32>
    %214 = arith.addf %212, %213 : vector<1x1152xf32>
    %c17 = arith.constant 17 : index
    %c152_231 = arith.constant 152 : index
    %215 = vector.load %arg8[%c17, %c152_231] : memref<25x1408xf32, #tpu.memory_space<vmem>>, vector<1x1152xf32>
    %216 = arith.addf %214, %215 : vector<1x1152xf32>
    %c18 = arith.constant 18 : index
    %c153 = arith.constant 153 : index
    %217 = vector.load %arg8[%c18, %c153] : memref<25x1408xf32, #tpu.memory_space<vmem>>, vector<1x1152xf32>
    %218 = arith.addf %216, %217 : vector<1x1152xf32>
    %c19 = arith.constant 19 : index
    %c154 = arith.constant 154 : index
    %219 = vector.load %arg8[%c19, %c154] : memref<25x1408xf32, #tpu.memory_space<vmem>>, vector<1x1152xf32>
    %220 = arith.addf %218, %219 : vector<1x1152xf32>
    %c20_232 = arith.constant 20 : index
    %c174_233 = arith.constant 174 : index
    %221 = vector.load %arg8[%c20_232, %c174_233] : memref<25x1408xf32, #tpu.memory_space<vmem>>, vector<1x1152xf32>
    %222 = arith.addf %220, %221 : vector<1x1152xf32>
    %c21 = arith.constant 21 : index
    %c175_234 = arith.constant 175 : index
    %223 = vector.load %arg8[%c21, %c175_234] : memref<25x1408xf32, #tpu.memory_space<vmem>>, vector<1x1152xf32>
    %224 = arith.addf %222, %223 : vector<1x1152xf32>
    %c22 = arith.constant 22 : index
    %c176_235 = arith.constant 176 : index
    %225 = vector.load %arg8[%c22, %c176_235] : memref<25x1408xf32, #tpu.memory_space<vmem>>, vector<1x1152xf32>
    %226 = arith.addf %224, %225 : vector<1x1152xf32>
    %c23 = arith.constant 23 : index
    %c177 = arith.constant 177 : index
    %227 = vector.load %arg8[%c23, %c177] : memref<25x1408xf32, #tpu.memory_space<vmem>>, vector<1x1152xf32>
    %228 = arith.addf %226, %227 : vector<1x1152xf32>
    %c24_236 = arith.constant 24 : index
    %c178 = arith.constant 178 : index
    %229 = vector.load %arg8[%c24_236, %c178] : memref<25x1408xf32, #tpu.memory_space<vmem>>, vector<1x1152xf32>
    %230 = arith.addf %228, %229 : vector<1x1152xf32>
    %c0_237 = arith.constant 0 : index
    %c0_238 = arith.constant 0 : index
    %231 = vector.load %arg4[%c0_237, %c0_238] : memref<1x1xf32, #tpu.memory_space<vmem>>, vector<1x1xf32>
    %232 = vector.broadcast %231 : vector<1x1xf32> to vector<1x1152xf32>
    %233 = arith.addf %230, %232 : vector<1x1152xf32>
    %c0_239 = arith.constant 0 : index
    %c0_240 = arith.constant 0 : index
    %234 = vector.load %arg6[%c0_239, %c0_240] : memref<1x1152xf32, #tpu.memory_space<vmem>>, vector<1x1152xf32>
    tpu.vector_store %arg6[%c0_239, %c0_240], %233 {strides = array<i32>} : memref<1x1152xf32, #tpu.memory_space<vmem>>, vector<1x1152xf32>,
    return
  }
}

</mosaic_0001>

<llo_original>
// kernel: snet_forward.1
$region0: #{snet_forward.1}
  #allocation0 [shape = 'u32[]', space=smem, size = 0x4, offset = 0x4, fixed_abs, tag = 'smem constant byte address 0x4 - core index']
  #allocation1 [shape = 'u32[144,128]{1,0:T(1,128)}', space=vmem, size = 0x12000, scoped, tag = 'internal scratch']
  #allocation2 [shape = 'f32[324,1152]{1,0:T(8,128)}', space=vmem, size = 0x171000, scoped, tag = 'scratch operand']
  #allocation3 [shape = 'f32[25,1408]{1,0:T(8,128)}', space=vmem, size = 0x2c000, scoped, tag = 'scratch operand']
  #allocation4 [shape = 'f32[1,1]{1,0:T(1,128)S(1)}', space=vmem, size = 0x200, scoped, tag = 'scoped memory for snet_forward.1']
  %s0 = inlined_call_operand.vmem [shape: f32[4,1408], index: 0, kind: input, shape index: {}]
  %s1 = inlined_call_operand.vmem [shape: f32[36,324], index: 1, kind: input, shape index: {}]
  %s2 = inlined_call_operand.vmem [shape: f32[36,1], index: 2, kind: input, shape index: {}]
  %s3 = inlined_call_operand.vmem [shape: f32[25,36], index: 3, kind: input, shape index: {}]
  %s4 = inlined_call_operand.<no memory space> [shape: f32[1,1], index: 4, kind: input, shape index: {}]
  %s5 = inlined_call_operand.vmem [shape: f32[1,1152], index: 5, kind: input, shape index: {}]
  %s6 = inlined_call_operand.vmem [shape: f32[1,1152], index: 6, kind: output, shape index: {}]
  %s7 = sld [smem:[#allocation0]]
  $region34: #{snet_forward.1} parent=0
    _
  %s9 = ssub.s32 1, %s7
  %s10 = scalar_select 0, %s9, %s7
  %v11 = vstv %s4
  %12 = vst [vmem:[#allocation4] sm:$0x1] %v11
  // Predicated region
  $region2: #{snet_forward.1} parent=0 // pred_check
    _
  $region3: #{snet_forward.1} parent=0 // pred_check_branch
    %14 = sbr.rel (0) target = $region5
  $region4: #{snet_forward.1} parent=0 // pred_region
    _
  $region5: #{snet_forward.1} parent=0 // pred_fallthru
    _
  // Predicated region
  $region6: #{snet_forward.1} parent=0 // pred_check
    _
  $region7: #{snet_forward.1} parent=0 // pred_check_branch
    %16 = sbr.rel (0) target = $region9
  $region8: #{snet_forward.1} parent=0 // pred_region
    _
  $region9: #{snet_forward.1} parent=0 // pred_fallthru
    _
  // Predicated region
  $region10: #{snet_forward.1} parent=0 // pred_check
    _
  $region11: #{snet_forward.1} parent=0 // pred_check_branch
    %18 = sbr.rel (0) target = $region13
  $region12: #{snet_forward.1} parent=0 // pred_region
    _
  $region13: #{snet_forward.1} parent=0 // pred_fallthru
    _
  // Predicated region
  $region14: #{snet_forward.1} parent=0 // pred_check
    _
  $region15: #{snet_forward.1} parent=0 // pred_check_branch
    %20 = sbr.rel (0) target = $region17
  $region16: #{snet_forward.1} parent=0 // pred_region
    _
  $region17: #{snet_forward.1} parent=0 // pred_fallthru
    _
  // Predicated region
  $region18: #{snet_forward.1} parent=0 // pred_check
    _
  $region19: #{snet_forward.1} parent=0 // pred_check_branch
    %22 = sbr.rel (0) target = $region21
  $region20: #{snet_forward.1} parent=0 // pred_region
    _
  $region21: #{snet_forward.1} parent=0 // pred_fallthru
    _
  // Predicated region
  $region22: #{snet_forward.1} parent=0 // pred_check
    _
  $region23: #{snet_forward.1} parent=0 // pred_check_branch
    %24 = sbr.rel (0) target = $region25
  $region24: #{snet_forward.1} parent=0 // pred_region
    _
  $region25: #{snet_forward.1} parent=0 // pred_fallthru
    _
  %v25 = vld [vmem:[%s0] sm:$0xff]
  %v26 = vld [vmem:[%s0 + $0x8] sm:$0xff]
  %v27 = vld [vmem:[%s0 + $0x10] sm:$0xff]
  %v28 = vld [vmem:[%s0 + $0x18] sm:$0xff]
  %v29 = vld [vmem:[%s0 + $0x20] sm:$0xf]
  %v34 = vcombine.high %v25, %v25
  %v35 = vcombine.high %v26, %v26
  %v36 = vcombine.high %v27, %v27
  %v37 = vcombine.high %v28, %v28
  %42 = vst [vmem:[#allocation2] sm:$0xf] %v25
  %43 = vst [vmem:[#allocation2 + $0x8] sm:$0xf] %v34
  %44 = vst [vmem:[#allocation2 + $0x10] sm:$0xf] %v26
  %45 = vst [vmem:[#allocation2 + $0x18] sm:$0xf] %v35
  %46 = vst [vmem:[#allocation2 + $0x20] sm:$0xf] %v27
  %47 = vst [vmem:[#allocation2 + $0x28] sm:$0xf] %v36
  %48 = vst [vmem:[#allocation2 + $0x30] sm:$0xf] %v28
  %49 = vst [vmem:[#allocation2 + $0x38] sm:$0xf] %v37
  %50 = vst [vmem:[#allocation2 + $0x40] sm:$0xf] %v29
  %v51 = vld [vmem:[%s0] sm:$0xff]
  %v52 = vld [vmem:[%s0 + $0x8] sm:$0xff]
  %v53 = vld [vmem:[%s0 + $0x10] sm:$0xff]
  %v54 = vld [vmem:[%s0 + $0x18] sm:$0xff]
  %v55 = vld [vmem:[%s0 + $0x20] sm:$0xff]
  %v61 = vcombine.low %v51, %v51
  %v62 = vcombine.low %v52, %v52
  %v63 = vcombine.low %v53, %v53
  %v64 = vcombine.low %v54, %v54
  %v65 = vcombine.low %v55, %v55
  %66 = vrot.lane.b32.xlu0 %v61, 127
  %v67 = vpop.permute.xlu0 %66
  %68 = vrot.lane.b32.xlu0 %v51, 127
  %v69 = vpop.permute.xlu0 %68
  %70 = vrot.lane.b32.xlu0 %v62, 127
  %v71 = vpop.permute.xlu0 %70
  %72 = vrot.lane.b32.xlu0 %v52, 127
  %v73 = vpop.permute.xlu0 %72
  %74 = vrot.lane.b32.xlu0 %v63, 127
  %v75 = vpop.permute.xlu0 %74
  %76 = vrot.lane.b32.xlu0 %v53, 127
  %v77 = vpop.permute.xlu0 %76
  %78 = vrot.lane.b32.xlu0 %v64, 127
  %v79 = vpop.permute.xlu0 %78
  %80 = vrot.lane.b32.xlu0 %v54, 127
  %v81 = vpop.permute.xlu0 %80
  %82 = vrot.lane.b32.xlu0 %v65, 127
  %v83 = vpop.permute.xlu0 %82
  %84 = vrot.lane.b32.xlu0 %v55, 127
  %v85 = vpop.permute.xlu0 %84
  %vm86 = vcmask 1039360
  %v87 = vsel %vm86, %v67, %v69
  %v88 = vsel %vm86, %v69, %v71
  %v89 = vsel %vm86, %v71, %v73
  %v90 = vsel %vm86, %v73, %v75
  %v91 = vsel %vm86, %v75, %v77
  %v92 = vsel %vm86, %v77, %v79
  %v93 = vsel %vm86, %v79, %v81
  %v94 = vsel %vm86, %v81, %v83
  %v95 = vsel %vm86, %v83, %v85
  %105 = vst [vmem:[#allocation2] sm:$0xf0] %v87
  %106 = vst [vmem:[#allocation2 + $0x8] sm:$0xf0] %v88
  %107 = vst [vmem:[#allocation2 + $0x10] sm:$0xf0] %v89
  %108 = vst [vmem:[#allocation2 + $0x18] sm:$0xf0] %v90
  %109 = vst [vmem:[#allocation2 + $0x20] sm:$0xf0] %v91
  %110 = vst [vmem:[#allocation2 + $0x28] sm:$0xf0] %v92
  %111 = vst [vmem:[#allocation2 + $0x30] sm:$0xf0] %v93
  %112 = vst [vmem:[#allocation2 + $0x38] sm:$0xf0] %v94
  %113 = vst [vmem:[#allocation2 + $0x40] sm:$0xf0] %v95
  %v114 = vld [vmem:[%s0] sm:$0xff]
  %v115 = vld [vmem:[%s0 + $0x8] sm:$0xff]
  %v116 = vld [vmem:[%s0 + $0x10] sm:$0xff]
  %v117 = vld [vmem:[%s0 + $0x18] sm:$0xff]
  %v118 = vld [vmem:[%s0 + $0x20] sm:$0xff]
  %v124 = vcombine.high %v114, %v114
  %v125 = vcombine.high %v115, %v115
  %v126 = vcombine.high %v116, %v116
  %v127 = vcombine.high %v117, %v117
  %v128 = vcombine.high %v118, %v118
  %129 = vrot.lane.b32.xlu0 %v114, 126
  %v130 = vpop.permute.xlu0 %129
  %131 = vrot.lane.b32.xlu0 %v124, 126
  %v132 = vpop.permute.xlu0 %131
  %133 = vrot.lane.b32.xlu0 %v115, 126
  %v134 = vpop.permute.xlu0 %133
  %135 = vrot.lane.b32.xlu0 %v125, 126
  %v136 = vpop.permute.xlu0 %135
  %137 = vrot.lane.b32.xlu0 %v116, 126
  %v138 = vpop.permute.xlu0 %137
  %139 = vrot.lane.b32.xlu0 %v126, 126
  %v140 = vpop.permute.xlu0 %139
  %141 = vrot.lane.b32.xlu0 %v117, 126
  %v142 = vpop.permute.xlu0 %141
  %143 = vrot.lane.b32.xlu0 %v127, 126
  %v144 = vpop.permute.xlu0 %143
  %145 = vrot.lane.b32.xlu0 %v118, 126
  %v146 = vpop.permute.xlu0 %145
  %147 = vrot.lane.b32.xlu0 %v128, 126
  %v148 = vpop.permute.xlu0 %147
  %vm149 = vcmask 1031168
  %v150 = vsel %vm149, %v130, %v132
  %v151 = vsel %vm149, %v132, %v134
  %v152 = vsel %vm149, %v134, %v136
  %v153 = vsel %vm149, %v136, %v138
  %v154 = vsel %vm149, %v138, %v140
  %v155 = vsel %vm149, %v140, %v142
  %v156 = vsel %vm149, %v142, %v144
  %v157 = vsel %vm149, %v144, %v146
  %v158 = vsel %vm149, %v146, %v148
  %168 = vst [vmem:[#allocation2 + $0x48] sm:$0xf] %v150
  %169 = vst [vmem:[#allocation2 + $0x50] sm:$0xf] %v151
  %170 = vst [vmem:[#allocation2 + $0x58] sm:$0xf] %v152
  %171 = vst [vmem:[#allocation2 + $0x60] sm:$0xf] %v153
  %172 = vst [vmem:[#allocation2 + $0x68] sm:$0xf] %v154
  %173 = vst [vmem:[#allocation2 + $0x70] sm:$0xf] %v155
  %174 = vst [vmem:[#allocation2 + $0x78] sm:$0xf] %v156
  %175 = vst [vmem:[#allocation2 + $0x80] sm:$0xf] %v157
  %176 = vst [vmem:[#allocation2 + $0x88] sm:$0xf] %v158
  %v177 = vld [vmem:[%s0] sm:$0xff]
  %v178 = vld [vmem:[%s0 + $0x8] sm:$0xff]
  %v179 = vld [vmem:[%s0 + $0x10] sm:$0xff]
  %v180 = vld [vmem:[%s0 + $0x18] sm:$0xff]
  %v181 = vld [vmem:[%s0 + $0x20] sm:$0xff]
  %v187 = vcombine.low %v177, %v177
  %v188 = vcombine.low %v178, %v178
  %v189 = vcombine.low %v179, %v179
  %v190 = vcombine.low %v180, %v180
  %v191 = vcombine.low %v181, %v181
  %192 = vrot.lane.b32.xlu0 %v187, 125
  %v193 = vpop.permute.xlu0 %192
  %194 = vrot.lane.b32.xlu0 %v177, 125
  %v195 = vpop.permute.xlu0 %194
  %196 = vrot.lane.b32.xlu0 %v188, 125
  %v197 = vpop.permute.xlu0 %196
  %198 = vrot.lane.b32.xlu0 %v178, 125
  %v199 = vpop.permute.xlu0 %198
  %200 = vrot.lane.b32.xlu0 %v189, 125
  %v201 = vpop.permute.xlu0 %200
  %202 = vrot.lane.b32.xlu0 %v179, 125
  %v203 = vpop.permute.xlu0 %202
  %204 = vrot.lane.b32.xlu0 %v190, 125
  %v205 = vpop.permute.xlu0 %204
  %206 = vrot.lane.b32.xlu0 %v180, 125
  %v207 = vpop.permute.xlu0 %206
  %208 = vrot.lane.b32.xlu0 %v191, 125
  %v209 = vpop.permute.xlu0 %208
  %210 = vrot.lane.b32.xlu0 %v181, 125
  %v211 = vpop.permute.xlu0 %210
  %vm212 = vcmask 1022976
  %v213 = vsel %vm212, %v193, %v195
  %v214 = vsel %vm212, %v195, %v197
  %v215 = vsel %vm212, %v197, %v199
  %v216 = vsel %vm212, %v199, %v201
  %v217 = vsel %vm212, %v201, %v203
  %v218 = vsel %vm212, %v203, %v205
  %v219 = vsel %vm212, %v205, %v207
  %v220 = vsel %vm212, %v207, %v209
  %v221 = vsel %vm212, %v209, %v211
  %231 = vst [vmem:[#allocation2 + $0x48] sm:$0xf0] %v213
  %232 = vst [vmem:[#allocation2 + $0x50] sm:$0xf0] %v214
  %233 = vst [vmem:[#allocation2 + $0x58] sm:$0xf0] %v215
  %234 = vst [vmem:[#allocation2 + $0x60] sm:$0xf0] %v216
  %235 = vst [vmem:[#allocation2 + $0x68] sm:$0xf0] %v217
  %236 = vst [vmem:[#allocation2 + $0x70] sm:$0xf0] %v218
  %237 = vst [vmem:[#allocation2 + $0x78] sm:$0xf0] %v219
  %238 = vst [vmem:[#allocation2 + $0x80] sm:$0xf0] %v220
  %239 = vst [vmem:[#allocation2 + $0x88] sm:$0xf0] %v221
  %v240 = vld [vmem:[%s0] sm:$0xff]
  %v241 = vld [vmem:[%s0 + $0x8] sm:$0xff]
  %v242 = vld [vmem:[%s0 + $0x10] sm:$0xff]
  %v243 = vld [vmem:[%s0 + $0x18] sm:$0xff]
  %v244 = vld [vmem:[%s0 + $0x20] sm:$0xff]
  %v250 = vcombine.high %v240, %v240
  %v251 = vcombine.high %v241, %v241
  %v252 = vcombine.high %v242, %v242
  %v253 = vcombine.high %v243, %v243
  %v254 = vcombine.high %v244, %v244
  %255 = vrot.lane.b32.xlu0 %v240, 124
  %v256 = vpop.permute.xlu0 %255
  %257 = vrot.lane.b32.xlu0 %v250, 124
  %v258 = vpop.permute.xlu0 %257
  %259 = vrot.lane.b32.xlu0 %v241, 124
  %v260 = vpop.permute.xlu0 %259
  %261 = vrot.lane.b32.xlu0 %v251, 124
  %v262 = vpop.permute.xlu0 %261
  %263 = vrot.lane.b32.xlu0 %v242, 124
  %v264 = vpop.permute.xlu0 %263
  %265 = vrot.lane.b32.xlu0 %v252, 124
  %v266 = vpop.permute.xlu0 %265
  %267 = vrot.lane.b32.xlu0 %v243, 124
  %v268 = vpop.permute.xlu0 %267
  %269 = vrot.lane.b32.xlu0 %v253, 124
  %v270 = vpop.permute.xlu0 %269
  %271 = vrot.lane.b32.xlu0 %v244, 124
  %v272 = vpop.permute.xlu0 %271
  %273 = vrot.lane.b32.xlu0 %v254, 124
  %v274 = vpop.permute.xlu0 %273
  %vm275 = vcmask 1014784
  %v276 = vsel %vm275, %v256, %v258
  %v277 = vsel %vm275, %v258, %v260
  %v278 = vsel %vm275, %v260, %v262
  %v279 = vsel %vm275, %v262, %v264
  %v280 = vsel %vm275, %v264, %v266
  %v281 = vsel %vm275, %v266, %v268
  %v282 = vsel %vm275, %v268, %v270
  %v283 = vsel %vm275, %v270, %v272
  %v284 = vsel %vm275, %v272, %v274
  %294 = vst [vmem:[#allocation2 + $0x90] sm:$0xf] %v276
  %295 = vst [vmem:[#allocation2 + $0x98] sm:$0xf] %v277
  %296 = vst [vmem:[#allocation2 + $0xa0] sm:$0xf] %v278
  %297 = vst [vmem:[#allocation2 + $0xa8] sm:$0xf] %v279
  %298 = vst [vmem:[#allocation2 + $0xb0] sm:$0xf] %v280
  %299 = vst [vmem:[#allocation2 + $0xb8] sm:$0xf] %v281
  %300 = vst [vmem:[#allocation2 + $0xc0] sm:$0xf] %v282
  %301 = vst [vmem:[#allocation2 + $0xc8] sm:$0xf] %v283
  %302 = vst [vmem:[#allocation2 + $0xd0] sm:$0xf] %v284
  %v303 = vld [vmem:[%s0] sm:$0xff]
  %v304 = vld [vmem:[%s0 + $0x8] sm:$0xff]
  %v305 = vld [vmem:[%s0 + $0x10] sm:$0xff]
  %v306 = vld [vmem:[%s0 + $0x18] sm:$0xff]
  %v307 = vld [vmem:[%s0 + $0x20] sm:$0xff]
  %v313 = vcombine.low %v303, %v303
  %v314 = vcombine.low %v304, %v304
  %v315 = vcombine.low %v305, %v305
  %v316 = vcombine.low %v306, %v306
  %v317 = vcombine.low %v307, %v307
  %318 = vrot.lane.b32.xlu0 %v313, 123
  %v319 = vpop.permute.xlu0 %318
  %320 = vrot.lane.b32.xlu0 %v303, 123
  %v321 = vpop.permute.xlu0 %320
  %322 = vrot.lane.b32.xlu0 %v314, 123
  %v323 = vpop.permute.xlu0 %322
  %324 = vrot.lane.b32.xlu0 %v304, 123
  %v325 = vpop.permute.xlu0 %324
  %326 = vrot.lane.b32.xlu0 %v315, 123
  %v327 = vpop.permute.xlu0 %326
  %328 = vrot.lane.b32.xlu0 %v305, 123
  %v329 = vpop.permute.xlu0 %328
  %330 = vrot.lane.b32.xlu0 %v316, 123
  %v331 = vpop.permute.xlu0 %330
  %332 = vrot.lane.b32.xlu0 %v306, 123
  %v333 = vpop.permute.xlu0 %332
  %334 = vrot.lane.b32.xlu0 %v317, 123
  %v335 = vpop.permute.xlu0 %334
  %336 = vrot.lane.b32.xlu0 %v307, 123
  %v337 = vpop.permute.xlu0 %336
  %vm338 = vcmask 1006592
  %v339 = vsel %vm338, %v319, %v321
  %v340 = vsel %vm338, %v321, %v323
  %v341 = vsel %vm338, %v323, %v325
  %v342 = vsel %vm338, %v325, %v327
  %v343 = vsel %vm338, %v327, %v329
  %v344 = vsel %vm338, %v329, %v331
  %v345 = vsel %vm338, %v331, %v333
  %v346 = vsel %vm338, %v333, %v335
  %v347 = vsel %vm338, %v335, %v337
  %357 = vst [vmem:[#allocation2 + $0x90] sm:$0xf0] %v339
  %358 = vst [vmem:[#allocation2 + $0x98] sm:$0xf0] %v340
  %359 = vst [vmem:[#allocation2 + $0xa0] sm:$0xf0] %v341
  %360 = vst [vmem:[#allocation2 + $0xa8] sm:$0xf0] %v342
  %361 = vst [vmem:[#allocation2 + $0xb0] sm:$0xf0] %v343
  %362 = vst [vmem:[#allocation2 + $0xb8] sm:$0xf0] %v344
  %363 = vst [vmem:[#allocation2 + $0xc0] sm:$0xf0] %v345
  %364 = vst [vmem:[#allocation2 + $0xc8] sm:$0xf0] %v346
  %365 = vst [vmem:[#allocation2 + $0xd0] sm:$0xf0] %v347
  %v366 = vld [vmem:[%s0] sm:$0xff]
  %v367 = vld [vmem:[%s0 + $0x8] sm:$0xff]
  %v368 = vld [vmem:[%s0 + $0x10] sm:$0xff]
  %v369 = vld [vmem:[%s0 + $0x18] sm:$0xff]
  %v370 = vld [vmem:[%s0 + $0x20] sm:$0xff]
  %v376 = vcombine.high %v366, %v366
  %v377 = vcombine.high %v367, %v367
  %v378 = vcombine.high %v368, %v368
  %v379 = vcombine.high %v369, %v369
  %v380 = vcombine.high %v370, %v370
  %381 = vrot.lane.b32.xlu0 %v366, 122
  %v382 = vpop.permute.xlu0 %381
  %383 = vrot.lane.b32.xlu0 %v376, 122
  %v384 = vpop.permute.xlu0 %383
  %385 = vrot.lane.b32.xlu0 %v367, 122
  %v386 = vpop.permute.xlu0 %385
  %387 = vrot.lane.b32.xlu0 %v377, 122
  %v388 = vpop.permute.xlu0 %387
  %389 = vrot.lane.b32.xlu0 %v368, 122
  %v390 = vpop.permute.xlu0 %389
  %391 = vrot.lane.b32.xlu0 %v378, 122
  %v392 = vpop.permute.xlu0 %391
  %393 = vrot.lane.b32.xlu0 %v369, 122
  %v394 = vpop.permute.xlu0 %393
  %395 = vrot.lane.b32.xlu0 %v379, 122
  %v396 = vpop.permute.xlu0 %395
  %397 = vrot.lane.b32.xlu0 %v370, 122
  %v398 = vpop.permute.xlu0 %397
  %399 = vrot.lane.b32.xlu0 %v380, 122
  %v400 = vpop.permute.xlu0 %399
  %vm401 = vcmask 998400
  %v402 = vsel %vm401, %v382, %v384
  %v403 = vsel %vm401, %v384, %v386
  %v404 = vsel %vm401, %v386, %v388
  %v405 = vsel %vm401, %v388, %v390
  %v406 = vsel %vm401, %v390, %v392
  %v407 = vsel %vm401, %v392, %v394
  %v408 = vsel %vm401, %v394, %v396
  %v409 = vsel %vm401, %v396, %v398
  %v410 = vsel %vm401, %v398, %v400
  %420 = vst [vmem:[#allocation2 + $0xd8] sm:$0xf] %v402
  %421 = vst [vmem:[#allocation2 + $0xe0] sm:$0xf] %v403
  %422 = vst [vmem:[#allocation2 + $0xe8] sm:$0xf] %v404
  %423 = vst [vmem:[#allocation2 + $0xf0] sm:$0xf] %v405
  %424 = vst [vmem:[#allocation2 + $0xf8] sm:$0xf] %v406
  %425 = vst [vmem:[#allocation2 + $0x100] sm:$0xf] %v407
  %426 = vst [vmem:[#allocation2 + $0x108] sm:$0xf] %v408
  %427 = vst [vmem:[#allocation2 + $0x110] sm:$0xf] %v409
  %428 = vst [vmem:[#allocation2 + $0x118] sm:$0xf] %v410
  %v429 = vld [vmem:[%s0] sm:$0xff]
  %v430 = vld [vmem:[%s0 + $0x8] sm:$0xff]
  %v431 = vld [vmem:[%s0 + $0x10] sm:$0xff]
  %v432 = vld [vmem:[%s0 + $0x18] sm:$0xff]
  %v433 = vld [vmem:[%s0 + $0x20] sm:$0xff]
  %v439 = vcombine.low %v429, %v429
  %v440 = vcombine.low %v430, %v430
  %v441 = vcombine.low %v431, %v431
  %v442 = vcombine.low %v432, %v432
  %v443 = vcombine.low %v433, %v433
  %444 = vrot.lane.b32.xlu0 %v439, 121
  %v445 = vpop.permute.xlu0 %444
  %446 = vrot.lane.b32.xlu0 %v429, 121
  %v447 = vpop.permute.xlu0 %446
  %448 = vrot.lane.b32.xlu0 %v440, 121
  %v449 = vpop.permute.xlu0 %448
  %450 = vrot.lane.b32.xlu0 %v430, 121
  %v451 = vpop.permute.xlu0 %450
  %452 = vrot.lane.b32.xlu0 %v441, 121
  %v453 = vpop.permute.xlu0 %452
  %454 = vrot.lane.b32.xlu0 %v431, 121
  %v455 = vpop.permute.xlu0 %454
  %456 = vrot.lane.b32.xlu0 %v442, 121
  %v457 = vpop.permute.xlu0 %456
  %458 = vrot.lane.b32.xlu0 %v432, 121
  %v459 = vpop.permute.xlu0 %458
  %460 = vrot.lane.b32.xlu0 %v443, 121
  %v461 = vpop.permute.xlu0 %460
  %462 = vrot.lane.b32.xlu0 %v433, 121
  %v463 = vpop.permute.xlu0 %462
  %vm464 = vcmask 990208
  %v465 = vsel %vm464, %v445, %v447
  %v466 = vsel %vm464, %v447, %v449
  %v467 = vsel %vm464, %v449, %v451
  %v468 = vsel %vm464, %v451, %v453
  %v469 = vsel %vm464, %v453, %v455
  %v470 = vsel %vm464, %v455, %v457
  %v471 = vsel %vm464, %v457, %v459
  %v472 = vsel %vm464, %v459, %v461
  %v473 = vsel %vm464, %v461, %v463
  %483 = vst [vmem:[#allocation2 + $0xd8] sm:$0xf0] %v465
  %484 = vst [vmem:[#allocation2 + $0xe0] sm:$0xf0] %v466
  %485 = vst [vmem:[#allocation2 + $0xe8] sm:$0xf0] %v467
  %486 = vst [vmem:[#allocation2 + $0xf0] sm:$0xf0] %v468
  %487 = vst [vmem:[#allocation2 + $0xf8] sm:$0xf0] %v469
  %488 = vst [vmem:[#allocation2 + $0x100] sm:$0xf0] %v470
  %489 = vst [vmem:[#allocation2 + $0x108] sm:$0xf0] %v471
  %490 = vst [vmem:[#allocation2 + $0x110] sm:$0xf0] %v472
  %491 = vst [vmem:[#allocation2 + $0x118] sm:$0xf0] %v473
  %v492 = vld [vmem:[%s0] sm:$0xff]
  %v493 = vld [vmem:[%s0 + $0x8] sm:$0xff]
  %v494 = vld [vmem:[%s0 + $0x10] sm:$0xff]
  %v495 = vld [vmem:[%s0 + $0x18] sm:$0xff]
  %v496 = vld [vmem:[%s0 + $0x20] sm:$0xff]
  %v502 = vcombine.high %v492, %v492
  %v503 = vcombine.high %v493, %v493
  %v504 = vcombine.high %v494, %v494
  %v505 = vcombine.high %v495, %v495
  %v506 = vcombine.high %v496, %v496
  %507 = vrot.lane.b32.xlu0 %v492, 120
  %v508 = vpop.permute.xlu0 %507
  %509 = vrot.lane.b32.xlu0 %v502, 120
  %v510 = vpop.permute.xlu0 %509
  %511 = vrot.lane.b32.xlu0 %v493, 120
  %v512 = vpop.permute.xlu0 %511
  %513 = vrot.lane.b32.xlu0 %v503, 120
  %v514 = vpop.permute.xlu0 %513
  %515 = vrot.lane.b32.xlu0 %v494, 120
  %v516 = vpop.permute.xlu0 %515
  %517 = vrot.lane.b32.xlu0 %v504, 120
  %v518 = vpop.permute.xlu0 %517
  %519 = vrot.lane.b32.xlu0 %v495, 120
  %v520 = vpop.permute.xlu0 %519
  %521 = vrot.lane.b32.xlu0 %v505, 120
  %v522 = vpop.permute.xlu0 %521
  %523 = vrot.lane.b32.xlu0 %v496, 120
  %v524 = vpop.permute.xlu0 %523
  %525 = vrot.lane.b32.xlu0 %v506, 120
  %v526 = vpop.permute.xlu0 %525
  %vm527 = vcmask 982016
  %v528 = vsel %vm527, %v508, %v510
  %v529 = vsel %vm527, %v510, %v512
  %v530 = vsel %vm527, %v512, %v514
  %v531 = vsel %vm527, %v514, %v516
  %v532 = vsel %vm527, %v516, %v518
  %v533 = vsel %vm527, %v518, %v520
  %v534 = vsel %vm527, %v520, %v522
  %v535 = vsel %vm527, %v522, %v524
  %v536 = vsel %vm527, %v524, %v526
  %546 = vst [vmem:[#allocation2 + $0x120] sm:$0xf] %v528
  %547 = vst [vmem:[#allocation2 + $0x128] sm:$0xf] %v529
  %548 = vst [vmem:[#allocation2 + $0x130] sm:$0xf] %v530
  %549 = vst [vmem:[#allocation2 + $0x138] sm:$0xf] %v531
  %550 = vst [vmem:[#allocation2 + $0x140] sm:$0xf] %v532
  %551 = vst [vmem:[#allocation2 + $0x148] sm:$0xf] %v533
  %552 = vst [vmem:[#allocation2 + $0x150] sm:$0xf] %v534
  %553 = vst [vmem:[#allocation2 + $0x158] sm:$0xf] %v535
  %554 = vst [vmem:[#allocation2 + $0x160] sm:$0xf] %v536
  %v555 = vld [vmem:[%s0] sm:$0xff]
  %v556 = vld [vmem:[%s0 + $0x8] sm:$0xff]
  %v557 = vld [vmem:[%s0 + $0x10] sm:$0xff]
  %v558 = vld [vmem:[%s0 + $0x18] sm:$0xff]
  %v559 = vld [vmem:[%s0 + $0x20] sm:$0xff]
  %v565 = vcombine.low %v555, %v555
  %v566 = vcombine.low %v556, %v556
  %v567 = vcombine.low %v557, %v557
  %v568 = vcombine.low %v558, %v558
  %v569 = vcombine.low %v559, %v559
  %570 = vrot.lane.b32.xlu0 %v565, 104
  %v571 = vpop.permute.xlu0 %570
  %572 = vrot.lane.b32.xlu0 %v555, 104
  %v573 = vpop.permute.xlu0 %572
  %574 = vrot.lane.b32.xlu0 %v566, 104
  %v575 = vpop.permute.xlu0 %574
  %576 = vrot.lane.b32.xlu0 %v556, 104
  %v577 = vpop.permute.xlu0 %576
  %578 = vrot.lane.b32.xlu0 %v567, 104
  %v579 = vpop.permute.xlu0 %578
  %580 = vrot.lane.b32.xlu0 %v557, 104
  %v581 = vpop.permute.xlu0 %580
  %582 = vrot.lane.b32.xlu0 %v568, 104
  %v583 = vpop.permute.xlu0 %582
  %584 = vrot.lane.b32.xlu0 %v558, 104
  %v585 = vpop.permute.xlu0 %584
  %586 = vrot.lane.b32.xlu0 %v569, 104
  %v587 = vpop.permute.xlu0 %586
  %588 = vrot.lane.b32.xlu0 %v559, 104
  %v589 = vpop.permute.xlu0 %588
  %vm590 = vcmask 850944
  %v591 = vsel %vm590, %v571, %v573
  %v592 = vsel %vm590, %v573, %v575
  %v593 = vsel %vm590, %v575, %v577
  %v594 = vsel %vm590, %v577, %v579
  %v595 = vsel %vm590, %v579, %v581
  %v596 = vsel %vm590, %v581, %v583
  %v597 = vsel %vm590, %v583, %v585
  %v598 = vsel %vm590, %v585, %v587
  %v599 = vsel %vm590, %v587, %v589
  %609 = vst [vmem:[#allocation2 + $0x120] sm:$0xf0] %v591
  %610 = vst [vmem:[#allocation2 + $0x128] sm:$0xf0] %v592
  %611 = vst [vmem:[#allocation2 + $0x130] sm:$0xf0] %v593
  %612 = vst [vmem:[#allocation2 + $0x138] sm:$0xf0] %v594
  %613 = vst [vmem:[#allocation2 + $0x140] sm:$0xf0] %v595
  %614 = vst [vmem:[#allocation2 + $0x148] sm:$0xf0] %v596
  %615 = vst [vmem:[#allocation2 + $0x150] sm:$0xf0] %v597
  %616 = vst [vmem:[#allocation2 + $0x158] sm:$0xf0] %v598
  %617 = vst [vmem:[#allocation2 + $0x160] sm:$0xf0] %v599
  %v618 = vld [vmem:[%s0] sm:$0xff]
  %v619 = vld [vmem:[%s0 + $0x8] sm:$0xff]
  %v620 = vld [vmem:[%s0 + $0x10] sm:$0xff]
  %v621 = vld [vmem:[%s0 + $0x18] sm:$0xff]
  %v622 = vld [vmem:[%s0 + $0x20] sm:$0xff]
  %v628 = vcombine.high %v618, %v618
  %v629 = vcombine.high %v619, %v619
  %v630 = vcombine.high %v620, %v620
  %v631 = vcombine.high %v621, %v621
  %v632 = vcombine.high %v622, %v622
  %633 = vrot.lane.b32.xlu0 %v618, 103
  %v634 = vpop.permute.xlu0 %633
  %635 = vrot.lane.b32.xlu0 %v628, 103
  %v636 = vpop.permute.xlu0 %635
  %637 = vrot.lane.b32.xlu0 %v619, 103
  %v638 = vpop.permute.xlu0 %637
  %639 = vrot.lane.b32.xlu0 %v629, 103
  %v640 = vpop.permute.xlu0 %639
  %641 = vrot.lane.b32.xlu0 %v620, 103
  %v642 = vpop.permute.xlu0 %641
  %643 = vrot.lane.b32.xlu0 %v630, 103
  %v644 = vpop.permute.xlu0 %643
  %645 = vrot.lane.b32.xlu0 %v621, 103
  %v646 = vpop.permute.xlu0 %645
  %647 = vrot.lane.b32.xlu0 %v631, 103
  %v648 = vpop.permute.xlu0 %647
  %649 = vrot.lane.b32.xlu0 %v622, 103
  %v650 = vpop.permute.xlu0 %649
  %651 = vrot.lane.b32.xlu0 %v632, 103
  %v652 = vpop.permute.xlu0 %651
  %vm653 = vcmask 842752
  %v654 = vsel %vm653, %v634, %v636
  %v655 = vsel %vm653, %v636, %v638
  %v656 = vsel %vm653, %v638, %v640
  %v657 = vsel %vm653, %v640, %v642
  %v658 = vsel %vm653, %v642, %v644
  %v659 = vsel %vm653, %v644, %v646
  %v660 = vsel %vm653, %v646, %v648
  %v661 = vsel %vm653, %v648, %v650
  %v662 = vsel %vm653, %v650, %v652
  %672 = vst [vmem:[#allocation2 + $0x168] sm:$0xf] %v654
  %673 = vst [vmem:[#allocation2 + $0x170] sm:$0xf] %v655
  %674 = vst [vmem:[#allocation2 + $0x178] sm:$0xf] %v656
  %675 = vst [vmem:[#allocation2 + $0x180] sm:$0xf] %v657
  %676 = vst [vmem:[#allocation2 + $0x188] sm:$0xf] %v658
  %677 = vst [vmem:[#allocation2 + $0x190] sm:$0xf] %v659
  %678 = vst [vmem:[#allocation2 + $0x198] sm:$0xf] %v660
  %679 = vst [vmem:[#allocation2 + $0x1a0] sm:$0xf] %v661
  %680 = vst [vmem:[#allocation2 + $0x1a8] sm:$0xf] %v662
  %v681 = vld [vmem:[%s0] sm:$0xff]
  %v682 = vld [vmem:[%s0 + $0x8] sm:$0xff]
  %v683 = vld [vmem:[%s0 + $0x10] sm:$0xff]
  %v684 = vld [vmem:[%s0 + $0x18] sm:$0xff]
  %v685 = vld [vmem:[%s0 + $0x20] sm:$0xff]
  %v691 = vcombine.low %v681, %v681
  %v692 = vcombine.low %v682, %v682
  %v693 = vcombine.low %v683, %v683
  %v694 = vcombine.low %v684, %v684
  %v695 = vcombine.low %v685, %v685
  %696 = vrot.lane.b32.xlu0 %v691, 102
  %v697 = vpop.permute.xlu0 %696
  %698 = vrot.lane.b32.xlu0 %v681, 102
  %v699 = vpop.permute.xlu0 %698
  %700 = vrot.lane.b32.xlu0 %v692, 102
  %v701 = vpop.permute.xlu0 %700
  %702 = vrot.lane.b32.xlu0 %v682, 102
  %v703 = vpop.permute.xlu0 %702
  %704 = vrot.lane.b32.xlu0 %v693, 102
  %v705 = vpop.permute.xlu0 %704
  %706 = vrot.lane.b32.xlu0 %v683, 102
  %v707 = vpop.permute.xlu0 %706
  %708 = vrot.lane.b32.xlu0 %v694, 102
  %v709 = vpop.permute.xlu0 %708
  %710 = vrot.lane.b32.xlu0 %v684, 102
  %v711 = vpop.permute.xlu0 %710
  %712 = vrot.lane.b32.xlu0 %v695, 102
  %v713 = vpop.permute.xlu0 %712
  %714 = vrot.lane.b32.xlu0 %v685, 102
  %v715 = vpop.permute.xlu0 %714
  %vm716 = vcmask 834560
  %v717 = vsel %vm716, %v697, %v699
  %v718 = vsel %vm716, %v699, %v701
  %v719 = vsel %vm716, %v701, %v703
  %v720 = vsel %vm716, %v703, %v705
  %v721 = vsel %vm716, %v705, %v707
  %v722 = vsel %vm716, %v707, %v709
  %v723 = vsel %vm716, %v709, %v711
  %v724 = vsel %vm716, %v711, %v713
  %v725 = vsel %vm716, %v713, %v715
  %735 = vst [vmem:[#allocation2 + $0x168] sm:$0xf0] %v717
  %736 = vst [vmem:[#allocation2 + $0x170] sm:$0xf0] %v718
  %737 = vst [vmem:[#allocation2 + $0x178] sm:$0xf0] %v719
  %738 = vst [vmem:[#allocation2 + $0x180] sm:$0xf0] %v720
  %739 = vst [vmem:[#allocation2 + $0x188] sm:$0xf0] %v721
  %740 = vst [vmem:[#allocation2 + $0x190] sm:$0xf0] %v722
  %741 = vst [vmem:[#allocation2 + $0x198] sm:$0xf0] %v723
  %742 = vst [vmem:[#allocation2 + $0x1a0] sm:$0xf0] %v724
  %743 = vst [vmem:[#allocation2 + $0x1a8] sm:$0xf0] %v725
  %v744 = vld [vmem:[%s0] sm:$0xff]
  %v745 = vld [vmem:[%s0 + $0x8] sm:$0xff]
  %v746 = vld [vmem:[%s0 + $0x10] sm:$0xff]
  %v747 = vld [vmem:[%s0 + $0x18] sm:$0xff]
  %v748 = vld [vmem:[%s0 + $0x20] sm:$0xff]
  %v754 = vcombine.high %v744, %v744
  %v755 = vcombine.high %v745, %v745
  %v756 = vcombine.high %v746, %v746
  %v757 = vcombine.high %v747, %v747
  %v758 = vcombine.high %v748, %v748
  %759 = vrot.lane.b32.xlu0 %v744, 101
  %v760 = vpop.permute.xlu0 %759
  %761 = vrot.lane.b32.xlu0 %v754, 101
  %v762 = vpop.permute.xlu0 %761
  %763 = vrot.lane.b32.xlu0 %v745, 101
  %v764 = vpop.permute.xlu0 %763
  %765 = vrot.lane.b32.xlu0 %v755, 101
  %v766 = vpop.permute.xlu0 %765
  %767 = vrot.lane.b32.xlu0 %v746, 101
  %v768 = vpop.permute.xlu0 %767
  %769 = vrot.lane.b32.xlu0 %v756, 101
  %v770 = vpop.permute.xlu0 %769
  %771 = vrot.lane.b32.xlu0 %v747, 101
  %v772 = vpop.permute.xlu0 %771
  %773 = vrot.lane.b32.xlu0 %v757, 101
  %v774 = vpop.permute.xlu0 %773
  %775 = vrot.lane.b32.xlu0 %v748, 101
  %v776 = vpop.permute.xlu0 %775
  %777 = vrot.lane.b32.xlu0 %v758, 101
  %v778 = vpop.permute.xlu0 %777
  %vm779 = vcmask 826368
  %v780 = vsel %vm779, %v760, %v762
  %v781 = vsel %vm779, %v762, %v764
  %v782 = vsel %vm779, %v764, %v766
  %v783 = vsel %vm779, %v766, %v768
  %v784 = vsel %vm779, %v768, %v770
  %v785 = vsel %vm779, %v770, %v772
  %v786 = vsel %vm779, %v772, %v774
  %v787 = vsel %vm779, %v774, %v776
  %v788 = vsel %vm779, %v776, %v778
  %798 = vst [vmem:[#allocation2 + $0x1b0] sm:$0xf] %v780
  %799 = vst [vmem:[#allocation2 + $0x1b8] sm:$0xf] %v781
  %800 = vst [vmem:[#allocation2 + $0x1c0] sm:$0xf] %v782
  %801 = vst [vmem:[#allocation2 + $0x1c8] sm:$0xf] %v783
  %802 = vst [vmem:[#allocation2 + $0x1d0] sm:$0xf] %v784
  %803 = vst [vmem:[#allocation2 + $0x1d8] sm:$0xf] %v785
  %804 = vst [vmem:[#allocation2 + $0x1e0] sm:$0xf] %v786
  %805 = vst [vmem:[#allocation2 + $0x1e8] sm:$0xf] %v787
  %806 = vst [vmem:[#allocation2 + $0x1f0] sm:$0xf] %v788
  %v807 = vld [vmem:[%s0] sm:$0xff]
  %v808 = vld [vmem:[%s0 + $0x8] sm:$0xff]
  %v809 = vld [vmem:[%s0 + $0x10] sm:$0xff]
  %v810 = vld [vmem:[%s0 + $0x18] sm:$0xff]
  %v811 = vld [vmem:[%s0 + $0x20] sm:$0xff]
  %v817 = vcombine.low %v807, %v807
  %v818 = vcombine.low %v808, %v808
  %v819 = vcombine.low %v809, %v809
  %v820 = vcombine.low %v810, %v810
  %v821 = vcombine.low %v811, %v811
  %822 = vrot.lane.b32.xlu0 %v817, 100
  %v823 = vpop.permute.xlu0 %822
  %824 = vrot.lane.b32.xlu0 %v807, 100
  %v825 = vpop.permute.xlu0 %824
  %826 = vrot.lane.b32.xlu0 %v818, 100
  %v827 = vpop.permute.xlu0 %826
  %828 = vrot.lane.b32.xlu0 %v808, 100
  %v829 = vpop.permute.xlu0 %828
  %830 = vrot.lane.b32.xlu0 %v819, 100
  %v831 = vpop.permute.xlu0 %830
  %832 = vrot.lane.b32.xlu0 %v809, 100
  %v833 = vpop.permute.xlu0 %832
  %834 = vrot.lane.b32.xlu0 %v820, 100
  %v835 = vpop.permute.xlu0 %834
  %836 = vrot.lane.b32.xlu0 %v810, 100
  %v837 = vpop.permute.xlu0 %836
  %838 = vrot.lane.b32.xlu0 %v821, 100
  %v839 = vpop.permute.xlu0 %838
  %840 = vrot.lane.b32.xlu0 %v811, 100
  %v841 = vpop.permute.xlu0 %840
  %vm842 = vcmask 818176
  %v843 = vsel %vm842, %v823, %v825
  %v844 = vsel %vm842, %v825, %v827
  %v845 = vsel %vm842, %v827, %v829
  %v846 = vsel %vm842, %v829, %v831
  %v847 = vsel %vm842, %v831, %v833
  %v848 = vsel %vm842, %v833, %v835
  %v849 = vsel %vm842, %v835, %v837
  %v850 = vsel %vm842, %v837, %v839
  %v851 = vsel %vm842, %v839, %v841
  %861 = vst [vmem:[#allocation2 + $0x1b0] sm:$0xf0] %v843
  %862 = vst [vmem:[#allocation2 + $0x1b8] sm:$0xf0] %v844
  %863 = vst [vmem:[#allocation2 + $0x1c0] sm:$0xf0] %v845
  %864 = vst [vmem:[#allocation2 + $0x1c8] sm:$0xf0] %v846
  %865 = vst [vmem:[#allocation2 + $0x1d0] sm:$0xf0] %v847
  %866 = vst [vmem:[#allocation2 + $0x1d8] sm:$0xf0] %v848
  %867 = vst [vmem:[#allocation2 + $0x1e0] sm:$0xf0] %v849
  %868 = vst [vmem:[#allocation2 + $0x1e8] sm:$0xf0] %v850
  %869 = vst [vmem:[#allocation2 + $0x1f0] sm:$0xf0] %v851
  %v870 = vld [vmem:[%s0] sm:$0xff]
  %v871 = vld [vmem:[%s0 + $0x8] sm:$0xff]
  %v872 = vld [vmem:[%s0 + $0x10] sm:$0xff]
  %v873 = vld [vmem:[%s0 + $0x18] sm:$0xff]
  %v874 = vld [vmem:[%s0 + $0x20] sm:$0xff]
  %v880 = vcombine.high %v870, %v870
  %v881 = vcombine.high %v871, %v871
  %v882 = vcombine.high %v872, %v872
  %v883 = vcombine.high %v873, %v873
  %v884 = vcombine.high %v874, %v874
  %885 = vrot.lane.b32.xlu0 %v870, 99
  %v886 = vpop.permute.xlu0 %885
  %887 = vrot.lane.b32.xlu0 %v880, 99
  %v888 = vpop.permute.xlu0 %887
  %889 = vrot.lane.b32.xlu0 %v871, 99
  %v890 = vpop.permute.xlu0 %889
  %891 = vrot.lane.b32.xlu0 %v881, 99
  %v892 = vpop.permute.xlu0 %891
  %893 = vrot.lane.b32.xlu0 %v872, 99
  %v894 = vpop.permute.xlu0 %893
  %895 = vrot.lane.b32.xlu0 %v882, 99
  %v896 = vpop.permute.xlu0 %895
  %897 = vrot.lane.b32.xlu0 %v873, 99
  %v898 = vpop.permute.xlu0 %897
  %899 = vrot.lane.b32.xlu0 %v883, 99
  %v900 = vpop.permute.xlu0 %899
  %901 = vrot.lane.b32.xlu0 %v874, 99
  %v902 = vpop.permute.xlu0 %901
  %903 = vrot.lane.b32.xlu0 %v884, 99
  %v904 = vpop.permute.xlu0 %903
  %vm905 = vcmask 809984
  %v906 = vsel %vm905, %v886, %v888
  %v907 = vsel %vm905, %v888, %v890
  %v908 = vsel %vm905, %v890, %v892
  %v909 = vsel %vm905, %v892, %v894
  %v910 = vsel %vm905, %v894, %v896
  %v911 = vsel %vm905, %v896, %v898
  %v912 = vsel %vm905, %v898, %v900
  %v913 = vsel %vm905, %v900, %v902
  %v914 = vsel %vm905, %v902, %v904
  %924 = vst [vmem:[#allocation2 + $0x1f8] sm:$0xf] %v906
  %925 = vst [vmem:[#allocation2 + $0x200] sm:$0xf] %v907
  %926 = vst [vmem:[#allocation2 + $0x208] sm:$0xf] %v908
  %927 = vst [vmem:[#allocation2 + $0x210] sm:$0xf] %v909
  %928 = vst [vmem:[#allocation2 + $0x218] sm:$0xf] %v910
  %929 = vst [vmem:[#allocation2 + $0x220] sm:$0xf] %v911
  %930 = vst [vmem:[#allocation2 + $0x228] sm:$0xf] %v912
  %931 = vst [vmem:[#allocation2 + $0x230] sm:$0xf] %v913
  %932 = vst [vmem:[#allocation2 + $0x238] sm:$0xf] %v914
  %v933 = vld [vmem:[%s0] sm:$0xff]
  %v934 = vld [vmem:[%s0 + $0x8] sm:$0xff]
  %v935 = vld [vmem:[%s0 + $0x10] sm:$0xff]
  %v936 = vld [vmem:[%s0 + $0x18] sm:$0xff]
  %v937 = vld [vmem:[%s0 + $0x20] sm:$0xff]
  %v943 = vcombine.low %v933, %v933
  %v944 = vcombine.low %v934, %v934
  %v945 = vcombine.low %v935, %v935
  %v946 = vcombine.low %v936, %v936
  %v947 = vcombine.low %v937, %v937
  %948 = vrot.lane.b32.xlu0 %v943, 98
  %v949 = vpop.permute.xlu0 %948
  %950 = vrot.lane.b32.xlu0 %v933, 98
  %v951 = vpop.permute.xlu0 %950
  %952 = vrot.lane.b32.xlu0 %v944, 98
  %v953 = vpop.permute.xlu0 %952
  %954 = vrot.lane.b32.xlu0 %v934, 98
  %v955 = vpop.permute.xlu0 %954
  %956 = vrot.lane.b32.xlu0 %v945, 98
  %v957 = vpop.permute.xlu0 %956
  %958 = vrot.lane.b32.xlu0 %v935, 98
  %v959 = vpop.permute.xlu0 %958
  %960 = vrot.lane.b32.xlu0 %v946, 98
  %v961 = vpop.permute.xlu0 %960
  %962 = vrot.lane.b32.xlu0 %v936, 98
  %v963 = vpop.permute.xlu0 %962
  %964 = vrot.lane.b32.xlu0 %v947, 98
  %v965 = vpop.permute.xlu0 %964
  %966 = vrot.lane.b32.xlu0 %v937, 98
  %v967 = vpop.permute.xlu0 %966
  %vm968 = vcmask 801792
  %v969 = vsel %vm968, %v949, %v951
  %v970 = vsel %vm968, %v951, %v953
  %v971 = vsel %vm968, %v953, %v955
  %v972 = vsel %vm968, %v955, %v957
  %v973 = vsel %vm968, %v957, %v959
  %v974 = vsel %vm968, %v959, %v961
  %v975 = vsel %vm968, %v961, %v963
  %v976 = vsel %vm968, %v963, %v965
  %v977 = vsel %vm968, %v965, %v967
  %987 = vst [vmem:[#allocation2 + $0x1f8] sm:$0xf0] %v969
  %988 = vst [vmem:[#allocation2 + $0x200] sm:$0xf0] %v970
  %989 = vst [vmem:[#allocation2 + $0x208] sm:$0xf0] %v971
  %990 = vst [vmem:[#allocation2 + $0x210] sm:$0xf0] %v972
  %991 = vst [vmem:[#allocation2 + $0x218] sm:$0xf0] %v973
  %992 = vst [vmem:[#allocation2 + $0x220] sm:$0xf0] %v974
  %993 = vst [vmem:[#allocation2 + $0x228] sm:$0xf0] %v975
  %994 = vst [vmem:[#allocation2 + $0x230] sm:$0xf0] %v976
  %995 = vst [vmem:[#allocation2 + $0x238] sm:$0xf0] %v977
  %v996 = vld [vmem:[%s0] sm:$0xff]
  %v997 = vld [vmem:[%s0 + $0x8] sm:$0xff]
  %v998 = vld [vmem:[%s0 + $0x10] sm:$0xff]
  %v999 = vld [vmem:[%s0 + $0x18] sm:$0xff]
  %v1000 = vld [vmem:[%s0 + $0x20] sm:$0xff]
  %v1006 = vcombine.high %v996, %v996
  %v1007 = vcombine.high %v997, %v997
  %v1008 = vcombine.high %v998, %v998
  %v1009 = vcombine.high %v999, %v999
  %v1010 = vcombine.high %v1000, %v1000
  %1011 = vrot.lane.b32.xlu0 %v996, 97
  %v1012 = vpop.permute.xlu0 %1011
  %1013 = vrot.lane.b32.xlu0 %v1006, 97
  %v1014 = vpop.permute.xlu0 %1013
  %1015 = vrot.lane.b32.xlu0 %v997, 97
  %v1016 = vpop.permute.xlu0 %1015
  %1017 = vrot.lane.b32.xlu0 %v1007, 97
  %v1018 = vpop.permute.xlu0 %1017
  %1019 = vrot.lane.b32.xlu0 %v998, 97
  %v1020 = vpop.permute.xlu0 %1019
  %1021 = vrot.lane.b32.xlu0 %v1008, 97
  %v1022 = vpop.permute.xlu0 %1021
  %1023 = vrot.lane.b32.xlu0 %v999, 97
  %v1024 = vpop.permute.xlu0 %1023
  %1025 = vrot.lane.b32.xlu0 %v1009, 97
  %v1026 = vpop.permute.xlu0 %1025
  %1027 = vrot.lane.b32.xlu0 %v1000, 97
  %v1028 = vpop.permute.xlu0 %1027
  %1029 = vrot.lane.b32.xlu0 %v1010, 97
  %v1030 = vpop.permute.xlu0 %1029
  %vm1031 = vcmask 793600
  %v1032 = vsel %vm1031, %v1012, %v1014
  %v1033 = vsel %vm1031, %v1014, %v1016
  %v1034 = vsel %vm1031, %v1016, %v1018
  %v1035 = vsel %vm1031, %v1018, %v1020
  %v1036 = vsel %vm1031, %v1020, %v1022
  %v1037 = vsel %vm1031, %v1022, %v1024
  %v1038 = vsel %vm1031, %v1024, %v1026
  %v1039 = vsel %vm1031, %v1026, %v1028
  %v1040 = vsel %vm1031, %v1028, %v1030
  %1050 = vst [vmem:[#allocation2 + $0x240] sm:$0xf] %v1032
  %1051 = vst [vmem:[#allocation2 + $0x248] sm:$0xf] %v1033
  %1052 = vst [vmem:[#allocation2 + $0x250] sm:$0xf] %v1034
  %1053 = vst [vmem:[#allocation2 + $0x258] sm:$0xf] %v1035
  %1054 = vst [vmem:[#allocation2 + $0x260] sm:$0xf] %v1036
  %1055 = vst [vmem:[#allocation2 + $0x268] sm:$0xf] %v1037
  %1056 = vst [vmem:[#allocation2 + $0x270] sm:$0xf] %v1038
  %1057 = vst [vmem:[#allocation2 + $0x278] sm:$0xf] %v1039
  %1058 = vst [vmem:[#allocation2 + $0x280] sm:$0xf] %v1040
  %v1059 = vld [vmem:[%s0] sm:$0xff]
  %v1060 = vld [vmem:[%s0 + $0x8] sm:$0xff]
  %v1061 = vld [vmem:[%s0 + $0x10] sm:$0xff]
  %v1062 = vld [vmem:[%s0 + $0x18] sm:$0xff]
  %v1063 = vld [vmem:[%s0 + $0x20] sm:$0xff]
  %v1069 = vcombine.low %v1059, %v1059
  %v1070 = vcombine.low %v1060, %v1060
  %v1071 = vcombine.low %v1061, %v1061
  %v1072 = vcombine.low %v1062, %v1062
  %v1073 = vcombine.low %v1063, %v1063
  %1074 = vrot.lane.b32.xlu0 %v1069, 96
  %v1075 = vpop.permute.xlu0 %1074
  %1076 = vrot.lane.b32.xlu0 %v1059, 96
  %v1077 = vpop.permute.xlu0 %1076
  %1078 = vrot.lane.b32.xlu0 %v1070, 96
  %v1079 = vpop.permute.xlu0 %1078
  %1080 = vrot.lane.b32.xlu0 %v1060, 96
  %v1081 = vpop.permute.xlu0 %1080
  %1082 = vrot.lane.b32.xlu0 %v1071, 96
  %v1083 = vpop.permute.xlu0 %1082
  %1084 = vrot.lane.b32.xlu0 %v1061, 96
  %v1085 = vpop.permute.xlu0 %1084
  %1086 = vrot.lane.b32.xlu0 %v1072, 96
  %v1087 = vpop.permute.xlu0 %1086
  %1088 = vrot.lane.b32.xlu0 %v1062, 96
  %v1089 = vpop.permute.xlu0 %1088
  %1090 = vrot.lane.b32.xlu0 %v1073, 96
  %v1091 = vpop.permute.xlu0 %1090
  %1092 = vrot.lane.b32.xlu0 %v1063, 96
  %v1093 = vpop.permute.xlu0 %1092
  %vm1094 = vcmask 785408
  %v1095 = vsel %vm1094, %v1075, %v1077
  %v1096 = vsel %vm1094, %v1077, %v1079
  %v1097 = vsel %vm1094, %v1079, %v1081
  %v1098 = vsel %vm1094, %v1081, %v1083
  %v1099 = vsel %vm1094, %v1083, %v1085
  %v1100 = vsel %vm1094, %v1085, %v1087
  %v1101 = vsel %vm1094, %v1087, %v1089
  %v1102 = vsel %vm1094, %v1089, %v1091
  %v1103 = vsel %vm1094, %v1091, %v1093
  %1113 = vst [vmem:[#allocation2 + $0x240] sm:$0xf0] %v1095
  %1114 = vst [vmem:[#allocation2 + $0x248] sm:$0xf0] %v1096
  %1115 = vst [vmem:[#allocation2 + $0x250] sm:$0xf0] %v1097
  %1116 = vst [vmem:[#allocation2 + $0x258] sm:$0xf0] %v1098
  %1117 = vst [vmem:[#allocation2 + $0x260] sm:$0xf0] %v1099
  %1118 = vst [vmem:[#allocation2 + $0x268] sm:$0xf0] %v1100
  %1119 = vst [vmem:[#allocation2 + $0x270] sm:$0xf0] %v1101
  %1120 = vst [vmem:[#allocation2 + $0x278] sm:$0xf0] %v1102
  %1121 = vst [vmem:[#allocation2 + $0x280] sm:$0xf0] %v1103
  %v1122 = vld [vmem:[%s0] sm:$0xff]
  %v1123 = vld [vmem:[%s0 + $0x8] sm:$0xff]
  %v1124 = vld [vmem:[%s0 + $0x10] sm:$0xff]
  %v1125 = vld [vmem:[%s0 + $0x18] sm:$0xff]
  %v1126 = vld [vmem:[%s0 + $0x20] sm:$0xff]
  %v1132 = vcombine.high %v1122, %v1122
  %v1133 = vcombine.high %v1123, %v1123
  %v1134 = vcombine.high %v1124, %v1124
  %v1135 = vcombine.high %v1125, %v1125
  %v1136 = vcombine.high %v1126, %v1126
  %1137 = vrot.lane.b32.xlu0 %v1122, 80
  %v1138 = vpop.permute.xlu0 %1137
  %1139 = vrot.lane.b32.xlu0 %v1132, 80
  %v1140 = vpop.permute.xlu0 %1139
  %1141 = vrot.lane.b32.xlu0 %v1123, 80
  %v1142 = vpop.permute.xlu0 %1141
  %1143 = vrot.lane.b32.xlu0 %v1133, 80
  %v1144 = vpop.permute.xlu0 %1143
  %1145 = vrot.lane.b32.xlu0 %v1124, 80
  %v1146 = vpop.permute.xlu0 %1145
  %1147 = vrot.lane.b32.xlu0 %v1134, 80
  %v1148 = vpop.permute.xlu0 %1147
  %1149 = vrot.lane.b32.xlu0 %v1125, 80
  %v1150 = vpop.permute.xlu0 %1149
  %1151 = vrot.lane.b32.xlu0 %v1135, 80
  %v1152 = vpop.permute.xlu0 %1151
  %1153 = vrot.lane.b32.xlu0 %v1126, 80
  %v1154 = vpop.permute.xlu0 %1153
  %1155 = vrot.lane.b32.xlu0 %v1136, 80
  %v1156 = vpop.permute.xlu0 %1155
  %vm1157 = vcmask 654336
  %v1158 = vsel %vm1157, %v1138, %v1140
  %v1159 = vsel %vm1157, %v1140, %v1142
  %v1160 = vsel %vm1157, %v1142, %v1144
  %v1161 = vsel %vm1157, %v1144, %v1146
  %v1162 = vsel %vm1157, %v1146, %v1148
  %v1163 = vsel %vm1157, %v1148, %v1150
  %v1164 = vsel %vm1157, %v1150, %v1152
  %v1165 = vsel %vm1157, %v1152, %v1154
  %v1166 = vsel %vm1157, %v1154, %v1156
  %1176 = vst [vmem:[#allocation2 + $0x288] sm:$0xf] %v1158
  %1177 = vst [vmem:[#allocation2 + $0x290] sm:$0xf] %v1159
  %1178 = vst [vmem:[#allocation2 + $0x298] sm:$0xf] %v1160
  %1179 = vst [vmem:[#allocation2 + $0x2a0] sm:$0xf] %v1161
  %1180 = vst [vmem:[#allocation2 + $0x2a8] sm:$0xf] %v1162
  %1181 = vst [vmem:[#allocation2 + $0x2b0] sm:$0xf] %v1163
  %1182 = vst [vmem:[#allocation2 + $0x2b8] sm:$0xf] %v1164
  %1183 = vst [vmem:[#allocation2 + $0x2c0] sm:$0xf] %v1165
  %1184 = vst [vmem:[#allocation2 + $0x2c8] sm:$0xf] %v1166
  %v1185 = vld [vmem:[%s0] sm:$0xff]
  %v1186 = vld [vmem:[%s0 + $0x8] sm:$0xff]
  %v1187 = vld [vmem:[%s0 + $0x10] sm:$0xff]
  %v1188 = vld [vmem:[%s0 + $0x18] sm:$0xff]
  %v1189 = vld [vmem:[%s0 + $0x20] sm:$0xff]
  %v1195 = vcombine.low %v1185, %v1185
  %v1196 = vcombine.low %v1186, %v1186
  %v1197 = vcombine.low %v1187, %v1187
  %v1198 = vcombine.low %v1188, %v1188
  %v1199 = vcombine.low %v1189, %v1189
  %1200 = vrot.lane.b32.xlu0 %v1195, 79
  %v1201 = vpop.permute.xlu0 %1200
  %1202 = vrot.lane.b32.xlu0 %v1185, 79
  %v1203 = vpop.permute.xlu0 %1202
  %1204 = vrot.lane.b32.xlu0 %v1196, 79
  %v1205 = vpop.permute.xlu0 %1204
  %1206 = vrot.lane.b32.xlu0 %v1186, 79
  %v1207 = vpop.permute.xlu0 %1206
  %1208 = vrot.lane.b32.xlu0 %v1197, 79
  %v1209 = vpop.permute.xlu0 %1208
  %1210 = vrot.lane.b32.xlu0 %v1187, 79
  %v1211 = vpop.permute.xlu0 %1210
  %1212 = vrot.lane.b32.xlu0 %v1198, 79
  %v1213 = vpop.permute.xlu0 %1212
  %1214 = vrot.lane.b32.xlu0 %v1188, 79
  %v1215 = vpop.permute.xlu0 %1214
  %1216 = vrot.lane.b32.xlu0 %v1199, 79
  %v1217 = vpop.permute.xlu0 %1216
  %1218 = vrot.lane.b32.xlu0 %v1189, 79
  %v1219 = vpop.permute.xlu0 %1218
  %vm1220 = vcmask 646144
  %v1221 = vsel %vm1220, %v1201, %v1203
  %v1222 = vsel %vm1220, %v1203, %v1205
  %v1223 = vsel %vm1220, %v1205, %v1207
  %v1224 = vsel %vm1220, %v1207, %v1209
  %v1225 = vsel %vm1220, %v1209, %v1211
  %v1226 = vsel %vm1220, %v1211, %v1213
  %v1227 = vsel %vm1220, %v1213, %v1215
  %v1228 = vsel %vm1220, %v1215, %v1217
  %v1229 = vsel %vm1220, %v1217, %v1219
  %1239 = vst [vmem:[#allocation2 + $0x288] sm:$0xf0] %v1221
  %1240 = vst [vmem:[#allocation2 + $0x290] sm:$0xf0] %v1222
  %1241 = vst [vmem:[#allocation2 + $0x298] sm:$0xf0] %v1223
  %1242 = vst [vmem:[#allocation2 + $0x2a0] sm:$0xf0] %v1224
  %1243 = vst [vmem:[#allocation2 + $0x2a8] sm:$0xf0] %v1225
  %1244 = vst [vmem:[#allocation2 + $0x2b0] sm:$0xf0] %v1226
  %1245 = vst [vmem:[#allocation2 + $0x2b8] sm:$0xf0] %v1227
  %1246 = vst [vmem:[#allocation2 + $0x2c0] sm:$0xf0] %v1228
  %1247 = vst [vmem:[#allocation2 + $0x2c8] sm:$0xf0] %v1229
  %v1248 = vld [vmem:[%s0] sm:$0xff]
  %v1249 = vld [vmem:[%s0 + $0x8] sm:$0xff]
  %v1250 = vld [vmem:[%s0 + $0x10] sm:$0xff]
  %v1251 = vld [vmem:[%s0 + $0x18] sm:$0xff]
  %v1252 = vld [vmem:[%s0 + $0x20] sm:$0xff]
  %v1258 = vcombine.high %v1248, %v1248
  %v1259 = vcombine.high %v1249, %v1249
  %v1260 = vcombine.high %v1250, %v1250
  %v1261 = vcombine.high %v1251, %v1251
  %v1262 = vcombine.high %v1252, %v1252
  %1263 = vrot.lane.b32.xlu0 %v1248, 78
  %v1264 = vpop.permute.xlu0 %1263
  %1265 = vrot.lane.b32.xlu0 %v1258, 78
  %v1266 = vpop.permute.xlu0 %1265
  %1267 = vrot.lane.b32.xlu0 %v1249, 78
  %v1268 = vpop.permute.xlu0 %1267
  %1269 = vrot.lane.b32.xlu0 %v1259, 78
  %v1270 = vpop.permute.xlu0 %1269
  %1271 = vrot.lane.b32.xlu0 %v1250, 78
  %v1272 = vpop.permute.xlu0 %1271
  %1273 = vrot.lane.b32.xlu0 %v1260, 78
  %v1274 = vpop.permute.xlu0 %1273
  %1275 = vrot.lane.b32.xlu0 %v1251, 78
  %v1276 = vpop.permute.xlu0 %1275
  %1277 = vrot.lane.b32.xlu0 %v1261, 78
  %v1278 = vpop.permute.xlu0 %1277
  %1279 = vrot.lane.b32.xlu0 %v1252, 78
  %v1280 = vpop.permute.xlu0 %1279
  %1281 = vrot.lane.b32.xlu0 %v1262, 78
  %v1282 = vpop.permute.xlu0 %1281
  %vm1283 = vcmask 637952
  %v1284 = vsel %vm1283, %v1264, %v1266
  %v1285 = vsel %vm1283, %v1266, %v1268
  %v1286 = vsel %vm1283, %v1268, %v1270
  %v1287 = vsel %vm1283, %v1270, %v1272
  %v1288 = vsel %vm1283, %v1272, %v1274
  %v1289 = vsel %vm1283, %v1274, %v1276
  %v1290 = vsel %vm1283, %v1276, %v1278
  %v1291 = vsel %vm1283, %v1278, %v1280
  %v1292 = vsel %vm1283, %v1280, %v1282
  %1302 = vst [vmem:[#allocation2 + $0x2d0] sm:$0xf] %v1284
  %1303 = vst [vmem:[#allocation2 + $0x2d8] sm:$0xf] %v1285
  %1304 = vst [vmem:[#allocation2 + $0x2e0] sm:$0xf] %v1286
  %1305 = vst [vmem:[#allocation2 + $0x2e8] sm:$0xf] %v1287
  %1306 = vst [vmem:[#allocation2 + $0x2f0] sm:$0xf] %v1288
  %1307 = vst [vmem:[#allocation2 + $0x2f8] sm:$0xf] %v1289
  %1308 = vst [vmem:[#allocation2 + $0x300] sm:$0xf] %v1290
  %1309 = vst [vmem:[#allocation2 + $0x308] sm:$0xf] %v1291
  %1310 = vst [vmem:[#allocation2 + $0x310] sm:$0xf] %v1292
  %v1311 = vld [vmem:[%s0] sm:$0xff]
  %v1312 = vld [vmem:[%s0 + $0x8] sm:$0xff]
  %v1313 = vld [vmem:[%s0 + $0x10] sm:$0xff]
  %v1314 = vld [vmem:[%s0 + $0x18] sm:$0xff]
  %v1315 = vld [vmem:[%s0 + $0x20] sm:$0xff]
  %v1321 = vcombine.low %v1311, %v1311
  %v1322 = vcombine.low %v1312, %v1312
  %v1323 = vcombine.low %v1313, %v1313
  %v1324 = vcombine.low %v1314, %v1314
  %v1325 = vcombine.low %v1315, %v1315
  %1326 = vrot.lane.b32.xlu0 %v1321, 77
  %v1327 = vpop.permute.xlu0 %1326
  %1328 = vrot.lane.b32.xlu0 %v1311, 77
  %v1329 = vpop.permute.xlu0 %1328
  %1330 = vrot.lane.b32.xlu0 %v1322, 77
  %v1331 = vpop.permute.xlu0 %1330
  %1332 = vrot.lane.b32.xlu0 %v1312, 77
  %v1333 = vpop.permute.xlu0 %1332
  %1334 = vrot.lane.b32.xlu0 %v1323, 77
  %v1335 = vpop.permute.xlu0 %1334
  %1336 = vrot.lane.b32.xlu0 %v1313, 77
  %v1337 = vpop.permute.xlu0 %1336
  %1338 = vrot.lane.b32.xlu0 %v1324, 77
  %v1339 = vpop.permute.xlu0 %1338
  %1340 = vrot.lane.b32.xlu0 %v1314, 77
  %v1341 = vpop.permute.xlu0 %1340
  %1342 = vrot.lane.b32.xlu0 %v1325, 77
  %v1343 = vpop.permute.xlu0 %1342
  %1344 = vrot.lane.b32.xlu0 %v1315, 77
  %v1345 = vpop.permute.xlu0 %1344
  %vm1346 = vcmask 629760
  %v1347 = vsel %vm1346, %v1327, %v1329
  %v1348 = vsel %vm1346, %v1329, %v1331
  %v1349 = vsel %vm1346, %v1331, %v1333
  %v1350 = vsel %vm1346, %v1333, %v1335
  %v1351 = vsel %vm1346, %v1335, %v1337
  %v1352 = vsel %vm1346, %v1337, %v1339
  %v1353 = vsel %vm1346, %v1339, %v1341
  %v1354 = vsel %vm1346, %v1341, %v1343
  %v1355 = vsel %vm1346, %v1343, %v1345
  %1365 = vst [vmem:[#allocation2 + $0x2d0] sm:$0xf0] %v1347
  %1366 = vst [vmem:[#allocation2 + $0x2d8] sm:$0xf0] %v1348
  %1367 = vst [vmem:[#allocation2 + $0x2e0] sm:$0xf0] %v1349
  %1368 = vst [vmem:[#allocation2 + $0x2e8] sm:$0xf0] %v1350
  %1369 = vst [vmem:[#allocation2 + $0x2f0] sm:$0xf0] %v1351
  %1370 = vst [vmem:[#allocation2 + $0x2f8] sm:$0xf0] %v1352
  %1371 = vst [vmem:[#allocation2 + $0x300] sm:$0xf0] %v1353
  %1372 = vst [vmem:[#allocation2 + $0x308] sm:$0xf0] %v1354
  %1373 = vst [vmem:[#allocation2 + $0x310] sm:$0xf0] %v1355
  %v1374 = vld [vmem:[%s0] sm:$0xff]
  %v1375 = vld [vmem:[%s0 + $0x8] sm:$0xff]
  %v1376 = vld [vmem:[%s0 + $0x10] sm:$0xff]
  %v1377 = vld [vmem:[%s0 + $0x18] sm:$0xff]
  %v1378 = vld [vmem:[%s0 + $0x20] sm:$0xff]
  %v1384 = vcombine.high %v1374, %v1374
  %v1385 = vcombine.high %v1375, %v1375
  %v1386 = vcombine.high %v1376, %v1376
  %v1387 = vcombine.high %v1377, %v1377
  %v1388 = vcombine.high %v1378, %v1378
  %1389 = vrot.lane.b32.xlu0 %v1374, 76
  %v1390 = vpop.permute.xlu0 %1389
  %1391 = vrot.lane.b32.xlu0 %v1384, 76
  %v1392 = vpop.permute.xlu0 %1391
  %1393 = vrot.lane.b32.xlu0 %v1375, 76
  %v1394 = vpop.permute.xlu0 %1393
  %1395 = vrot.lane.b32.xlu0 %v1385, 76
  %v1396 = vpop.permute.xlu0 %1395
  %1397 = vrot.lane.b32.xlu0 %v1376, 76
  %v1398 = vpop.permute.xlu0 %1397
  %1399 = vrot.lane.b32.xlu0 %v1386, 76
  %v1400 = vpop.permute.xlu0 %1399
  %1401 = vrot.lane.b32.xlu0 %v1377, 76
  %v1402 = vpop.permute.xlu0 %1401
  %1403 = vrot.lane.b32.xlu0 %v1387, 76
  %v1404 = vpop.permute.xlu0 %1403
  %1405 = vrot.lane.b32.xlu0 %v1378, 76
  %v1406 = vpop.permute.xlu0 %1405
  %1407 = vrot.lane.b32.xlu0 %v1388, 76
  %v1408 = vpop.permute.xlu0 %1407
  %vm1409 = vcmask 621568
  %v1410 = vsel %vm1409, %v1390, %v1392
  %v1411 = vsel %vm1409, %v1392, %v1394
  %v1412 = vsel %vm1409, %v1394, %v1396
  %v1413 = vsel %vm1409, %v1396, %v1398
  %v1414 = vsel %vm1409, %v1398, %v1400
  %v1415 = vsel %vm1409, %v1400, %v1402
  %v1416 = vsel %vm1409, %v1402, %v1404
  %v1417 = vsel %vm1409, %v1404, %v1406
  %v1418 = vsel %vm1409, %v1406, %v1408
  %1428 = vst [vmem:[#allocation2 + $0x318] sm:$0xf] %v1410
  %1429 = vst [vmem:[#allocation2 + $0x320] sm:$0xf] %v1411
  %1430 = vst [vmem:[#allocation2 + $0x328] sm:$0xf] %v1412
  %1431 = vst [vmem:[#allocation2 + $0x330] sm:$0xf] %v1413
  %1432 = vst [vmem:[#allocation2 + $0x338] sm:$0xf] %v1414
  %1433 = vst [vmem:[#allocation2 + $0x340] sm:$0xf] %v1415
  %1434 = vst [vmem:[#allocation2 + $0x348] sm:$0xf] %v1416
  %1435 = vst [vmem:[#allocation2 + $0x350] sm:$0xf] %v1417
  %1436 = vst [vmem:[#allocation2 + $0x358] sm:$0xf] %v1418
  %v1437 = vld [vmem:[%s0] sm:$0xff]
  %v1438 = vld [vmem:[%s0 + $0x8] sm:$0xff]
  %v1439 = vld [vmem:[%s0 + $0x10] sm:$0xff]
  %v1440 = vld [vmem:[%s0 + $0x18] sm:$0xff]
  %v1441 = vld [vmem:[%s0 + $0x20] sm:$0xff]
  %v1447 = vcombine.low %v1437, %v1437
  %v1448 = vcombine.low %v1438, %v1438
  %v1449 = vcombine.low %v1439, %v1439
  %v1450 = vcombine.low %v1440, %v1440
  %v1451 = vcombine.low %v1441, %v1441
  %1452 = vrot.lane.b32.xlu0 %v1447, 75
  %v1453 = vpop.permute.xlu0 %1452
  %1454 = vrot.lane.b32.xlu0 %v1437, 75
  %v1455 = vpop.permute.xlu0 %1454
  %1456 = vrot.lane.b32.xlu0 %v1448, 75
  %v1457 = vpop.permute.xlu0 %1456
  %1458 = vrot.lane.b32.xlu0 %v1438, 75
  %v1459 = vpop.permute.xlu0 %1458
  %1460 = vrot.lane.b32.xlu0 %v1449, 75
  %v1461 = vpop.permute.xlu0 %1460
  %1462 = vrot.lane.b32.xlu0 %v1439, 75
  %v1463 = vpop.permute.xlu0 %1462
  %1464 = vrot.lane.b32.xlu0 %v1450, 75
  %v1465 = vpop.permute.xlu0 %1464
  %1466 = vrot.lane.b32.xlu0 %v1440, 75
  %v1467 = vpop.permute.xlu0 %1466
  %1468 = vrot.lane.b32.xlu0 %v1451, 75
  %v1469 = vpop.permute.xlu0 %1468
  %1470 = vrot.lane.b32.xlu0 %v1441, 75
  %v1471 = vpop.permute.xlu0 %1470
  %vm1472 = vcmask 613376
  %v1473 = vsel %vm1472, %v1453, %v1455
  %v1474 = vsel %vm1472, %v1455, %v1457
  %v1475 = vsel %vm1472, %v1457, %v1459
  %v1476 = vsel %vm1472, %v1459, %v1461
  %v1477 = vsel %vm1472, %v1461, %v1463
  %v1478 = vsel %vm1472, %v1463, %v1465
  %v1479 = vsel %vm1472, %v1465, %v1467
  %v1480 = vsel %vm1472, %v1467, %v1469
  %v1481 = vsel %vm1472, %v1469, %v1471
  %1491 = vst [vmem:[#allocation2 + $0x318] sm:$0xf0] %v1473
  %1492 = vst [vmem:[#allocation2 + $0x320] sm:$0xf0] %v1474
  %1493 = vst [vmem:[#allocation2 + $0x328] sm:$0xf0] %v1475
  %1494 = vst [vmem:[#allocation2 + $0x330] sm:$0xf0] %v1476
  %1495 = vst [vmem:[#allocation2 + $0x338] sm:$0xf0] %v1477
  %1496 = vst [vmem:[#allocation2 + $0x340] sm:$0xf0] %v1478
  %1497 = vst [vmem:[#allocation2 + $0x348] sm:$0xf0] %v1479
  %1498 = vst [vmem:[#allocation2 + $0x350] sm:$0xf0] %v1480
  %1499 = vst [vmem:[#allocation2 + $0x358] sm:$0xf0] %v1481
  %v1500 = vld [vmem:[%s0] sm:$0xff]
  %v1501 = vld [vmem:[%s0 + $0x8] sm:$0xff]
  %v1502 = vld [vmem:[%s0 + $0x10] sm:$0xff]
  %v1503 = vld [vmem:[%s0 + $0x18] sm:$0xff]
  %v1504 = vld [vmem:[%s0 + $0x20] sm:$0xff]
  %v1510 = vcombine.high %v1500, %v1500
  %v1511 = vcombine.high %v1501, %v1501
  %v1512 = vcombine.high %v1502, %v1502
  %v1513 = vcombine.high %v1503, %v1503
  %v1514 = vcombine.high %v1504, %v1504
  %1515 = vrot.lane.b32.xlu0 %v1500, 74
  %v1516 = vpop.permute.xlu0 %1515
  %1517 = vrot.lane.b32.xlu0 %v1510, 74
  %v1518 = vpop.permute.xlu0 %1517
  %1519 = vrot.lane.b32.xlu0 %v1501, 74
  %v1520 = vpop.permute.xlu0 %1519
  %1521 = vrot.lane.b32.xlu0 %v1511, 74
  %v1522 = vpop.permute.xlu0 %1521
  %1523 = vrot.lane.b32.xlu0 %v1502, 74
  %v1524 = vpop.permute.xlu0 %1523
  %1525 = vrot.lane.b32.xlu0 %v1512, 74
  %v1526 = vpop.permute.xlu0 %1525
  %1527 = vrot.lane.b32.xlu0 %v1503, 74
  %v1528 = vpop.permute.xlu0 %1527
  %1529 = vrot.lane.b32.xlu0 %v1513, 74
  %v1530 = vpop.permute.xlu0 %1529
  %1531 = vrot.lane.b32.xlu0 %v1504, 74
  %v1532 = vpop.permute.xlu0 %1531
  %1533 = vrot.lane.b32.xlu0 %v1514, 74
  %v1534 = vpop.permute.xlu0 %1533
  %vm1535 = vcmask 605184
  %v1536 = vsel %vm1535, %v1516, %v1518
  %v1537 = vsel %vm1535, %v1518, %v1520
  %v1538 = vsel %vm1535, %v1520, %v1522
  %v1539 = vsel %vm1535, %v1522, %v1524
  %v1540 = vsel %vm1535, %v1524, %v1526
  %v1541 = vsel %vm1535, %v1526, %v1528
  %v1542 = vsel %vm1535, %v1528, %v1530
  %v1543 = vsel %vm1535, %v1530, %v1532
  %v1544 = vsel %vm1535, %v1532, %v1534
  %1554 = vst [vmem:[#allocation2 + $0x360] sm:$0xf] %v1536
  %1555 = vst [vmem:[#allocation2 + $0x368] sm:$0xf] %v1537
  %1556 = vst [vmem:[#allocation2 + $0x370] sm:$0xf] %v1538
  %1557 = vst [vmem:[#allocation2 + $0x378] sm:$0xf] %v1539
  %1558 = vst [vmem:[#allocation2 + $0x380] sm:$0xf] %v1540
  %1559 = vst [vmem:[#allocation2 + $0x388] sm:$0xf] %v1541
  %1560 = vst [vmem:[#allocation2 + $0x390] sm:$0xf] %v1542
  %1561 = vst [vmem:[#allocation2 + $0x398] sm:$0xf] %v1543
  %1562 = vst [vmem:[#allocation2 + $0x3a0] sm:$0xf] %v1544
  %v1563 = vld [vmem:[%s0] sm:$0xff]
  %v1564 = vld [vmem:[%s0 + $0x8] sm:$0xff]
  %v1565 = vld [vmem:[%s0 + $0x10] sm:$0xff]
  %v1566 = vld [vmem:[%s0 + $0x18] sm:$0xff]
  %v1567 = vld [vmem:[%s0 + $0x20] sm:$0xff]
  %v1573 = vcombine.low %v1563, %v1563
  %v1574 = vcombine.low %v1564, %v1564
  %v1575 = vcombine.low %v1565, %v1565
  %v1576 = vcombine.low %v1566, %v1566
  %v1577 = vcombine.low %v1567, %v1567
  %1578 = vrot.lane.b32.xlu0 %v1573, 73
  %v1579 = vpop.permute.xlu0 %1578
  %1580 = vrot.lane.b32.xlu0 %v1563, 73
  %v1581 = vpop.permute.xlu0 %1580
  %1582 = vrot.lane.b32.xlu0 %v1574, 73
  %v1583 = vpop.permute.xlu0 %1582
  %1584 = vrot.lane.b32.xlu0 %v1564, 73
  %v1585 = vpop.permute.xlu0 %1584
  %1586 = vrot.lane.b32.xlu0 %v1575, 73
  %v1587 = vpop.permute.xlu0 %1586
  %1588 = vrot.lane.b32.xlu0 %v1565, 73
  %v1589 = vpop.permute.xlu0 %1588
  %1590 = vrot.lane.b32.xlu0 %v1576, 73
  %v1591 = vpop.permute.xlu0 %1590
  %1592 = vrot.lane.b32.xlu0 %v1566, 73
  %v1593 = vpop.permute.xlu0 %1592
  %1594 = vrot.lane.b32.xlu0 %v1577, 73
  %v1595 = vpop.permute.xlu0 %1594
  %1596 = vrot.lane.b32.xlu0 %v1567, 73
  %v1597 = vpop.permute.xlu0 %1596
  %vm1598 = vcmask 596992
  %v1599 = vsel %vm1598, %v1579, %v1581
  %v1600 = vsel %vm1598, %v1581, %v1583
  %v1601 = vsel %vm1598, %v1583, %v1585
  %v1602 = vsel %vm1598, %v1585, %v1587
  %v1603 = vsel %vm1598, %v1587, %v1589
  %v1604 = vsel %vm1598, %v1589, %v1591
  %v1605 = vsel %vm1598, %v1591, %v1593
  %v1606 = vsel %vm1598, %v1593, %v1595
  %v1607 = vsel %vm1598, %v1595, %v1597
  %1617 = vst [vmem:[#allocation2 + $0x360] sm:$0xf0] %v1599
  %1618 = vst [vmem:[#allocation2 + $0x368] sm:$0xf0] %v1600
  %1619 = vst [vmem:[#allocation2 + $0x370] sm:$0xf0] %v1601
  %1620 = vst [vmem:[#allocation2 + $0x378] sm:$0xf0] %v1602
  %1621 = vst [vmem:[#allocation2 + $0x380] sm:$0xf0] %v1603
  %1622 = vst [vmem:[#allocation2 + $0x388] sm:$0xf0] %v1604
  %1623 = vst [vmem:[#allocation2 + $0x390] sm:$0xf0] %v1605
  %1624 = vst [vmem:[#allocation2 + $0x398] sm:$0xf0] %v1606
  %1625 = vst [vmem:[#allocation2 + $0x3a0] sm:$0xf0] %v1607
  %v1626 = vld [vmem:[%s0] sm:$0xff]
  %v1627 = vld [vmem:[%s0 + $0x8] sm:$0xff]
  %v1628 = vld [vmem:[%s0 + $0x10] sm:$0xff]
  %v1629 = vld [vmem:[%s0 + $0x18] sm:$0xff]
  %v1630 = vld [vmem:[%s0 + $0x20] sm:$0xff]
  %v1636 = vcombine.high %v1626, %v1626
  %v1637 = vcombine.high %v1627, %v1627
  %v1638 = vcombine.high %v1628, %v1628
  %v1639 = vcombine.high %v1629, %v1629
  %v1640 = vcombine.high %v1630, %v1630
  %1641 = vrot.lane.b32.xlu0 %v1626, 72
  %v1642 = vpop.permute.xlu0 %1641
  %1643 = vrot.lane.b32.xlu0 %v1636, 72
  %v1644 = vpop.permute.xlu0 %1643
  %1645 = vrot.lane.b32.xlu0 %v1627, 72
  %v1646 = vpop.permute.xlu0 %1645
  %1647 = vrot.lane.b32.xlu0 %v1637, 72
  %v1648 = vpop.permute.xlu0 %1647
  %1649 = vrot.lane.b32.xlu0 %v1628, 72
  %v1650 = vpop.permute.xlu0 %1649
  %1651 = vrot.lane.b32.xlu0 %v1638, 72
  %v1652 = vpop.permute.xlu0 %1651
  %1653 = vrot.lane.b32.xlu0 %v1629, 72
  %v1654 = vpop.permute.xlu0 %1653
  %1655 = vrot.lane.b32.xlu0 %v1639, 72
  %v1656 = vpop.permute.xlu0 %1655
  %1657 = vrot.lane.b32.xlu0 %v1630, 72
  %v1658 = vpop.permute.xlu0 %1657
  %1659 = vrot.lane.b32.xlu0 %v1640, 72
  %v1660 = vpop.permute.xlu0 %1659
  %vm1661 = vcmask 588800
  %v1662 = vsel %vm1661, %v1642, %v1644
  %v1663 = vsel %vm1661, %v1644, %v1646
  %v1664 = vsel %vm1661, %v1646, %v1648
  %v1665 = vsel %vm1661, %v1648, %v1650
  %v1666 = vsel %vm1661, %v1650, %v1652
  %v1667 = vsel %vm1661, %v1652, %v1654
  %v1668 = vsel %vm1661, %v1654, %v1656
  %v1669 = vsel %vm1661, %v1656, %v1658
  %v1670 = vsel %vm1661, %v1658, %v1660
  %1680 = vst [vmem:[#allocation2 + $0x3a8] sm:$0xf] %v1662
  %1681 = vst [vmem:[#allocation2 + $0x3b0] sm:$0xf] %v1663
  %1682 = vst [vmem:[#allocation2 + $0x3b8] sm:$0xf] %v1664
  %1683 = vst [vmem:[#allocation2 + $0x3c0] sm:$0xf] %v1665
  %1684 = vst [vmem:[#allocation2 + $0x3c8] sm:$0xf] %v1666
  %1685 = vst [vmem:[#allocation2 + $0x3d0] sm:$0xf] %v1667
  %1686 = vst [vmem:[#allocation2 + $0x3d8] sm:$0xf] %v1668
  %1687 = vst [vmem:[#allocation2 + $0x3e0] sm:$0xf] %v1669
  %1688 = vst [vmem:[#allocation2 + $0x3e8] sm:$0xf] %v1670
  %v1689 = vld [vmem:[%s0] sm:$0xff]
  %v1690 = vld [vmem:[%s0 + $0x8] sm:$0xff]
  %v1691 = vld [vmem:[%s0 + $0x10] sm:$0xff]
  %v1692 = vld [vmem:[%s0 + $0x18] sm:$0xff]
  %v1693 = vld [vmem:[%s0 + $0x20] sm:$0xff]
  %v1699 = vcombine.low %v1689, %v1689
  %v1700 = vcombine.low %v1690, %v1690
  %v1701 = vcombine.low %v1691, %v1691
  %v1702 = vcombine.low %v1692, %v1692
  %v1703 = vcombine.low %v1693, %v1693
  %1704 = vrot.lane.b32.xlu0 %v1699, 56
  %v1705 = vpop.permute.xlu0 %1704
  %1706 = vrot.lane.b32.xlu0 %v1689, 56
  %v1707 = vpop.permute.xlu0 %1706
  %1708 = vrot.lane.b32.xlu0 %v1700, 56
  %v1709 = vpop.permute.xlu0 %1708
  %1710 = vrot.lane.b32.xlu0 %v1690, 56
  %v1711 = vpop.permute.xlu0 %1710
  %1712 = vrot.lane.b32.xlu0 %v1701, 56
  %v1713 = vpop.permute.xlu0 %1712
  %1714 = vrot.lane.b32.xlu0 %v1691, 56
  %v1715 = vpop.permute.xlu0 %1714
  %1716 = vrot.lane.b32.xlu0 %v1702, 56
  %v1717 = vpop.permute.xlu0 %1716
  %1718 = vrot.lane.b32.xlu0 %v1692, 56
  %v1719 = vpop.permute.xlu0 %1718
  %1720 = vrot.lane.b32.xlu0 %v1703, 56
  %v1721 = vpop.permute.xlu0 %1720
  %1722 = vrot.lane.b32.xlu0 %v1693, 56
  %v1723 = vpop.permute.xlu0 %1722
  %vm1724 = vcmask 457728
  %v1725 = vsel %vm1724, %v1705, %v1707
  %v1726 = vsel %vm1724, %v1707, %v1709
  %v1727 = vsel %vm1724, %v1709, %v1711
  %v1728 = vsel %vm1724, %v1711, %v1713
  %v1729 = vsel %vm1724, %v1713, %v1715
  %v1730 = vsel %vm1724, %v1715, %v1717
  %v1731 = vsel %vm1724, %v1717, %v1719
  %v1732 = vsel %vm1724, %v1719, %v1721
  %v1733 = vsel %vm1724, %v1721, %v1723
  %1743 = vst [vmem:[#allocation2 + $0x3a8] sm:$0xf0] %v1725
  %1744 = vst [vmem:[#allocation2 + $0x3b0] sm:$0xf0] %v1726
  %1745 = vst [vmem:[#allocation2 + $0x3b8] sm:$0xf0] %v1727
  %1746 = vst [vmem:[#allocation2 + $0x3c0] sm:$0xf0] %v1728
  %1747 = vst [vmem:[#allocation2 + $0x3c8] sm:$0xf0] %v1729
  %1748 = vst [vmem:[#allocation2 + $0x3d0] sm:$0xf0] %v1730
  %1749 = vst [vmem:[#allocation2 + $0x3d8] sm:$0xf0] %v1731
  %1750 = vst [vmem:[#allocation2 + $0x3e0] sm:$0xf0] %v1732
  %1751 = vst [vmem:[#allocation2 + $0x3e8] sm:$0xf0] %v1733
  %v1752 = vld [vmem:[%s0] sm:$0xff]
  %v1753 = vld [vmem:[%s0 + $0x8] sm:$0xff]
  %v1754 = vld [vmem:[%s0 + $0x10] sm:$0xff]
  %v1755 = vld [vmem:[%s0 + $0x18] sm:$0xff]
  %v1756 = vld [vmem:[%s0 + $0x20] sm:$0xff]
  %v1762 = vcombine.high %v1752, %v1752
  %v1763 = vcombine.high %v1753, %v1753
  %v1764 = vcombine.high %v1754, %v1754
  %v1765 = vcombine.high %v1755, %v1755
  %v1766 = vcombine.high %v1756, %v1756
  %1767 = vrot.lane.b32.xlu0 %v1752, 55
  %v1768 = vpop.permute.xlu0 %1767
  %1769 = vrot.lane.b32.xlu0 %v1762, 55
  %v1770 = vpop.permute.xlu0 %1769
  %1771 = vrot.lane.b32.xlu0 %v1753, 55
  %v1772 = vpop.permute.xlu0 %1771
  %1773 = vrot.lane.b32.xlu0 %v1763, 55
  %v1774 = vpop.permute.xlu0 %1773
  %1775 = vrot.lane.b32.xlu0 %v1754, 55
  %v1776 = vpop.permute.xlu0 %1775
  %1777 = vrot.lane.b32.xlu0 %v1764, 55
  %v1778 = vpop.permute.xlu0 %1777
  %1779 = vrot.lane.b32.xlu0 %v1755, 55
  %v1780 = vpop.permute.xlu0 %1779
  %1781 = vrot.lane.b32.xlu0 %v1765, 55
  %v1782 = vpop.permute.xlu0 %1781
  %1783 = vrot.lane.b32.xlu0 %v1756, 55
  %v1784 = vpop.permute.xlu0 %1783
  %1785 = vrot.lane.b32.xlu0 %v1766, 55
  %v1786 = vpop.permute.xlu0 %1785
  %vm1787 = vcmask 449536
  %v1788 = vsel %vm1787, %v1768, %v1770
  %v1789 = vsel %vm1787, %v1770, %v1772
  %v1790 = vsel %vm1787, %v1772, %v1774
  %v1791 = vsel %vm1787, %v1774, %v1776
  %v1792 = vsel %vm1787, %v1776, %v1778
  %v1793 = vsel %vm1787, %v1778, %v1780
  %v1794 = vsel %vm1787, %v1780, %v1782
  %v1795 = vsel %vm1787, %v1782, %v1784
  %v1796 = vsel %vm1787, %v1784, %v1786
  %1806 = vst [vmem:[#allocation2 + $0x3f0] sm:$0xf] %v1788
  %1807 = vst [vmem:[#allocation2 + $0x3f8] sm:$0xf] %v1789
  %1808 = vst [vmem:[#allocation2 + $0x400] sm:$0xf] %v1790
  %1809 = vst [vmem:[#allocation2 + $0x408] sm:$0xf] %v1791
  %1810 = vst [vmem:[#allocation2 + $0x410] sm:$0xf] %v1792
  %1811 = vst [vmem:[#allocation2 + $0x418] sm:$0xf] %v1793
  %1812 = vst [vmem:[#allocation2 + $0x420] sm:$0xf] %v1794
  %1813 = vst [vmem:[#allocation2 + $0x428] sm:$0xf] %v1795
  %1814 = vst [vmem:[#allocation2 + $0x430] sm:$0xf] %v1796
  %v1815 = vld [vmem:[%s0] sm:$0xff]
  %v1816 = vld [vmem:[%s0 + $0x8] sm:$0xff]
  %v1817 = vld [vmem:[%s0 + $0x10] sm:$0xff]
  %v1818 = vld [vmem:[%s0 + $0x18] sm:$0xff]
  %v1819 = vld [vmem:[%s0 + $0x20] sm:$0xff]
  %v1825 = vcombine.low %v1815, %v1815
  %v1826 = vcombine.low %v1816, %v1816
  %v1827 = vcombine.low %v1817, %v1817
  %v1828 = vcombine.low %v1818, %v1818
  %v1829 = vcombine.low %v1819, %v1819
  %1830 = vrot.lane.b32.xlu0 %v1825, 54
  %v1831 = vpop.permute.xlu0 %1830
  %1832 = vrot.lane.b32.xlu0 %v1815, 54
  %v1833 = vpop.permute.xlu0 %1832
  %1834 = vrot.lane.b32.xlu0 %v1826, 54
  %v1835 = vpop.permute.xlu0 %1834
  %1836 = vrot.lane.b32.xlu0 %v1816, 54
  %v1837 = vpop.permute.xlu0 %1836
  %1838 = vrot.lane.b32.xlu0 %v1827, 54
  %v1839 = vpop.permute.xlu0 %1838
  %1840 = vrot.lane.b32.xlu0 %v1817, 54
  %v1841 = vpop.permute.xlu0 %1840
  %1842 = vrot.lane.b32.xlu0 %v1828, 54
  %v1843 = vpop.permute.xlu0 %1842
  %1844 = vrot.lane.b32.xlu0 %v1818, 54
  %v1845 = vpop.permute.xlu0 %1844
  %1846 = vrot.lane.b32.xlu0 %v1829, 54
  %v1847 = vpop.permute.xlu0 %1846
  %1848 = vrot.lane.b32.xlu0 %v1819, 54
  %v1849 = vpop.permute.xlu0 %1848
  %vm1850 = vcmask 441344
  %v1851 = vsel %vm1850, %v1831, %v1833
  %v1852 = vsel %vm1850, %v1833, %v1835
  %v1853 = vsel %vm1850, %v1835, %v1837
  %v1854 = vsel %vm1850, %v1837, %v1839
  %v1855 = vsel %vm1850, %v1839, %v1841
  %v1856 = vsel %vm1850, %v1841, %v1843
  %v1857 = vsel %vm1850, %v1843, %v1845
  %v1858 = vsel %vm1850, %v1845, %v1847
  %v1859 = vsel %vm1850, %v1847, %v1849
  %1869 = vst [vmem:[#allocation2 + $0x3f0] sm:$0xf0] %v1851
  %1870 = vst [vmem:[#allocation2 + $0x3f8] sm:$0xf0] %v1852
  %1871 = vst [vmem:[#allocation2 + $0x400] sm:$0xf0] %v1853
  %1872 = vst [vmem:[#allocation2 + $0x408] sm:$0xf0] %v1854
  %1873 = vst [vmem:[#allocation2 + $0x410] sm:$0xf0] %v1855
  %1874 = vst [vmem:[#allocation2 + $0x418] sm:$0xf0] %v1856
  %1875 = vst [vmem:[#allocation2 + $0x420] sm:$0xf0] %v1857
  %1876 = vst [vmem:[#allocation2 + $0x428] sm:$0xf0] %v1858
  %1877 = vst [vmem:[#allocation2 + $0x430] sm:$0xf0] %v1859
  %v1878 = vld [vmem:[%s0] sm:$0xff]
  %v1879 = vld [vmem:[%s0 + $0x8] sm:$0xff]
  %v1880 = vld [vmem:[%s0 + $0x10] sm:$0xff]
  %v1881 = vld [vmem:[%s0 + $0x18] sm:$0xff]
  %v1882 = vld [vmem:[%s0 + $0x20] sm:$0xff]
  %v1888 = vcombine.high %v1878, %v1878
  %v1889 = vcombine.high %v1879, %v1879
  %v1890 = vcombine.high %v1880, %v1880
  %v1891 = vcombine.high %v1881, %v1881
  %v1892 = vcombine.high %v1882, %v1882
  %1893 = vrot.lane.b32.xlu0 %v1878, 53
  %v1894 = vpop.permute.xlu0 %1893
  %1895 = vrot.lane.b32.xlu0 %v1888, 53
  %v1896 = vpop.permute.xlu0 %1895
  %1897 = vrot.lane.b32.xlu0 %v1879, 53
  %v1898 = vpop.permute.xlu0 %1897
  %1899 = vrot.lane.b32.xlu0 %v1889, 53
  %v1900 = vpop.permute.xlu0 %1899
  %1901 = vrot.lane.b32.xlu0 %v1880, 53
  %v1902 = vpop.permute.xlu0 %1901
  %1903 = vrot.lane.b32.xlu0 %v1890, 53
  %v1904 = vpop.permute.xlu0 %1903
  %1905 = vrot.lane.b32.xlu0 %v1881, 53
  %v1906 = vpop.permute.xlu0 %1905
  %1907 = vrot.lane.b32.xlu0 %v1891, 53
  %v1908 = vpop.permute.xlu0 %1907
  %1909 = vrot.lane.b32.xlu0 %v1882, 53
  %v1910 = vpop.permute.xlu0 %1909
  %1911 = vrot.lane.b32.xlu0 %v1892, 53
  %v1912 = vpop.permute.xlu0 %1911
  %vm1913 = vcmask 433152
  %v1914 = vsel %vm1913, %v1894, %v1896
  %v1915 = vsel %vm1913, %v1896, %v1898
  %v1916 = vsel %vm1913, %v1898, %v1900
  %v1917 = vsel %vm1913, %v1900, %v1902
  %v1918 = vsel %vm1913, %v1902, %v1904
  %v1919 = vsel %vm1913, %v1904, %v1906
  %v1920 = vsel %vm1913, %v1906, %v1908
  %v1921 = vsel %vm1913, %v1908, %v1910
  %v1922 = vsel %vm1913, %v1910, %v1912
  %1932 = vst [vmem:[#allocation2 + $0x438] sm:$0xf] %v1914
  %1933 = vst [vmem:[#allocation2 + $0x440] sm:$0xf] %v1915
  %1934 = vst [vmem:[#allocation2 + $0x448] sm:$0xf] %v1916
  %1935 = vst [vmem:[#allocation2 + $0x450] sm:$0xf] %v1917
  %1936 = vst [vmem:[#allocation2 + $0x458] sm:$0xf] %v1918
  %1937 = vst [vmem:[#allocation2 + $0x460] sm:$0xf] %v1919
  %1938 = vst [vmem:[#allocation2 + $0x468] sm:$0xf] %v1920
  %1939 = vst [vmem:[#allocation2 + $0x470] sm:$0xf] %v1921
  %1940 = vst [vmem:[#allocation2 + $0x478] sm:$0xf] %v1922
  %v1941 = vld [vmem:[%s0] sm:$0xff]
  %v1942 = vld [vmem:[%s0 + $0x8] sm:$0xff]
  %v1943 = vld [vmem:[%s0 + $0x10] sm:$0xff]
  %v1944 = vld [vmem:[%s0 + $0x18] sm:$0xff]
  %v1945 = vld [vmem:[%s0 + $0x20] sm:$0xff]
  %v1951 = vcombine.low %v1941, %v1941
  %v1952 = vcombine.low %v1942, %v1942
  %v1953 = vcombine.low %v1943, %v1943
  %v1954 = vcombine.low %v1944, %v1944
  %v1955 = vcombine.low %v1945, %v1945
  %1956 = vrot.lane.b32.xlu0 %v1951, 52
  %v1957 = vpop.permute.xlu0 %1956
  %1958 = vrot.lane.b32.xlu0 %v1941, 52
  %v1959 = vpop.permute.xlu0 %1958
  %1960 = vrot.lane.b32.xlu0 %v1952, 52
  %v1961 = vpop.permute.xlu0 %1960
  %1962 = vrot.lane.b32.xlu0 %v1942, 52
  %v1963 = vpop.permute.xlu0 %1962
  %1964 = vrot.lane.b32.xlu0 %v1953, 52
  %v1965 = vpop.permute.xlu0 %1964
  %1966 = vrot.lane.b32.xlu0 %v1943, 52
  %v1967 = vpop.permute.xlu0 %1966
  %1968 = vrot.lane.b32.xlu0 %v1954, 52
  %v1969 = vpop.permute.xlu0 %1968
  %1970 = vrot.lane.b32.xlu0 %v1944, 52
  %v1971 = vpop.permute.xlu0 %1970
  %1972 = vrot.lane.b32.xlu0 %v1955, 52
  %v1973 = vpop.permute.xlu0 %1972
  %1974 = vrot.lane.b32.xlu0 %v1945, 52
  %v1975 = vpop.permute.xlu0 %1974
  %vm1976 = vcmask 424960
  %v1977 = vsel %vm1976, %v1957, %v1959
  %v1978 = vsel %vm1976, %v1959, %v1961
  %v1979 = vsel %vm1976, %v1961, %v1963
  %v1980 = vsel %vm1976, %v1963, %v1965
  %v1981 = vsel %vm1976, %v1965, %v1967
  %v1982 = vsel %vm1976, %v1967, %v1969
  %v1983 = vsel %vm1976, %v1969, %v1971
  %v1984 = vsel %vm1976, %v1971, %v1973
  %v1985 = vsel %vm1976, %v1973, %v1975
  %1995 = vst [vmem:[#allocation2 + $0x438] sm:$0xf0] %v1977
  %1996 = vst [vmem:[#allocation2 + $0x440] sm:$0xf0] %v1978
  %1997 = vst [vmem:[#allocation2 + $0x448] sm:$0xf0] %v1979
  %1998 = vst [vmem:[#allocation2 + $0x450] sm:$0xf0] %v1980
  %1999 = vst [vmem:[#allocation2 + $0x458] sm:$0xf0] %v1981
  %2000 = vst [vmem:[#allocation2 + $0x460] sm:$0xf0] %v1982
  %2001 = vst [vmem:[#allocation2 + $0x468] sm:$0xf0] %v1983
  %2002 = vst [vmem:[#allocation2 + $0x470] sm:$0xf0] %v1984
  %2003 = vst [vmem:[#allocation2 + $0x478] sm:$0xf0] %v1985
  %v2004 = vld [vmem:[%s0] sm:$0xff]
  %v2005 = vld [vmem:[%s0 + $0x8] sm:$0xff]
  %v2006 = vld [vmem:[%s0 + $0x10] sm:$0xff]
  %v2007 = vld [vmem:[%s0 + $0x18] sm:$0xff]
  %v2008 = vld [vmem:[%s0 + $0x20] sm:$0xff]
  %v2014 = vcombine.high %v2004, %v2004
  %v2015 = vcombine.high %v2005, %v2005
  %v2016 = vcombine.high %v2006, %v2006
  %v2017 = vcombine.high %v2007, %v2007
  %v2018 = vcombine.high %v2008, %v2008
  %2019 = vrot.lane.b32.xlu0 %v2004, 51
  %v2020 = vpop.permute.xlu0 %2019
  %2021 = vrot.lane.b32.xlu0 %v2014, 51
  %v2022 = vpop.permute.xlu0 %2021
  %2023 = vrot.lane.b32.xlu0 %v2005, 51
  %v2024 = vpop.permute.xlu0 %2023
  %2025 = vrot.lane.b32.xlu0 %v2015, 51
  %v2026 = vpop.permute.xlu0 %2025
  %2027 = vrot.lane.b32.xlu0 %v2006, 51
  %v2028 = vpop.permute.xlu0 %2027
  %2029 = vrot.lane.b32.xlu0 %v2016, 51
  %v2030 = vpop.permute.xlu0 %2029
  %2031 = vrot.lane.b32.xlu0 %v2007, 51
  %v2032 = vpop.permute.xlu0 %2031
  %2033 = vrot.lane.b32.xlu0 %v2017, 51
  %v2034 = vpop.permute.xlu0 %2033
  %2035 = vrot.lane.b32.xlu0 %v2008, 51
  %v2036 = vpop.permute.xlu0 %2035
  %2037 = vrot.lane.b32.xlu0 %v2018, 51
  %v2038 = vpop.permute.xlu0 %2037
  %vm2039 = vcmask 416768
  %v2040 = vsel %vm2039, %v2020, %v2022
  %v2041 = vsel %vm2039, %v2022, %v2024
  %v2042 = vsel %vm2039, %v2024, %v2026
  %v2043 = vsel %vm2039, %v2026, %v2028
  %v2044 = vsel %vm2039, %v2028, %v2030
  %v2045 = vsel %vm2039, %v2030, %v2032
  %v2046 = vsel %vm2039, %v2032, %v2034
  %v2047 = vsel %vm2039, %v2034, %v2036
  %v2048 = vsel %vm2039, %v2036, %v2038
  %2058 = vst [vmem:[#allocation2 + $0x480] sm:$0xf] %v2040
  %2059 = vst [vmem:[#allocation2 + $0x488] sm:$0xf] %v2041
  %2060 = vst [vmem:[#allocation2 + $0x490] sm:$0xf] %v2042
  %2061 = vst [vmem:[#allocation2 + $0x498] sm:$0xf] %v2043
  %2062 = vst [vmem:[#allocation2 + $0x4a0] sm:$0xf] %v2044
  %2063 = vst [vmem:[#allocation2 + $0x4a8] sm:$0xf] %v2045
  %2064 = vst [vmem:[#allocation2 + $0x4b0] sm:$0xf] %v2046
  %2065 = vst [vmem:[#allocation2 + $0x4b8] sm:$0xf] %v2047
  %2066 = vst [vmem:[#allocation2 + $0x4c0] sm:$0xf] %v2048
  %v2067 = vld [vmem:[%s0] sm:$0xff]
  %v2068 = vld [vmem:[%s0 + $0x8] sm:$0xff]
  %v2069 = vld [vmem:[%s0 + $0x10] sm:$0xff]
  %v2070 = vld [vmem:[%s0 + $0x18] sm:$0xff]
  %v2071 = vld [vmem:[%s0 + $0x20] sm:$0xff]
  %v2077 = vcombine.low %v2067, %v2067
  %v2078 = vcombine.low %v2068, %v2068
  %v2079 = vcombine.low %v2069, %v2069
  %v2080 = vcombine.low %v2070, %v2070
  %v2081 = vcombine.low %v2071, %v2071
  %2082 = vrot.lane.b32.xlu0 %v2077, 50
  %v2083 = vpop.permute.xlu0 %2082
  %2084 = vrot.lane.b32.xlu0 %v2067, 50
  %v2085 = vpop.permute.xlu0 %2084
  %2086 = vrot.lane.b32.xlu0 %v2078, 50
  %v2087 = vpop.permute.xlu0 %2086
  %2088 = vrot.lane.b32.xlu0 %v2068, 50
  %v2089 = vpop.permute.xlu0 %2088
  %2090 = vrot.lane.b32.xlu0 %v2079, 50
  %v2091 = vpop.permute.xlu0 %2090
  %2092 = vrot.lane.b32.xlu0 %v2069, 50
  %v2093 = vpop.permute.xlu0 %2092
  %2094 = vrot.lane.b32.xlu0 %v2080, 50
  %v2095 = vpop.permute.xlu0 %2094
  %2096 = vrot.lane.b32.xlu0 %v2070, 50
  %v2097 = vpop.permute.xlu0 %2096
  %2098 = vrot.lane.b32.xlu0 %v2081, 50
  %v2099 = vpop.permute.xlu0 %2098
  %2100 = vrot.lane.b32.xlu0 %v2071, 50
  %v2101 = vpop.permute.xlu0 %2100
  %vm2102 = vcmask 408576
  %v2103 = vsel %vm2102, %v2083, %v2085
  %v2104 = vsel %vm2102, %v2085, %v2087
  %v2105 = vsel %vm2102, %v2087, %v2089
  %v2106 = vsel %vm2102, %v2089, %v2091
  %v2107 = vsel %vm2102, %v2091, %v2093
  %v2108 = vsel %vm2102, %v2093, %v2095
  %v2109 = vsel %vm2102, %v2095, %v2097
  %v2110 = vsel %vm2102, %v2097, %v2099
  %v2111 = vsel %vm2102, %v2099, %v2101
  %2121 = vst [vmem:[#allocation2 + $0x480] sm:$0xf0] %v2103
  %2122 = vst [vmem:[#allocation2 + $0x488] sm:$0xf0] %v2104
  %2123 = vst [vmem:[#allocation2 + $0x490] sm:$0xf0] %v2105
  %2124 = vst [vmem:[#allocation2 + $0x498] sm:$0xf0] %v2106
  %2125 = vst [vmem:[#allocation2 + $0x4a0] sm:$0xf0] %v2107
  %2126 = vst [vmem:[#allocation2 + $0x4a8] sm:$0xf0] %v2108
  %2127 = vst [vmem:[#allocation2 + $0x4b0] sm:$0xf0] %v2109
  %2128 = vst [vmem:[#allocation2 + $0x4b8] sm:$0xf0] %v2110
  %2129 = vst [vmem:[#allocation2 + $0x4c0] sm:$0xf0] %v2111
  %v2130 = vld [vmem:[%s0] sm:$0xff]
  %v2131 = vld [vmem:[%s0 + $0x8] sm:$0xff]
  %v2132 = vld [vmem:[%s0 + $0x10] sm:$0xff]
  %v2133 = vld [vmem:[%s0 + $0x18] sm:$0xff]
  %v2134 = vld [vmem:[%s0 + $0x20] sm:$0xff]
  %v2140 = vcombine.high %v2130, %v2130
  %v2141 = vcombine.high %v2131, %v2131
  %v2142 = vcombine.high %v2132, %v2132
  %v2143 = vcombine.high %v2133, %v2133
  %v2144 = vcombine.high %v2134, %v2134
  %2145 = vrot.lane.b32.xlu0 %v2130, 49
  %v2146 = vpop.permute.xlu0 %2145
  %2147 = vrot.lane.b32.xlu0 %v2140, 49
  %v2148 = vpop.permute.xlu0 %2147
  %2149 = vrot.lane.b32.xlu0 %v2131, 49
  %v2150 = vpop.permute.xlu0 %2149
  %2151 = vrot.lane.b32.xlu0 %v2141, 49
  %v2152 = vpop.permute.xlu0 %2151
  %2153 = vrot.lane.b32.xlu0 %v2132, 49
  %v2154 = vpop.permute.xlu0 %2153
  %2155 = vrot.lane.b32.xlu0 %v2142, 49
  %v2156 = vpop.permute.xlu0 %2155
  %2157 = vrot.lane.b32.xlu0 %v2133, 49
  %v2158 = vpop.permute.xlu0 %2157
  %2159 = vrot.lane.b32.xlu0 %v2143, 49
  %v2160 = vpop.permute.xlu0 %2159
  %2161 = vrot.lane.b32.xlu0 %v2134, 49
  %v2162 = vpop.permute.xlu0 %2161
  %2163 = vrot.lane.b32.xlu0 %v2144, 49
  %v2164 = vpop.permute.xlu0 %2163
  %vm2165 = vcmask 400384
  %v2166 = vsel %vm2165, %v2146, %v2148
  %v2167 = vsel %vm2165, %v2148, %v2150
  %v2168 = vsel %vm2165, %v2150, %v2152
  %v2169 = vsel %vm2165, %v2152, %v2154
  %v2170 = vsel %vm2165, %v2154, %v2156
  %v2171 = vsel %vm2165, %v2156, %v2158
  %v2172 = vsel %vm2165, %v2158, %v2160
  %v2173 = vsel %vm2165, %v2160, %v2162
  %v2174 = vsel %vm2165, %v2162, %v2164
  %2184 = vst [vmem:[#allocation2 + $0x4c8] sm:$0xf] %v2166
  %2185 = vst [vmem:[#allocation2 + $0x4d0] sm:$0xf] %v2167
  %2186 = vst [vmem:[#allocation2 + $0x4d8] sm:$0xf] %v2168
  %2187 = vst [vmem:[#allocation2 + $0x4e0] sm:$0xf] %v2169
  %2188 = vst [vmem:[#allocation2 + $0x4e8] sm:$0xf] %v2170
  %2189 = vst [vmem:[#allocation2 + $0x4f0] sm:$0xf] %v2171
  %2190 = vst [vmem:[#allocation2 + $0x4f8] sm:$0xf] %v2172
  %2191 = vst [vmem:[#allocation2 + $0x500] sm:$0xf] %v2173
  %2192 = vst [vmem:[#allocation2 + $0x508] sm:$0xf] %v2174
  %v2193 = vld [vmem:[%s0] sm:$0xff]
  %v2194 = vld [vmem:[%s0 + $0x8] sm:$0xff]
  %v2195 = vld [vmem:[%s0 + $0x10] sm:$0xff]
  %v2196 = vld [vmem:[%s0 + $0x18] sm:$0xff]
  %v2197 = vld [vmem:[%s0 + $0x20] sm:$0xff]
  %v2203 = vcombine.low %v2193, %v2193
  %v2204 = vcombine.low %v2194, %v2194
  %v2205 = vcombine.low %v2195, %v2195
  %v2206 = vcombine.low %v2196, %v2196
  %v2207 = vcombine.low %v2197, %v2197
  %2208 = vrot.lane.b32.xlu0 %v2203, 48
  %v2209 = vpop.permute.xlu0 %2208
  %2210 = vrot.lane.b32.xlu0 %v2193, 48
  %v2211 = vpop.permute.xlu0 %2210
  %2212 = vrot.lane.b32.xlu0 %v2204, 48
  %v2213 = vpop.permute.xlu0 %2212
  %2214 = vrot.lane.b32.xlu0 %v2194, 48
  %v2215 = vpop.permute.xlu0 %2214
  %2216 = vrot.lane.b32.xlu0 %v2205, 48
  %v2217 = vpop.permute.xlu0 %2216
  %2218 = vrot.lane.b32.xlu0 %v2195, 48
  %v2219 = vpop.permute.xlu0 %2218
  %2220 = vrot.lane.b32.xlu0 %v2206, 48
  %v2221 = vpop.permute.xlu0 %2220
  %2222 = vrot.lane.b32.xlu0 %v2196, 48
  %v2223 = vpop.permute.xlu0 %2222
  %2224 = vrot.lane.b32.xlu0 %v2207, 48
  %v2225 = vpop.permute.xlu0 %2224
  %2226 = vrot.lane.b32.xlu0 %v2197, 48
  %v2227 = vpop.permute.xlu0 %2226
  %vm2228 = vcmask 392192
  %v2229 = vsel %vm2228, %v2209, %v2211
  %v2230 = vsel %vm2228, %v2211, %v2213
  %v2231 = vsel %vm2228, %v2213, %v2215
  %v2232 = vsel %vm2228, %v2215, %v2217
  %v2233 = vsel %vm2228, %v2217, %v2219
  %v2234 = vsel %vm2228, %v2219, %v2221
  %v2235 = vsel %vm2228, %v2221, %v2223
  %v2236 = vsel %vm2228, %v2223, %v2225
  %v2237 = vsel %vm2228, %v2225, %v2227
  %2247 = vst [vmem:[#allocation2 + $0x4c8] sm:$0xf0] %v2229
  %2248 = vst [vmem:[#allocation2 + $0x4d0] sm:$0xf0] %v2230
  %2249 = vst [vmem:[#allocation2 + $0x4d8] sm:$0xf0] %v2231
  %2250 = vst [vmem:[#allocation2 + $0x4e0] sm:$0xf0] %v2232
  %2251 = vst [vmem:[#allocation2 + $0x4e8] sm:$0xf0] %v2233
  %2252 = vst [vmem:[#allocation2 + $0x4f0] sm:$0xf0] %v2234
  %2253 = vst [vmem:[#allocation2 + $0x4f8] sm:$0xf0] %v2235
  %2254 = vst [vmem:[#allocation2 + $0x500] sm:$0xf0] %v2236
  %2255 = vst [vmem:[#allocation2 + $0x508] sm:$0xf0] %v2237
  %v2256 = vld [vmem:[%s0] sm:$0xff]
  %v2257 = vld [vmem:[%s0 + $0x8] sm:$0xff]
  %v2258 = vld [vmem:[%s0 + $0x10] sm:$0xff]
  %v2259 = vld [vmem:[%s0 + $0x18] sm:$0xff]
  %v2260 = vld [vmem:[%s0 + $0x20] sm:$0xff]
  %v2266 = vcombine.high %v2256, %v2256
  %v2267 = vcombine.high %v2257, %v2257
  %v2268 = vcombine.high %v2258, %v2258
  %v2269 = vcombine.high %v2259, %v2259
  %v2270 = vcombine.high %v2260, %v2260
  %2271 = vrot.lane.b32.xlu0 %v2256, 32
  %v2272 = vpop.permute.xlu0 %2271
  %2273 = vrot.lane.b32.xlu0 %v2266, 32
  %v2274 = vpop.permute.xlu0 %2273
  %2275 = vrot.lane.b32.xlu0 %v2257, 32
  %v2276 = vpop.permute.xlu0 %2275
  %2277 = vrot.lane.b32.xlu0 %v2267, 32
  %v2278 = vpop.permute.xlu0 %2277
  %2279 = vrot.lane.b32.xlu0 %v2258, 32
  %v2280 = vpop.permute.xlu0 %2279
  %2281 = vrot.lane.b32.xlu0 %v2268, 32
  %v2282 = vpop.permute.xlu0 %2281
  %2283 = vrot.lane.b32.xlu0 %v2259, 32
  %v2284 = vpop.permute.xlu0 %2283
  %2285 = vrot.lane.b32.xlu0 %v2269, 32
  %v2286 = vpop.permute.xlu0 %2285
  %2287 = vrot.lane.b32.xlu0 %v2260, 32
  %v2288 = vpop.permute.xlu0 %2287
  %2289 = vrot.lane.b32.xlu0 %v2270, 32
  %v2290 = vpop.permute.xlu0 %2289
  %vm2291 = vcmask 261120
  %v2292 = vsel %vm2291, %v2272, %v2274
  %v2293 = vsel %vm2291, %v2274, %v2276
  %v2294 = vsel %vm2291, %v2276, %v2278
  %v2295 = vsel %vm2291, %v2278, %v2280
  %v2296 = vsel %vm2291, %v2280, %v2282
  %v2297 = vsel %vm2291, %v2282, %v2284
  %v2298 = vsel %vm2291, %v2284, %v2286
  %v2299 = vsel %vm2291, %v2286, %v2288
  %v2300 = vsel %vm2291, %v2288, %v2290
  %2310 = vst [vmem:[#allocation2 + $0x510] sm:$0xf] %v2292
  %2311 = vst [vmem:[#allocation2 + $0x518] sm:$0xf] %v2293
  %2312 = vst [vmem:[#allocation2 + $0x520] sm:$0xf] %v2294
  %2313 = vst [vmem:[#allocation2 + $0x528] sm:$0xf] %v2295
  %2314 = vst [vmem:[#allocation2 + $0x530] sm:$0xf] %v2296
  %2315 = vst [vmem:[#allocation2 + $0x538] sm:$0xf] %v2297
  %2316 = vst [vmem:[#allocation2 + $0x540] sm:$0xf] %v2298
  %2317 = vst [vmem:[#allocation2 + $0x548] sm:$0xf] %v2299
  %2318 = vst [vmem:[#allocation2 + $0x550] sm:$0xf] %v2300
  %v2319 = vld [vmem:[%s0] sm:$0xff]
  %v2320 = vld [vmem:[%s0 + $0x8] sm:$0xff]
  %v2321 = vld [vmem:[%s0 + $0x10] sm:$0xff]
  %v2322 = vld [vmem:[%s0 + $0x18] sm:$0xff]
  %v2323 = vld [vmem:[%s0 + $0x20] sm:$0xff]
  %v2329 = vcombine.low %v2319, %v2319
  %v2330 = vcombine.low %v2320, %v2320
  %v2331 = vcombine.low %v2321, %v2321
  %v2332 = vcombine.low %v2322, %v2322
  %v2333 = vcombine.low %v2323, %v2323
  %2334 = vrot.lane.b32.xlu0 %v2329, 31
  %v2335 = vpop.permute.xlu0 %2334
  %2336 = vrot.lane.b32.xlu0 %v2319, 31
  %v2337 = vpop.permute.xlu0 %2336
  %2338 = vrot.lane.b32.xlu0 %v2330, 31
  %v2339 = vpop.permute.xlu0 %2338
  %2340 = vrot.lane.b32.xlu0 %v2320, 31
  %v2341 = vpop.permute.xlu0 %2340
  %2342 = vrot.lane.b32.xlu0 %v2331, 31
  %v2343 = vpop.permute.xlu0 %2342
  %2344 = vrot.lane.b32.xlu0 %v2321, 31
  %v2345 = vpop.permute.xlu0 %2344
  %2346 = vrot.lane.b32.xlu0 %v2332, 31
  %v2347 = vpop.permute.xlu0 %2346
  %2348 = vrot.lane.b32.xlu0 %v2322, 31
  %v2349 = vpop.permute.xlu0 %2348
  %2350 = vrot.lane.b32.xlu0 %v2333, 31
  %v2351 = vpop.permute.xlu0 %2350
  %2352 = vrot.lane.b32.xlu0 %v2323, 31
  %v2353 = vpop.permute.xlu0 %2352
  %vm2354 = vcmask 252928
  %v2355 = vsel %vm2354, %v2335, %v2337
  %v2356 = vsel %vm2354, %v2337, %v2339
  %v2357 = vsel %vm2354, %v2339, %v2341
  %v2358 = vsel %vm2354, %v2341, %v2343
  %v2359 = vsel %vm2354, %v2343, %v2345
  %v2360 = vsel %vm2354, %v2345, %v2347
  %v2361 = vsel %vm2354, %v2347, %v2349
  %v2362 = vsel %vm2354, %v2349, %v2351
  %v2363 = vsel %vm2354, %v2351, %v2353
  %2373 = vst [vmem:[#allocation2 + $0x510] sm:$0xf0] %v2355
  %2374 = vst [vmem:[#allocation2 + $0x518] sm:$0xf0] %v2356
  %2375 = vst [vmem:[#allocation2 + $0x520] sm:$0xf0] %v2357
  %2376 = vst [vmem:[#allocation2 + $0x528] sm:$0xf0] %v2358
  %2377 = vst [vmem:[#allocation2 + $0x530] sm:$0xf0] %v2359
  %2378 = vst [vmem:[#allocation2 + $0x538] sm:$0xf0] %v2360
  %2379 = vst [vmem:[#allocation2 + $0x540] sm:$0xf0] %v2361
  %2380 = vst [vmem:[#allocation2 + $0x548] sm:$0xf0] %v2362
  %2381 = vst [vmem:[#allocation2 + $0x550] sm:$0xf0] %v2363
  %v2382 = vld [vmem:[%s0] sm:$0xff]
  %v2383 = vld [vmem:[%s0 + $0x8] sm:$0xff]
  %v2384 = vld [vmem:[%s0 + $0x10] sm:$0xff]
  %v2385 = vld [vmem:[%s0 + $0x18] sm:$0xff]
  %v2386 = vld [vmem:[%s0 + $0x20] sm:$0xff]
  %v2392 = vcombine.high %v2382, %v2382
  %v2393 = vcombine.high %v2383, %v2383
  %v2394 = vcombine.high %v2384, %v2384
  %v2395 = vcombine.high %v2385, %v2385
  %v2396 = vcombine.high %v2386, %v2386
  %2397 = vrot.lane.b32.xlu0 %v2382, 30
  %v2398 = vpop.permute.xlu0 %2397
  %2399 = vrot.lane.b32.xlu0 %v2392, 30
  %v2400 = vpop.permute.xlu0 %2399
  %2401 = vrot.lane.b32.xlu0 %v2383, 30
  %v2402 = vpop.permute.xlu0 %2401
  %2403 = vrot.lane.b32.xlu0 %v2393, 30
  %v2404 = vpop.permute.xlu0 %2403
  %2405 = vrot.lane.b32.xlu0 %v2384, 30
  %v2406 = vpop.permute.xlu0 %2405
  %2407 = vrot.lane.b32.xlu0 %v2394, 30
  %v2408 = vpop.permute.xlu0 %2407
  %2409 = vrot.lane.b32.xlu0 %v2385, 30
  %v2410 = vpop.permute.xlu0 %2409
  %2411 = vrot.lane.b32.xlu0 %v2395, 30
  %v2412 = vpop.permute.xlu0 %2411
  %2413 = vrot.lane.b32.xlu0 %v2386, 30
  %v2414 = vpop.permute.xlu0 %2413
  %2415 = vrot.lane.b32.xlu0 %v2396, 30
  %v2416 = vpop.permute.xlu0 %2415
  %vm2417 = vcmask 244736
  %v2418 = vsel %vm2417, %v2398, %v2400
  %v2419 = vsel %vm2417, %v2400, %v2402
  %v2420 = vsel %vm2417, %v2402, %v2404
  %v2421 = vsel %vm2417, %v2404, %v2406
  %v2422 = vsel %vm2417, %v2406, %v2408
  %v2423 = vsel %vm2417, %v2408, %v2410
  %v2424 = vsel %vm2417, %v2410, %v2412
  %v2425 = vsel %vm2417, %v2412, %v2414
  %v2426 = vsel %vm2417, %v2414, %v2416
  %2436 = vst [vmem:[#allocation2 + $0x558] sm:$0xf] %v2418
  %2437 = vst [vmem:[#allocation2 + $0x560] sm:$0xf] %v2419
  %2438 = vst [vmem:[#allocation2 + $0x568] sm:$0xf] %v2420
  %2439 = vst [vmem:[#allocation2 + $0x570] sm:$0xf] %v2421
  %2440 = vst [vmem:[#allocation2 + $0x578] sm:$0xf] %v2422
  %2441 = vst [vmem:[#allocation2 + $0x580] sm:$0xf] %v2423
  %2442 = vst [vmem:[#allocation2 + $0x588] sm:$0xf] %v2424
  %2443 = vst [vmem:[#allocation2 + $0x590] sm:$0xf] %v2425
  %2444 = vst [vmem:[#allocation2 + $0x598] sm:$0xf] %v2426
  %v2445 = vld [vmem:[%s0] sm:$0xff]
  %v2446 = vld [vmem:[%s0 + $0x8] sm:$0xff]
  %v2447 = vld [vmem:[%s0 + $0x10] sm:$0xff]
  %v2448 = vld [vmem:[%s0 + $0x18] sm:$0xff]
  %v2449 = vld [vmem:[%s0 + $0x20] sm:$0xff]
  %v2455 = vcombine.low %v2445, %v2445
  %v2456 = vcombine.low %v2446, %v2446
  %v2457 = vcombine.low %v2447, %v2447
  %v2458 = vcombine.low %v2448, %v2448
  %v2459 = vcombine.low %v2449, %v2449
  %2460 = vrot.lane.b32.xlu0 %v2455, 29
  %v2461 = vpop.permute.xlu0 %2460
  %2462 = vrot.lane.b32.xlu0 %v2445, 29
  %v2463 = vpop.permute.xlu0 %2462
  %2464 = vrot.lane.b32.xlu0 %v2456, 29
  %v2465 = vpop.permute.xlu0 %2464
  %2466 = vrot.lane.b32.xlu0 %v2446, 29
  %v2467 = vpop.permute.xlu0 %2466
  %2468 = vrot.lane.b32.xlu0 %v2457, 29
  %v2469 = vpop.permute.xlu0 %2468
  %2470 = vrot.lane.b32.xlu0 %v2447, 29
  %v2471 = vpop.permute.xlu0 %2470
  %2472 = vrot.lane.b32.xlu0 %v2458, 29
  %v2473 = vpop.permute.xlu0 %2472
  %2474 = vrot.lane.b32.xlu0 %v2448, 29
  %v2475 = vpop.permute.xlu0 %2474
  %2476 = vrot.lane.b32.xlu0 %v2459, 29
  %v2477 = vpop.permute.xlu0 %2476
  %2478 = vrot.lane.b32.xlu0 %v2449, 29
  %v2479 = vpop.permute.xlu0 %2478
  %vm2480 = vcmask 236544
  %v2481 = vsel %vm2480, %v2461, %v2463
  %v2482 = vsel %vm2480, %v2463, %v2465
  %v2483 = vsel %vm2480, %v2465, %v2467
  %v2484 = vsel %vm2480, %v2467, %v2469
  %v2485 = vsel %vm2480, %v2469, %v2471
  %v2486 = vsel %vm2480, %v2471, %v2473
  %v2487 = vsel %vm2480, %v2473, %v2475
  %v2488 = vsel %vm2480, %v2475, %v2477
  %v2489 = vsel %vm2480, %v2477, %v2479
  %2499 = vst [vmem:[#allocation2 + $0x558] sm:$0xf0] %v2481
  %2500 = vst [vmem:[#allocation2 + $0x560] sm:$0xf0] %v2482
  %2501 = vst [vmem:[#allocation2 + $0x568] sm:$0xf0] %v2483
  %2502 = vst [vmem:[#allocation2 + $0x570] sm:$0xf0] %v2484
  %2503 = vst [vmem:[#allocation2 + $0x578] sm:$0xf0] %v2485
  %2504 = vst [vmem:[#allocation2 + $0x580] sm:$0xf0] %v2486
  %2505 = vst [vmem:[#allocation2 + $0x588] sm:$0xf0] %v2487
  %2506 = vst [vmem:[#allocation2 + $0x590] sm:$0xf0] %v2488
  %2507 = vst [vmem:[#allocation2 + $0x598] sm:$0xf0] %v2489
  %v2508 = vld [vmem:[%s0] sm:$0xff]
  %v2509 = vld [vmem:[%s0 + $0x8] sm:$0xff]
  %v2510 = vld [vmem:[%s0 + $0x10] sm:$0xff]
  %v2511 = vld [vmem:[%s0 + $0x18] sm:$0xff]
  %v2512 = vld [vmem:[%s0 + $0x20] sm:$0xff]
  %v2518 = vcombine.high %v2508, %v2508
  %v2519 = vcombine.high %v2509, %v2509
  %v2520 = vcombine.high %v2510, %v2510
  %v2521 = vcombine.high %v2511, %v2511
  %v2522 = vcombine.high %v2512, %v2512
  %2523 = vrot.lane.b32.xlu0 %v2508, 28
  %v2524 = vpop.permute.xlu0 %2523
  %2525 = vrot.lane.b32.xlu0 %v2518, 28
  %v2526 = vpop.permute.xlu0 %2525
  %2527 = vrot.lane.b32.xlu0 %v2509, 28
  %v2528 = vpop.permute.xlu0 %2527
  %2529 = vrot.lane.b32.xlu0 %v2519, 28
  %v2530 = vpop.permute.xlu0 %2529
  %2531 = vrot.lane.b32.xlu0 %v2510, 28
  %v2532 = vpop.permute.xlu0 %2531
  %2533 = vrot.lane.b32.xlu0 %v2520, 28
  %v2534 = vpop.permute.xlu0 %2533
  %2535 = vrot.lane.b32.xlu0 %v2511, 28
  %v2536 = vpop.permute.xlu0 %2535
  %2537 = vrot.lane.b32.xlu0 %v2521, 28
  %v2538 = vpop.permute.xlu0 %2537
  %2539 = vrot.lane.b32.xlu0 %v2512, 28
  %v2540 = vpop.permute.xlu0 %2539
  %2541 = vrot.lane.b32.xlu0 %v2522, 28
  %v2542 = vpop.permute.xlu0 %2541
  %vm2543 = vcmask 228352
  %v2544 = vsel %vm2543, %v2524, %v2526
  %v2545 = vsel %vm2543, %v2526, %v2528
  %v2546 = vsel %vm2543, %v2528, %v2530
  %v2547 = vsel %vm2543, %v2530, %v2532
  %v2548 = vsel %vm2543, %v2532, %v2534
  %v2549 = vsel %vm2543, %v2534, %v2536
  %v2550 = vsel %vm2543, %v2536, %v2538
  %v2551 = vsel %vm2543, %v2538, %v2540
  %v2552 = vsel %vm2543, %v2540, %v2542
  %2562 = vst [vmem:[#allocation2 + $0x5a0] sm:$0xf] %v2544
  %2563 = vst [vmem:[#allocation2 + $0x5a8] sm:$0xf] %v2545
  %2564 = vst [vmem:[#allocation2 + $0x5b0] sm:$0xf] %v2546
  %2565 = vst [vmem:[#allocation2 + $0x5b8] sm:$0xf] %v2547
  %2566 = vst [vmem:[#allocation2 + $0x5c0] sm:$0xf] %v2548
  %2567 = vst [vmem:[#allocation2 + $0x5c8] sm:$0xf] %v2549
  %2568 = vst [vmem:[#allocation2 + $0x5d0] sm:$0xf] %v2550
  %2569 = vst [vmem:[#allocation2 + $0x5d8] sm:$0xf] %v2551
  %2570 = vst [vmem:[#allocation2 + $0x5e0] sm:$0xf] %v2552
  %v2571 = vld [vmem:[%s0] sm:$0xff]
  %v2572 = vld [vmem:[%s0 + $0x8] sm:$0xff]
  %v2573 = vld [vmem:[%s0 + $0x10] sm:$0xff]
  %v2574 = vld [vmem:[%s0 + $0x18] sm:$0xff]
  %v2575 = vld [vmem:[%s0 + $0x20] sm:$0xff]
  %v2581 = vcombine.low %v2571, %v2571
  %v2582 = vcombine.low %v2572, %v2572
  %v2583 = vcombine.low %v2573, %v2573
  %v2584 = vcombine.low %v2574, %v2574
  %v2585 = vcombine.low %v2575, %v2575
  %2586 = vrot.lane.b32.xlu0 %v2581, 27
  %v2587 = vpop.permute.xlu0 %2586
  %2588 = vrot.lane.b32.xlu0 %v2571, 27
  %v2589 = vpop.permute.xlu0 %2588
  %2590 = vrot.lane.b32.xlu0 %v2582, 27
  %v2591 = vpop.permute.xlu0 %2590
  %2592 = vrot.lane.b32.xlu0 %v2572, 27
  %v2593 = vpop.permute.xlu0 %2592
  %2594 = vrot.lane.b32.xlu0 %v2583, 27
  %v2595 = vpop.permute.xlu0 %2594
  %2596 = vrot.lane.b32.xlu0 %v2573, 27
  %v2597 = vpop.permute.xlu0 %2596
  %2598 = vrot.lane.b32.xlu0 %v2584, 27
  %v2599 = vpop.permute.xlu0 %2598
  %2600 = vrot.lane.b32.xlu0 %v2574, 27
  %v2601 = vpop.permute.xlu0 %2600
  %2602 = vrot.lane.b32.xlu0 %v2585, 27
  %v2603 = vpop.permute.xlu0 %2602
  %2604 = vrot.lane.b32.xlu0 %v2575, 27
  %v2605 = vpop.permute.xlu0 %2604
  %vm2606 = vcmask 220160
  %v2607 = vsel %vm2606, %v2587, %v2589
  %v2608 = vsel %vm2606, %v2589, %v2591
  %v2609 = vsel %vm2606, %v2591, %v2593
  %v2610 = vsel %vm2606, %v2593, %v2595
  %v2611 = vsel %vm2606, %v2595, %v2597
  %v2612 = vsel %vm2606, %v2597, %v2599
  %v2613 = vsel %vm2606, %v2599, %v2601
  %v2614 = vsel %vm2606, %v2601, %v2603
  %v2615 = vsel %vm2606, %v2603, %v2605
  %2625 = vst [vmem:[#allocation2 + $0x5a0] sm:$0xf0] %v2607
  %2626 = vst [vmem:[#allocation2 + $0x5a8] sm:$0xf0] %v2608
  %2627 = vst [vmem:[#allocation2 + $0x5b0] sm:$0xf0] %v2609
  %2628 = vst [vmem:[#allocation2 + $0x5b8] sm:$0xf0] %v2610
  %2629 = vst [vmem:[#allocation2 + $0x5c0] sm:$0xf0] %v2611
  %2630 = vst [vmem:[#allocation2 + $0x5c8] sm:$0xf0] %v2612
  %2631 = vst [vmem:[#allocation2 + $0x5d0] sm:$0xf0] %v2613
  %2632 = vst [vmem:[#allocation2 + $0x5d8] sm:$0xf0] %v2614
  %2633 = vst [vmem:[#allocation2 + $0x5e0] sm:$0xf0] %v2615
  %v2634 = vld [vmem:[%s0] sm:$0xff]
  %v2635 = vld [vmem:[%s0 + $0x8] sm:$0xff]
  %v2636 = vld [vmem:[%s0 + $0x10] sm:$0xff]
  %v2637 = vld [vmem:[%s0 + $0x18] sm:$0xff]
  %v2638 = vld [vmem:[%s0 + $0x20] sm:$0xff]
  %v2644 = vcombine.high %v2634, %v2634
  %v2645 = vcombine.high %v2635, %v2635
  %v2646 = vcombine.high %v2636, %v2636
  %v2647 = vcombine.high %v2637, %v2637
  %v2648 = vcombine.high %v2638, %v2638
  %2649 = vrot.lane.b32.xlu0 %v2634, 26
  %v2650 = vpop.permute.xlu0 %2649
  %2651 = vrot.lane.b32.xlu0 %v2644, 26
  %v2652 = vpop.permute.xlu0 %2651
  %2653 = vrot.lane.b32.xlu0 %v2635, 26
  %v2654 = vpop.permute.xlu0 %2653
  %2655 = vrot.lane.b32.xlu0 %v2645, 26
  %v2656 = vpop.permute.xlu0 %2655
  %2657 = vrot.lane.b32.xlu0 %v2636, 26
  %v2658 = vpop.permute.xlu0 %2657
  %2659 = vrot.lane.b32.xlu0 %v2646, 26
  %v2660 = vpop.permute.xlu0 %2659
  %2661 = vrot.lane.b32.xlu0 %v2637, 26
  %v2662 = vpop.permute.xlu0 %2661
  %2663 = vrot.lane.b32.xlu0 %v2647, 26
  %v2664 = vpop.permute.xlu0 %2663
  %2665 = vrot.lane.b32.xlu0 %v2638, 26
  %v2666 = vpop.permute.xlu0 %2665
  %2667 = vrot.lane.b32.xlu0 %v2648, 26
  %v2668 = vpop.permute.xlu0 %2667
  %vm2669 = vcmask 211968
  %v2670 = vsel %vm2669, %v2650, %v2652
  %v2671 = vsel %vm2669, %v2652, %v2654
  %v2672 = vsel %vm2669, %v2654, %v2656
  %v2673 = vsel %vm2669, %v2656, %v2658
  %v2674 = vsel %vm2669, %v2658, %v2660
  %v2675 = vsel %vm2669, %v2660, %v2662
  %v2676 = vsel %vm2669, %v2662, %v2664
  %v2677 = vsel %vm2669, %v2664, %v2666
  %v2678 = vsel %vm2669, %v2666, %v2668
  %2688 = vst [vmem:[#allocation2 + $0x5e8] sm:$0xf] %v2670
  %2689 = vst [vmem:[#allocation2 + $0x5f0] sm:$0xf] %v2671
  %2690 = vst [vmem:[#allocation2 + $0x5f8] sm:$0xf] %v2672
  %2691 = vst [vmem:[#allocation2 + $0x600] sm:$0xf] %v2673
  %2692 = vst [vmem:[#allocation2 + $0x608] sm:$0xf] %v2674
  %2693 = vst [vmem:[#allocation2 + $0x610] sm:$0xf] %v2675
  %2694 = vst [vmem:[#allocation2 + $0x618] sm:$0xf] %v2676
  %2695 = vst [vmem:[#allocation2 + $0x620] sm:$0xf] %v2677
  %2696 = vst [vmem:[#allocation2 + $0x628] sm:$0xf] %v2678
  %v2697 = vld [vmem:[%s0] sm:$0xff]
  %v2698 = vld [vmem:[%s0 + $0x8] sm:$0xff]
  %v2699 = vld [vmem:[%s0 + $0x10] sm:$0xff]
  %v2700 = vld [vmem:[%s0 + $0x18] sm:$0xff]
  %v2701 = vld [vmem:[%s0 + $0x20] sm:$0xff]
  %v2707 = vcombine.low %v2697, %v2697
  %v2708 = vcombine.low %v2698, %v2698
  %v2709 = vcombine.low %v2699, %v2699
  %v2710 = vcombine.low %v2700, %v2700
  %v2711 = vcombine.low %v2701, %v2701
  %2712 = vrot.lane.b32.xlu0 %v2707, 25
  %v2713 = vpop.permute.xlu0 %2712
  %2714 = vrot.lane.b32.xlu0 %v2697, 25
  %v2715 = vpop.permute.xlu0 %2714
  %2716 = vrot.lane.b32.xlu0 %v2708, 25
  %v2717 = vpop.permute.xlu0 %2716
  %2718 = vrot.lane.b32.xlu0 %v2698, 25
  %v2719 = vpop.permute.xlu0 %2718
  %2720 = vrot.lane.b32.xlu0 %v2709, 25
  %v2721 = vpop.permute.xlu0 %2720
  %2722 = vrot.lane.b32.xlu0 %v2699, 25
  %v2723 = vpop.permute.xlu0 %2722
  %2724 = vrot.lane.b32.xlu0 %v2710, 25
  %v2725 = vpop.permute.xlu0 %2724
  %2726 = vrot.lane.b32.xlu0 %v2700, 25
  %v2727 = vpop.permute.xlu0 %2726
  %2728 = vrot.lane.b32.xlu0 %v2711, 25
  %v2729 = vpop.permute.xlu0 %2728
  %2730 = vrot.lane.b32.xlu0 %v2701, 25
  %v2731 = vpop.permute.xlu0 %2730
  %vm2732 = vcmask 203776
  %v2733 = vsel %vm2732, %v2713, %v2715
  %v2734 = vsel %vm2732, %v2715, %v2717
  %v2735 = vsel %vm2732, %v2717, %v2719
  %v2736 = vsel %vm2732, %v2719, %v2721
  %v2737 = vsel %vm2732, %v2721, %v2723
  %v2738 = vsel %vm2732, %v2723, %v2725
  %v2739 = vsel %vm2732, %v2725, %v2727
  %v2740 = vsel %vm2732, %v2727, %v2729
  %v2741 = vsel %vm2732, %v2729, %v2731
  %2751 = vst [vmem:[#allocation2 + $0x5e8] sm:$0xf0] %v2733
  %2752 = vst [vmem:[#allocation2 + $0x5f0] sm:$0xf0] %v2734
  %2753 = vst [vmem:[#allocation2 + $0x5f8] sm:$0xf0] %v2735
  %2754 = vst [vmem:[#allocation2 + $0x600] sm:$0xf0] %v2736
  %2755 = vst [vmem:[#allocation2 + $0x608] sm:$0xf0] %v2737
  %2756 = vst [vmem:[#allocation2 + $0x610] sm:$0xf0] %v2738
  %2757 = vst [vmem:[#allocation2 + $0x618] sm:$0xf0] %v2739
  %2758 = vst [vmem:[#allocation2 + $0x620] sm:$0xf0] %v2740
  %2759 = vst [vmem:[#allocation2 + $0x628] sm:$0xf0] %v2741
  %v2760 = vld [vmem:[%s0] sm:$0xff]
  %v2761 = vld [vmem:[%s0 + $0x8] sm:$0xff]
  %v2762 = vld [vmem:[%s0 + $0x10] sm:$0xff]
  %v2763 = vld [vmem:[%s0 + $0x18] sm:$0xff]
  %v2764 = vld [vmem:[%s0 + $0x20] sm:$0xff]
  %v2770 = vcombine.high %v2760, %v2760
  %v2771 = vcombine.high %v2761, %v2761
  %v2772 = vcombine.high %v2762, %v2762
  %v2773 = vcombine.high %v2763, %v2763
  %v2774 = vcombine.high %v2764, %v2764
  %2775 = vrot.lane.b32.xlu0 %v2760, 24
  %v2776 = vpop.permute.xlu0 %2775
  %2777 = vrot.lane.b32.xlu0 %v2770, 24
  %v2778 = vpop.permute.xlu0 %2777
  %2779 = vrot.lane.b32.xlu0 %v2761, 24
  %v2780 = vpop.permute.xlu0 %2779
  %2781 = vrot.lane.b32.xlu0 %v2771, 24
  %v2782 = vpop.permute.xlu0 %2781
  %2783 = vrot.lane.b32.xlu0 %v2762, 24
  %v2784 = vpop.permute.xlu0 %2783
  %2785 = vrot.lane.b32.xlu0 %v2772, 24
  %v2786 = vpop.permute.xlu0 %2785
  %2787 = vrot.lane.b32.xlu0 %v2763, 24
  %v2788 = vpop.permute.xlu0 %2787
  %2789 = vrot.lane.b32.xlu0 %v2773, 24
  %v2790 = vpop.permute.xlu0 %2789
  %2791 = vrot.lane.b32.xlu0 %v2764, 24
  %v2792 = vpop.permute.xlu0 %2791
  %2793 = vrot.lane.b32.xlu0 %v2774, 24
  %v2794 = vpop.permute.xlu0 %2793
  %vm2795 = vcmask 195584
  %v2796 = vsel %vm2795, %v2776, %v2778
  %v2797 = vsel %vm2795, %v2778, %v2780
  %v2798 = vsel %vm2795, %v2780, %v2782
  %v2799 = vsel %vm2795, %v2782, %v2784
  %v2800 = vsel %vm2795, %v2784, %v2786
  %v2801 = vsel %vm2795, %v2786, %v2788
  %v2802 = vsel %vm2795, %v2788, %v2790
  %v2803 = vsel %vm2795, %v2790, %v2792
  %v2804 = vsel %vm2795, %v2792, %v2794
  %2814 = vst [vmem:[#allocation2 + $0x630] sm:$0xf] %v2796
  %2815 = vst [vmem:[#allocation2 + $0x638] sm:$0xf] %v2797
  %2816 = vst [vmem:[#allocation2 + $0x640] sm:$0xf] %v2798
  %2817 = vst [vmem:[#allocation2 + $0x648] sm:$0xf] %v2799
  %2818 = vst [vmem:[#allocation2 + $0x650] sm:$0xf] %v2800
  %2819 = vst [vmem:[#allocation2 + $0x658] sm:$0xf] %v2801
  %2820 = vst [vmem:[#allocation2 + $0x660] sm:$0xf] %v2802
  %2821 = vst [vmem:[#allocation2 + $0x668] sm:$0xf] %v2803
  %2822 = vst [vmem:[#allocation2 + $0x670] sm:$0xf] %v2804
  %v2823 = vld [vmem:[%s0] sm:$0xff]
  %v2824 = vld [vmem:[%s0 + $0x8] sm:$0xff]
  %v2825 = vld [vmem:[%s0 + $0x10] sm:$0xff]
  %v2826 = vld [vmem:[%s0 + $0x18] sm:$0xff]
  %v2827 = vld [vmem:[%s0 + $0x20] sm:$0xff]
  %v2833 = vcombine.low %v2823, %v2823
  %v2834 = vcombine.low %v2824, %v2824
  %v2835 = vcombine.low %v2825, %v2825
  %v2836 = vcombine.low %v2826, %v2826
  %v2837 = vcombine.low %v2827, %v2827
  %2838 = vrot.lane.b32.xlu0 %v2833, 8
  %v2839 = vpop.permute.xlu0 %2838
  %2840 = vrot.lane.b32.xlu0 %v2823, 8
  %v2841 = vpop.permute.xlu0 %2840
  %2842 = vrot.lane.b32.xlu0 %v2834, 8
  %v2843 = vpop.permute.xlu0 %2842
  %2844 = vrot.lane.b32.xlu0 %v2824, 8
  %v2845 = vpop.permute.xlu0 %2844
  %2846 = vrot.lane.b32.xlu0 %v2835, 8
  %v2847 = vpop.permute.xlu0 %2846
  %2848 = vrot.lane.b32.xlu0 %v2825, 8
  %v2849 = vpop.permute.xlu0 %2848
  %2850 = vrot.lane.b32.xlu0 %v2836, 8
  %v2851 = vpop.permute.xlu0 %2850
  %2852 = vrot.lane.b32.xlu0 %v2826, 8
  %v2853 = vpop.permute.xlu0 %2852
  %2854 = vrot.lane.b32.xlu0 %v2837, 8
  %v2855 = vpop.permute.xlu0 %2854
  %2856 = vrot.lane.b32.xlu0 %v2827, 8
  %v2857 = vpop.permute.xlu0 %2856
  %vm2858 = vcmask 64512
  %v2859 = vsel %vm2858, %v2839, %v2841
  %v2860 = vsel %vm2858, %v2841, %v2843
  %v2861 = vsel %vm2858, %v2843, %v2845
  %v2862 = vsel %vm2858, %v2845, %v2847
  %v2863 = vsel %vm2858, %v2847, %v2849
  %v2864 = vsel %vm2858, %v2849, %v2851
  %v2865 = vsel %vm2858, %v2851, %v2853
  %v2866 = vsel %vm2858, %v2853, %v2855
  %v2867 = vsel %vm2858, %v2855, %v2857
  %2877 = vst [vmem:[#allocation2 + $0x630] sm:$0xf0] %v2859
  %2878 = vst [vmem:[#allocation2 + $0x638] sm:$0xf0] %v2860
  %2879 = vst [vmem:[#allocation2 + $0x640] sm:$0xf0] %v2861
  %2880 = vst [vmem:[#allocation2 + $0x648] sm:$0xf0] %v2862
  %2881 = vst [vmem:[#allocation2 + $0x650] sm:$0xf0] %v2863
  %2882 = vst [vmem:[#allocation2 + $0x658] sm:$0xf0] %v2864
  %2883 = vst [vmem:[#allocation2 + $0x660] sm:$0xf0] %v2865
  %2884 = vst [vmem:[#allocation2 + $0x668] sm:$0xf0] %v2866
  %2885 = vst [vmem:[#allocation2 + $0x670] sm:$0xf0] %v2867
  %v2886 = vld [vmem:[%s0] sm:$0xff]
  %v2887 = vld [vmem:[%s0 + $0x8] sm:$0xff]
  %v2888 = vld [vmem:[%s0 + $0x10] sm:$0xff]
  %v2889 = vld [vmem:[%s0 + $0x18] sm:$0xff]
  %v2890 = vld [vmem:[%s0 + $0x20] sm:$0xff]
  %v2896 = vcombine.high %v2886, %v2886
  %v2897 = vcombine.high %v2887, %v2887
  %v2898 = vcombine.high %v2888, %v2888
  %v2899 = vcombine.high %v2889, %v2889
  %v2900 = vcombine.high %v2890, %v2890
  %2901 = vrot.lane.b32.xlu0 %v2886, 7
  %v2902 = vpop.permute.xlu0 %2901
  %2903 = vrot.lane.b32.xlu0 %v2896, 7
  %v2904 = vpop.permute.xlu0 %2903
  %2905 = vrot.lane.b32.xlu0 %v2887, 7
  %v2906 = vpop.permute.xlu0 %2905
  %2907 = vrot.lane.b32.xlu0 %v2897, 7
  %v2908 = vpop.permute.xlu0 %2907
  %2909 = vrot.lane.b32.xlu0 %v2888, 7
  %v2910 = vpop.permute.xlu0 %2909
  %2911 = vrot.lane.b32.xlu0 %v2898, 7
  %v2912 = vpop.permute.xlu0 %2911
  %2913 = vrot.lane.b32.xlu0 %v2889, 7
  %v2914 = vpop.permute.xlu0 %2913
  %2915 = vrot.lane.b32.xlu0 %v2899, 7
  %v2916 = vpop.permute.xlu0 %2915
  %2917 = vrot.lane.b32.xlu0 %v2890, 7
  %v2918 = vpop.permute.xlu0 %2917
  %2919 = vrot.lane.b32.xlu0 %v2900, 7
  %v2920 = vpop.permute.xlu0 %2919
  %vm2921 = vcmask 56320
  %v2922 = vsel %vm2921, %v2902, %v2904
  %v2923 = vsel %vm2921, %v2904, %v2906
  %v2924 = vsel %vm2921, %v2906, %v2908
  %v2925 = vsel %vm2921, %v2908, %v2910
  %v2926 = vsel %vm2921, %v2910, %v2912
  %v2927 = vsel %vm2921, %v2912, %v2914
  %v2928 = vsel %vm2921, %v2914, %v2916
  %v2929 = vsel %vm2921, %v2916, %v2918
  %v2930 = vsel %vm2921, %v2918, %v2920
  %2940 = vst [vmem:[#allocation2 + $0x678] sm:$0xf] %v2922
  %2941 = vst [vmem:[#allocation2 + $0x680] sm:$0xf] %v2923
  %2942 = vst [vmem:[#allocation2 + $0x688] sm:$0xf] %v2924
  %2943 = vst [vmem:[#allocation2 + $0x690] sm:$0xf] %v2925
  %2944 = vst [vmem:[#allocation2 + $0x698] sm:$0xf] %v2926
  %2945 = vst [vmem:[#allocation2 + $0x6a0] sm:$0xf] %v2927
  %2946 = vst [vmem:[#allocation2 + $0x6a8] sm:$0xf] %v2928
  %2947 = vst [vmem:[#allocation2 + $0x6b0] sm:$0xf] %v2929
  %2948 = vst [vmem:[#allocation2 + $0x6b8] sm:$0xf] %v2930
  %v2949 = vld [vmem:[%s0] sm:$0xff]
  %v2950 = vld [vmem:[%s0 + $0x8] sm:$0xff]
  %v2951 = vld [vmem:[%s0 + $0x10] sm:$0xff]
  %v2952 = vld [vmem:[%s0 + $0x18] sm:$0xff]
  %v2953 = vld [vmem:[%s0 + $0x20] sm:$0xff]
  %v2959 = vcombine.low %v2949, %v2949
  %v2960 = vcombine.low %v2950, %v2950
  %v2961 = vcombine.low %v2951, %v2951
  %v2962 = vcombine.low %v2952, %v2952
  %v2963 = vcombine.low %v2953, %v2953
  %2964 = vrot.lane.b32.xlu0 %v2959, 6
  %v2965 = vpop.permute.xlu0 %2964
  %2966 = vrot.lane.b32.xlu0 %v2949, 6
  %v2967 = vpop.permute.xlu0 %2966
  %2968 = vrot.lane.b32.xlu0 %v2960, 6
  %v2969 = vpop.permute.xlu0 %2968
  %2970 = vrot.lane.b32.xlu0 %v2950, 6
  %v2971 = vpop.permute.xlu0 %2970
  %2972 = vrot.lane.b32.xlu0 %v2961, 6
  %v2973 = vpop.permute.xlu0 %2972
  %2974 = vrot.lane.b32.xlu0 %v2951, 6
  %v2975 = vpop.permute.xlu0 %2974
  %2976 = vrot.lane.b32.xlu0 %v2962, 6
  %v2977 = vpop.permute.xlu0 %2976
  %2978 = vrot.lane.b32.xlu0 %v2952, 6
  %v2979 = vpop.permute.xlu0 %2978
  %2980 = vrot.lane.b32.xlu0 %v2963, 6
  %v2981 = vpop.permute.xlu0 %2980
  %2982 = vrot.lane.b32.xlu0 %v2953, 6
  %v2983 = vpop.permute.xlu0 %2982
  %vm2984 = vcmask 48128
  %v2985 = vsel %vm2984, %v2965, %v2967
  %v2986 = vsel %vm2984, %v2967, %v2969
  %v2987 = vsel %vm2984, %v2969, %v2971
  %v2988 = vsel %vm2984, %v2971, %v2973
  %v2989 = vsel %vm2984, %v2973, %v2975
  %v2990 = vsel %vm2984, %v2975, %v2977
  %v2991 = vsel %vm2984, %v2977, %v2979
  %v2992 = vsel %vm2984, %v2979, %v2981
  %v2993 = vsel %vm2984, %v2981, %v2983
  %3003 = vst [vmem:[#allocation2 + $0x678] sm:$0xf0] %v2985
  %3004 = vst [vmem:[#allocation2 + $0x680] sm:$0xf0] %v2986
  %3005 = vst [vmem:[#allocation2 + $0x688] sm:$0xf0] %v2987
  %3006 = vst [vmem:[#allocation2 + $0x690] sm:$0xf0] %v2988
  %3007 = vst [vmem:[#allocation2 + $0x698] sm:$0xf0] %v2989
  %3008 = vst [vmem:[#allocation2 + $0x6a0] sm:$0xf0] %v2990
  %3009 = vst [vmem:[#allocation2 + $0x6a8] sm:$0xf0] %v2991
  %3010 = vst [vmem:[#allocation2 + $0x6b0] sm:$0xf0] %v2992
  %3011 = vst [vmem:[#allocation2 + $0x6b8] sm:$0xf0] %v2993
  %v3012 = vld [vmem:[%s0] sm:$0xff]
  %v3013 = vld [vmem:[%s0 + $0x8] sm:$0xff]
  %v3014 = vld [vmem:[%s0 + $0x10] sm:$0xff]
  %v3015 = vld [vmem:[%s0 + $0x18] sm:$0xff]
  %v3016 = vld [vmem:[%s0 + $0x20] sm:$0xff]
  %v3022 = vcombine.high %v3012, %v3012
  %v3023 = vcombine.high %v3013, %v3013
  %v3024 = vcombine.high %v3014, %v3014
  %v3025 = vcombine.high %v3015, %v3015
  %v3026 = vcombine.high %v3016, %v3016
  %3027 = vrot.lane.b32.xlu0 %v3012, 5
  %v3028 = vpop.permute.xlu0 %3027
  %3029 = vrot.lane.b32.xlu0 %v3022, 5
  %v3030 = vpop.permute.xlu0 %3029
  %3031 = vrot.lane.b32.xlu0 %v3013, 5
  %v3032 = vpop.permute.xlu0 %3031
  %3033 = vrot.lane.b32.xlu0 %v3023, 5
  %v3034 = vpop.permute.xlu0 %3033
  %3035 = vrot.lane.b32.xlu0 %v3014, 5
  %v3036 = vpop.permute.xlu0 %3035
  %3037 = vrot.lane.b32.xlu0 %v3024, 5
  %v3038 = vpop.permute.xlu0 %3037
  %3039 = vrot.lane.b32.xlu0 %v3015, 5
  %v3040 = vpop.permute.xlu0 %3039
  %3041 = vrot.lane.b32.xlu0 %v3025, 5
  %v3042 = vpop.permute.xlu0 %3041
  %3043 = vrot.lane.b32.xlu0 %v3016, 5
  %v3044 = vpop.permute.xlu0 %3043
  %3045 = vrot.lane.b32.xlu0 %v3026, 5
  %v3046 = vpop.permute.xlu0 %3045
  %vm3047 = vcmask 39936
  %v3048 = vsel %vm3047, %v3028, %v3030
  %v3049 = vsel %vm3047, %v3030, %v3032
  %v3050 = vsel %vm3047, %v3032, %v3034
  %v3051 = vsel %vm3047, %v3034, %v3036
  %v3052 = vsel %vm3047, %v3036, %v3038
  %v3053 = vsel %vm3047, %v3038, %v3040
  %v3054 = vsel %vm3047, %v3040, %v3042
  %v3055 = vsel %vm3047, %v3042, %v3044
  %v3056 = vsel %vm3047, %v3044, %v3046
  %3066 = vst [vmem:[#allocation2 + $0x6c0] sm:$0xf] %v3048
  %3067 = vst [vmem:[#allocation2 + $0x6c8] sm:$0xf] %v3049
  %3068 = vst [vmem:[#allocation2 + $0x6d0] sm:$0xf] %v3050
  %3069 = vst [vmem:[#allocation2 + $0x6d8] sm:$0xf] %v3051
  %3070 = vst [vmem:[#allocation2 + $0x6e0] sm:$0xf] %v3052
  %3071 = vst [vmem:[#allocation2 + $0x6e8] sm:$0xf] %v3053
  %3072 = vst [vmem:[#allocation2 + $0x6f0] sm:$0xf] %v3054
  %3073 = vst [vmem:[#allocation2 + $0x6f8] sm:$0xf] %v3055
  %3074 = vst [vmem:[#allocation2 + $0x700] sm:$0xf] %v3056
  %v3075 = vld [vmem:[%s0] sm:$0xff]
  %v3076 = vld [vmem:[%s0 + $0x8] sm:$0xff]
  %v3077 = vld [vmem:[%s0 + $0x10] sm:$0xff]
  %v3078 = vld [vmem:[%s0 + $0x18] sm:$0xff]
  %v3079 = vld [vmem:[%s0 + $0x20] sm:$0xff]
  %v3085 = vcombine.low %v3075, %v3075
  %v3086 = vcombine.low %v3076, %v3076
  %v3087 = vcombine.low %v3077, %v3077
  %v3088 = vcombine.low %v3078, %v3078
  %v3089 = vcombine.low %v3079, %v3079
  %3090 = vrot.lane.b32.xlu0 %v3085, 4
  %v3091 = vpop.permute.xlu0 %3090
  %3092 = vrot.lane.b32.xlu0 %v3075, 4
  %v3093 = vpop.permute.xlu0 %3092
  %3094 = vrot.lane.b32.xlu0 %v3086, 4
  %v3095 = vpop.permute.xlu0 %3094
  %3096 = vrot.lane.b32.xlu0 %v3076, 4
  %v3097 = vpop.permute.xlu0 %3096
  %3098 = vrot.lane.b32.xlu0 %v3087, 4
  %v3099 = vpop.permute.xlu0 %3098
  %3100 = vrot.lane.b32.xlu0 %v3077, 4
  %v3101 = vpop.permute.xlu0 %3100
  %3102 = vrot.lane.b32.xlu0 %v3088, 4
  %v3103 = vpop.permute.xlu0 %3102
  %3104 = vrot.lane.b32.xlu0 %v3078, 4
  %v3105 = vpop.permute.xlu0 %3104
  %3106 = vrot.lane.b32.xlu0 %v3089, 4
  %v3107 = vpop.permute.xlu0 %3106
  %3108 = vrot.lane.b32.xlu0 %v3079, 4
  %v3109 = vpop.permute.xlu0 %3108
  %vm3110 = vcmask 31744
  %v3111 = vsel %vm3110, %v3091, %v3093
  %v3112 = vsel %vm3110, %v3093, %v3095
  %v3113 = vsel %vm3110, %v3095, %v3097
  %v3114 = vsel %vm3110, %v3097, %v3099
  %v3115 = vsel %vm3110, %v3099, %v3101
  %v3116 = vsel %vm3110, %v3101, %v3103
  %v3117 = vsel %vm3110, %v3103, %v3105
  %v3118 = vsel %vm3110, %v3105, %v3107
  %v3119 = vsel %vm3110, %v3107, %v3109
  %3129 = vst [vmem:[#allocation2 + $0x6c0] sm:$0xf0] %v3111
  %3130 = vst [vmem:[#allocation2 + $0x6c8] sm:$0xf0] %v3112
  %3131 = vst [vmem:[#allocation2 + $0x6d0] sm:$0xf0] %v3113
  %3132 = vst [vmem:[#allocation2 + $0x6d8] sm:$0xf0] %v3114
  %3133 = vst [vmem:[#allocation2 + $0x6e0] sm:$0xf0] %v3115
  %3134 = vst [vmem:[#allocation2 + $0x6e8] sm:$0xf0] %v3116
  %3135 = vst [vmem:[#allocation2 + $0x6f0] sm:$0xf0] %v3117
  %3136 = vst [vmem:[#allocation2 + $0x6f8] sm:$0xf0] %v3118
  %3137 = vst [vmem:[#allocation2 + $0x700] sm:$0xf0] %v3119
  %v3138 = vld [vmem:[%s0] sm:$0xff]
  %v3139 = vld [vmem:[%s0 + $0x8] sm:$0xff]
  %v3140 = vld [vmem:[%s0 + $0x10] sm:$0xff]
  %v3141 = vld [vmem:[%s0 + $0x18] sm:$0xff]
  %v3142 = vld [vmem:[%s0 + $0x20] sm:$0xff]
  %v3148 = vcombine.high %v3138, %v3138
  %v3149 = vcombine.high %v3139, %v3139
  %v3150 = vcombine.high %v3140, %v3140
  %v3151 = vcombine.high %v3141, %v3141
  %v3152 = vcombine.high %v3142, %v3142
  %3153 = vrot.lane.b32.xlu0 %v3138, 3
  %v3154 = vpop.permute.xlu0 %3153
  %3155 = vrot.lane.b32.xlu0 %v3148, 3
  %v3156 = vpop.permute.xlu0 %3155
  %3157 = vrot.lane.b32.xlu0 %v3139, 3
  %v3158 = vpop.permute.xlu0 %3157
  %3159 = vrot.lane.b32.xlu0 %v3149, 3
  %v3160 = vpop.permute.xlu0 %3159
  %3161 = vrot.lane.b32.xlu0 %v3140, 3
  %v3162 = vpop.permute.xlu0 %3161
  %3163 = vrot.lane.b32.xlu0 %v3150, 3
  %v3164 = vpop.permute.xlu0 %3163
  %3165 = vrot.lane.b32.xlu0 %v3141, 3
  %v3166 = vpop.permute.xlu0 %3165
  %3167 = vrot.lane.b32.xlu0 %v3151, 3
  %v3168 = vpop.permute.xlu0 %3167
  %3169 = vrot.lane.b32.xlu0 %v3142, 3
  %v3170 = vpop.permute.xlu0 %3169
  %3171 = vrot.lane.b32.xlu0 %v3152, 3
  %v3172 = vpop.permute.xlu0 %3171
  %vm3173 = vcmask 23552
  %v3174 = vsel %vm3173, %v3154, %v3156
  %v3175 = vsel %vm3173, %v3156, %v3158
  %v3176 = vsel %vm3173, %v3158, %v3160
  %v3177 = vsel %vm3173, %v3160, %v3162
  %v3178 = vsel %vm3173, %v3162, %v3164
  %v3179 = vsel %vm3173, %v3164, %v3166
  %v3180 = vsel %vm3173, %v3166, %v3168
  %v3181 = vsel %vm3173, %v3168, %v3170
  %v3182 = vsel %vm3173, %v3170, %v3172
  %3192 = vst [vmem:[#allocation2 + $0x708] sm:$0xf] %v3174
  %3193 = vst [vmem:[#allocation2 + $0x710] sm:$0xf] %v3175
  %3194 = vst [vmem:[#allocation2 + $0x718] sm:$0xf] %v3176
  %3195 = vst [vmem:[#allocation2 + $0x720] sm:$0xf] %v3177
  %3196 = vst [vmem:[#allocation2 + $0x728] sm:$0xf] %v3178
  %3197 = vst [vmem:[#allocation2 + $0x730] sm:$0xf] %v3179
  %3198 = vst [vmem:[#allocation2 + $0x738] sm:$0xf] %v3180
  %3199 = vst [vmem:[#allocation2 + $0x740] sm:$0xf] %v3181
  %3200 = vst [vmem:[#allocation2 + $0x748] sm:$0xf] %v3182
  %v3201 = vld [vmem:[%s0] sm:$0xff]
  %v3202 = vld [vmem:[%s0 + $0x8] sm:$0xff]
  %v3203 = vld [vmem:[%s0 + $0x10] sm:$0xff]
  %v3204 = vld [vmem:[%s0 + $0x18] sm:$0xff]
  %v3205 = vld [vmem:[%s0 + $0x20] sm:$0xff]
  %v3211 = vcombine.low %v3201, %v3201
  %v3212 = vcombine.low %v3202, %v3202
  %v3213 = vcombine.low %v3203, %v3203
  %v3214 = vcombine.low %v3204, %v3204
  %v3215 = vcombine.low %v3205, %v3205
  %3216 = vrot.lane.b32.xlu0 %v3211, 2
  %v3217 = vpop.permute.xlu0 %3216
  %3218 = vrot.lane.b32.xlu0 %v3201, 2
  %v3219 = vpop.permute.xlu0 %3218
  %3220 = vrot.lane.b32.xlu0 %v3212, 2
  %v3221 = vpop.permute.xlu0 %3220
  %3222 = vrot.lane.b32.xlu0 %v3202, 2
  %v3223 = vpop.permute.xlu0 %3222
  %3224 = vrot.lane.b32.xlu0 %v3213, 2
  %v3225 = vpop.permute.xlu0 %3224
  %3226 = vrot.lane.b32.xlu0 %v3203, 2
  %v3227 = vpop.permute.xlu0 %3226
  %3228 = vrot.lane.b32.xlu0 %v3214, 2
  %v3229 = vpop.permute.xlu0 %3228
  %3230 = vrot.lane.b32.xlu0 %v3204, 2
  %v3231 = vpop.permute.xlu0 %3230
  %3232 = vrot.lane.b32.xlu0 %v3215, 2
  %v3233 = vpop.permute.xlu0 %3232
  %3234 = vrot.lane.b32.xlu0 %v3205, 2
  %v3235 = vpop.permute.xlu0 %3234
  %vm3236 = vcmask 15360
  %v3237 = vsel %vm3236, %v3217, %v3219
  %v3238 = vsel %vm3236, %v3219, %v3221
  %v3239 = vsel %vm3236, %v3221, %v3223
  %v3240 = vsel %vm3236, %v3223, %v3225
  %v3241 = vsel %vm3236, %v3225, %v3227
  %v3242 = vsel %vm3236, %v3227, %v3229
  %v3243 = vsel %vm3236, %v3229, %v3231
  %v3244 = vsel %vm3236, %v3231, %v3233
  %v3245 = vsel %vm3236, %v3233, %v3235
  %3255 = vst [vmem:[#allocation2 + $0x708] sm:$0xf0] %v3237
  %3256 = vst [vmem:[#allocation2 + $0x710] sm:$0xf0] %v3238
  %3257 = vst [vmem:[#allocation2 + $0x718] sm:$0xf0] %v3239
  %3258 = vst [vmem:[#allocation2 + $0x720] sm:$0xf0] %v3240
  %3259 = vst [vmem:[#allocation2 + $0x728] sm:$0xf0] %v3241
  %3260 = vst [vmem:[#allocation2 + $0x730] sm:$0xf0] %v3242
  %3261 = vst [vmem:[#allocation2 + $0x738] sm:$0xf0] %v3243
  %3262 = vst [vmem:[#allocation2 + $0x740] sm:$0xf0] %v3244
  %3263 = vst [vmem:[#allocation2 + $0x748] sm:$0xf0] %v3245
  %v3264 = vld [vmem:[%s0] sm:$0xff]
  %v3265 = vld [vmem:[%s0 + $0x8] sm:$0xff]
  %v3266 = vld [vmem:[%s0 + $0x10] sm:$0xff]
  %v3267 = vld [vmem:[%s0 + $0x18] sm:$0xff]
  %v3268 = vld [vmem:[%s0 + $0x20] sm:$0xff]
  %v3274 = vcombine.high %v3264, %v3264
  %v3275 = vcombine.high %v3265, %v3265
  %v3276 = vcombine.high %v3266, %v3266
  %v3277 = vcombine.high %v3267, %v3267
  %v3278 = vcombine.high %v3268, %v3268
  %3279 = vrot.lane.b32.xlu0 %v3264, 1
  %v3280 = vpop.permute.xlu0 %3279
  %3281 = vrot.lane.b32.xlu0 %v3274, 1
  %v3282 = vpop.permute.xlu0 %3281
  %3283 = vrot.lane.b32.xlu0 %v3265, 1
  %v3284 = vpop.permute.xlu0 %3283
  %3285 = vrot.lane.b32.xlu0 %v3275, 1
  %v3286 = vpop.permute.xlu0 %3285
  %3287 = vrot.lane.b32.xlu0 %v3266, 1
  %v3288 = vpop.permute.xlu0 %3287
  %3289 = vrot.lane.b32.xlu0 %v3276, 1
  %v3290 = vpop.permute.xlu0 %3289
  %3291 = vrot.lane.b32.xlu0 %v3267, 1
  %v3292 = vpop.permute.xlu0 %3291
  %3293 = vrot.lane.b32.xlu0 %v3277, 1
  %v3294 = vpop.permute.xlu0 %3293
  %3295 = vrot.lane.b32.xlu0 %v3268, 1
  %v3296 = vpop.permute.xlu0 %3295
  %3297 = vrot.lane.b32.xlu0 %v3278, 1
  %v3298 = vpop.permute.xlu0 %3297
  %vm3299 = vcmask 7168
  %v3300 = vsel %vm3299, %v3280, %v3282
  %v3301 = vsel %vm3299, %v3282, %v3284
  %v3302 = vsel %vm3299, %v3284, %v3286
  %v3303 = vsel %vm3299, %v3286, %v3288
  %v3304 = vsel %vm3299, %v3288, %v3290
  %v3305 = vsel %vm3299, %v3290, %v3292
  %v3306 = vsel %vm3299, %v3292, %v3294
  %v3307 = vsel %vm3299, %v3294, %v3296
  %v3308 = vsel %vm3299, %v3296, %v3298
  %3318 = vst [vmem:[#allocation2 + $0x750] sm:$0xf] %v3300
  %3319 = vst [vmem:[#allocation2 + $0x758] sm:$0xf] %v3301
  %3320 = vst [vmem:[#allocation2 + $0x760] sm:$0xf] %v3302
  %3321 = vst [vmem:[#allocation2 + $0x768] sm:$0xf] %v3303
  %3322 = vst [vmem:[#allocation2 + $0x770] sm:$0xf] %v3304
  %3323 = vst [vmem:[#allocation2 + $0x778] sm:$0xf] %v3305
  %3324 = vst [vmem:[#allocation2 + $0x780] sm:$0xf] %v3306
  %3325 = vst [vmem:[#allocation2 + $0x788] sm:$0xf] %v3307
  %3326 = vst [vmem:[#allocation2 + $0x790] sm:$0xf] %v3308
  %v3327 = vld [vmem:[%s0 + $0x4] sm:$0xff]
  %v3328 = vld [vmem:[%s0 + $0xc] sm:$0xff]
  %v3329 = vld [vmem:[%s0 + $0x14] sm:$0xff]
  %v3330 = vld [vmem:[%s0 + $0x1c] sm:$0xff]
  %v3331 = vld [vmem:[%s0 + $0x24] sm:$0xf]
  %v3337 = vcombine.low %v3327, %v3327
  %v3338 = vcombine.low %v3328, %v3328
  %v3339 = vcombine.low %v3329, %v3329
  %v3340 = vcombine.low %v3330, %v3330
  %v3341 = vcombine.low %v3331, %v3331
  %3347 = vst [vmem:[#allocation2 + $0x750] sm:$0xf0] %v3337
  %3348 = vst [vmem:[#allocation2 + $0x758] sm:$0xf0] %v3327
  %3349 = vst [vmem:[#allocation2 + $0x760] sm:$0xf0] %v3338
  %3350 = vst [vmem:[#allocation2 + $0x768] sm:$0xf0] %v3328
  %3351 = vst [vmem:[#allocation2 + $0x770] sm:$0xf0] %v3339
  %3352 = vst [vmem:[#allocation2 + $0x778] sm:$0xf0] %v3329
  %3353 = vst [vmem:[#allocation2 + $0x780] sm:$0xf0] %v3340
  %3354 = vst [vmem:[#allocation2 + $0x788] sm:$0xf0] %v3330
  %3355 = vst [vmem:[#allocation2 + $0x790] sm:$0xf0] %v3341
  %v3356 = vld [vmem:[%s0 + $0x4] sm:$0xff]
  %v3357 = vld [vmem:[%s0 + $0xc] sm:$0xff]
  %v3358 = vld [vmem:[%s0 + $0x14] sm:$0xff]
  %v3359 = vld [vmem:[%s0 + $0x1c] sm:$0xff]
  %v3360 = vld [vmem:[%s0 + $0x24] sm:$0xff]
  %v3366 = vcombine.high %v3356, %v3356
  %v3367 = vcombine.high %v3357, %v3357
  %v3368 = vcombine.high %v3358, %v3358
  %v3369 = vcombine.high %v3359, %v3359
  %v3370 = vcombine.high %v3360, %v3360
  %3371 = vrot.lane.b32.xlu0 %v3356, 112
  %v3372 = vpop.permute.xlu0 %3371
  %3373 = vrot.lane.b32.xlu0 %v3366, 112
  %v3374 = vpop.permute.xlu0 %3373
  %3375 = vrot.lane.b32.xlu0 %v3357, 112
  %v3376 = vpop.permute.xlu0 %3375
  %3377 = vrot.lane.b32.xlu0 %v3367, 112
  %v3378 = vpop.permute.xlu0 %3377
  %3379 = vrot.lane.b32.xlu0 %v3358, 112
  %v3380 = vpop.permute.xlu0 %3379
  %3381 = vrot.lane.b32.xlu0 %v3368, 112
  %v3382 = vpop.permute.xlu0 %3381
  %3383 = vrot.lane.b32.xlu0 %v3359, 112
  %v3384 = vpop.permute.xlu0 %3383
  %3385 = vrot.lane.b32.xlu0 %v3369, 112
  %v3386 = vpop.permute.xlu0 %3385
  %3387 = vrot.lane.b32.xlu0 %v3360, 112
  %v3388 = vpop.permute.xlu0 %3387
  %3389 = vrot.lane.b32.xlu0 %v3370, 112
  %v3390 = vpop.permute.xlu0 %3389
  %vm3391 = vcmask 916480
  %v3392 = vsel %vm3391, %v3372, %v3374
  %v3393 = vsel %vm3391, %v3374, %v3376
  %v3394 = vsel %vm3391, %v3376, %v3378
  %v3395 = vsel %vm3391, %v3378, %v3380
  %v3396 = vsel %vm3391, %v3380, %v3382
  %v3397 = vsel %vm3391, %v3382, %v3384
  %v3398 = vsel %vm3391, %v3384, %v3386
  %v3399 = vsel %vm3391, %v3386, %v3388
  %v3400 = vsel %vm3391, %v3388, %v3390
  %3410 = vst [vmem:[#allocation2 + $0x798] sm:$0xf] %v3392
  %3411 = vst [vmem:[#allocation2 + $0x7a0] sm:$0xf] %v3393
  %3412 = vst [vmem:[#allocation2 + $0x7a8] sm:$0xf] %v3394
  %3413 = vst [vmem:[#allocation2 + $0x7b0] sm:$0xf] %v3395
  %3414 = vst [vmem:[#allocation2 + $0x7b8] sm:$0xf] %v3396
  %3415 = vst [vmem:[#allocation2 + $0x7c0] sm:$0xf] %v3397
  %3416 = vst [vmem:[#allocation2 + $0x7c8] sm:$0xf] %v3398
  %3417 = vst [vmem:[#allocation2 + $0x7d0] sm:$0xf] %v3399
  %3418 = vst [vmem:[#allocation2 + $0x7d8] sm:$0xf] %v3400
  %v3419 = vld [vmem:[%s0 + $0x4] sm:$0xff]
  %v3420 = vld [vmem:[%s0 + $0xc] sm:$0xff]
  %v3421 = vld [vmem:[%s0 + $0x14] sm:$0xff]
  %v3422 = vld [vmem:[%s0 + $0x1c] sm:$0xff]
  %v3423 = vld [vmem:[%s0 + $0x24] sm:$0xff]
  %v3429 = vcombine.low %v3419, %v3419
  %v3430 = vcombine.low %v3420, %v3420
  %v3431 = vcombine.low %v3421, %v3421
  %v3432 = vcombine.low %v3422, %v3422
  %v3433 = vcombine.low %v3423, %v3423
  %3434 = vrot.lane.b32.xlu0 %v3429, 111
  %v3435 = vpop.permute.xlu0 %3434
  %3436 = vrot.lane.b32.xlu0 %v3419, 111
  %v3437 = vpop.permute.xlu0 %3436
  %3438 = vrot.lane.b32.xlu0 %v3430, 111
  %v3439 = vpop.permute.xlu0 %3438
  %3440 = vrot.lane.b32.xlu0 %v3420, 111
  %v3441 = vpop.permute.xlu0 %3440
  %3442 = vrot.lane.b32.xlu0 %v3431, 111
  %v3443 = vpop.permute.xlu0 %3442
  %3444 = vrot.lane.b32.xlu0 %v3421, 111
  %v3445 = vpop.permute.xlu0 %3444
  %3446 = vrot.lane.b32.xlu0 %v3432, 111
  %v3447 = vpop.permute.xlu0 %3446
  %3448 = vrot.lane.b32.xlu0 %v3422, 111
  %v3449 = vpop.permute.xlu0 %3448
  %3450 = vrot.lane.b32.xlu0 %v3433, 111
  %v3451 = vpop.permute.xlu0 %3450
  %3452 = vrot.lane.b32.xlu0 %v3423, 111
  %v3453 = vpop.permute.xlu0 %3452
  %vm3454 = vcmask 908288
  %v3455 = vsel %vm3454, %v3435, %v3437
  %v3456 = vsel %vm3454, %v3437, %v3439
  %v3457 = vsel %vm3454, %v3439, %v3441
  %v3458 = vsel %vm3454, %v3441, %v3443
  %v3459 = vsel %vm3454, %v3443, %v3445
  %v3460 = vsel %vm3454, %v3445, %v3447
  %v3461 = vsel %vm3454, %v3447, %v3449
  %v3462 = vsel %vm3454, %v3449, %v3451
  %v3463 = vsel %vm3454, %v3451, %v3453
  %3473 = vst [vmem:[#allocation2 + $0x798] sm:$0xf0] %v3455
  %3474 = vst [vmem:[#allocation2 + $0x7a0] sm:$0xf0] %v3456
  %3475 = vst [vmem:[#allocation2 + $0x7a8] sm:$0xf0] %v3457
  %3476 = vst [vmem:[#allocation2 + $0x7b0] sm:$0xf0] %v3458
  %3477 = vst [vmem:[#allocation2 + $0x7b8] sm:$0xf0] %v3459
  %3478 = vst [vmem:[#allocation2 + $0x7c0] sm:$0xf0] %v3460
  %3479 = vst [vmem:[#allocation2 + $0x7c8] sm:$0xf0] %v3461
  %3480 = vst [vmem:[#allocation2 + $0x7d0] sm:$0xf0] %v3462
  %3481 = vst [vmem:[#allocation2 + $0x7d8] sm:$0xf0] %v3463
  %v3482 = vld [vmem:[%s0 + $0x4] sm:$0xff]
  %v3483 = vld [vmem:[%s0 + $0xc] sm:$0xff]
  %v3484 = vld [vmem:[%s0 + $0x14] sm:$0xff]
  %v3485 = vld [vmem:[%s0 + $0x1c] sm:$0xff]
  %v3486 = vld [vmem:[%s0 + $0x24] sm:$0xff]
  %v3492 = vcombine.high %v3482, %v3482
  %v3493 = vcombine.high %v3483, %v3483
  %v3494 = vcombine.high %v3484, %v3484
  %v3495 = vcombine.high %v3485, %v3485
  %v3496 = vcombine.high %v3486, %v3486
  %3497 = vrot.lane.b32.xlu0 %v3482, 110
  %v3498 = vpop.permute.xlu0 %3497
  %3499 = vrot.lane.b32.xlu0 %v3492, 110
  %v3500 = vpop.permute.xlu0 %3499
  %3501 = vrot.lane.b32.xlu0 %v3483, 110
  %v3502 = vpop.permute.xlu0 %3501
  %3503 = vrot.lane.b32.xlu0 %v3493, 110
  %v3504 = vpop.permute.xlu0 %3503
  %3505 = vrot.lane.b32.xlu0 %v3484, 110
  %v3506 = vpop.permute.xlu0 %3505
  %3507 = vrot.lane.b32.xlu0 %v3494, 110
  %v3508 = vpop.permute.xlu0 %3507
  %3509 = vrot.lane.b32.xlu0 %v3485, 110
  %v3510 = vpop.permute.xlu0 %3509
  %3511 = vrot.lane.b32.xlu0 %v3495, 110
  %v3512 = vpop.permute.xlu0 %3511
  %3513 = vrot.lane.b32.xlu0 %v3486, 110
  %v3514 = vpop.permute.xlu0 %3513
  %3515 = vrot.lane.b32.xlu0 %v3496, 110
  %v3516 = vpop.permute.xlu0 %3515
  %vm3517 = vcmask 900096
  %v3518 = vsel %vm3517, %v3498, %v3500
  %v3519 = vsel %vm3517, %v3500, %v3502
  %v3520 = vsel %vm3517, %v3502, %v3504
  %v3521 = vsel %vm3517, %v3504, %v3506
  %v3522 = vsel %vm3517, %v3506, %v3508
  %v3523 = vsel %vm3517, %v3508, %v3510
  %v3524 = vsel %vm3517, %v3510, %v3512
  %v3525 = vsel %vm3517, %v3512, %v3514
  %v3526 = vsel %vm3517, %v3514, %v3516
  %3536 = vst [vmem:[#allocation2 + $0x7e0] sm:$0xf] %v3518
  %3537 = vst [vmem:[#allocation2 + $0x7e8] sm:$0xf] %v3519
  %3538 = vst [vmem:[#allocation2 + $0x7f0] sm:$0xf] %v3520
  %3539 = vst [vmem:[#allocation2 + $0x7f8] sm:$0xf] %v3521
  %3540 = vst [vmem:[#allocation2 + $0x800] sm:$0xf] %v3522
  %3541 = vst [vmem:[#allocation2 + $0x808] sm:$0xf] %v3523
  %3542 = vst [vmem:[#allocation2 + $0x810] sm:$0xf] %v3524
  %3543 = vst [vmem:[#allocation2 + $0x818] sm:$0xf] %v3525
  %3544 = vst [vmem:[#allocation2 + $0x820] sm:$0xf] %v3526
  %v3545 = vld [vmem:[%s0 + $0x4] sm:$0xff]
  %v3546 = vld [vmem:[%s0 + $0xc] sm:$0xff]
  %v3547 = vld [vmem:[%s0 + $0x14] sm:$0xff]
  %v3548 = vld [vmem:[%s0 + $0x1c] sm:$0xff]
  %v3549 = vld [vmem:[%s0 + $0x24] sm:$0xff]
  %v3555 = vcombine.low %v3545, %v3545
  %v3556 = vcombine.low %v3546, %v3546
  %v3557 = vcombine.low %v3547, %v3547
  %v3558 = vcombine.low %v3548, %v3548
  %v3559 = vcombine.low %v3549, %v3549
  %3560 = vrot.lane.b32.xlu0 %v3555, 109
  %v3561 = vpop.permute.xlu0 %3560
  %3562 = vrot.lane.b32.xlu0 %v3545, 109
  %v3563 = vpop.permute.xlu0 %3562
  %3564 = vrot.lane.b32.xlu0 %v3556, 109
  %v3565 = vpop.permute.xlu0 %3564
  %3566 = vrot.lane.b32.xlu0 %v3546, 109
  %v3567 = vpop.permute.xlu0 %3566
  %3568 = vrot.lane.b32.xlu0 %v3557, 109
  %v3569 = vpop.permute.xlu0 %3568
  %3570 = vrot.lane.b32.xlu0 %v3547, 109
  %v3571 = vpop.permute.xlu0 %3570
  %3572 = vrot.lane.b32.xlu0 %v3558, 109
  %v3573 = vpop.permute.xlu0 %3572
  %3574 = vrot.lane.b32.xlu0 %v3548, 109
  %v3575 = vpop.permute.xlu0 %3574
  %3576 = vrot.lane.b32.xlu0 %v3559, 109
  %v3577 = vpop.permute.xlu0 %3576
  %3578 = vrot.lane.b32.xlu0 %v3549, 109
  %v3579 = vpop.permute.xlu0 %3578
  %vm3580 = vcmask 891904
  %v3581 = vsel %vm3580, %v3561, %v3563
  %v3582 = vsel %vm3580, %v3563, %v3565
  %v3583 = vsel %vm3580, %v3565, %v3567
  %v3584 = vsel %vm3580, %v3567, %v3569
  %v3585 = vsel %vm3580, %v3569, %v3571
  %v3586 = vsel %vm3580, %v3571, %v3573
  %v3587 = vsel %vm3580, %v3573, %v3575
  %v3588 = vsel %vm3580, %v3575, %v3577
  %v3589 = vsel %vm3580, %v3577, %v3579
  %3599 = vst [vmem:[#allocation2 + $0x7e0] sm:$0xf0] %v3581
  %3600 = vst [vmem:[#allocation2 + $0x7e8] sm:$0xf0] %v3582
  %3601 = vst [vmem:[#allocation2 + $0x7f0] sm:$0xf0] %v3583
  %3602 = vst [vmem:[#allocation2 + $0x7f8] sm:$0xf0] %v3584
  %3603 = vst [vmem:[#allocation2 + $0x800] sm:$0xf0] %v3585
  %3604 = vst [vmem:[#allocation2 + $0x808] sm:$0xf0] %v3586
  %3605 = vst [vmem:[#allocation2 + $0x810] sm:$0xf0] %v3587
  %3606 = vst [vmem:[#allocation2 + $0x818] sm:$0xf0] %v3588
  %3607 = vst [vmem:[#allocation2 + $0x820] sm:$0xf0] %v3589
  %v3608 = vld [vmem:[%s0 + $0x4] sm:$0xff]
  %v3609 = vld [vmem:[%s0 + $0xc] sm:$0xff]
  %v3610 = vld [vmem:[%s0 + $0x14] sm:$0xff]
  %v3611 = vld [vmem:[%s0 + $0x1c] sm:$0xff]
  %v3612 = vld [vmem:[%s0 + $0x24] sm:$0xff]
  %v3618 = vcombine.high %v3608, %v3608
  %v3619 = vcombine.high %v3609, %v3609
  %v3620 = vcombine.high %v3610, %v3610
  %v3621 = vcombine.high %v3611, %v3611
  %v3622 = vcombine.high %v3612, %v3612
  %3623 = vrot.lane.b32.xlu0 %v3608, 108
  %v3624 = vpop.permute.xlu0 %3623
  %3625 = vrot.lane.b32.xlu0 %v3618, 108
  %v3626 = vpop.permute.xlu0 %3625
  %3627 = vrot.lane.b32.xlu0 %v3609, 108
  %v3628 = vpop.permute.xlu0 %3627
  %3629 = vrot.lane.b32.xlu0 %v3619, 108
  %v3630 = vpop.permute.xlu0 %3629
  %3631 = vrot.lane.b32.xlu0 %v3610, 108
  %v3632 = vpop.permute.xlu0 %3631
  %3633 = vrot.lane.b32.xlu0 %v3620, 108
  %v3634 = vpop.permute.xlu0 %3633
  %3635 = vrot.lane.b32.xlu0 %v3611, 108
  %v3636 = vpop.permute.xlu0 %3635
  %3637 = vrot.lane.b32.xlu0 %v3621, 108
  %v3638 = vpop.permute.xlu0 %3637
  %3639 = vrot.lane.b32.xlu0 %v3612, 108
  %v3640 = vpop.permute.xlu0 %3639
  %3641 = vrot.lane.b32.xlu0 %v3622, 108
  %v3642 = vpop.permute.xlu0 %3641
  %vm3643 = vcmask 883712
  %v3644 = vsel %vm3643, %v3624, %v3626
  %v3645 = vsel %vm3643, %v3626, %v3628
  %v3646 = vsel %vm3643, %v3628, %v3630
  %v3647 = vsel %vm3643, %v3630, %v3632
  %v3648 = vsel %vm3643, %v3632, %v3634
  %v3649 = vsel %vm3643, %v3634, %v3636
  %v3650 = vsel %vm3643, %v3636, %v3638
  %v3651 = vsel %vm3643, %v3638, %v3640
  %v3652 = vsel %vm3643, %v3640, %v3642
  %3662 = vst [vmem:[#allocation2 + $0x828] sm:$0xf] %v3644
  %3663 = vst [vmem:[#allocation2 + $0x830] sm:$0xf] %v3645
  %3664 = vst [vmem:[#allocation2 + $0x838] sm:$0xf] %v3646
  %3665 = vst [vmem:[#allocation2 + $0x840] sm:$0xf] %v3647
  %3666 = vst [vmem:[#allocation2 + $0x848] sm:$0xf] %v3648
  %3667 = vst [vmem:[#allocation2 + $0x850] sm:$0xf] %v3649
  %3668 = vst [vmem:[#allocation2 + $0x858] sm:$0xf] %v3650
  %3669 = vst [vmem:[#allocation2 + $0x860] sm:$0xf] %v3651
  %3670 = vst [vmem:[#allocation2 + $0x868] sm:$0xf] %v3652
  %v3671 = vld [vmem:[%s0 + $0x4] sm:$0xff]
  %v3672 = vld [vmem:[%s0 + $0xc] sm:$0xff]
  %v3673 = vld [vmem:[%s0 + $0x14] sm:$0xff]
  %v3674 = vld [vmem:[%s0 + $0x1c] sm:$0xff]
  %v3675 = vld [vmem:[%s0 + $0x24] sm:$0xff]
  %v3681 = vcombine.low %v3671, %v3671
  %v3682 = vcombine.low %v3672, %v3672
  %v3683 = vcombine.low %v3673, %v3673
  %v3684 = vcombine.low %v3674, %v3674
  %v3685 = vcombine.low %v3675, %v3675
  %3686 = vrot.lane.b32.xlu0 %v3681, 107
  %v3687 = vpop.permute.xlu0 %3686
  %3688 = vrot.lane.b32.xlu0 %v3671, 107
  %v3689 = vpop.permute.xlu0 %3688
  %3690 = vrot.lane.b32.xlu0 %v3682, 107
  %v3691 = vpop.permute.xlu0 %3690
  %3692 = vrot.lane.b32.xlu0 %v3672, 107
  %v3693 = vpop.permute.xlu0 %3692
  %3694 = vrot.lane.b32.xlu0 %v3683, 107
  %v3695 = vpop.permute.xlu0 %3694
  %3696 = vrot.lane.b32.xlu0 %v3673, 107
  %v3697 = vpop.permute.xlu0 %3696
  %3698 = vrot.lane.b32.xlu0 %v3684, 107
  %v3699 = vpop.permute.xlu0 %3698
  %3700 = vrot.lane.b32.xlu0 %v3674, 107
  %v3701 = vpop.permute.xlu0 %3700
  %3702 = vrot.lane.b32.xlu0 %v3685, 107
  %v3703 = vpop.permute.xlu0 %3702
  %3704 = vrot.lane.b32.xlu0 %v3675, 107
  %v3705 = vpop.permute.xlu0 %3704
  %vm3706 = vcmask 875520
  %v3707 = vsel %vm3706, %v3687, %v3689
  %v3708 = vsel %vm3706, %v3689, %v3691
  %v3709 = vsel %vm3706, %v3691, %v3693
  %v3710 = vsel %vm3706, %v3693, %v3695
  %v3711 = vsel %vm3706, %v3695, %v3697
  %v3712 = vsel %vm3706, %v3697, %v3699
  %v3713 = vsel %vm3706, %v3699, %v3701
  %v3714 = vsel %vm3706, %v3701, %v3703
  %v3715 = vsel %vm3706, %v3703, %v3705
  %3725 = vst [vmem:[#allocation2 + $0x828] sm:$0xf0] %v3707
  %3726 = vst [vmem:[#allocation2 + $0x830] sm:$0xf0] %v3708
  %3727 = vst [vmem:[#allocation2 + $0x838] sm:$0xf0] %v3709
  %3728 = vst [vmem:[#allocation2 + $0x840] sm:$0xf0] %v3710
  %3729 = vst [vmem:[#allocation2 + $0x848] sm:$0xf0] %v3711
  %3730 = vst [vmem:[#allocation2 + $0x850] sm:$0xf0] %v3712
  %3731 = vst [vmem:[#allocation2 + $0x858] sm:$0xf0] %v3713
  %3732 = vst [vmem:[#allocation2 + $0x860] sm:$0xf0] %v3714
  %3733 = vst [vmem:[#allocation2 + $0x868] sm:$0xf0] %v3715
  %v3734 = vld [vmem:[%s0 + $0x4] sm:$0xff]
  %v3735 = vld [vmem:[%s0 + $0xc] sm:$0xff]
  %v3736 = vld [vmem:[%s0 + $0x14] sm:$0xff]
  %v3737 = vld [vmem:[%s0 + $0x1c] sm:$0xff]
  %v3738 = vld [vmem:[%s0 + $0x24] sm:$0xff]
  %v3744 = vcombine.high %v3734, %v3734
  %v3745 = vcombine.high %v3735, %v3735
  %v3746 = vcombine.high %v3736, %v3736
  %v3747 = vcombine.high %v3737, %v3737
  %v3748 = vcombine.high %v3738, %v3738
  %3749 = vrot.lane.b32.xlu0 %v3734, 106
  %v3750 = vpop.permute.xlu0 %3749
  %3751 = vrot.lane.b32.xlu0 %v3744, 106
  %v3752 = vpop.permute.xlu0 %3751
  %3753 = vrot.lane.b32.xlu0 %v3735, 106
  %v3754 = vpop.permute.xlu0 %3753
  %3755 = vrot.lane.b32.xlu0 %v3745, 106
  %v3756 = vpop.permute.xlu0 %3755
  %3757 = vrot.lane.b32.xlu0 %v3736, 106
  %v3758 = vpop.permute.xlu0 %3757
  %3759 = vrot.lane.b32.xlu0 %v3746, 106
  %v3760 = vpop.permute.xlu0 %3759
  %3761 = vrot.lane.b32.xlu0 %v3737, 106
  %v3762 = vpop.permute.xlu0 %3761
  %3763 = vrot.lane.b32.xlu0 %v3747, 106
  %v3764 = vpop.permute.xlu0 %3763
  %3765 = vrot.lane.b32.xlu0 %v3738, 106
  %v3766 = vpop.permute.xlu0 %3765
  %3767 = vrot.lane.b32.xlu0 %v3748, 106
  %v3768 = vpop.permute.xlu0 %3767
  %vm3769 = vcmask 867328
  %v3770 = vsel %vm3769, %v3750, %v3752
  %v3771 = vsel %vm3769, %v3752, %v3754
  %v3772 = vsel %vm3769, %v3754, %v3756
  %v3773 = vsel %vm3769, %v3756, %v3758
  %v3774 = vsel %vm3769, %v3758, %v3760
  %v3775 = vsel %vm3769, %v3760, %v3762
  %v3776 = vsel %vm3769, %v3762, %v3764
  %v3777 = vsel %vm3769, %v3764, %v3766
  %v3778 = vsel %vm3769, %v3766, %v3768
  %3788 = vst [vmem:[#allocation2 + $0x870] sm:$0xf] %v3770
  %3789 = vst [vmem:[#allocation2 + $0x878] sm:$0xf] %v3771
  %3790 = vst [vmem:[#allocation2 + $0x880] sm:$0xf] %v3772
  %3791 = vst [vmem:[#allocation2 + $0x888] sm:$0xf] %v3773
  %3792 = vst [vmem:[#allocation2 + $0x890] sm:$0xf] %v3774
  %3793 = vst [vmem:[#allocation2 + $0x898] sm:$0xf] %v3775
  %3794 = vst [vmem:[#allocation2 + $0x8a0] sm:$0xf] %v3776
  %3795 = vst [vmem:[#allocation2 + $0x8a8] sm:$0xf] %v3777
  %3796 = vst [vmem:[#allocation2 + $0x8b0] sm:$0xf] %v3778
  %v3797 = vld [vmem:[%s0 + $0x4] sm:$0xff]
  %v3798 = vld [vmem:[%s0 + $0xc] sm:$0xff]
  %v3799 = vld [vmem:[%s0 + $0x14] sm:$0xff]
  %v3800 = vld [vmem:[%s0 + $0x1c] sm:$0xff]
  %v3801 = vld [vmem:[%s0 + $0x24] sm:$0xff]
  %v3807 = vcombine.low %v3797, %v3797
  %v3808 = vcombine.low %v3798, %v3798
  %v3809 = vcombine.low %v3799, %v3799
  %v3810 = vcombine.low %v3800, %v3800
  %v3811 = vcombine.low %v3801, %v3801
  %3812 = vrot.lane.b32.xlu0 %v3807, 105
  %v3813 = vpop.permute.xlu0 %3812
  %3814 = vrot.lane.b32.xlu0 %v3797, 105
  %v3815 = vpop.permute.xlu0 %3814
  %3816 = vrot.lane.b32.xlu0 %v3808, 105
  %v3817 = vpop.permute.xlu0 %3816
  %3818 = vrot.lane.b32.xlu0 %v3798, 105
  %v3819 = vpop.permute.xlu0 %3818
  %3820 = vrot.lane.b32.xlu0 %v3809, 105
  %v3821 = vpop.permute.xlu0 %3820
  %3822 = vrot.lane.b32.xlu0 %v3799, 105
  %v3823 = vpop.permute.xlu0 %3822
  %3824 = vrot.lane.b32.xlu0 %v3810, 105
  %v3825 = vpop.permute.xlu0 %3824
  %3826 = vrot.lane.b32.xlu0 %v3800, 105
  %v3827 = vpop.permute.xlu0 %3826
  %3828 = vrot.lane.b32.xlu0 %v3811, 105
  %v3829 = vpop.permute.xlu0 %3828
  %3830 = vrot.lane.b32.xlu0 %v3801, 105
  %v3831 = vpop.permute.xlu0 %3830
  %vm3832 = vcmask 859136
  %v3833 = vsel %vm3832, %v3813, %v3815
  %v3834 = vsel %vm3832, %v3815, %v3817
  %v3835 = vsel %vm3832, %v3817, %v3819
  %v3836 = vsel %vm3832, %v3819, %v3821
  %v3837 = vsel %vm3832, %v3821, %v3823
  %v3838 = vsel %vm3832, %v3823, %v3825
  %v3839 = vsel %vm3832, %v3825, %v3827
  %v3840 = vsel %vm3832, %v3827, %v3829
  %v3841 = vsel %vm3832, %v3829, %v3831
  %3851 = vst [vmem:[#allocation2 + $0x870] sm:$0xf0] %v3833
  %3852 = vst [vmem:[#allocation2 + $0x878] sm:$0xf0] %v3834
  %3853 = vst [vmem:[#allocation2 + $0x880] sm:$0xf0] %v3835
  %3854 = vst [vmem:[#allocation2 + $0x888] sm:$0xf0] %v3836
  %3855 = vst [vmem:[#allocation2 + $0x890] sm:$0xf0] %v3837
  %3856 = vst [vmem:[#allocation2 + $0x898] sm:$0xf0] %v3838
  %3857 = vst [vmem:[#allocation2 + $0x8a0] sm:$0xf0] %v3839
  %3858 = vst [vmem:[#allocation2 + $0x8a8] sm:$0xf0] %v3840
  %3859 = vst [vmem:[#allocation2 + $0x8b0] sm:$0xf0] %v3841
  %v3860 = vld [vmem:[%s0 + $0x4] sm:$0xff]
  %v3861 = vld [vmem:[%s0 + $0xc] sm:$0xff]
  %v3862 = vld [vmem:[%s0 + $0x14] sm:$0xff]
  %v3863 = vld [vmem:[%s0 + $0x1c] sm:$0xff]
  %v3864 = vld [vmem:[%s0 + $0x24] sm:$0xff]
  %v3870 = vcombine.high %v3860, %v3860
  %v3871 = vcombine.high %v3861, %v3861
  %v3872 = vcombine.high %v3862, %v3862
  %v3873 = vcombine.high %v3863, %v3863
  %v3874 = vcombine.high %v3864, %v3864
  %3875 = vrot.lane.b32.xlu0 %v3860, 104
  %v3876 = vpop.permute.xlu0 %3875
  %3877 = vrot.lane.b32.xlu0 %v3870, 104
  %v3878 = vpop.permute.xlu0 %3877
  %3879 = vrot.lane.b32.xlu0 %v3861, 104
  %v3880 = vpop.permute.xlu0 %3879
  %3881 = vrot.lane.b32.xlu0 %v3871, 104
  %v3882 = vpop.permute.xlu0 %3881
  %3883 = vrot.lane.b32.xlu0 %v3862, 104
  %v3884 = vpop.permute.xlu0 %3883
  %3885 = vrot.lane.b32.xlu0 %v3872, 104
  %v3886 = vpop.permute.xlu0 %3885
  %3887 = vrot.lane.b32.xlu0 %v3863, 104
  %v3888 = vpop.permute.xlu0 %3887
  %3889 = vrot.lane.b32.xlu0 %v3873, 104
  %v3890 = vpop.permute.xlu0 %3889
  %3891 = vrot.lane.b32.xlu0 %v3864, 104
  %v3892 = vpop.permute.xlu0 %3891
  %3893 = vrot.lane.b32.xlu0 %v3874, 104
  %v3894 = vpop.permute.xlu0 %3893
  %v3895 = vsel %vm590, %v3876, %v3878
  %v3896 = vsel %vm590, %v3878, %v3880
  %v3897 = vsel %vm590, %v3880, %v3882
  %v3898 = vsel %vm590, %v3882, %v3884
  %v3899 = vsel %vm590, %v3884, %v3886
  %v3900 = vsel %vm590, %v3886, %v3888
  %v3901 = vsel %vm590, %v3888, %v3890
  %v3902 = vsel %vm590, %v3890, %v3892
  %v3903 = vsel %vm590, %v3892, %v3894
  %3913 = vst [vmem:[#allocation2 + $0x8b8] sm:$0xf] %v3895
  %3914 = vst [vmem:[#allocation2 + $0x8c0] sm:$0xf] %v3896
  %3915 = vst [vmem:[#allocation2 + $0x8c8] sm:$0xf] %v3897
  %3916 = vst [vmem:[#allocation2 + $0x8d0] sm:$0xf] %v3898
  %3917 = vst [vmem:[#allocation2 + $0x8d8] sm:$0xf] %v3899
  %3918 = vst [vmem:[#allocation2 + $0x8e0] sm:$0xf] %v3900
  %3919 = vst [vmem:[#allocation2 + $0x8e8] sm:$0xf] %v3901
  %3920 = vst [vmem:[#allocation2 + $0x8f0] sm:$0xf] %v3902
  %3921 = vst [vmem:[#allocation2 + $0x8f8] sm:$0xf] %v3903
  %v3922 = vld [vmem:[%s0 + $0x4] sm:$0xff]
  %v3923 = vld [vmem:[%s0 + $0xc] sm:$0xff]
  %v3924 = vld [vmem:[%s0 + $0x14] sm:$0xff]
  %v3925 = vld [vmem:[%s0 + $0x1c] sm:$0xff]
  %v3926 = vld [vmem:[%s0 + $0x24] sm:$0xff]
  %v3932 = vcombine.low %v3922, %v3922
  %v3933 = vcombine.low %v3923, %v3923
  %v3934 = vcombine.low %v3924, %v3924
  %v3935 = vcombine.low %v3925, %v3925
  %v3936 = vcombine.low %v3926, %v3926
  %3937 = vrot.lane.b32.xlu0 %v3932, 88
  %v3938 = vpop.permute.xlu0 %3937
  %3939 = vrot.lane.b32.xlu0 %v3922, 88
  %v3940 = vpop.permute.xlu0 %3939
  %3941 = vrot.lane.b32.xlu0 %v3933, 88
  %v3942 = vpop.permute.xlu0 %3941
  %3943 = vrot.lane.b32.xlu0 %v3923, 88
  %v3944 = vpop.permute.xlu0 %3943
  %3945 = vrot.lane.b32.xlu0 %v3934, 88
  %v3946 = vpop.permute.xlu0 %3945
  %3947 = vrot.lane.b32.xlu0 %v3924, 88
  %v3948 = vpop.permute.xlu0 %3947
  %3949 = vrot.lane.b32.xlu0 %v3935, 88
  %v3950 = vpop.permute.xlu0 %3949
  %3951 = vrot.lane.b32.xlu0 %v3925, 88
  %v3952 = vpop.permute.xlu0 %3951
  %3953 = vrot.lane.b32.xlu0 %v3936, 88
  %v3954 = vpop.permute.xlu0 %3953
  %3955 = vrot.lane.b32.xlu0 %v3926, 88
  %v3956 = vpop.permute.xlu0 %3955
  %vm3957 = vcmask 719872
  %v3958 = vsel %vm3957, %v3938, %v3940
  %v3959 = vsel %vm3957, %v3940, %v3942
  %v3960 = vsel %vm3957, %v3942, %v3944
  %v3961 = vsel %vm3957, %v3944, %v3946
  %v3962 = vsel %vm3957, %v3946, %v3948
  %v3963 = vsel %vm3957, %v3948, %v3950
  %v3964 = vsel %vm3957, %v3950, %v3952
  %v3965 = vsel %vm3957, %v3952, %v3954
  %v3966 = vsel %vm3957, %v3954, %v3956
  %3976 = vst [vmem:[#allocation2 + $0x8b8] sm:$0xf0] %v3958
  %3977 = vst [vmem:[#allocation2 + $0x8c0] sm:$0xf0] %v3959
  %3978 = vst [vmem:[#allocation2 + $0x8c8] sm:$0xf0] %v3960
  %3979 = vst [vmem:[#allocation2 + $0x8d0] sm:$0xf0] %v3961
  %3980 = vst [vmem:[#allocation2 + $0x8d8] sm:$0xf0] %v3962
  %3981 = vst [vmem:[#allocation2 + $0x8e0] sm:$0xf0] %v3963
  %3982 = vst [vmem:[#allocation2 + $0x8e8] sm:$0xf0] %v3964
  %3983 = vst [vmem:[#allocation2 + $0x8f0] sm:$0xf0] %v3965
  %3984 = vst [vmem:[#allocation2 + $0x8f8] sm:$0xf0] %v3966
  %v3985 = vld [vmem:[%s0 + $0x4] sm:$0xff]
  %v3986 = vld [vmem:[%s0 + $0xc] sm:$0xff]
  %v3987 = vld [vmem:[%s0 + $0x14] sm:$0xff]
  %v3988 = vld [vmem:[%s0 + $0x1c] sm:$0xff]
  %v3989 = vld [vmem:[%s0 + $0x24] sm:$0xff]
  %v3995 = vcombine.high %v3985, %v3985
  %v3996 = vcombine.high %v3986, %v3986
  %v3997 = vcombine.high %v3987, %v3987
  %v3998 = vcombine.high %v3988, %v3988
  %v3999 = vcombine.high %v3989, %v3989
  %4000 = vrot.lane.b32.xlu0 %v3985, 87
  %v4001 = vpop.permute.xlu0 %4000
  %4002 = vrot.lane.b32.xlu0 %v3995, 87
  %v4003 = vpop.permute.xlu0 %4002
  %4004 = vrot.lane.b32.xlu0 %v3986, 87
  %v4005 = vpop.permute.xlu0 %4004
  %4006 = vrot.lane.b32.xlu0 %v3996, 87
  %v4007 = vpop.permute.xlu0 %4006
  %4008 = vrot.lane.b32.xlu0 %v3987, 87
  %v4009 = vpop.permute.xlu0 %4008
  %4010 = vrot.lane.b32.xlu0 %v3997, 87
  %v4011 = vpop.permute.xlu0 %4010
  %4012 = vrot.lane.b32.xlu0 %v3988, 87
  %v4013 = vpop.permute.xlu0 %4012
  %4014 = vrot.lane.b32.xlu0 %v3998, 87
  %v4015 = vpop.permute.xlu0 %4014
  %4016 = vrot.lane.b32.xlu0 %v3989, 87
  %v4017 = vpop.permute.xlu0 %4016
  %4018 = vrot.lane.b32.xlu0 %v3999, 87
  %v4019 = vpop.permute.xlu0 %4018
  %vm4020 = vcmask 711680
  %v4021 = vsel %vm4020, %v4001, %v4003
  %v4022 = vsel %vm4020, %v4003, %v4005
  %v4023 = vsel %vm4020, %v4005, %v4007
  %v4024 = vsel %vm4020, %v4007, %v4009
  %v4025 = vsel %vm4020, %v4009, %v4011
  %v4026 = vsel %vm4020, %v4011, %v4013
  %v4027 = vsel %vm4020, %v4013, %v4015
  %v4028 = vsel %vm4020, %v4015, %v4017
  %v4029 = vsel %vm4020, %v4017, %v4019
  %4039 = vst [vmem:[#allocation2 + $0x900] sm:$0xf] %v4021
  %4040 = vst [vmem:[#allocation2 + $0x908] sm:$0xf] %v4022
  %4041 = vst [vmem:[#allocation2 + $0x910] sm:$0xf] %v4023
  %4042 = vst [vmem:[#allocation2 + $0x918] sm:$0xf] %v4024
  %4043 = vst [vmem:[#allocation2 + $0x920] sm:$0xf] %v4025
  %4044 = vst [vmem:[#allocation2 + $0x928] sm:$0xf] %v4026
  %4045 = vst [vmem:[#allocation2 + $0x930] sm:$0xf] %v4027
  %4046 = vst [vmem:[#allocation2 + $0x938] sm:$0xf] %v4028
  %4047 = vst [vmem:[#allocation2 + $0x940] sm:$0xf] %v4029
  %v4048 = vld [vmem:[%s0 + $0x4] sm:$0xff]
  %v4049 = vld [vmem:[%s0 + $0xc] sm:$0xff]
  %v4050 = vld [vmem:[%s0 + $0x14] sm:$0xff]
  %v4051 = vld [vmem:[%s0 + $0x1c] sm:$0xff]
  %v4052 = vld [vmem:[%s0 + $0x24] sm:$0xff]
  %v4058 = vcombine.low %v4048, %v4048
  %v4059 = vcombine.low %v4049, %v4049
  %v4060 = vcombine.low %v4050, %v4050
  %v4061 = vcombine.low %v4051, %v4051
  %v4062 = vcombine.low %v4052, %v4052
  %4063 = vrot.lane.b32.xlu0 %v4058, 86
  %v4064 = vpop.permute.xlu0 %4063
  %4065 = vrot.lane.b32.xlu0 %v4048, 86
  %v4066 = vpop.permute.xlu0 %4065
  %4067 = vrot.lane.b32.xlu0 %v4059, 86
  %v4068 = vpop.permute.xlu0 %4067
  %4069 = vrot.lane.b32.xlu0 %v4049, 86
  %v4070 = vpop.permute.xlu0 %4069
  %4071 = vrot.lane.b32.xlu0 %v4060, 86
  %v4072 = vpop.permute.xlu0 %4071
  %4073 = vrot.lane.b32.xlu0 %v4050, 86
  %v4074 = vpop.permute.xlu0 %4073
  %4075 = vrot.lane.b32.xlu0 %v4061, 86
  %v4076 = vpop.permute.xlu0 %4075
  %4077 = vrot.lane.b32.xlu0 %v4051, 86
  %v4078 = vpop.permute.xlu0 %4077
  %4079 = vrot.lane.b32.xlu0 %v4062, 86
  %v4080 = vpop.permute.xlu0 %4079
  %4081 = vrot.lane.b32.xlu0 %v4052, 86
  %v4082 = vpop.permute.xlu0 %4081
  %vm4083 = vcmask 703488
  %v4084 = vsel %vm4083, %v4064, %v4066
  %v4085 = vsel %vm4083, %v4066, %v4068
  %v4086 = vsel %vm4083, %v4068, %v4070
  %v4087 = vsel %vm4083, %v4070, %v4072
  %v4088 = vsel %vm4083, %v4072, %v4074
  %v4089 = vsel %vm4083, %v4074, %v4076
  %v4090 = vsel %vm4083, %v4076, %v4078
  %v4091 = vsel %vm4083, %v4078, %v4080
  %v4092 = vsel %vm4083, %v4080, %v4082
  %4102 = vst [vmem:[#allocation2 + $0x900] sm:$0xf0] %v4084
  %4103 = vst [vmem:[#allocation2 + $0x908] sm:$0xf0] %v4085
  %4104 = vst [vmem:[#allocation2 + $0x910] sm:$0xf0] %v4086
  %4105 = vst [vmem:[#allocation2 + $0x918] sm:$0xf0] %v4087
  %4106 = vst [vmem:[#allocation2 + $0x920] sm:$0xf0] %v4088
  %4107 = vst [vmem:[#allocation2 + $0x928] sm:$0xf0] %v4089
  %4108 = vst [vmem:[#allocation2 + $0x930] sm:$0xf0] %v4090
  %4109 = vst [vmem:[#allocation2 + $0x938] sm:$0xf0] %v4091
  %4110 = vst [vmem:[#allocation2 + $0x940] sm:$0xf0] %v4092
  %v4111 = vld [vmem:[%s0 + $0x4] sm:$0xff]
  %v4112 = vld [vmem:[%s0 + $0xc] sm:$0xff]
  %v4113 = vld [vmem:[%s0 + $0x14] sm:$0xff]
  %v4114 = vld [vmem:[%s0 + $0x1c] sm:$0xff]
  %v4115 = vld [vmem:[%s0 + $0x24] sm:$0xff]
  %v4121 = vcombine.high %v4111, %v4111
  %v4122 = vcombine.high %v4112, %v4112
  %v4123 = vcombine.high %v4113, %v4113
  %v4124 = vcombine.high %v4114, %v4114
  %v4125 = vcombine.high %v4115, %v4115
  %4126 = vrot.lane.b32.xlu0 %v4111, 85
  %v4127 = vpop.permute.xlu0 %4126
  %4128 = vrot.lane.b32.xlu0 %v4121, 85
  %v4129 = vpop.permute.xlu0 %4128
  %4130 = vrot.lane.b32.xlu0 %v4112, 85
  %v4131 = vpop.permute.xlu0 %4130
  %4132 = vrot.lane.b32.xlu0 %v4122, 85
  %v4133 = vpop.permute.xlu0 %4132
  %4134 = vrot.lane.b32.xlu0 %v4113, 85
  %v4135 = vpop.permute.xlu0 %4134
  %4136 = vrot.lane.b32.xlu0 %v4123, 85
  %v4137 = vpop.permute.xlu0 %4136
  %4138 = vrot.lane.b32.xlu0 %v4114, 85
  %v4139 = vpop.permute.xlu0 %4138
  %4140 = vrot.lane.b32.xlu0 %v4124, 85
  %v4141 = vpop.permute.xlu0 %4140
  %4142 = vrot.lane.b32.xlu0 %v4115, 85
  %v4143 = vpop.permute.xlu0 %4142
  %4144 = vrot.lane.b32.xlu0 %v4125, 85
  %v4145 = vpop.permute.xlu0 %4144
  %vm4146 = vcmask 695296
  %v4147 = vsel %vm4146, %v4127, %v4129
  %v4148 = vsel %vm4146, %v4129, %v4131
  %v4149 = vsel %vm4146, %v4131, %v4133
  %v4150 = vsel %vm4146, %v4133, %v4135
  %v4151 = vsel %vm4146, %v4135, %v4137
  %v4152 = vsel %vm4146, %v4137, %v4139
  %v4153 = vsel %vm4146, %v4139, %v4141
  %v4154 = vsel %vm4146, %v4141, %v4143
  %v4155 = vsel %vm4146, %v4143, %v4145
  %4165 = vst [vmem:[#allocation2 + $0x948] sm:$0xf] %v4147
  %4166 = vst [vmem:[#allocation2 + $0x950] sm:$0xf] %v4148
  %4167 = vst [vmem:[#allocation2 + $0x958] sm:$0xf] %v4149
  %4168 = vst [vmem:[#allocation2 + $0x960] sm:$0xf] %v4150
  %4169 = vst [vmem:[#allocation2 + $0x968] sm:$0xf] %v4151
  %4170 = vst [vmem:[#allocation2 + $0x970] sm:$0xf] %v4152
  %4171 = vst [vmem:[#allocation2 + $0x978] sm:$0xf] %v4153
  %4172 = vst [vmem:[#allocation2 + $0x980] sm:$0xf] %v4154
  %4173 = vst [vmem:[#allocation2 + $0x988] sm:$0xf] %v4155
  %v4174 = vld [vmem:[%s0 + $0x4] sm:$0xff]
  %v4175 = vld [vmem:[%s0 + $0xc] sm:$0xff]
  %v4176 = vld [vmem:[%s0 + $0x14] sm:$0xff]
  %v4177 = vld [vmem:[%s0 + $0x1c] sm:$0xff]
  %v4178 = vld [vmem:[%s0 + $0x24] sm:$0xff]
  %v4184 = vcombine.low %v4174, %v4174
  %v4185 = vcombine.low %v4175, %v4175
  %v4186 = vcombine.low %v4176, %v4176
  %v4187 = vcombine.low %v4177, %v4177
  %v4188 = vcombine.low %v4178, %v4178
  %4189 = vrot.lane.b32.xlu0 %v4184, 84
  %v4190 = vpop.permute.xlu0 %4189
  %4191 = vrot.lane.b32.xlu0 %v4174, 84
  %v4192 = vpop.permute.xlu0 %4191
  %4193 = vrot.lane.b32.xlu0 %v4185, 84
  %v4194 = vpop.permute.xlu0 %4193
  %4195 = vrot.lane.b32.xlu0 %v4175, 84
  %v4196 = vpop.permute.xlu0 %4195
  %4197 = vrot.lane.b32.xlu0 %v4186, 84
  %v4198 = vpop.permute.xlu0 %4197
  %4199 = vrot.lane.b32.xlu0 %v4176, 84
  %v4200 = vpop.permute.xlu0 %4199
  %4201 = vrot.lane.b32.xlu0 %v4187, 84
  %v4202 = vpop.permute.xlu0 %4201
  %4203 = vrot.lane.b32.xlu0 %v4177, 84
  %v4204 = vpop.permute.xlu0 %4203
  %4205 = vrot.lane.b32.xlu0 %v4188, 84
  %v4206 = vpop.permute.xlu0 %4205
  %4207 = vrot.lane.b32.xlu0 %v4178, 84
  %v4208 = vpop.permute.xlu0 %4207
  %vm4209 = vcmask 687104
  %v4210 = vsel %vm4209, %v4190, %v4192
  %v4211 = vsel %vm4209, %v4192, %v4194
  %v4212 = vsel %vm4209, %v4194, %v4196
  %v4213 = vsel %vm4209, %v4196, %v4198
  %v4214 = vsel %vm4209, %v4198, %v4200
  %v4215 = vsel %vm4209, %v4200, %v4202
  %v4216 = vsel %vm4209, %v4202, %v4204
  %v4217 = vsel %vm4209, %v4204, %v4206
  %v4218 = vsel %vm4209, %v4206, %v4208
  %4228 = vst [vmem:[#allocation2 + $0x948] sm:$0xf0] %v4210
  %4229 = vst [vmem:[#allocation2 + $0x950] sm:$0xf0] %v4211
  %4230 = vst [vmem:[#allocation2 + $0x958] sm:$0xf0] %v4212
  %4231 = vst [vmem:[#allocation2 + $0x960] sm:$0xf0] %v4213
  %4232 = vst [vmem:[#allocation2 + $0x968] sm:$0xf0] %v4214
  %4233 = vst [vmem:[#allocation2 + $0x970] sm:$0xf0] %v4215
  %4234 = vst [vmem:[#allocation2 + $0x978] sm:$0xf0] %v4216
  %4235 = vst [vmem:[#allocation2 + $0x980] sm:$0xf0] %v4217
  %4236 = vst [vmem:[#allocation2 + $0x988] sm:$0xf0] %v4218
  %v4237 = vld [vmem:[%s0 + $0x4] sm:$0xff]
  %v4238 = vld [vmem:[%s0 + $0xc] sm:$0xff]
  %v4239 = vld [vmem:[%s0 + $0x14] sm:$0xff]
  %v4240 = vld [vmem:[%s0 + $0x1c] sm:$0xff]
  %v4241 = vld [vmem:[%s0 + $0x24] sm:$0xff]
  %v4247 = vcombine.high %v4237, %v4237
  %v4248 = vcombine.high %v4238, %v4238
  %v4249 = vcombine.high %v4239, %v4239
  %v4250 = vcombine.high %v4240, %v4240
  %v4251 = vcombine.high %v4241, %v4241
  %4252 = vrot.lane.b32.xlu0 %v4237, 83
  %v4253 = vpop.permute.xlu0 %4252
  %4254 = vrot.lane.b32.xlu0 %v4247, 83
  %v4255 = vpop.permute.xlu0 %4254
  %4256 = vrot.lane.b32.xlu0 %v4238, 83
  %v4257 = vpop.permute.xlu0 %4256
  %4258 = vrot.lane.b32.xlu0 %v4248, 83
  %v4259 = vpop.permute.xlu0 %4258
  %4260 = vrot.lane.b32.xlu0 %v4239, 83
  %v4261 = vpop.permute.xlu0 %4260
  %4262 = vrot.lane.b32.xlu0 %v4249, 83
  %v4263 = vpop.permute.xlu0 %4262
  %4264 = vrot.lane.b32.xlu0 %v4240, 83
  %v4265 = vpop.permute.xlu0 %4264
  %4266 = vrot.lane.b32.xlu0 %v4250, 83
  %v4267 = vpop.permute.xlu0 %4266
  %4268 = vrot.lane.b32.xlu0 %v4241, 83
  %v4269 = vpop.permute.xlu0 %4268
  %4270 = vrot.lane.b32.xlu0 %v4251, 83
  %v4271 = vpop.permute.xlu0 %4270
  %vm4272 = vcmask 678912
  %v4273 = vsel %vm4272, %v4253, %v4255
  %v4274 = vsel %vm4272, %v4255, %v4257
  %v4275 = vsel %vm4272, %v4257, %v4259
  %v4276 = vsel %vm4272, %v4259, %v4261
  %v4277 = vsel %vm4272, %v4261, %v4263
  %v4278 = vsel %vm4272, %v4263, %v4265
  %v4279 = vsel %vm4272, %v4265, %v4267
  %v4280 = vsel %vm4272, %v4267, %v4269
  %v4281 = vsel %vm4272, %v4269, %v4271
  %4291 = vst [vmem:[#allocation2 + $0x990] sm:$0xf] %v4273
  %4292 = vst [vmem:[#allocation2 + $0x998] sm:$0xf] %v4274
  %4293 = vst [vmem:[#allocation2 + $0x9a0] sm:$0xf] %v4275
  %4294 = vst [vmem:[#allocation2 + $0x9a8] sm:$0xf] %v4276
  %4295 = vst [vmem:[#allocation2 + $0x9b0] sm:$0xf] %v4277
  %4296 = vst [vmem:[#allocation2 + $0x9b8] sm:$0xf] %v4278
  %4297 = vst [vmem:[#allocation2 + $0x9c0] sm:$0xf] %v4279
  %4298 = vst [vmem:[#allocation2 + $0x9c8] sm:$0xf] %v4280
  %4299 = vst [vmem:[#allocation2 + $0x9d0] sm:$0xf] %v4281
  %v4300 = vld [vmem:[%s0 + $0x4] sm:$0xff]
  %v4301 = vld [vmem:[%s0 + $0xc] sm:$0xff]
  %v4302 = vld [vmem:[%s0 + $0x14] sm:$0xff]
  %v4303 = vld [vmem:[%s0 + $0x1c] sm:$0xff]
  %v4304 = vld [vmem:[%s0 + $0x24] sm:$0xff]
  %v4310 = vcombine.low %v4300, %v4300
  %v4311 = vcombine.low %v4301, %v4301
  %v4312 = vcombine.low %v4302, %v4302
  %v4313 = vcombine.low %v4303, %v4303
  %v4314 = vcombine.low %v4304, %v4304
  %4315 = vrot.lane.b32.xlu0 %v4310, 82
  %v4316 = vpop.permute.xlu0 %4315
  %4317 = vrot.lane.b32.xlu0 %v4300, 82
  %v4318 = vpop.permute.xlu0 %4317
  %4319 = vrot.lane.b32.xlu0 %v4311, 82
  %v4320 = vpop.permute.xlu0 %4319
  %4321 = vrot.lane.b32.xlu0 %v4301, 82
  %v4322 = vpop.permute.xlu0 %4321
  %4323 = vrot.lane.b32.xlu0 %v4312, 82
  %v4324 = vpop.permute.xlu0 %4323
  %4325 = vrot.lane.b32.xlu0 %v4302, 82
  %v4326 = vpop.permute.xlu0 %4325
  %4327 = vrot.lane.b32.xlu0 %v4313, 82
  %v4328 = vpop.permute.xlu0 %4327
  %4329 = vrot.lane.b32.xlu0 %v4303, 82
  %v4330 = vpop.permute.xlu0 %4329
  %4331 = vrot.lane.b32.xlu0 %v4314, 82
  %v4332 = vpop.permute.xlu0 %4331
  %4333 = vrot.lane.b32.xlu0 %v4304, 82
  %v4334 = vpop.permute.xlu0 %4333
  %vm4335 = vcmask 670720
  %v4336 = vsel %vm4335, %v4316, %v4318
  %v4337 = vsel %vm4335, %v4318, %v4320
  %v4338 = vsel %vm4335, %v4320, %v4322
  %v4339 = vsel %vm4335, %v4322, %v4324
  %v4340 = vsel %vm4335, %v4324, %v4326
  %v4341 = vsel %vm4335, %v4326, %v4328
  %v4342 = vsel %vm4335, %v4328, %v4330
  %v4343 = vsel %vm4335, %v4330, %v4332
  %v4344 = vsel %vm4335, %v4332, %v4334
  %4354 = vst [vmem:[#allocation2 + $0x990] sm:$0xf0] %v4336
  %4355 = vst [vmem:[#allocation2 + $0x998] sm:$0xf0] %v4337
  %4356 = vst [vmem:[#allocation2 + $0x9a0] sm:$0xf0] %v4338
  %4357 = vst [vmem:[#allocation2 + $0x9a8] sm:$0xf0] %v4339
  %4358 = vst [vmem:[#allocation2 + $0x9b0] sm:$0xf0] %v4340
  %4359 = vst [vmem:[#allocation2 + $0x9b8] sm:$0xf0] %v4341
  %4360 = vst [vmem:[#allocation2 + $0x9c0] sm:$0xf0] %v4342
  %4361 = vst [vmem:[#allocation2 + $0x9c8] sm:$0xf0] %v4343
  %4362 = vst [vmem:[#allocation2 + $0x9d0] sm:$0xf0] %v4344
  %v4363 = vld [vmem:[%s0 + $0x4] sm:$0xff]
  %v4364 = vld [vmem:[%s0 + $0xc] sm:$0xff]
  %v4365 = vld [vmem:[%s0 + $0x14] sm:$0xff]
  %v4366 = vld [vmem:[%s0 + $0x1c] sm:$0xff]
  %v4367 = vld [vmem:[%s0 + $0x24] sm:$0xff]
  %v4373 = vcombine.high %v4363, %v4363
  %v4374 = vcombine.high %v4364, %v4364
  %v4375 = vcombine.high %v4365, %v4365
  %v4376 = vcombine.high %v4366, %v4366
  %v4377 = vcombine.high %v4367, %v4367
  %4378 = vrot.lane.b32.xlu0 %v4363, 81
  %v4379 = vpop.permute.xlu0 %4378
  %4380 = vrot.lane.b32.xlu0 %v4373, 81
  %v4381 = vpop.permute.xlu0 %4380
  %4382 = vrot.lane.b32.xlu0 %v4364, 81
  %v4383 = vpop.permute.xlu0 %4382
  %4384 = vrot.lane.b32.xlu0 %v4374, 81
  %v4385 = vpop.permute.xlu0 %4384
  %4386 = vrot.lane.b32.xlu0 %v4365, 81
  %v4387 = vpop.permute.xlu0 %4386
  %4388 = vrot.lane.b32.xlu0 %v4375, 81
  %v4389 = vpop.permute.xlu0 %4388
  %4390 = vrot.lane.b32.xlu0 %v4366, 81
  %v4391 = vpop.permute.xlu0 %4390
  %4392 = vrot.lane.b32.xlu0 %v4376, 81
  %v4393 = vpop.permute.xlu0 %4392
  %4394 = vrot.lane.b32.xlu0 %v4367, 81
  %v4395 = vpop.permute.xlu0 %4394
  %4396 = vrot.lane.b32.xlu0 %v4377, 81
  %v4397 = vpop.permute.xlu0 %4396
  %vm4398 = vcmask 662528
  %v4399 = vsel %vm4398, %v4379, %v4381
  %v4400 = vsel %vm4398, %v4381, %v4383
  %v4401 = vsel %vm4398, %v4383, %v4385
  %v4402 = vsel %vm4398, %v4385, %v4387
  %v4403 = vsel %vm4398, %v4387, %v4389
  %v4404 = vsel %vm4398, %v4389, %v4391
  %v4405 = vsel %vm4398, %v4391, %v4393
  %v4406 = vsel %vm4398, %v4393, %v4395
  %v4407 = vsel %vm4398, %v4395, %v4397
  %4417 = vst [vmem:[#allocation2 + $0x9d8] sm:$0xf] %v4399
  %4418 = vst [vmem:[#allocation2 + $0x9e0] sm:$0xf] %v4400
  %4419 = vst [vmem:[#allocation2 + $0x9e8] sm:$0xf] %v4401
  %4420 = vst [vmem:[#allocation2 + $0x9f0] sm:$0xf] %v4402
  %4421 = vst [vmem:[#allocation2 + $0x9f8] sm:$0xf] %v4403
  %4422 = vst [vmem:[#allocation2 + $0xa00] sm:$0xf] %v4404
  %4423 = vst [vmem:[#allocation2 + $0xa08] sm:$0xf] %v4405
  %4424 = vst [vmem:[#allocation2 + $0xa10] sm:$0xf] %v4406
  %4425 = vst [vmem:[#allocation2 + $0xa18] sm:$0xf] %v4407
  %v4426 = vld [vmem:[%s0 + $0x4] sm:$0xff]
  %v4427 = vld [vmem:[%s0 + $0xc] sm:$0xff]
  %v4428 = vld [vmem:[%s0 + $0x14] sm:$0xff]
  %v4429 = vld [vmem:[%s0 + $0x1c] sm:$0xff]
  %v4430 = vld [vmem:[%s0 + $0x24] sm:$0xff]
  %v4436 = vcombine.low %v4426, %v4426
  %v4437 = vcombine.low %v4427, %v4427
  %v4438 = vcombine.low %v4428, %v4428
  %v4439 = vcombine.low %v4429, %v4429
  %v4440 = vcombine.low %v4430, %v4430
  %4441 = vrot.lane.b32.xlu0 %v4436, 80
  %v4442 = vpop.permute.xlu0 %4441
  %4443 = vrot.lane.b32.xlu0 %v4426, 80
  %v4444 = vpop.permute.xlu0 %4443
  %4445 = vrot.lane.b32.xlu0 %v4437, 80
  %v4446 = vpop.permute.xlu0 %4445
  %4447 = vrot.lane.b32.xlu0 %v4427, 80
  %v4448 = vpop.permute.xlu0 %4447
  %4449 = vrot.lane.b32.xlu0 %v4438, 80
  %v4450 = vpop.permute.xlu0 %4449
  %4451 = vrot.lane.b32.xlu0 %v4428, 80
  %v4452 = vpop.permute.xlu0 %4451
  %4453 = vrot.lane.b32.xlu0 %v4439, 80
  %v4454 = vpop.permute.xlu0 %4453
  %4455 = vrot.lane.b32.xlu0 %v4429, 80
  %v4456 = vpop.permute.xlu0 %4455
  %4457 = vrot.lane.b32.xlu0 %v4440, 80
  %v4458 = vpop.permute.xlu0 %4457
  %4459 = vrot.lane.b32.xlu0 %v4430, 80
  %v4460 = vpop.permute.xlu0 %4459
  %v4461 = vsel %vm1157, %v4442, %v4444
  %v4462 = vsel %vm1157, %v4444, %v4446
  %v4463 = vsel %vm1157, %v4446, %v4448
  %v4464 = vsel %vm1157, %v4448, %v4450
  %v4465 = vsel %vm1157, %v4450, %v4452
  %v4466 = vsel %vm1157, %v4452, %v4454
  %v4467 = vsel %vm1157, %v4454, %v4456
  %v4468 = vsel %vm1157, %v4456, %v4458
  %v4469 = vsel %vm1157, %v4458, %v4460
  %4479 = vst [vmem:[#allocation2 + $0x9d8] sm:$0xf0] %v4461
  %4480 = vst [vmem:[#allocation2 + $0x9e0] sm:$0xf0] %v4462
  %4481 = vst [vmem:[#allocation2 + $0x9e8] sm:$0xf0] %v4463
  %4482 = vst [vmem:[#allocation2 + $0x9f0] sm:$0xf0] %v4464
  %4483 = vst [vmem:[#allocation2 + $0x9f8] sm:$0xf0] %v4465
  %4484 = vst [vmem:[#allocation2 + $0xa00] sm:$0xf0] %v4466
  %4485 = vst [vmem:[#allocation2 + $0xa08] sm:$0xf0] %v4467
  %4486 = vst [vmem:[#allocation2 + $0xa10] sm:$0xf0] %v4468
  %4487 = vst [vmem:[#allocation2 + $0xa18] sm:$0xf0] %v4469
  %v4488 = vld [vmem:[%s0 + $0x4] sm:$0xff]
  %v4489 = vld [vmem:[%s0 + $0xc] sm:$0xff]
  %v4490 = vld [vmem:[%s0 + $0x14] sm:$0xff]
  %v4491 = vld [vmem:[%s0 + $0x1c] sm:$0xff]
  %v4492 = vld [vmem:[%s0 + $0x24] sm:$0xff]
  %v4498 = vcombine.high %v4488, %v4488
  %v4499 = vcombine.high %v4489, %v4489
  %v4500 = vcombine.high %v4490, %v4490
  %v4501 = vcombine.high %v4491, %v4491
  %v4502 = vcombine.high %v4492, %v4492
  %4503 = vrot.lane.b32.xlu0 %v4488, 64
  %v4504 = vpop.permute.xlu0 %4503
  %4505 = vrot.lane.b32.xlu0 %v4498, 64
  %v4506 = vpop.permute.xlu0 %4505
  %4507 = vrot.lane.b32.xlu0 %v4489, 64
  %v4508 = vpop.permute.xlu0 %4507
  %4509 = vrot.lane.b32.xlu0 %v4499, 64
  %v4510 = vpop.permute.xlu0 %4509
  %4511 = vrot.lane.b32.xlu0 %v4490, 64
  %v4512 = vpop.permute.xlu0 %4511
  %4513 = vrot.lane.b32.xlu0 %v4500, 64
  %v4514 = vpop.permute.xlu0 %4513
  %4515 = vrot.lane.b32.xlu0 %v4491, 64
  %v4516 = vpop.permute.xlu0 %4515
  %4517 = vrot.lane.b32.xlu0 %v4501, 64
  %v4518 = vpop.permute.xlu0 %4517
  %4519 = vrot.lane.b32.xlu0 %v4492, 64
  %v4520 = vpop.permute.xlu0 %4519
  %4521 = vrot.lane.b32.xlu0 %v4502, 64
  %v4522 = vpop.permute.xlu0 %4521
  %vm4523 = vcmask 523264
  %v4524 = vsel %vm4523, %v4504, %v4506
  %v4525 = vsel %vm4523, %v4506, %v4508
  %v4526 = vsel %vm4523, %v4508, %v4510
  %v4527 = vsel %vm4523, %v4510, %v4512
  %v4528 = vsel %vm4523, %v4512, %v4514
  %v4529 = vsel %vm4523, %v4514, %v4516
  %v4530 = vsel %vm4523, %v4516, %v4518
  %v4531 = vsel %vm4523, %v4518, %v4520
  %v4532 = vsel %vm4523, %v4520, %v4522
  %4542 = vst [vmem:[#allocation2 + $0xa20] sm:$0xf] %v4524
  %4543 = vst [vmem:[#allocation2 + $0xa28] sm:$0xf] %v4525
  %4544 = vst [vmem:[#allocation2 + $0xa30] sm:$0xf] %v4526
  %4545 = vst [vmem:[#allocation2 + $0xa38] sm:$0xf] %v4527
  %4546 = vst [vmem:[#allocation2 + $0xa40] sm:$0xf] %v4528
  %4547 = vst [vmem:[#allocation2 + $0xa48] sm:$0xf] %v4529
  %4548 = vst [vmem:[#allocation2 + $0xa50] sm:$0xf] %v4530
  %4549 = vst [vmem:[#allocation2 + $0xa58] sm:$0xf] %v4531
  %4550 = vst [vmem:[#allocation2 + $0xa60] sm:$0xf] %v4532
  %v4551 = vld [vmem:[%s0 + $0x4] sm:$0xff]
  %v4552 = vld [vmem:[%s0 + $0xc] sm:$0xff]
  %v4553 = vld [vmem:[%s0 + $0x14] sm:$0xff]
  %v4554 = vld [vmem:[%s0 + $0x1c] sm:$0xff]
  %v4555 = vld [vmem:[%s0 + $0x24] sm:$0xff]
  %v4561 = vcombine.low %v4551, %v4551
  %v4562 = vcombine.low %v4552, %v4552
  %v4563 = vcombine.low %v4553, %v4553
  %v4564 = vcombine.low %v4554, %v4554
  %v4565 = vcombine.low %v4555, %v4555
  %4566 = vrot.lane.b32.xlu0 %v4561, 63
  %v4567 = vpop.permute.xlu0 %4566
  %4568 = vrot.lane.b32.xlu0 %v4551, 63
  %v4569 = vpop.permute.xlu0 %4568
  %4570 = vrot.lane.b32.xlu0 %v4562, 63
  %v4571 = vpop.permute.xlu0 %4570
  %4572 = vrot.lane.b32.xlu0 %v4552, 63
  %v4573 = vpop.permute.xlu0 %4572
  %4574 = vrot.lane.b32.xlu0 %v4563, 63
  %v4575 = vpop.permute.xlu0 %4574
  %4576 = vrot.lane.b32.xlu0 %v4553, 63
  %v4577 = vpop.permute.xlu0 %4576
  %4578 = vrot.lane.b32.xlu0 %v4564, 63
  %v4579 = vpop.permute.xlu0 %4578
  %4580 = vrot.lane.b32.xlu0 %v4554, 63
  %v4581 = vpop.permute.xlu0 %4580
  %4582 = vrot.lane.b32.xlu0 %v4565, 63
  %v4583 = vpop.permute.xlu0 %4582
  %4584 = vrot.lane.b32.xlu0 %v4555, 63
  %v4585 = vpop.permute.xlu0 %4584
  %vm4586 = vcmask 515072
  %v4587 = vsel %vm4586, %v4567, %v4569
  %v4588 = vsel %vm4586, %v4569, %v4571
  %v4589 = vsel %vm4586, %v4571, %v4573
  %v4590 = vsel %vm4586, %v4573, %v4575
  %v4591 = vsel %vm4586, %v4575, %v4577
  %v4592 = vsel %vm4586, %v4577, %v4579
  %v4593 = vsel %vm4586, %v4579, %v4581
  %v4594 = vsel %vm4586, %v4581, %v4583
  %v4595 = vsel %vm4586, %v4583, %v4585
  %4605 = vst [vmem:[#allocation2 + $0xa20] sm:$0xf0] %v4587
  %4606 = vst [vmem:[#allocation2 + $0xa28] sm:$0xf0] %v4588
  %4607 = vst [vmem:[#allocation2 + $0xa30] sm:$0xf0] %v4589
  %4608 = vst [vmem:[#allocation2 + $0xa38] sm:$0xf0] %v4590
  %4609 = vst [vmem:[#allocation2 + $0xa40] sm:$0xf0] %v4591
  %4610 = vst [vmem:[#allocation2 + $0xa48] sm:$0xf0] %v4592
  %4611 = vst [vmem:[#allocation2 + $0xa50] sm:$0xf0] %v4593
  %4612 = vst [vmem:[#allocation2 + $0xa58] sm:$0xf0] %v4594
  %4613 = vst [vmem:[#allocation2 + $0xa60] sm:$0xf0] %v4595
  %v4614 = vld [vmem:[%s0 + $0x4] sm:$0xff]
  %v4615 = vld [vmem:[%s0 + $0xc] sm:$0xff]
  %v4616 = vld [vmem:[%s0 + $0x14] sm:$0xff]
  %v4617 = vld [vmem:[%s0 + $0x1c] sm:$0xff]
  %v4618 = vld [vmem:[%s0 + $0x24] sm:$0xff]
  %v4624 = vcombine.high %v4614, %v4614
  %v4625 = vcombine.high %v4615, %v4615
  %v4626 = vcombine.high %v4616, %v4616
  %v4627 = vcombine.high %v4617, %v4617
  %v4628 = vcombine.high %v4618, %v4618
  %4629 = vrot.lane.b32.xlu0 %v4614, 62
  %v4630 = vpop.permute.xlu0 %4629
  %4631 = vrot.lane.b32.xlu0 %v4624, 62
  %v4632 = vpop.permute.xlu0 %4631
  %4633 = vrot.lane.b32.xlu0 %v4615, 62
  %v4634 = vpop.permute.xlu0 %4633
  %4635 = vrot.lane.b32.xlu0 %v4625, 62
  %v4636 = vpop.permute.xlu0 %4635
  %4637 = vrot.lane.b32.xlu0 %v4616, 62
  %v4638 = vpop.permute.xlu0 %4637
  %4639 = vrot.lane.b32.xlu0 %v4626, 62
  %v4640 = vpop.permute.xlu0 %4639
  %4641 = vrot.lane.b32.xlu0 %v4617, 62
  %v4642 = vpop.permute.xlu0 %4641
  %4643 = vrot.lane.b32.xlu0 %v4627, 62
  %v4644 = vpop.permute.xlu0 %4643
  %4645 = vrot.lane.b32.xlu0 %v4618, 62
  %v4646 = vpop.permute.xlu0 %4645
  %4647 = vrot.lane.b32.xlu0 %v4628, 62
  %v4648 = vpop.permute.xlu0 %4647
  %vm4649 = vcmask 506880
  %v4650 = vsel %vm4649, %v4630, %v4632
  %v4651 = vsel %vm4649, %v4632, %v4634
  %v4652 = vsel %vm4649, %v4634, %v4636
  %v4653 = vsel %vm4649, %v4636, %v4638
  %v4654 = vsel %vm4649, %v4638, %v4640
  %v4655 = vsel %vm4649, %v4640, %v4642
  %v4656 = vsel %vm4649, %v4642, %v4644
  %v4657 = vsel %vm4649, %v4644, %v4646
  %v4658 = vsel %vm4649, %v4646, %v4648
  %4668 = vst [vmem:[#allocation2 + $0xa68] sm:$0xf] %v4650
  %4669 = vst [vmem:[#allocation2 + $0xa70] sm:$0xf] %v4651
  %4670 = vst [vmem:[#allocation2 + $0xa78] sm:$0xf] %v4652
  %4671 = vst [vmem:[#allocation2 + $0xa80] sm:$0xf] %v4653
  %4672 = vst [vmem:[#allocation2 + $0xa88] sm:$0xf] %v4654
  %4673 = vst [vmem:[#allocation2 + $0xa90] sm:$0xf] %v4655
  %4674 = vst [vmem:[#allocation2 + $0xa98] sm:$0xf] %v4656
  %4675 = vst [vmem:[#allocation2 + $0xaa0] sm:$0xf] %v4657
  %4676 = vst [vmem:[#allocation2 + $0xaa8] sm:$0xf] %v4658
  %v4677 = vld [vmem:[%s0 + $0x4] sm:$0xff]
  %v4678 = vld [vmem:[%s0 + $0xc] sm:$0xff]
  %v4679 = vld [vmem:[%s0 + $0x14] sm:$0xff]
  %v4680 = vld [vmem:[%s0 + $0x1c] sm:$0xff]
  %v4681 = vld [vmem:[%s0 + $0x24] sm:$0xff]
  %v4687 = vcombine.low %v4677, %v4677
  %v4688 = vcombine.low %v4678, %v4678
  %v4689 = vcombine.low %v4679, %v4679
  %v4690 = vcombine.low %v4680, %v4680
  %v4691 = vcombine.low %v4681, %v4681
  %4692 = vrot.lane.b32.xlu0 %v4687, 61
  %v4693 = vpop.permute.xlu0 %4692
  %4694 = vrot.lane.b32.xlu0 %v4677, 61
  %v4695 = vpop.permute.xlu0 %4694
  %4696 = vrot.lane.b32.xlu0 %v4688, 61
  %v4697 = vpop.permute.xlu0 %4696
  %4698 = vrot.lane.b32.xlu0 %v4678, 61
  %v4699 = vpop.permute.xlu0 %4698
  %4700 = vrot.lane.b32.xlu0 %v4689, 61
  %v4701 = vpop.permute.xlu0 %4700
  %4702 = vrot.lane.b32.xlu0 %v4679, 61
  %v4703 = vpop.permute.xlu0 %4702
  %4704 = vrot.lane.b32.xlu0 %v4690, 61
  %v4705 = vpop.permute.xlu0 %4704
  %4706 = vrot.lane.b32.xlu0 %v4680, 61
  %v4707 = vpop.permute.xlu0 %4706
  %4708 = vrot.lane.b32.xlu0 %v4691, 61
  %v4709 = vpop.permute.xlu0 %4708
  %4710 = vrot.lane.b32.xlu0 %v4681, 61
  %v4711 = vpop.permute.xlu0 %4710
  %vm4712 = vcmask 498688
  %v4713 = vsel %vm4712, %v4693, %v4695
  %v4714 = vsel %vm4712, %v4695, %v4697
  %v4715 = vsel %vm4712, %v4697, %v4699
  %v4716 = vsel %vm4712, %v4699, %v4701
  %v4717 = vsel %vm4712, %v4701, %v4703
  %v4718 = vsel %vm4712, %v4703, %v4705
  %v4719 = vsel %vm4712, %v4705, %v4707
  %v4720 = vsel %vm4712, %v4707, %v4709
  %v4721 = vsel %vm4712, %v4709, %v4711
  %4731 = vst [vmem:[#allocation2 + $0xa68] sm:$0xf0] %v4713
  %4732 = vst [vmem:[#allocation2 + $0xa70] sm:$0xf0] %v4714
  %4733 = vst [vmem:[#allocation2 + $0xa78] sm:$0xf0] %v4715
  %4734 = vst [vmem:[#allocation2 + $0xa80] sm:$0xf0] %v4716
  %4735 = vst [vmem:[#allocation2 + $0xa88] sm:$0xf0] %v4717
  %4736 = vst [vmem:[#allocation2 + $0xa90] sm:$0xf0] %v4718
  %4737 = vst [vmem:[#allocation2 + $0xa98] sm:$0xf0] %v4719
  %4738 = vst [vmem:[#allocation2 + $0xaa0] sm:$0xf0] %v4720
  %4739 = vst [vmem:[#allocation2 + $0xaa8] sm:$0xf0] %v4721
  %v4740 = vld [vmem:[%s0 + $0x4] sm:$0xff]
  %v4741 = vld [vmem:[%s0 + $0xc] sm:$0xff]
  %v4742 = vld [vmem:[%s0 + $0x14] sm:$0xff]
  %v4743 = vld [vmem:[%s0 + $0x1c] sm:$0xff]
  %v4744 = vld [vmem:[%s0 + $0x24] sm:$0xff]
  %v4750 = vcombine.high %v4740, %v4740
  %v4751 = vcombine.high %v4741, %v4741
  %v4752 = vcombine.high %v4742, %v4742
  %v4753 = vcombine.high %v4743, %v4743
  %v4754 = vcombine.high %v4744, %v4744
  %4755 = vrot.lane.b32.xlu0 %v4740, 60
  %v4756 = vpop.permute.xlu0 %4755
  %4757 = vrot.lane.b32.xlu0 %v4750, 60
  %v4758 = vpop.permute.xlu0 %4757
  %4759 = vrot.lane.b32.xlu0 %v4741, 60
  %v4760 = vpop.permute.xlu0 %4759
  %4761 = vrot.lane.b32.xlu0 %v4751, 60
  %v4762 = vpop.permute.xlu0 %4761
  %4763 = vrot.lane.b32.xlu0 %v4742, 60
  %v4764 = vpop.permute.xlu0 %4763
  %4765 = vrot.lane.b32.xlu0 %v4752, 60
  %v4766 = vpop.permute.xlu0 %4765
  %4767 = vrot.lane.b32.xlu0 %v4743, 60
  %v4768 = vpop.permute.xlu0 %4767
  %4769 = vrot.lane.b32.xlu0 %v4753, 60
  %v4770 = vpop.permute.xlu0 %4769
  %4771 = vrot.lane.b32.xlu0 %v4744, 60
  %v4772 = vpop.permute.xlu0 %4771
  %4773 = vrot.lane.b32.xlu0 %v4754, 60
  %v4774 = vpop.permute.xlu0 %4773
  %vm4775 = vcmask 490496
  %v4776 = vsel %vm4775, %v4756, %v4758
  %v4777 = vsel %vm4775, %v4758, %v4760
  %v4778 = vsel %vm4775, %v4760, %v4762
  %v4779 = vsel %vm4775, %v4762, %v4764
  %v4780 = vsel %vm4775, %v4764, %v4766
  %v4781 = vsel %vm4775, %v4766, %v4768
  %v4782 = vsel %vm4775, %v4768, %v4770
  %v4783 = vsel %vm4775, %v4770, %v4772
  %v4784 = vsel %vm4775, %v4772, %v4774
  %4794 = vst [vmem:[#allocation2 + $0xab0] sm:$0xf] %v4776
  %4795 = vst [vmem:[#allocation2 + $0xab8] sm:$0xf] %v4777
  %4796 = vst [vmem:[#allocation2 + $0xac0] sm:$0xf] %v4778
  %4797 = vst [vmem:[#allocation2 + $0xac8] sm:$0xf] %v4779
  %4798 = vst [vmem:[#allocation2 + $0xad0] sm:$0xf] %v4780
  %4799 = vst [vmem:[#allocation2 + $0xad8] sm:$0xf] %v4781
  %4800 = vst [vmem:[#allocation2 + $0xae0] sm:$0xf] %v4782
  %4801 = vst [vmem:[#allocation2 + $0xae8] sm:$0xf] %v4783
  %4802 = vst [vmem:[#allocation2 + $0xaf0] sm:$0xf] %v4784
  %v4803 = vld [vmem:[%s0 + $0x4] sm:$0xff]
  %v4804 = vld [vmem:[%s0 + $0xc] sm:$0xff]
  %v4805 = vld [vmem:[%s0 + $0x14] sm:$0xff]
  %v4806 = vld [vmem:[%s0 + $0x1c] sm:$0xff]
  %v4807 = vld [vmem:[%s0 + $0x24] sm:$0xff]
  %v4813 = vcombine.low %v4803, %v4803
  %v4814 = vcombine.low %v4804, %v4804
  %v4815 = vcombine.low %v4805, %v4805
  %v4816 = vcombine.low %v4806, %v4806
  %v4817 = vcombine.low %v4807, %v4807
  %4818 = vrot.lane.b32.xlu0 %v4813, 59
  %v4819 = vpop.permute.xlu0 %4818
  %4820 = vrot.lane.b32.xlu0 %v4803, 59
  %v4821 = vpop.permute.xlu0 %4820
  %4822 = vrot.lane.b32.xlu0 %v4814, 59
  %v4823 = vpop.permute.xlu0 %4822
  %4824 = vrot.lane.b32.xlu0 %v4804, 59
  %v4825 = vpop.permute.xlu0 %4824
  %4826 = vrot.lane.b32.xlu0 %v4815, 59
  %v4827 = vpop.permute.xlu0 %4826
  %4828 = vrot.lane.b32.xlu0 %v4805, 59
  %v4829 = vpop.permute.xlu0 %4828
  %4830 = vrot.lane.b32.xlu0 %v4816, 59
  %v4831 = vpop.permute.xlu0 %4830
  %4832 = vrot.lane.b32.xlu0 %v4806, 59
  %v4833 = vpop.permute.xlu0 %4832
  %4834 = vrot.lane.b32.xlu0 %v4817, 59
  %v4835 = vpop.permute.xlu0 %4834
  %4836 = vrot.lane.b32.xlu0 %v4807, 59
  %v4837 = vpop.permute.xlu0 %4836
  %vm4838 = vcmask 482304
  %v4839 = vsel %vm4838, %v4819, %v4821
  %v4840 = vsel %vm4838, %v4821, %v4823
  %v4841 = vsel %vm4838, %v4823, %v4825
  %v4842 = vsel %vm4838, %v4825, %v4827
  %v4843 = vsel %vm4838, %v4827, %v4829
  %v4844 = vsel %vm4838, %v4829, %v4831
  %v4845 = vsel %vm4838, %v4831, %v4833
  %v4846 = vsel %vm4838, %v4833, %v4835
  %v4847 = vsel %vm4838, %v4835, %v4837
  %4857 = vst [vmem:[#allocation2 + $0xab0] sm:$0xf0] %v4839
  %4858 = vst [vmem:[#allocation2 + $0xab8] sm:$0xf0] %v4840
  %4859 = vst [vmem:[#allocation2 + $0xac0] sm:$0xf0] %v4841
  %4860 = vst [vmem:[#allocation2 + $0xac8] sm:$0xf0] %v4842
  %4861 = vst [vmem:[#allocation2 + $0xad0] sm:$0xf0] %v4843
  %4862 = vst [vmem:[#allocation2 + $0xad8] sm:$0xf0] %v4844
  %4863 = vst [vmem:[#allocation2 + $0xae0] sm:$0xf0] %v4845
  %4864 = vst [vmem:[#allocation2 + $0xae8] sm:$0xf0] %v4846
  %4865 = vst [vmem:[#allocation2 + $0xaf0] sm:$0xf0] %v4847
  %v4866 = vld [vmem:[%s0 + $0x4] sm:$0xff]
  %v4867 = vld [vmem:[%s0 + $0xc] sm:$0xff]
  %v4868 = vld [vmem:[%s0 + $0x14] sm:$0xff]
  %v4869 = vld [vmem:[%s0 + $0x1c] sm:$0xff]
  %v4870 = vld [vmem:[%s0 + $0x24] sm:$0xff]
  %v4876 = vcombine.high %v4866, %v4866
  %v4877 = vcombine.high %v4867, %v4867
  %v4878 = vcombine.high %v4868, %v4868
  %v4879 = vcombine.high %v4869, %v4869
  %v4880 = vcombine.high %v4870, %v4870
  %4881 = vrot.lane.b32.xlu0 %v4866, 58
  %v4882 = vpop.permute.xlu0 %4881
  %4883 = vrot.lane.b32.xlu0 %v4876, 58
  %v4884 = vpop.permute.xlu0 %4883
  %4885 = vrot.lane.b32.xlu0 %v4867, 58
  %v4886 = vpop.permute.xlu0 %4885
  %4887 = vrot.lane.b32.xlu0 %v4877, 58
  %v4888 = vpop.permute.xlu0 %4887
  %4889 = vrot.lane.b32.xlu0 %v4868, 58
  %v4890 = vpop.permute.xlu0 %4889
  %4891 = vrot.lane.b32.xlu0 %v4878, 58
  %v4892 = vpop.permute.xlu0 %4891
  %4893 = vrot.lane.b32.xlu0 %v4869, 58
  %v4894 = vpop.permute.xlu0 %4893
  %4895 = vrot.lane.b32.xlu0 %v4879, 58
  %v4896 = vpop.permute.xlu0 %4895
  %4897 = vrot.lane.b32.xlu0 %v4870, 58
  %v4898 = vpop.permute.xlu0 %4897
  %4899 = vrot.lane.b32.xlu0 %v4880, 58
  %v4900 = vpop.permute.xlu0 %4899
  %vm4901 = vcmask 474112
  %v4902 = vsel %vm4901, %v4882, %v4884
  %v4903 = vsel %vm4901, %v4884, %v4886
  %v4904 = vsel %vm4901, %v4886, %v4888
  %v4905 = vsel %vm4901, %v4888, %v4890
  %v4906 = vsel %vm4901, %v4890, %v4892
  %v4907 = vsel %vm4901, %v4892, %v4894
  %v4908 = vsel %vm4901, %v4894, %v4896
  %v4909 = vsel %vm4901, %v4896, %v4898
  %v4910 = vsel %vm4901, %v4898, %v4900
  %4920 = vst [vmem:[#allocation2 + $0xaf8] sm:$0xf] %v4902
  %4921 = vst [vmem:[#allocation2 + $0xb00] sm:$0xf] %v4903
  %4922 = vst [vmem:[#allocation2 + $0xb08] sm:$0xf] %v4904
  %4923 = vst [vmem:[#allocation2 + $0xb10] sm:$0xf] %v4905
  %4924 = vst [vmem:[#allocation2 + $0xb18] sm:$0xf] %v4906
  %4925 = vst [vmem:[#allocation2 + $0xb20] sm:$0xf] %v4907
  %4926 = vst [vmem:[#allocation2 + $0xb28] sm:$0xf] %v4908
  %4927 = vst [vmem:[#allocation2 + $0xb30] sm:$0xf] %v4909
  %4928 = vst [vmem:[#allocation2 + $0xb38] sm:$0xf] %v4910
  %v4929 = vld [vmem:[%s0 + $0x4] sm:$0xff]
  %v4930 = vld [vmem:[%s0 + $0xc] sm:$0xff]
  %v4931 = vld [vmem:[%s0 + $0x14] sm:$0xff]
  %v4932 = vld [vmem:[%s0 + $0x1c] sm:$0xff]
  %v4933 = vld [vmem:[%s0 + $0x24] sm:$0xff]
  %v4939 = vcombine.low %v4929, %v4929
  %v4940 = vcombine.low %v4930, %v4930
  %v4941 = vcombine.low %v4931, %v4931
  %v4942 = vcombine.low %v4932, %v4932
  %v4943 = vcombine.low %v4933, %v4933
  %4944 = vrot.lane.b32.xlu0 %v4939, 57
  %v4945 = vpop.permute.xlu0 %4944
  %4946 = vrot.lane.b32.xlu0 %v4929, 57
  %v4947 = vpop.permute.xlu0 %4946
  %4948 = vrot.lane.b32.xlu0 %v4940, 57
  %v4949 = vpop.permute.xlu0 %4948
  %4950 = vrot.lane.b32.xlu0 %v4930, 57
  %v4951 = vpop.permute.xlu0 %4950
  %4952 = vrot.lane.b32.xlu0 %v4941, 57
  %v4953 = vpop.permute.xlu0 %4952
  %4954 = vrot.lane.b32.xlu0 %v4931, 57
  %v4955 = vpop.permute.xlu0 %4954
  %4956 = vrot.lane.b32.xlu0 %v4942, 57
  %v4957 = vpop.permute.xlu0 %4956
  %4958 = vrot.lane.b32.xlu0 %v4932, 57
  %v4959 = vpop.permute.xlu0 %4958
  %4960 = vrot.lane.b32.xlu0 %v4943, 57
  %v4961 = vpop.permute.xlu0 %4960
  %4962 = vrot.lane.b32.xlu0 %v4933, 57
  %v4963 = vpop.permute.xlu0 %4962
  %vm4964 = vcmask 465920
  %v4965 = vsel %vm4964, %v4945, %v4947
  %v4966 = vsel %vm4964, %v4947, %v4949
  %v4967 = vsel %vm4964, %v4949, %v4951
  %v4968 = vsel %vm4964, %v4951, %v4953
  %v4969 = vsel %vm4964, %v4953, %v4955
  %v4970 = vsel %vm4964, %v4955, %v4957
  %v4971 = vsel %vm4964, %v4957, %v4959
  %v4972 = vsel %vm4964, %v4959, %v4961
  %v4973 = vsel %vm4964, %v4961, %v4963
  %4983 = vst [vmem:[#allocation2 + $0xaf8] sm:$0xf0] %v4965
  %4984 = vst [vmem:[#allocation2 + $0xb00] sm:$0xf0] %v4966
  %4985 = vst [vmem:[#allocation2 + $0xb08] sm:$0xf0] %v4967
  %4986 = vst [vmem:[#allocation2 + $0xb10] sm:$0xf0] %v4968
  %4987 = vst [vmem:[#allocation2 + $0xb18] sm:$0xf0] %v4969
  %4988 = vst [vmem:[#allocation2 + $0xb20] sm:$0xf0] %v4970
  %4989 = vst [vmem:[#allocation2 + $0xb28] sm:$0xf0] %v4971
  %4990 = vst [vmem:[#allocation2 + $0xb30] sm:$0xf0] %v4972
  %4991 = vst [vmem:[#allocation2 + $0xb38] sm:$0xf0] %v4973
  %v4992 = vld [vmem:[%s0 + $0x4] sm:$0xff]
  %v4993 = vld [vmem:[%s0 + $0xc] sm:$0xff]
  %v4994 = vld [vmem:[%s0 + $0x14] sm:$0xff]
  %v4995 = vld [vmem:[%s0 + $0x1c] sm:$0xff]
  %v4996 = vld [vmem:[%s0 + $0x24] sm:$0xff]
  %v5002 = vcombine.high %v4992, %v4992
  %v5003 = vcombine.high %v4993, %v4993
  %v5004 = vcombine.high %v4994, %v4994
  %v5005 = vcombine.high %v4995, %v4995
  %v5006 = vcombine.high %v4996, %v4996
  %5007 = vrot.lane.b32.xlu0 %v4992, 56
  %v5008 = vpop.permute.xlu0 %5007
  %5009 = vrot.lane.b32.xlu0 %v5002, 56
  %v5010 = vpop.permute.xlu0 %5009
  %5011 = vrot.lane.b32.xlu0 %v4993, 56
  %v5012 = vpop.permute.xlu0 %5011
  %5013 = vrot.lane.b32.xlu0 %v5003, 56
  %v5014 = vpop.permute.xlu0 %5013
  %5015 = vrot.lane.b32.xlu0 %v4994, 56
  %v5016 = vpop.permute.xlu0 %5015
  %5017 = vrot.lane.b32.xlu0 %v5004, 56
  %v5018 = vpop.permute.xlu0 %5017
  %5019 = vrot.lane.b32.xlu0 %v4995, 56
  %v5020 = vpop.permute.xlu0 %5019
  %5021 = vrot.lane.b32.xlu0 %v5005, 56
  %v5022 = vpop.permute.xlu0 %5021
  %5023 = vrot.lane.b32.xlu0 %v4996, 56
  %v5024 = vpop.permute.xlu0 %5023
  %5025 = vrot.lane.b32.xlu0 %v5006, 56
  %v5026 = vpop.permute.xlu0 %5025
  %v5027 = vsel %vm1724, %v5008, %v5010
  %v5028 = vsel %vm1724, %v5010, %v5012
  %v5029 = vsel %vm1724, %v5012, %v5014
  %v5030 = vsel %vm1724, %v5014, %v5016
  %v5031 = vsel %vm1724, %v5016, %v5018
  %v5032 = vsel %vm1724, %v5018, %v5020
  %v5033 = vsel %vm1724, %v5020, %v5022
  %v5034 = vsel %vm1724, %v5022, %v5024
  %v5035 = vsel %vm1724, %v5024, %v5026
  %5045 = vst [vmem:[#allocation2 + $0xb40] sm:$0xf] %v5027
  %5046 = vst [vmem:[#allocation2 + $0xb48] sm:$0xf] %v5028
  %5047 = vst [vmem:[#allocation2 + $0xb50] sm:$0xf] %v5029
  %5048 = vst [vmem:[#allocation2 + $0xb58] sm:$0xf] %v5030
  %5049 = vst [vmem:[#allocation2 + $0xb60] sm:$0xf] %v5031
  %5050 = vst [vmem:[#allocation2 + $0xb68] sm:$0xf] %v5032
  %5051 = vst [vmem:[#allocation2 + $0xb70] sm:$0xf] %v5033
  %5052 = vst [vmem:[#allocation2 + $0xb78] sm:$0xf] %v5034
  %5053 = vst [vmem:[#allocation2 + $0xb80] sm:$0xf] %v5035
  %v5054 = vld [vmem:[%s1] sm:$0xff]
  %v5055 = vld [vmem:[%s1 + $0x8] sm:$0xff]
  %v5056 = vld [vmem:[%s1 + $0x10] sm:$0xff]
  %v5057 = vld [vmem:[%s1 + $0x18] sm:$0xff]
  %v5058 = vld [vmem:[%s1 + $0x20] sm:$0xff]
  %v5059 = vld [vmem:[%s1 + $0x28] sm:$0xff]
  %v5060 = vld [vmem:[%s1 + $0x30] sm:$0xff]
  %v5061 = vld [vmem:[%s1 + $0x38] sm:$0xff]
  %v5062 = vld [vmem:[%s1 + $0x40] sm:$0xff]
  %v5063 = vld [vmem:[%s1 + $0x48] sm:$0xff]
  %v5064 = vld [vmem:[%s1 + $0x50] sm:$0xff]
  %v5065 = vld [vmem:[%s1 + $0x58] sm:$0xff]
  %v5066 = vld [vmem:[%s1 + $0x60] sm:$0xf]
  %v5067 = vld [vmem:[%s1 + $0x68] sm:$0xf]
  %v5068 = vld [vmem:[%s1 + $0x70] sm:$0xf]
  %v5069 = vld [vmem:[#allocation2] sm:$0xff]
  %v5070 = vld [vmem:[#allocation2 + $0x8] sm:$0xff]
  %v5071 = vld [vmem:[#allocation2 + $0x10] sm:$0xff]
  %v5072 = vld [vmem:[#allocation2 + $0x18] sm:$0xff]
  %v5073 = vld [vmem:[#allocation2 + $0x20] sm:$0xff]
  %v5074 = vld [vmem:[#allocation2 + $0x28] sm:$0xff]
  %v5075 = vld [vmem:[#allocation2 + $0x30] sm:$0xff]
  %v5076 = vld [vmem:[#allocation2 + $0x38] sm:$0xff]
  %v5077 = vld [vmem:[#allocation2 + $0x40] sm:$0xff]
  %v5078 = vld [vmem:[#allocation2 + $0x48] sm:$0xff]
  %v5079 = vld [vmem:[#allocation2 + $0x50] sm:$0xff]
  %v5080 = vld [vmem:[#allocation2 + $0x58] sm:$0xff]
  %v5081 = vld [vmem:[#allocation2 + $0x60] sm:$0xff]
  %v5082 = vld [vmem:[#allocation2 + $0x68] sm:$0xff]
  %v5083 = vld [vmem:[#allocation2 + $0x70] sm:$0xff]
  %v5084 = vld [vmem:[#allocation2 + $0x78] sm:$0xff]
  %v5085 = vld [vmem:[#allocation2 + $0x80] sm:$0xff]
  %v5086 = vld [vmem:[#allocation2 + $0x88] sm:$0xff]
  %v5087 = vld [vmem:[#allocation2 + $0x90] sm:$0xff]
  %v5088 = vld [vmem:[#allocation2 + $0x98] sm:$0xff]
  %v5089 = vld [vmem:[#allocation2 + $0xa0] sm:$0xff]
  %v5090 = vld [vmem:[#allocation2 + $0xa8] sm:$0xff]
  %v5091 = vld [vmem:[#allocation2 + $0xb0] sm:$0xff]
  %v5092 = vld [vmem:[#allocation2 + $0xb8] sm:$0xff]
  %v5093 = vld [vmem:[#allocation2 + $0xc0] sm:$0xff]
  %v5094 = vld [vmem:[#allocation2 + $0xc8] sm:$0xff]
  %v5095 = vld [vmem:[#allocation2 + $0xd0] sm:$0xff]
  %v5096 = vld [vmem:[#allocation2 + $0xd8] sm:$0xff]
  %v5097 = vld [vmem:[#allocation2 + $0xe0] sm:$0xff]
  %v5098 = vld [vmem:[#allocation2 + $0xe8] sm:$0xff]
  %v5099 = vld [vmem:[#allocation2 + $0xf0] sm:$0xff]
  %v5100 = vld [vmem:[#allocation2 + $0xf8] sm:$0xff]
  %v5101 = vld [vmem:[#allocation2 + $0x100] sm:$0xff]
  %v5102 = vld [vmem:[#allocation2 + $0x108] sm:$0xff]
  %v5103 = vld [vmem:[#allocation2 + $0x110] sm:$0xff]
  %v5104 = vld [vmem:[#allocation2 + $0x118] sm:$0xff]
  %v5105 = vld [vmem:[#allocation2 + $0x120] sm:$0xff]
  %v5106 = vld [vmem:[#allocation2 + $0x128] sm:$0xff]
  %v5107 = vld [vmem:[#allocation2 + $0x130] sm:$0xff]
  %v5108 = vld [vmem:[#allocation2 + $0x138] sm:$0xff]
  %v5109 = vld [vmem:[#allocation2 + $0x140] sm:$0xff]
  %v5110 = vld [vmem:[#allocation2 + $0x148] sm:$0xff]
  %v5111 = vld [vmem:[#allocation2 + $0x150] sm:$0xff]
  %v5112 = vld [vmem:[#allocation2 + $0x158] sm:$0xff]
  %v5113 = vld [vmem:[#allocation2 + $0x160] sm:$0xff]
  %v5114 = vld [vmem:[#allocation2 + $0x168] sm:$0xff]
  %v5115 = vld [vmem:[#allocation2 + $0x170] sm:$0xff]
  %v5116 = vld [vmem:[#allocation2 + $0x178] sm:$0xff]
  %v5117 = vld [vmem:[#allocation2 + $0x180] sm:$0xff]
  %v5118 = vld [vmem:[#allocation2 + $0x188] sm:$0xff]
  %v5119 = vld [vmem:[#allocation2 + $0x190] sm:$0xff]
  %v5120 = vld [vmem:[#allocation2 + $0x198] sm:$0xff]
  %v5121 = vld [vmem:[#allocation2 + $0x1a0] sm:$0xff]
  %v5122 = vld [vmem:[#allocation2 + $0x1a8] sm:$0xff]
  %v5123 = vld [vmem:[#allocation2 + $0x1b0] sm:$0xff]
  %v5124 = vld [vmem:[#allocation2 + $0x1b8] sm:$0xff]
  %v5125 = vld [vmem:[#allocation2 + $0x1c0] sm:$0xff]
  %v5126 = vld [vmem:[#allocation2 + $0x1c8] sm:$0xff]
  %v5127 = vld [vmem:[#allocation2 + $0x1d0] sm:$0xff]
  %v5128 = vld [vmem:[#allocation2 + $0x1d8] sm:$0xff]
  %v5129 = vld [vmem:[#allocation2 + $0x1e0] sm:$0xff]
  %v5130 = vld [vmem:[#allocation2 + $0x1e8] sm:$0xff]
  %v5131 = vld [vmem:[#allocation2 + $0x1f0] sm:$0xff]
  %v5132 = vld [vmem:[#allocation2 + $0x1f8] sm:$0xff]
  %v5133 = vld [vmem:[#allocation2 + $0x200] sm:$0xff]
  %v5134 = vld [vmem:[#allocation2 + $0x208] sm:$0xff]
  %v5135 = vld [vmem:[#allocation2 + $0x210] sm:$0xff]
  %v5136 = vld [vmem:[#allocation2 + $0x218] sm:$0xff]
  %v5137 = vld [vmem:[#allocation2 + $0x220] sm:$0xff]
  %v5138 = vld [vmem:[#allocation2 + $0x228] sm:$0xff]
  %v5139 = vld [vmem:[#allocation2 + $0x230] sm:$0xff]
  %v5140 = vld [vmem:[#allocation2 + $0x238] sm:$0xff]
  %v5141 = vld [vmem:[#allocation2 + $0x240] sm:$0xff]
  %v5142 = vld [vmem:[#allocation2 + $0x248] sm:$0xff]
  %v5143 = vld [vmem:[#allocation2 + $0x250] sm:$0xff]
  %v5144 = vld [vmem:[#allocation2 + $0x258] sm:$0xff]
  %v5145 = vld [vmem:[#allocation2 + $0x260] sm:$0xff]
  %v5146 = vld [vmem:[#allocation2 + $0x268] sm:$0xff]
  %v5147 = vld [vmem:[#allocation2 + $0x270] sm:$0xff]
  %v5148 = vld [vmem:[#allocation2 + $0x278] sm:$0xff]
  %v5149 = vld [vmem:[#allocation2 + $0x280] sm:$0xff]
  %v5150 = vld [vmem:[#allocation2 + $0x288] sm:$0xff]
  %v5151 = vld [vmem:[#allocation2 + $0x290] sm:$0xff]
  %v5152 = vld [vmem:[#allocation2 + $0x298] sm:$0xff]
  %v5153 = vld [vmem:[#allocation2 + $0x2a0] sm:$0xff]
  %v5154 = vld [vmem:[#allocation2 + $0x2a8] sm:$0xff]
  %v5155 = vld [vmem:[#allocation2 + $0x2b0] sm:$0xff]
  %v5156 = vld [vmem:[#allocation2 + $0x2b8] sm:$0xff]
  %v5157 = vld [vmem:[#allocation2 + $0x2c0] sm:$0xff]
  %v5158 = vld [vmem:[#allocation2 + $0x2c8] sm:$0xff]
  %v5159 = vld [vmem:[#allocation2 + $0x2d0] sm:$0xff]
  %v5160 = vld [vmem:[#allocation2 + $0x2d8] sm:$0xff]
  %v5161 = vld [vmem:[#allocation2 + $0x2e0] sm:$0xff]
  %v5162 = vld [vmem:[#allocation2 + $0x2e8] sm:$0xff]
  %v5163 = vld [vmem:[#allocation2 + $0x2f0] sm:$0xff]
  %v5164 = vld [vmem:[#allocation2 + $0x2f8] sm:$0xff]
  %v5165 = vld [vmem:[#allocation2 + $0x300] sm:$0xff]
  %v5166 = vld [vmem:[#allocation2 + $0x308] sm:$0xff]
  %v5167 = vld [vmem:[#allocation2 + $0x310] sm:$0xff]
  %v5168 = vld [vmem:[#allocation2 + $0x318] sm:$0xff]
  %v5169 = vld [vmem:[#allocation2 + $0x320] sm:$0xff]
  %v5170 = vld [vmem:[#allocation2 + $0x328] sm:$0xff]
  %v5171 = vld [vmem:[#allocation2 + $0x330] sm:$0xff]
  %v5172 = vld [vmem:[#allocation2 + $0x338] sm:$0xff]
  %v5173 = vld [vmem:[#allocation2 + $0x340] sm:$0xff]
  %v5174 = vld [vmem:[#allocation2 + $0x348] sm:$0xff]
  %v5175 = vld [vmem:[#allocation2 + $0x350] sm:$0xff]
  %v5176 = vld [vmem:[#allocation2 + $0x358] sm:$0xff]
  %v5177 = vld [vmem:[#allocation2 + $0x360] sm:$0xff]
  %v5178 = vld [vmem:[#allocation2 + $0x368] sm:$0xff]
  %v5179 = vld [vmem:[#allocation2 + $0x370] sm:$0xff]
  %v5180 = vld [vmem:[#allocation2 + $0x378] sm:$0xff]
  %v5181 = vld [vmem:[#allocation2 + $0x380] sm:$0xff]
  %v5182 = vld [vmem:[#allocation2 + $0x388] sm:$0xff]
  %v5183 = vld [vmem:[#allocation2 + $0x390] sm:$0xff]
  %v5184 = vld [vmem:[#allocation2 + $0x398] sm:$0xff]
  %v5185 = vld [vmem:[#allocation2 + $0x3a0] sm:$0xff]
  %v5186 = vld [vmem:[#allocation2 + $0x3a8] sm:$0xff]
  %v5187 = vld [vmem:[#allocation2 + $0x3b0] sm:$0xff]
  %v5188 = vld [vmem:[#allocation2 + $0x3b8] sm:$0xff]
  %v5189 = vld [vmem:[#allocation2 + $0x3c0] sm:$0xff]
  %v5190 = vld [vmem:[#allocation2 + $0x3c8] sm:$0xff]
  %v5191 = vld [vmem:[#allocation2 + $0x3d0] sm:$0xff]
  %v5192 = vld [vmem:[#allocation2 + $0x3d8] sm:$0xff]
  %v5193 = vld [vmem:[#allocation2 + $0x3e0] sm:$0xff]
  %v5194 = vld [vmem:[#allocation2 + $0x3e8] sm:$0xff]
  %v5195 = vld [vmem:[#allocation2 + $0x3f0] sm:$0xff]
  %v5196 = vld [vmem:[#allocation2 + $0x3f8] sm:$0xff]
  %v5197 = vld [vmem:[#allocation2 + $0x400] sm:$0xff]
  %v5198 = vld [vmem:[#allocation2 + $0x408] sm:$0xff]
  %v5199 = vld [vmem:[#allocation2 + $0x410] sm:$0xff]
  %v5200 = vld [vmem:[#allocation2 + $0x418] sm:$0xff]
  %v5201 = vld [vmem:[#allocation2 + $0x420] sm:$0xff]
  %v5202 = vld [vmem:[#allocation2 + $0x428] sm:$0xff]
  %v5203 = vld [vmem:[#allocation2 + $0x430] sm:$0xff]
  %v5204 = vld [vmem:[#allocation2 + $0x438] sm:$0xff]
  %v5205 = vld [vmem:[#allocation2 + $0x440] sm:$0xff]
  %v5206 = vld [vmem:[#allocation2 + $0x448] sm:$0xff]
  %v5207 = vld [vmem:[#allocation2 + $0x450] sm:$0xff]
  %v5208 = vld [vmem:[#allocation2 + $0x458] sm:$0xff]
  %v5209 = vld [vmem:[#allocation2 + $0x460] sm:$0xff]
  %v5210 = vld [vmem:[#allocation2 + $0x468] sm:$0xff]
  %v5211 = vld [vmem:[#allocation2 + $0x470] sm:$0xff]
  %v5212 = vld [vmem:[#allocation2 + $0x478] sm:$0xff]
  %v5213 = vld [vmem:[#allocation2 + $0x480] sm:$0xff]
  %v5214 = vld [vmem:[#allocation2 + $0x488] sm:$0xff]
  %v5215 = vld [vmem:[#allocation2 + $0x490] sm:$0xff]
  %v5216 = vld [vmem:[#allocation2 + $0x498] sm:$0xff]
  %v5217 = vld [vmem:[#allocation2 + $0x4a0] sm:$0xff]
  %v5218 = vld [vmem:[#allocation2 + $0x4a8] sm:$0xff]
  %v5219 = vld [vmem:[#allocation2 + $0x4b0] sm:$0xff]
  %v5220 = vld [vmem:[#allocation2 + $0x4b8] sm:$0xff]
  %v5221 = vld [vmem:[#allocation2 + $0x4c0] sm:$0xff]
  %v5222 = vld [vmem:[#allocation2 + $0x4c8] sm:$0xff]
  %v5223 = vld [vmem:[#allocation2 + $0x4d0] sm:$0xff]
  %v5224 = vld [vmem:[#allocation2 + $0x4d8] sm:$0xff]
  %v5225 = vld [vmem:[#allocation2 + $0x4e0] sm:$0xff]
  %v5226 = vld [vmem:[#allocation2 + $0x4e8] sm:$0xff]
  %v5227 = vld [vmem:[#allocation2 + $0x4f0] sm:$0xff]
  %v5228 = vld [vmem:[#allocation2 + $0x4f8] sm:$0xff]
  %v5229 = vld [vmem:[#allocation2 + $0x500] sm:$0xff]
  %v5230 = vld [vmem:[#allocation2 + $0x508] sm:$0xff]
  %v5231 = vld [vmem:[#allocation2 + $0x510] sm:$0xff]
  %v5232 = vld [vmem:[#allocation2 + $0x518] sm:$0xff]
  %v5233 = vld [vmem:[#allocation2 + $0x520] sm:$0xff]
  %v5234 = vld [vmem:[#allocation2 + $0x528] sm:$0xff]
  %v5235 = vld [vmem:[#allocation2 + $0x530] sm:$0xff]
  %v5236 = vld [vmem:[#allocation2 + $0x538] sm:$0xff]
  %v5237 = vld [vmem:[#allocation2 + $0x540] sm:$0xff]
  %v5238 = vld [vmem:[#allocation2 + $0x548] sm:$0xff]
  %v5239 = vld [vmem:[#allocation2 + $0x550] sm:$0xff]
  %v5240 = vld [vmem:[#allocation2 + $0x558] sm:$0xff]
  %v5241 = vld [vmem:[#allocation2 + $0x560] sm:$0xff]
  %v5242 = vld [vmem:[#allocation2 + $0x568] sm:$0xff]
  %v5243 = vld [vmem:[#allocation2 + $0x570] sm:$0xff]
  %v5244 = vld [vmem:[#allocation2 + $0x578] sm:$0xff]
  %v5245 = vld [vmem:[#allocation2 + $0x580] sm:$0xff]
  %v5246 = vld [vmem:[#allocation2 + $0x588] sm:$0xff]
  %v5247 = vld [vmem:[#allocation2 + $0x590] sm:$0xff]
  %v5248 = vld [vmem:[#allocation2 + $0x598] sm:$0xff]
  %v5249 = vld [vmem:[#allocation2 + $0x5a0] sm:$0xff]
  %v5250 = vld [vmem:[#allocation2 + $0x5a8] sm:$0xff]
  %v5251 = vld [vmem:[#allocation2 + $0x5b0] sm:$0xff]
  %v5252 = vld [vmem:[#allocation2 + $0x5b8] sm:$0xff]
  %v5253 = vld [vmem:[#allocation2 + $0x5c0] sm:$0xff]
  %v5254 = vld [vmem:[#allocation2 + $0x5c8] sm:$0xff]
  %v5255 = vld [vmem:[#allocation2 + $0x5d0] sm:$0xff]
  %v5256 = vld [vmem:[#allocation2 + $0x5d8] sm:$0xff]
  %v5257 = vld [vmem:[#allocation2 + $0x5e0] sm:$0xff]
  %v5258 = vld [vmem:[#allocation2 + $0x5e8] sm:$0xff]
  %v5259 = vld [vmem:[#allocation2 + $0x5f0] sm:$0xff]
  %v5260 = vld [vmem:[#allocation2 + $0x5f8] sm:$0xff]
  %v5261 = vld [vmem:[#allocation2 + $0x600] sm:$0xff]
  %v5262 = vld [vmem:[#allocation2 + $0x608] sm:$0xff]
  %v5263 = vld [vmem:[#allocation2 + $0x610] sm:$0xff]
  %v5264 = vld [vmem:[#allocation2 + $0x618] sm:$0xff]
  %v5265 = vld [vmem:[#allocation2 + $0x620] sm:$0xff]
  %v5266 = vld [vmem:[#allocation2 + $0x628] sm:$0xff]
  %v5267 = vld [vmem:[#allocation2 + $0x630] sm:$0xff]
  %v5268 = vld [vmem:[#allocation2 + $0x638] sm:$0xff]
  %v5269 = vld [vmem:[#allocation2 + $0x640] sm:$0xff]
  %v5270 = vld [vmem:[#allocation2 + $0x648] sm:$0xff]
  %v5271 = vld [vmem:[#allocation2 + $0x650] sm:$0xff]
  %v5272 = vld [vmem:[#allocation2 + $0x658] sm:$0xff]
  %v5273 = vld [vmem:[#allocation2 + $0x660] sm:$0xff]
  %v5274 = vld [vmem:[#allocation2 + $0x668] sm:$0xff]
  %v5275 = vld [vmem:[#allocation2 + $0x670] sm:$0xff]
  %v5276 = vld [vmem:[#allocation2 + $0x678] sm:$0xff]
  %v5277 = vld [vmem:[#allocation2 + $0x680] sm:$0xff]
  %v5278 = vld [vmem:[#allocation2 + $0x688] sm:$0xff]
  %v5279 = vld [vmem:[#allocation2 + $0x690] sm:$0xff]
  %v5280 = vld [vmem:[#allocation2 + $0x698] sm:$0xff]
  %v5281 = vld [vmem:[#allocation2 + $0x6a0] sm:$0xff]
  %v5282 = vld [vmem:[#allocation2 + $0x6a8] sm:$0xff]
  %v5283 = vld [vmem:[#allocation2 + $0x6b0] sm:$0xff]
  %v5284 = vld [vmem:[#allocation2 + $0x6b8] sm:$0xff]
  %v5285 = vld [vmem:[#allocation2 + $0x6c0] sm:$0xff]
  %v5286 = vld [vmem:[#allocation2 + $0x6c8] sm:$0xff]
  %v5287 = vld [vmem:[#allocation2 + $0x6d0] sm:$0xff]
  %v5288 = vld [vmem:[#allocation2 + $0x6d8] sm:$0xff]
  %v5289 = vld [vmem:[#allocation2 + $0x6e0] sm:$0xff]
  %v5290 = vld [vmem:[#allocation2 + $0x6e8] sm:$0xff]
  %v5291 = vld [vmem:[#allocation2 + $0x6f0] sm:$0xff]
  %v5292 = vld [vmem:[#allocation2 + $0x6f8] sm:$0xff]
  %v5293 = vld [vmem:[#allocation2 + $0x700] sm:$0xff]
  %v5294 = vld [vmem:[#allocation2 + $0x708] sm:$0xff]
  %v5295 = vld [vmem:[#allocation2 + $0x710] sm:$0xff]
  %v5296 = vld [vmem:[#allocation2 + $0x718] sm:$0xff]
  %v5297 = vld [vmem:[#allocation2 + $0x720] sm:$0xff]
  %v5298 = vld [vmem:[#allocation2 + $0x728] sm:$0xff]
  %v5299 = vld [vmem:[#allocation2 + $0x730] sm:$0xff]
  %v5300 = vld [vmem:[#allocation2 + $0x738] sm:$0xff]
  %v5301 = vld [vmem:[#allocation2 + $0x740] sm:$0xff]
  %v5302 = vld [vmem:[#allocation2 + $0x748] sm:$0xff]
  %v5303 = vld [vmem:[#allocation2 + $0x750] sm:$0xff]
  %v5304 = vld [vmem:[#allocation2 + $0x758] sm:$0xff]
  %v5305 = vld [vmem:[#allocation2 + $0x760] sm:$0xff]
  %v5306 = vld [vmem:[#allocation2 + $0x768] sm:$0xff]
  %v5307 = vld [vmem:[#allocation2 + $0x770] sm:$0xff]
  %v5308 = vld [vmem:[#allocation2 + $0x778] sm:$0xff]
  %v5309 = vld [vmem:[#allocation2 + $0x780] sm:$0xff]
  %v5310 = vld [vmem:[#allocation2 + $0x788] sm:$0xff]
  %v5311 = vld [vmem:[#allocation2 + $0x790] sm:$0xff]
  %v5312 = vld [vmem:[#allocation2 + $0x798] sm:$0xff]
  %v5313 = vld [vmem:[#allocation2 + $0x7a0] sm:$0xff]
  %v5314 = vld [vmem:[#allocation2 + $0x7a8] sm:$0xff]
  %v5315 = vld [vmem:[#allocation2 + $0x7b0] sm:$0xff]
  %v5316 = vld [vmem:[#allocation2 + $0x7b8] sm:$0xff]
  %v5317 = vld [vmem:[#allocation2 + $0x7c0] sm:$0xff]
  %v5318 = vld [vmem:[#allocation2 + $0x7c8] sm:$0xff]
  %v5319 = vld [vmem:[#allocation2 + $0x7d0] sm:$0xff]
  %v5320 = vld [vmem:[#allocation2 + $0x7d8] sm:$0xff]
  %v5321 = vld [vmem:[#allocation2 + $0x7e0] sm:$0xff]
  %v5322 = vld [vmem:[#allocation2 + $0x7e8] sm:$0xff]
  %v5323 = vld [vmem:[#allocation2 + $0x7f0] sm:$0xff]
  %v5324 = vld [vmem:[#allocation2 + $0x7f8] sm:$0xff]
  %v5325 = vld [vmem:[#allocation2 + $0x800] sm:$0xff]
  %v5326 = vld [vmem:[#allocation2 + $0x808] sm:$0xff]
  %v5327 = vld [vmem:[#allocation2 + $0x810] sm:$0xff]
  %v5328 = vld [vmem:[#allocation2 + $0x818] sm:$0xff]
  %v5329 = vld [vmem:[#allocation2 + $0x820] sm:$0xff]
  %v5330 = vld [vmem:[#allocation2 + $0x828] sm:$0xff]
  %v5331 = vld [vmem:[#allocation2 + $0x830] sm:$0xff]
  %v5332 = vld [vmem:[#allocation2 + $0x838] sm:$0xff]
  %v5333 = vld [vmem:[#allocation2 + $0x840] sm:$0xff]
  %v5334 = vld [vmem:[#allocation2 + $0x848] sm:$0xff]
  %v5335 = vld [vmem:[#allocation2 + $0x850] sm:$0xff]
  %v5336 = vld [vmem:[#allocation2 + $0x858] sm:$0xff]
  %v5337 = vld [vmem:[#allocation2 + $0x860] sm:$0xff]
  %v5338 = vld [vmem:[#allocation2 + $0x868] sm:$0xff]
  %v5339 = vld [vmem:[#allocation2 + $0x870] sm:$0xff]
  %v5340 = vld [vmem:[#allocation2 + $0x878] sm:$0xff]
  %v5341 = vld [vmem:[#allocation2 + $0x880] sm:$0xff]
  %v5342 = vld [vmem:[#allocation2 + $0x888] sm:$0xff]
  %v5343 = vld [vmem:[#allocation2 + $0x890] sm:$0xff]
  %v5344 = vld [vmem:[#allocation2 + $0x898] sm:$0xff]
  %v5345 = vld [vmem:[#allocation2 + $0x8a0] sm:$0xff]
  %v5346 = vld [vmem:[#allocation2 + $0x8a8] sm:$0xff]
  %v5347 = vld [vmem:[#allocation2 + $0x8b0] sm:$0xff]
  %v5348 = vld [vmem:[#allocation2 + $0x8b8] sm:$0xff]
  %v5349 = vld [vmem:[#allocation2 + $0x8c0] sm:$0xff]
  %v5350 = vld [vmem:[#allocation2 + $0x8c8] sm:$0xff]
  %v5351 = vld [vmem:[#allocation2 + $0x8d0] sm:$0xff]
  %v5352 = vld [vmem:[#allocation2 + $0x8d8] sm:$0xff]
  %v5353 = vld [vmem:[#allocation2 + $0x8e0] sm:$0xff]
  %v5354 = vld [vmem:[#allocation2 + $0x8e8] sm:$0xff]
  %v5355 = vld [vmem:[#allocation2 + $0x8f0] sm:$0xff]
  %v5356 = vld [vmem:[#allocation2 + $0x8f8] sm:$0xff]
  %v5357 = vld [vmem:[#allocation2 + $0x900] sm:$0xff]
  %v5358 = vld [vmem:[#allocation2 + $0x908] sm:$0xff]
  %v5359 = vld [vmem:[#allocation2 + $0x910] sm:$0xff]
  %v5360 = vld [vmem:[#allocation2 + $0x918] sm:$0xff]
  %v5361 = vld [vmem:[#allocation2 + $0x920] sm:$0xff]
  %v5362 = vld [vmem:[#allocation2 + $0x928] sm:$0xff]
  %v5363 = vld [vmem:[#allocation2 + $0x930] sm:$0xff]
  %v5364 = vld [vmem:[#allocation2 + $0x938] sm:$0xff]
  %v5365 = vld [vmem:[#allocation2 + $0x940] sm:$0xff]
  %v5366 = vld [vmem:[#allocation2 + $0x948] sm:$0xff]
  %v5367 = vld [vmem:[#allocation2 + $0x950] sm:$0xff]
  %v5368 = vld [vmem:[#allocation2 + $0x958] sm:$0xff]
  %v5369 = vld [vmem:[#allocation2 + $0x960] sm:$0xff]
  %v5370 = vld [vmem:[#allocation2 + $0x968] sm:$0xff]
  %v5371 = vld [vmem:[#allocation2 + $0x970] sm:$0xff]
  %v5372 = vld [vmem:[#allocation2 + $0x978] sm:$0xff]
  %v5373 = vld [vmem:[#allocation2 + $0x980] sm:$0xff]
  %v5374 = vld [vmem:[#allocation2 + $0x988] sm:$0xff]
  %v5375 = vld [vmem:[#allocation2 + $0x990] sm:$0xff]
  %v5376 = vld [vmem:[#allocation2 + $0x998] sm:$0xff]
  %v5377 = vld [vmem:[#allocation2 + $0x9a0] sm:$0xff]
  %v5378 = vld [vmem:[#allocation2 + $0x9a8] sm:$0xff]
  %v5379 = vld [vmem:[#allocation2 + $0x9b0] sm:$0xff]
  %v5380 = vld [vmem:[#allocation2 + $0x9b8] sm:$0xff]
  %v5381 = vld [vmem:[#allocation2 + $0x9c0] sm:$0xff]
  %v5382 = vld [vmem:[#allocation2 + $0x9c8] sm:$0xff]
  %v5383 = vld [vmem:[#allocation2 + $0x9d0] sm:$0xff]
  %v5384 = vld [vmem:[#allocation2 + $0x9d8] sm:$0xff]
  %v5385 = vld [vmem:[#allocation2 + $0x9e0] sm:$0xff]
  %v5386 = vld [vmem:[#allocation2 + $0x9e8] sm:$0xff]
  %v5387 = vld [vmem:[#allocation2 + $0x9f0] sm:$0xff]
  %v5388 = vld [vmem:[#allocation2 + $0x9f8] sm:$0xff]
  %v5389 = vld [vmem:[#allocation2 + $0xa00] sm:$0xff]
  %v5390 = vld [vmem:[#allocation2 + $0xa08] sm:$0xff]
  %v5391 = vld [vmem:[#allocation2 + $0xa10] sm:$0xff]
  %v5392 = vld [vmem:[#allocation2 + $0xa18] sm:$0xff]
  %v5393 = vld [vmem:[#allocation2 + $0xa20] sm:$0xff]
  %v5394 = vld [vmem:[#allocation2 + $0xa28] sm:$0xff]
  %v5395 = vld [vmem:[#allocation2 + $0xa30] sm:$0xff]
  %v5396 = vld [vmem:[#allocation2 + $0xa38] sm:$0xff]
  %v5397 = vld [vmem:[#allocation2 + $0xa40] sm:$0xff]
  %v5398 = vld [vmem:[#allocation2 + $0xa48] sm:$0xff]
  %v5399 = vld [vmem:[#allocation2 + $0xa50] sm:$0xff]
  %v5400 = vld [vmem:[#allocation2 + $0xa58] sm:$0xff]
  %v5401 = vld [vmem:[#allocation2 + $0xa60] sm:$0xff]
  %v5402 = vld [vmem:[#allocation2 + $0xa68] sm:$0xff]
  %v5403 = vld [vmem:[#allocation2 + $0xa70] sm:$0xff]
  %v5404 = vld [vmem:[#allocation2 + $0xa78] sm:$0xff]
  %v5405 = vld [vmem:[#allocation2 + $0xa80] sm:$0xff]
  %v5406 = vld [vmem:[#allocation2 + $0xa88] sm:$0xff]
  %v5407 = vld [vmem:[#allocation2 + $0xa90] sm:$0xff]
  %v5408 = vld [vmem:[#allocation2 + $0xa98] sm:$0xff]
  %v5409 = vld [vmem:[#allocation2 + $0xaa0] sm:$0xff]
  %v5410 = vld [vmem:[#allocation2 + $0xaa8] sm:$0xff]
  %v5411 = vld [vmem:[#allocation2 + $0xab0] sm:$0xff]
  %v5412 = vld [vmem:[#allocation2 + $0xab8] sm:$0xff]
  %v5413 = vld [vmem:[#allocation2 + $0xac0] sm:$0xff]
  %v5414 = vld [vmem:[#allocation2 + $0xac8] sm:$0xff]
  %v5415 = vld [vmem:[#allocation2 + $0xad0] sm:$0xff]
  %v5416 = vld [vmem:[#allocation2 + $0xad8] sm:$0xff]
  %v5417 = vld [vmem:[#allocation2 + $0xae0] sm:$0xff]
  %v5418 = vld [vmem:[#allocation2 + $0xae8] sm:$0xff]
  %v5419 = vld [vmem:[#allocation2 + $0xaf0] sm:$0xff]
  %v5420 = vld [vmem:[#allocation2 + $0xaf8] sm:$0xff]
  %v5421 = vld [vmem:[#allocation2 + $0xb00] sm:$0xff]
  %v5422 = vld [vmem:[#allocation2 + $0xb08] sm:$0xff]
  %v5423 = vld [vmem:[#allocation2 + $0xb10] sm:$0xff]
  %v5424 = vld [vmem:[#allocation2 + $0xb18] sm:$0xff]
  %v5425 = vld [vmem:[#allocation2 + $0xb20] sm:$0xff]
  %v5426 = vld [vmem:[#allocation2 + $0xb28] sm:$0xff]
  %v5427 = vld [vmem:[#allocation2 + $0xb30] sm:$0xff]
  %v5428 = vld [vmem:[#allocation2 + $0xb38] sm:$0xff]
  %v5429 = vld [vmem:[#allocation2 + $0xb40] sm:$0xf]
  %v5430 = vld [vmem:[#allocation2 + $0xb48] sm:$0xf]
  %v5431 = vld [vmem:[#allocation2 + $0xb50] sm:$0xf]
  %v5432 = vld [vmem:[#allocation2 + $0xb58] sm:$0xf]
  %v5433 = vld [vmem:[#allocation2 + $0xb60] sm:$0xf]
  %v5434 = vld [vmem:[#allocation2 + $0xb68] sm:$0xf]
  %v5435 = vld [vmem:[#allocation2 + $0xb70] sm:$0xf]
  %v5436 = vld [vmem:[#allocation2 + $0xb78] sm:$0xf]
  %v5437 = vld [vmem:[#allocation2 + $0xb80] sm:$0xf]
  %v5438 = vld [vmem:[%s2] sm:$0xff]
  %v5439 = vld [vmem:[%s2 + $0x8] sm:$0xff]
  %v5440 = vld [vmem:[%s2 + $0x10] sm:$0xff]
  %v5441 = vld [vmem:[%s2 + $0x18] sm:$0xff]
  %v5442 = vld [vmem:[%s2 + $0x20] sm:$0xf]
  %5444 = vset.pattern.permute.xlu0 0
  %5445 = vperm.xlu0 %5444, %v5438
  %v5446 = vpop.permute.xlu0 %5445
  %5449 = vset.pattern.permute.xlu0 0
  %5450 = vperm.xlu0 %5449, %v5439
  %v5451 = vpop.permute.xlu0 %5450
  %5454 = vset.pattern.permute.xlu0 0
  %5455 = vperm.xlu0 %5454, %v5440
  %v5456 = vpop.permute.xlu0 %5455
  %5459 = vset.pattern.permute.xlu0 0
  %5460 = vperm.xlu0 %5459, %v5441
  %v5461 = vpop.permute.xlu0 %5460
  %5464 = vset.pattern.permute.xlu0 0
  %5465 = vperm.xlu0 %5464, %v5442
  %v5466 = vpop.permute.xlu0 %5465
  %vm5468 = vcmask 556032
  %v5470 = vsel %vm5468, %v5056, 0
  %v5473 = vsel %vm5468, %v5059, 0
  %v5476 = vsel %vm5468, %v5062, 0
  %v5479 = vsel %vm5468, %v5065, 0
  %v5482 = vsel %vm5468, %v5068, 0
  %vm5484 = vcmask 1043456
  %v5486 = vsel %vm5484, %v5429, 0
  %v5489 = vsel %vm5484, %v5430, 0
  %v5492 = vsel %vm5484, %v5431, 0
  %v5495 = vsel %vm5484, %v5432, 0
  %v5498 = vsel %vm5484, %v5433, 0
  %v5501 = vsel %vm5484, %v5434, 0
  %v5504 = vsel %vm5484, %v5435, 0
  %v5507 = vsel %vm5484, %v5436, 0
  %v5510 = vsel %vm5484, %v5437, 0
  %5512 = vmatprep.subr.mxu0 %v5205
  %5513 = vmatpush1.msra.mxu0 %v5204
  %5514 = vmatprep.subr.mxu0 %v5196
  %5515 = vmatpush1.msra.mxu0 %v5195
  %5516 = vmatprep.subr.mxu0 %v5187
  %5517 = vmatpush1.msra.mxu0 %v5186
  %5518 = vmatprep.subr.mxu0 %v5178
  %5519 = vmatpush1.msra.mxu0 %v5177
  %5520 = vmatprep.subr.mxu0 %v5169
  %5521 = vmatpush1.msra.mxu0 %v5168
  %5522 = vmatprep.subr.mxu0 %v5160
  %5523 = vmatpush1.msra.mxu0 %v5159
  %5524 = vmatprep.subr.mxu0 %v5151
  %5525 = vmatpush1.msra.mxu0 %v5150
  %5526 = vmatprep.subr.mxu0 %v5142
  %5527 = vmatpush1.msra.mxu0 %v5141
  %5528 = vmatprep.subr.mxu0 %v5133
  %5529 = vmatpush1.msra.mxu0 %v5132
  %5530 = vmatprep.subr.mxu0 %v5124
  %5531 = vmatpush1.msra.mxu0 %v5123
  %5532 = vmatprep.subr.mxu0 %v5115
  %5533 = vmatpush1.msra.mxu0 %v5114
  %5534 = vmatprep.subr.mxu0 %v5106
  %5535 = vmatpush1.msra.mxu0 %v5105
  %5536 = vmatprep.subr.mxu0 %v5097
  %5537 = vmatpush1.msra.mxu0 %v5096
  %5538 = vmatprep.subr.mxu0 %v5088
  %5539 = vmatpush1.msra.mxu0 %v5087
  %5540 = vmatprep.subr.mxu0 %v5079
  %5541 = vmatpush1.msra.mxu0 %v5078
  %5542 = vmatprep.subr.mxu0 %v5070
  %5543 = vmatpush1.msra.mxu0 %v5069
  %5544 = vmatprep.subr.mxu0 %v5349
  %5545 = vmatpush2.msra.mxu0 %v5348
  %5546 = vmatprep.subr.mxu0 %v5340
  %5547 = vmatpush2.msra.mxu0 %v5339
  %5548 = vmatprep.subr.mxu0 %v5331
  %5549 = vmatpush2.msra.mxu0 %v5330
  %5550 = vmatprep.subr.mxu0 %v5322
  %5551 = vmatpush2.msra.mxu0 %v5321
  %5552 = vmatprep.subr.mxu0 %v5313
  %5553 = vmatpush2.msra.mxu0 %v5312
  %5554 = vmatprep.subr.mxu0 %v5304
  %5555 = vmatpush2.msra.mxu0 %v5303
  %5556 = vmatprep.subr.mxu0 %v5295
  %5557 = vmatpush2.msra.mxu0 %v5294
  %5558 = vmatprep.subr.mxu0 %v5286
  %5559 = vmatpush2.msra.mxu0 %v5285
  %5560 = vmatprep.subr.mxu0 %v5277
  %5561 = vmatpush2.msra.mxu0 %v5276
  %5562 = vmatprep.subr.mxu0 %v5268
  %5563 = vmatpush2.msra.mxu0 %v5267
  %5564 = vmatprep.subr.mxu0 %v5259
  %5565 = vmatpush2.msra.mxu0 %v5258
  %5566 = vmatprep.subr.mxu0 %v5250
  %5567 = vmatpush2.msra.mxu0 %v5249
  %5568 = vmatprep.subr.mxu0 %v5241
  %5569 = vmatpush2.msra.mxu0 %v5240
  %5570 = vmatprep.subr.mxu0 %v5232
  %5571 = vmatpush2.msra.mxu0 %v5231
  %5572 = vmatprep.subr.mxu0 %v5223
  %5573 = vmatpush2.msra.mxu0 %v5222
  %5574 = vmatprep.subr.mxu0 %v5214
  %5575 = vmatpush2.msra.mxu0 %v5213
  %5576 = vmatprep.mubr.f32.mxu0 %v5055
  %5577 = vmatmul.mubr.f32.gmra.mxu0 %v5054
  %v5578 = vpop.f32.mrf.mxu0
  %v5579 = vadd.f32 %v5446, %v5578
  %v5580 = vpop.f32.mrf.mxu0
  %v5581 = vadd.f32 %v5446, %v5580
  %5582 = vmatprep.mubr.f32.mxu0 %v5058
  %5583 = vmatmul.mubr.f32.gmra.mxu0 %v5057
  %v5584 = vpop.f32.mrf.mxu0
  %v5585 = vadd.f32 %v5451, %v5584
  %v5586 = vpop.f32.mrf.mxu0
  %v5587 = vadd.f32 %v5451, %v5586
  %5588 = vmatprep.mubr.f32.mxu0 %v5061
  %5589 = vmatmul.mubr.f32.gmra.mxu0 %v5060
  %v5590 = vpop.f32.mrf.mxu0
  %v5591 = vadd.f32 %v5456, %v5590
  %v5592 = vpop.f32.mrf.mxu0
  %v5593 = vadd.f32 %v5456, %v5592
  %5594 = vmatprep.mubr.f32.mxu0 %v5064
  %5595 = vmatmul.mubr.f32.gmra.mxu0 %v5063
  %v5596 = vpop.f32.mrf.mxu0
  %v5597 = vadd.f32 %v5461, %v5596
  %v5598 = vpop.f32.mrf.mxu0
  %v5599 = vadd.f32 %v5461, %v5598
  %5600 = vmatprep.mubr.f32.mxu0 %v5067
  %5601 = vmatmul.mubr.f32.gmra.mxu0 %v5066
  %v5602 = vpop.f32.mrf.mxu0
  %v5603 = vadd.f32 %v5466, %v5602
  %v5604 = vpop.f32.mrf.mxu0
  %v5605 = vadd.f32 %v5466, %v5604
  %5606 = vdwg.mxu0
  %5607 = vmatprep.subr.mxu0 0.0
  %5608 = vmatpush1.msra.mxu0 0.0
  %5609 = vmatprep.subr.mxu0 0.0
  %5610 = vmatpush1.msra.mxu0 0.0
  %5611 = vmatprep.subr.mxu0 0.0
  %5612 = vmatpush1.msra.mxu0 0.0
  %5613 = vmatprep.subr.mxu0 0.0
  %5614 = vmatpush1.msra.mxu0 0.0
  %5615 = vmatprep.subr.mxu0 0.0
  %5616 = vmatpush1.msra.mxu0 0.0
  %5617 = vmatprep.subr.mxu0 0.0
  %5618 = vmatpush1.msra.mxu0 0.0
  %5619 = vmatprep.subr.mxu0 0.0
  %5620 = vmatpush1.msra.mxu0 0.0
  %5621 = vmatprep.subr.mxu0 %v5489
  %5622 = vmatpush1.msra.mxu0 %v5486
  %5623 = vmatprep.subr.mxu0 %v5421
  %5624 = vmatpush1.msra.mxu0 %v5420
  %5625 = vmatprep.subr.mxu0 %v5412
  %5626 = vmatpush1.msra.mxu0 %v5411
  %5627 = vmatprep.subr.mxu0 %v5403
  %5628 = vmatpush1.msra.mxu0 %v5402
  %5629 = vmatprep.subr.mxu0 %v5394
  %5630 = vmatpush1.msra.mxu0 %v5393
  %5631 = vmatprep.subr.mxu0 %v5385
  %5632 = vmatpush1.msra.mxu0 %v5384
  %5633 = vmatprep.subr.mxu0 %v5376
  %5634 = vmatpush1.msra.mxu0 %v5375
  %5635 = vmatprep.subr.mxu0 %v5367
  %5636 = vmatpush1.msra.mxu0 %v5366
  %5637 = vmatprep.subr.mxu0 %v5358
  %5638 = vmatpush1.msra.mxu0 %v5357
  %5639 = vmatprep.subr.mxu0 0.0
  %5640 = vmatpush2.msra.mxu0 0.0
  %5641 = vmatprep.subr.mxu0 0.0
  %5642 = vmatpush2.msra.mxu0 0.0
  %5643 = vmatprep.subr.mxu0 0.0
  %5644 = vmatpush2.msra.mxu0 0.0
  %5645 = vmatprep.subr.mxu0 0.0
  %5646 = vmatpush2.msra.mxu0 0.0
  %5647 = vmatprep.subr.mxu0 0.0
  %5648 = vmatpush2.msra.mxu0 0.0
  %5649 = vmatprep.subr.mxu0 0.0
  %5650 = vmatpush2.msra.mxu0 0.0
  %5651 = vmatprep.subr.mxu0 0.0
  %5652 = vmatpush2.msra.mxu0 0.0
  %5653 = vmatprep.subr.mxu0 0.0
  %5654 = vmatpush2.msra.mxu0 0.0
  %5655 = vmatprep.subr.mxu0 0.0
  %5656 = vmatpush2.msra.mxu0 0.0
  %5657 = vmatprep.subr.mxu0 0.0
  %5658 = vmatpush2.msra.mxu0 0.0
  %5659 = vmatprep.subr.mxu0 0.0
  %5660 = vmatpush2.msra.mxu0 0.0
  %5661 = vmatprep.subr.mxu0 0.0
  %5662 = vmatpush2.msra.mxu0 0.0
  %5663 = vmatprep.subr.mxu0 0.0
  %5664 = vmatpush2.msra.mxu0 0.0
  %5665 = vmatprep.subr.mxu0 0.0
  %5666 = vmatpush2.msra.mxu0 0.0
  %5667 = vmatprep.subr.mxu0 0.0
  %5668 = vmatpush2.msra.mxu0 0.0
  %5669 = vmatprep.subr.mxu0 0.0
  %5670 = vmatpush2.msra.mxu0 0.0
  %5671 = vmatprep.mubr.f32.mxu0 0.0
  %5672 = vmatmul.mubr.f32.gmra.mxu0 %v5470
  %v5673 = vpop.f32.mrf.mxu0
  %v5674 = vadd.f32 %v5579, %v5673
  %v5675 = vpop.f32.mrf.mxu0
  %v5676 = vadd.f32 %v5581, %v5675
  %5677 = vmatprep.mubr.f32.mxu0 0.0
  %5678 = vmatmul.mubr.f32.gmra.mxu0 %v5473
  %v5679 = vpop.f32.mrf.mxu0
  %v5680 = vadd.f32 %v5585, %v5679
  %v5681 = vpop.f32.mrf.mxu0
  %v5682 = vadd.f32 %v5587, %v5681
  %5683 = vmatprep.mubr.f32.mxu0 0.0
  %5684 = vmatmul.mubr.f32.gmra.mxu0 %v5476
  %v5685 = vpop.f32.mrf.mxu0
  %v5686 = vadd.f32 %v5591, %v5685
  %v5687 = vpop.f32.mrf.mxu0
  %v5688 = vadd.f32 %v5593, %v5687
  %5689 = vmatprep.mubr.f32.mxu0 0.0
  %5690 = vmatmul.mubr.f32.gmra.mxu0 %v5479
  %v5691 = vpop.f32.mrf.mxu0
  %v5692 = vadd.f32 %v5597, %v5691
  %v5693 = vpop.f32.mrf.mxu0
  %v5694 = vadd.f32 %v5599, %v5693
  %5695 = vmatprep.mubr.f32.mxu0 0.0
  %5696 = vmatmul.mubr.f32.gmra.mxu0 %v5482
  %v5697 = vpop.f32.mrf.mxu0
  %v5698 = vadd.f32 %v5603, %v5697
  %v5699 = vpop.f32.mrf.mxu0
  %v5700 = vadd.f32 %v5605, %v5699
  %5701 = vdwg.mxu0
  %5702 = vmatprep.subr.mxu0 %v5207
  %5703 = vmatpush1.msra.mxu0 %v5206
  %5704 = vmatprep.subr.mxu0 %v5198
  %5705 = vmatpush1.msra.mxu0 %v5197
  %5706 = vmatprep.subr.mxu0 %v5189
  %5707 = vmatpush1.msra.mxu0 %v5188
  %5708 = vmatprep.subr.mxu0 %v5180
  %5709 = vmatpush1.msra.mxu0 %v5179
  %5710 = vmatprep.subr.mxu0 %v5171
  %5711 = vmatpush1.msra.mxu0 %v5170
  %5712 = vmatprep.subr.mxu0 %v5162
  %5713 = vmatpush1.msra.mxu0 %v5161
  %5714 = vmatprep.subr.mxu0 %v5153
  %5715 = vmatpush1.msra.mxu0 %v5152
  %5716 = vmatprep.subr.mxu0 %v5144
  %5717 = vmatpush1.msra.mxu0 %v5143
  %5718 = vmatprep.subr.mxu0 %v5135
  %5719 = vmatpush1.msra.mxu0 %v5134
  %5720 = vmatprep.subr.mxu0 %v5126
  %5721 = vmatpush1.msra.mxu0 %v5125
  %5722 = vmatprep.subr.mxu0 %v5117
  %5723 = vmatpush1.msra.mxu0 %v5116
  %5724 = vmatprep.subr.mxu0 %v5108
  %5725 = vmatpush1.msra.mxu0 %v5107
  %5726 = vmatprep.subr.mxu0 %v5099
  %5727 = vmatpush1.msra.mxu0 %v5098
  %5728 = vmatprep.subr.mxu0 %v5090
  %5729 = vmatpush1.msra.mxu0 %v5089
  %5730 = vmatprep.subr.mxu0 %v5081
  %5731 = vmatpush1.msra.mxu0 %v5080
  %5732 = vmatprep.subr.mxu0 %v5072
  %5733 = vmatpush1.msra.mxu0 %v5071
  %5734 = vmatprep.subr.mxu0 %v5351
  %5735 = vmatpush2.msra.mxu0 %v5350
  %5736 = vmatprep.subr.mxu0 %v5342
  %5737 = vmatpush2.msra.mxu0 %v5341
  %5738 = vmatprep.subr.mxu0 %v5333
  %5739 = vmatpush2.msra.mxu0 %v5332
  %5740 = vmatprep.subr.mxu0 %v5324
  %5741 = vmatpush2.msra.mxu0 %v5323
  %5742 = vmatprep.subr.mxu0 %v5315
  %5743 = vmatpush2.msra.mxu0 %v5314
  %5744 = vmatprep.subr.mxu0 %v5306
  %5745 = vmatpush2.msra.mxu0 %v5305
  %5746 = vmatprep.subr.mxu0 %v5297
  %5747 = vmatpush2.msra.mxu0 %v5296
  %5748 = vmatprep.subr.mxu0 %v5288
  %5749 = vmatpush2.msra.mxu0 %v5287
  %5750 = vmatprep.subr.mxu0 %v5279
  %5751 = vmatpush2.msra.mxu0 %v5278
  %5752 = vmatprep.subr.mxu0 %v5270
  %5753 = vmatpush2.msra.mxu0 %v5269
  %5754 = vmatprep.subr.mxu0 %v5261
  %5755 = vmatpush2.msra.mxu0 %v5260
  %5756 = vmatprep.subr.mxu0 %v5252
  %5757 = vmatpush2.msra.mxu0 %v5251
  %5758 = vmatprep.subr.mxu0 %v5243
  %5759 = vmatpush2.msra.mxu0 %v5242
  %5760 = vmatprep.subr.mxu0 %v5234
  %5761 = vmatpush2.msra.mxu0 %v5233
  %5762 = vmatprep.subr.mxu0 %v5225
  %5763 = vmatpush2.msra.mxu0 %v5224
  %5764 = vmatprep.subr.mxu0 %v5216
  %5765 = vmatpush2.msra.mxu0 %v5215
  %5766 = vmatprep.mubr.f32.mxu0 %v5055
  %5767 = vmatmul.mubr.f32.gmra.mxu0 %v5054
  %v5768 = vpop.f32.mrf.mxu0
  %v5769 = vadd.f32 %v5446, %v5768
  %v5770 = vpop.f32.mrf.mxu0
  %v5771 = vadd.f32 %v5446, %v5770
  %5772 = vmatprep.mubr.f32.mxu0 %v5058
  %5773 = vmatmul.mubr.f32.gmra.mxu0 %v5057
  %v5774 = vpop.f32.mrf.mxu0
  %v5775 = vadd.f32 %v5451, %v5774
  %v5776 = vpop.f32.mrf.mxu0
  %v5777 = vadd.f32 %v5451, %v5776
  %5778 = vmatprep.mubr.f32.mxu0 %v5061
  %5779 = vmatmul.mubr.f32.gmra.mxu0 %v5060
  %v5780 = vpop.f32.mrf.mxu0
  %v5781 = vadd.f32 %v5456, %v5780
  %v5782 = vpop.f32.mrf.mxu0
  %v5783 = vadd.f32 %v5456, %v5782
  %5784 = vmatprep.mubr.f32.mxu0 %v5064
  %5785 = vmatmul.mubr.f32.gmra.mxu0 %v5063
  %v5786 = vpop.f32.mrf.mxu0
  %v5787 = vadd.f32 %v5461, %v5786
  %v5788 = vpop.f32.mrf.mxu0
  %v5789 = vadd.f32 %v5461, %v5788
  %5790 = vmatprep.mubr.f32.mxu0 %v5067
  %5791 = vmatmul.mubr.f32.gmra.mxu0 %v5066
  %v5792 = vpop.f32.mrf.mxu0
  %v5793 = vadd.f32 %v5466, %v5792
  %v5794 = vpop.f32.mrf.mxu0
  %v5795 = vadd.f32 %v5466, %v5794
  %5796 = vdwg.mxu0
  %5797 = vmatprep.subr.mxu0 0.0
  %5798 = vmatpush1.msra.mxu0 0.0
  %5799 = vmatprep.subr.mxu0 0.0
  %5800 = vmatpush1.msra.mxu0 0.0
  %5801 = vmatprep.subr.mxu0 0.0
  %5802 = vmatpush1.msra.mxu0 0.0
  %5803 = vmatprep.subr.mxu0 0.0
  %5804 = vmatpush1.msra.mxu0 0.0
  %5805 = vmatprep.subr.mxu0 0.0
  %5806 = vmatpush1.msra.mxu0 0.0
  %5807 = vmatprep.subr.mxu0 0.0
  %5808 = vmatpush1.msra.mxu0 0.0
  %5809 = vmatprep.subr.mxu0 0.0
  %5810 = vmatpush1.msra.mxu0 0.0
  %5811 = vmatprep.subr.mxu0 %v5495
  %5812 = vmatpush1.msra.mxu0 %v5492
  %5813 = vmatprep.subr.mxu0 %v5423
  %5814 = vmatpush1.msra.mxu0 %v5422
  %5815 = vmatprep.subr.mxu0 %v5414
  %5816 = vmatpush1.msra.mxu0 %v5413
  %5817 = vmatprep.subr.mxu0 %v5405
  %5818 = vmatpush1.msra.mxu0 %v5404
  %5819 = vmatprep.subr.mxu0 %v5396
  %5820 = vmatpush1.msra.mxu0 %v5395
  %5821 = vmatprep.subr.mxu0 %v5387
  %5822 = vmatpush1.msra.mxu0 %v5386
  %5823 = vmatprep.subr.mxu0 %v5378
  %5824 = vmatpush1.msra.mxu0 %v5377
  %5825 = vmatprep.subr.mxu0 %v5369
  %5826 = vmatpush1.msra.mxu0 %v5368
  %5827 = vmatprep.subr.mxu0 %v5360
  %5828 = vmatpush1.msra.mxu0 %v5359
  %5829 = vmatprep.subr.mxu0 0.0
  %5830 = vmatpush2.msra.mxu0 0.0
  %5831 = vmatprep.subr.mxu0 0.0
  %5832 = vmatpush2.msra.mxu0 0.0
  %5833 = vmatprep.subr.mxu0 0.0
  %5834 = vmatpush2.msra.mxu0 0.0
  %5835 = vmatprep.subr.mxu0 0.0
  %5836 = vmatpush2.msra.mxu0 0.0
  %5837 = vmatprep.subr.mxu0 0.0
  %5838 = vmatpush2.msra.mxu0 0.0
  %5839 = vmatprep.subr.mxu0 0.0
  %5840 = vmatpush2.msra.mxu0 0.0
  %5841 = vmatprep.subr.mxu0 0.0
  %5842 = vmatpush2.msra.mxu0 0.0
  %5843 = vmatprep.subr.mxu0 0.0
  %5844 = vmatpush2.msra.mxu0 0.0
  %5845 = vmatprep.subr.mxu0 0.0
  %5846 = vmatpush2.msra.mxu0 0.0
  %5847 = vmatprep.subr.mxu0 0.0
  %5848 = vmatpush2.msra.mxu0 0.0
  %5849 = vmatprep.subr.mxu0 0.0
  %5850 = vmatpush2.msra.mxu0 0.0
  %5851 = vmatprep.subr.mxu0 0.0
  %5852 = vmatpush2.msra.mxu0 0.0
  %5853 = vmatprep.subr.mxu0 0.0
  %5854 = vmatpush2.msra.mxu0 0.0
  %5855 = vmatprep.subr.mxu0 0.0
  %5856 = vmatpush2.msra.mxu0 0.0
  %5857 = vmatprep.subr.mxu0 0.0
  %5858 = vmatpush2.msra.mxu0 0.0
  %5859 = vmatprep.subr.mxu0 0.0
  %5860 = vmatpush2.msra.mxu0 0.0
  %5861 = vmatprep.mubr.f32.mxu0 0.0
  %5862 = vmatmul.mubr.f32.gmra.mxu0 %v5470
  %v5863 = vpop.f32.mrf.mxu0
  %v5864 = vadd.f32 %v5769, %v5863
  %v5865 = vpop.f32.mrf.mxu0
  %v5866 = vadd.f32 %v5771, %v5865
  %5867 = vmatprep.mubr.f32.mxu0 0.0
  %5868 = vmatmul.mubr.f32.gmra.mxu0 %v5473
  %v5869 = vpop.f32.mrf.mxu0
  %v5870 = vadd.f32 %v5775, %v5869
  %v5871 = vpop.f32.mrf.mxu0
  %v5872 = vadd.f32 %v5777, %v5871
  %5873 = vmatprep.mubr.f32.mxu0 0.0
  %5874 = vmatmul.mubr.f32.gmra.mxu0 %v5476
  %v5875 = vpop.f32.mrf.mxu0
  %v5876 = vadd.f32 %v5781, %v5875
  %v5877 = vpop.f32.mrf.mxu0
  %v5878 = vadd.f32 %v5783, %v5877
  %5879 = vmatprep.mubr.f32.mxu0 0.0
  %5880 = vmatmul.mubr.f32.gmra.mxu0 %v5479
  %v5881 = vpop.f32.mrf.mxu0
  %v5882 = vadd.f32 %v5787, %v5881
  %v5883 = vpop.f32.mrf.mxu0
  %v5884 = vadd.f32 %v5789, %v5883
  %5885 = vmatprep.mubr.f32.mxu0 0.0
  %5886 = vmatmul.mubr.f32.gmra.mxu0 %v5482
  %v5887 = vpop.f32.mrf.mxu0
  %v5888 = vadd.f32 %v5793, %v5887
  %v5889 = vpop.f32.mrf.mxu0
  %v5890 = vadd.f32 %v5795, %v5889
  %5891 = vdwg.mxu0
  %5892 = vmatprep.subr.mxu0 %v5209
  %5893 = vmatpush1.msra.mxu0 %v5208
  %5894 = vmatprep.subr.mxu0 %v5200
  %5895 = vmatpush1.msra.mxu0 %v5199
  %5896 = vmatprep.subr.mxu0 %v5191
  %5897 = vmatpush1.msra.mxu0 %v5190
  %5898 = vmatprep.subr.mxu0 %v5182
  %5899 = vmatpush1.msra.mxu0 %v5181
  %5900 = vmatprep.subr.mxu0 %v5173
  %5901 = vmatpush1.msra.mxu0 %v5172
  %5902 = vmatprep.subr.mxu0 %v5164
  %5903 = vmatpush1.msra.mxu0 %v5163
  %5904 = vmatprep.subr.mxu0 %v5155
  %5905 = vmatpush1.msra.mxu0 %v5154
  %5906 = vmatprep.subr.mxu0 %v5146
  %5907 = vmatpush1.msra.mxu0 %v5145
  %5908 = vmatprep.subr.mxu0 %v5137
  %5909 = vmatpush1.msra.mxu0 %v5136
  %5910 = vmatprep.subr.mxu0 %v5128
  %5911 = vmatpush1.msra.mxu0 %v5127
  %5912 = vmatprep.subr.mxu0 %v5119
  %5913 = vmatpush1.msra.mxu0 %v5118
  %5914 = vmatprep.subr.mxu0 %v5110
  %5915 = vmatpush1.msra.mxu0 %v5109
  %5916 = vmatprep.subr.mxu0 %v5101
  %5917 = vmatpush1.msra.mxu0 %v5100
  %5918 = vmatprep.subr.mxu0 %v5092
  %5919 = vmatpush1.msra.mxu0 %v5091
  %5920 = vmatprep.subr.mxu0 %v5083
  %5921 = vmatpush1.msra.mxu0 %v5082
  %5922 = vmatprep.subr.mxu0 %v5074
  %5923 = vmatpush1.msra.mxu0 %v5073
  %5924 = vmatprep.subr.mxu0 %v5353
  %5925 = vmatpush2.msra.mxu0 %v5352
  %5926 = vmatprep.subr.mxu0 %v5344
  %5927 = vmatpush2.msra.mxu0 %v5343
  %5928 = vmatprep.subr.mxu0 %v5335
  %5929 = vmatpush2.msra.mxu0 %v5334
  %5930 = vmatprep.subr.mxu0 %v5326
  %5931 = vmatpush2.msra.mxu0 %v5325
  %5932 = vmatprep.subr.mxu0 %v5317
  %5933 = vmatpush2.msra.mxu0 %v5316
  %5934 = vmatprep.subr.mxu0 %v5308
  %5935 = vmatpush2.msra.mxu0 %v5307
  %5936 = vmatprep.subr.mxu0 %v5299
  %5937 = vmatpush2.msra.mxu0 %v5298
  %5938 = vmatprep.subr.mxu0 %v5290
  %5939 = vmatpush2.msra.mxu0 %v5289
  %5940 = vmatprep.subr.mxu0 %v5281
  %5941 = vmatpush2.msra.mxu0 %v5280
  %5942 = vmatprep.subr.mxu0 %v5272
  %5943 = vmatpush2.msra.mxu0 %v5271
  %5944 = vmatprep.subr.mxu0 %v5263
  %5945 = vmatpush2.msra.mxu0 %v5262
  %5946 = vmatprep.subr.mxu0 %v5254
  %5947 = vmatpush2.msra.mxu0 %v5253
  %5948 = vmatprep.subr.mxu0 %v5245
  %5949 = vmatpush2.msra.mxu0 %v5244
  %5950 = vmatprep.subr.mxu0 %v5236
  %5951 = vmatpush2.msra.mxu0 %v5235
  %5952 = vmatprep.subr.mxu0 %v5227
  %5953 = vmatpush2.msra.mxu0 %v5226
  %5954 = vmatprep.subr.mxu0 %v5218
  %5955 = vmatpush2.msra.mxu0 %v5217
  %5956 = vmatprep.mubr.f32.mxu0 %v5055
  %5957 = vmatmul.mubr.f32.gmra.mxu0 %v5054
  %v5958 = vpop.f32.mrf.mxu0
  %v5959 = vadd.f32 %v5446, %v5958
  %v5960 = vpop.f32.mrf.mxu0
  %v5961 = vadd.f32 %v5446, %v5960
  %5962 = vmatprep.mubr.f32.mxu0 %v5058
  %5963 = vmatmul.mubr.f32.gmra.mxu0 %v5057
  %v5964 = vpop.f32.mrf.mxu0
  %v5965 = vadd.f32 %v5451, %v5964
  %v5966 = vpop.f32.mrf.mxu0
  %v5967 = vadd.f32 %v5451, %v5966
  %5968 = vmatprep.mubr.f32.mxu0 %v5061
  %5969 = vmatmul.mubr.f32.gmra.mxu0 %v5060
  %v5970 = vpop.f32.mrf.mxu0
  %v5971 = vadd.f32 %v5456, %v5970
  %v5972 = vpop.f32.mrf.mxu0
  %v5973 = vadd.f32 %v5456, %v5972
  %5974 = vmatprep.mubr.f32.mxu0 %v5064
  %5975 = vmatmul.mubr.f32.gmra.mxu0 %v5063
  %v5976 = vpop.f32.mrf.mxu0
  %v5977 = vadd.f32 %v5461, %v5976
  %v5978 = vpop.f32.mrf.mxu0
  %v5979 = vadd.f32 %v5461, %v5978
  %5980 = vmatprep.mubr.f32.mxu0 %v5067
  %5981 = vmatmul.mubr.f32.gmra.mxu0 %v5066
  %v5982 = vpop.f32.mrf.mxu0
  %v5983 = vadd.f32 %v5466, %v5982
  %v5984 = vpop.f32.mrf.mxu0
  %v5985 = vadd.f32 %v5466, %v5984
  %5986 = vdwg.mxu0
  %5987 = vmatprep.subr.mxu0 0.0
  %5988 = vmatpush1.msra.mxu0 0.0
  %5989 = vmatprep.subr.mxu0 0.0
  %5990 = vmatpush1.msra.mxu0 0.0
  %5991 = vmatprep.subr.mxu0 0.0
  %5992 = vmatpush1.msra.mxu0 0.0
  %5993 = vmatprep.subr.mxu0 0.0
  %5994 = vmatpush1.msra.mxu0 0.0
  %5995 = vmatprep.subr.mxu0 0.0
  %5996 = vmatpush1.msra.mxu0 0.0
  %5997 = vmatprep.subr.mxu0 0.0
  %5998 = vmatpush1.msra.mxu0 0.0
  %5999 = vmatprep.subr.mxu0 0.0
  %6000 = vmatpush1.msra.mxu0 0.0
  %6001 = vmatprep.subr.mxu0 %v5501
  %6002 = vmatpush1.msra.mxu0 %v5498
  %6003 = vmatprep.subr.mxu0 %v5425
  %6004 = vmatpush1.msra.mxu0 %v5424
  %6005 = vmatprep.subr.mxu0 %v5416
  %6006 = vmatpush1.msra.mxu0 %v5415
  %6007 = vmatprep.subr.mxu0 %v5407
  %6008 = vmatpush1.msra.mxu0 %v5406
  %6009 = vmatprep.subr.mxu0 %v5398
  %6010 = vmatpush1.msra.mxu0 %v5397
  %6011 = vmatprep.subr.mxu0 %v5389
  %6012 = vmatpush1.msra.mxu0 %v5388
  %6013 = vmatprep.subr.mxu0 %v5380
  %6014 = vmatpush1.msra.mxu0 %v5379
  %6015 = vmatprep.subr.mxu0 %v5371
  %6016 = vmatpush1.msra.mxu0 %v5370
  %6017 = vmatprep.subr.mxu0 %v5362
  %6018 = vmatpush1.msra.mxu0 %v5361
  %6019 = vmatprep.subr.mxu0 0.0
  %6020 = vmatpush2.msra.mxu0 0.0
  %6021 = vmatprep.subr.mxu0 0.0
  %6022 = vmatpush2.msra.mxu0 0.0
  %6023 = vmatprep.subr.mxu0 0.0
  %6024 = vmatpush2.msra.mxu0 0.0
  %6025 = vmatprep.subr.mxu0 0.0
  %6026 = vmatpush2.msra.mxu0 0.0
  %6027 = vmatprep.subr.mxu0 0.0
  %6028 = vmatpush2.msra.mxu0 0.0
  %6029 = vmatprep.subr.mxu0 0.0
  %6030 = vmatpush2.msra.mxu0 0.0
  %6031 = vmatprep.subr.mxu0 0.0
  %6032 = vmatpush2.msra.mxu0 0.0
  %6033 = vmatprep.subr.mxu0 0.0
  %6034 = vmatpush2.msra.mxu0 0.0
  %6035 = vmatprep.subr.mxu0 0.0
  %6036 = vmatpush2.msra.mxu0 0.0
  %6037 = vmatprep.subr.mxu0 0.0
  %6038 = vmatpush2.msra.mxu0 0.0
  %6039 = vmatprep.subr.mxu0 0.0
  %6040 = vmatpush2.msra.mxu0 0.0
  %6041 = vmatprep.subr.mxu0 0.0
  %6042 = vmatpush2.msra.mxu0 0.0
  %6043 = vmatprep.subr.mxu0 0.0
  %6044 = vmatpush2.msra.mxu0 0.0
  %6045 = vmatprep.subr.mxu0 0.0
  %6046 = vmatpush2.msra.mxu0 0.0
  %6047 = vmatprep.subr.mxu0 0.0
  %6048 = vmatpush2.msra.mxu0 0.0
  %6049 = vmatprep.subr.mxu0 0.0
  %6050 = vmatpush2.msra.mxu0 0.0
  %6051 = vmatprep.mubr.f32.mxu0 0.0
  %6052 = vmatmul.mubr.f32.gmra.mxu0 %v5470
  %v6053 = vpop.f32.mrf.mxu0
  %v6054 = vadd.f32 %v5959, %v6053
  %v6055 = vpop.f32.mrf.mxu0
  %v6056 = vadd.f32 %v5961, %v6055
  %6057 = vmatprep.mubr.f32.mxu0 0.0
  %6058 = vmatmul.mubr.f32.gmra.mxu0 %v5473
  %v6059 = vpop.f32.mrf.mxu0
  %v6060 = vadd.f32 %v5965, %v6059
  %v6061 = vpop.f32.mrf.mxu0
  %v6062 = vadd.f32 %v5967, %v6061
  %6063 = vmatprep.mubr.f32.mxu0 0.0
  %6064 = vmatmul.mubr.f32.gmra.mxu0 %v5476
  %v6065 = vpop.f32.mrf.mxu0
  %v6066 = vadd.f32 %v5971, %v6065
  %v6067 = vpop.f32.mrf.mxu0
  %v6068 = vadd.f32 %v5973, %v6067
  %6069 = vmatprep.mubr.f32.mxu0 0.0
  %6070 = vmatmul.mubr.f32.gmra.mxu0 %v5479
  %v6071 = vpop.f32.mrf.mxu0
  %v6072 = vadd.f32 %v5977, %v6071
  %v6073 = vpop.f32.mrf.mxu0
  %v6074 = vadd.f32 %v5979, %v6073
  %6075 = vmatprep.mubr.f32.mxu0 0.0
  %6076 = vmatmul.mubr.f32.gmra.mxu0 %v5482
  %v6077 = vpop.f32.mrf.mxu0
  %v6078 = vadd.f32 %v5983, %v6077
  %v6079 = vpop.f32.mrf.mxu0
  %v6080 = vadd.f32 %v5985, %v6079
  %6081 = vdwg.mxu0
  %6082 = vmatprep.subr.mxu0 %v5211
  %6083 = vmatpush1.msra.mxu0 %v5210
  %6084 = vmatprep.subr.mxu0 %v5202
  %6085 = vmatpush1.msra.mxu0 %v5201
  %6086 = vmatprep.subr.mxu0 %v5193
  %6087 = vmatpush1.msra.mxu0 %v5192
  %6088 = vmatprep.subr.mxu0 %v5184
  %6089 = vmatpush1.msra.mxu0 %v5183
  %6090 = vmatprep.subr.mxu0 %v5175
  %6091 = vmatpush1.msra.mxu0 %v5174
  %6092 = vmatprep.subr.mxu0 %v5166
  %6093 = vmatpush1.msra.mxu0 %v5165
  %6094 = vmatprep.subr.mxu0 %v5157
  %6095 = vmatpush1.msra.mxu0 %v5156
  %6096 = vmatprep.subr.mxu0 %v5148
  %6097 = vmatpush1.msra.mxu0 %v5147
  %6098 = vmatprep.subr.mxu0 %v5139
  %6099 = vmatpush1.msra.mxu0 %v5138
  %6100 = vmatprep.subr.mxu0 %v5130
  %6101 = vmatpush1.msra.mxu0 %v5129
  %6102 = vmatprep.subr.mxu0 %v5121
  %6103 = vmatpush1.msra.mxu0 %v5120
  %6104 = vmatprep.subr.mxu0 %v5112
  %6105 = vmatpush1.msra.mxu0 %v5111
  %6106 = vmatprep.subr.mxu0 %v5103
  %6107 = vmatpush1.msra.mxu0 %v5102
  %6108 = vmatprep.subr.mxu0 %v5094
  %6109 = vmatpush1.msra.mxu0 %v5093
  %6110 = vmatprep.subr.mxu0 %v5085
  %6111 = vmatpush1.msra.mxu0 %v5084
  %6112 = vmatprep.subr.mxu0 %v5076
  %6113 = vmatpush1.msra.mxu0 %v5075
  %6114 = vmatprep.subr.mxu0 %v5355
  %6115 = vmatpush2.msra.mxu0 %v5354
  %6116 = vmatprep.subr.mxu0 %v5346
  %6117 = vmatpush2.msra.mxu0 %v5345
  %6118 = vmatprep.subr.mxu0 %v5337
  %6119 = vmatpush2.msra.mxu0 %v5336
  %6120 = vmatprep.subr.mxu0 %v5328
  %6121 = vmatpush2.msra.mxu0 %v5327
  %6122 = vmatprep.subr.mxu0 %v5319
  %6123 = vmatpush2.msra.mxu0 %v5318
  %6124 = vmatprep.subr.mxu0 %v5310
  %6125 = vmatpush2.msra.mxu0 %v5309
  %6126 = vmatprep.subr.mxu0 %v5301
  %6127 = vmatpush2.msra.mxu0 %v5300
  %6128 = vmatprep.subr.mxu0 %v5292
  %6129 = vmatpush2.msra.mxu0 %v5291
  %6130 = vmatprep.subr.mxu0 %v5283
  %6131 = vmatpush2.msra.mxu0 %v5282
  %6132 = vmatprep.subr.mxu0 %v5274
  %6133 = vmatpush2.msra.mxu0 %v5273
  %6134 = vmatprep.subr.mxu0 %v5265
  %6135 = vmatpush2.msra.mxu0 %v5264
  %6136 = vmatprep.subr.mxu0 %v5256
  %6137 = vmatpush2.msra.mxu0 %v5255
  %6138 = vmatprep.subr.mxu0 %v5247
  %6139 = vmatpush2.msra.mxu0 %v5246
  %6140 = vmatprep.subr.mxu0 %v5238
  %6141 = vmatpush2.msra.mxu0 %v5237
  %6142 = vmatprep.subr.mxu0 %v5229
  %6143 = vmatpush2.msra.mxu0 %v5228
  %6144 = vmatprep.subr.mxu0 %v5220
  %6145 = vmatpush2.msra.mxu0 %v5219
  %6146 = vmatprep.mubr.f32.mxu0 %v5055
  %6147 = vmatmul.mubr.f32.gmra.mxu0 %v5054
  %v6148 = vpop.f32.mrf.mxu0
  %v6149 = vadd.f32 %v5446, %v6148
  %v6150 = vpop.f32.mrf.mxu0
  %v6151 = vadd.f32 %v5446, %v6150
  %6152 = vmatprep.mubr.f32.mxu0 %v5058
  %6153 = vmatmul.mubr.f32.gmra.mxu0 %v5057
  %v6154 = vpop.f32.mrf.mxu0
  %v6155 = vadd.f32 %v5451, %v6154
  %v6156 = vpop.f32.mrf.mxu0
  %v6157 = vadd.f32 %v5451, %v6156
  %6158 = vmatprep.mubr.f32.mxu0 %v5061
  %6159 = vmatmul.mubr.f32.gmra.mxu0 %v5060
  %v6160 = vpop.f32.mrf.mxu0
  %v6161 = vadd.f32 %v5456, %v6160
  %v6162 = vpop.f32.mrf.mxu0
  %v6163 = vadd.f32 %v5456, %v6162
  %6164 = vmatprep.mubr.f32.mxu0 %v5064
  %6165 = vmatmul.mubr.f32.gmra.mxu0 %v5063
  %v6166 = vpop.f32.mrf.mxu0
  %v6167 = vadd.f32 %v5461, %v6166
  %v6168 = vpop.f32.mrf.mxu0
  %v6169 = vadd.f32 %v5461, %v6168
  %6170 = vmatprep.mubr.f32.mxu0 %v5067
  %6171 = vmatmul.mubr.f32.gmra.mxu0 %v5066
  %v6172 = vpop.f32.mrf.mxu0
  %v6173 = vadd.f32 %v5466, %v6172
  %v6174 = vpop.f32.mrf.mxu0
  %v6175 = vadd.f32 %v5466, %v6174
  %6176 = vdwg.mxu0
  %6177 = vmatprep.subr.mxu0 0.0
  %6178 = vmatpush1.msra.mxu0 0.0
  %6179 = vmatprep.subr.mxu0 0.0
  %6180 = vmatpush1.msra.mxu0 0.0
  %6181 = vmatprep.subr.mxu0 0.0
  %6182 = vmatpush1.msra.mxu0 0.0
  %6183 = vmatprep.subr.mxu0 0.0
  %6184 = vmatpush1.msra.mxu0 0.0
  %6185 = vmatprep.subr.mxu0 0.0
  %6186 = vmatpush1.msra.mxu0 0.0
  %6187 = vmatprep.subr.mxu0 0.0
  %6188 = vmatpush1.msra.mxu0 0.0
  %6189 = vmatprep.subr.mxu0 0.0
  %6190 = vmatpush1.msra.mxu0 0.0
  %6191 = vmatprep.subr.mxu0 %v5507
  %6192 = vmatpush1.msra.mxu0 %v5504
  %6193 = vmatprep.subr.mxu0 %v5427
  %6194 = vmatpush1.msra.mxu0 %v5426
  %6195 = vmatprep.subr.mxu0 %v5418
  %6196 = vmatpush1.msra.mxu0 %v5417
  %6197 = vmatprep.subr.mxu0 %v5409
  %6198 = vmatpush1.msra.mxu0 %v5408
  %6199 = vmatprep.subr.mxu0 %v5400
  %6200 = vmatpush1.msra.mxu0 %v5399
  %6201 = vmatprep.subr.mxu0 %v5391
  %6202 = vmatpush1.msra.mxu0 %v5390
  %6203 = vmatprep.subr.mxu0 %v5382
  %6204 = vmatpush1.msra.mxu0 %v5381
  %6205 = vmatprep.subr.mxu0 %v5373
  %6206 = vmatpush1.msra.mxu0 %v5372
  %6207 = vmatprep.subr.mxu0 %v5364
  %6208 = vmatpush1.msra.mxu0 %v5363
  %6209 = vmatprep.subr.mxu0 0.0
  %6210 = vmatpush2.msra.mxu0 0.0
  %6211 = vmatprep.subr.mxu0 0.0
  %6212 = vmatpush2.msra.mxu0 0.0
  %6213 = vmatprep.subr.mxu0 0.0
  %6214 = vmatpush2.msra.mxu0 0.0
  %6215 = vmatprep.subr.mxu0 0.0
  %6216 = vmatpush2.msra.mxu0 0.0
  %6217 = vmatprep.subr.mxu0 0.0
  %6218 = vmatpush2.msra.mxu0 0.0
  %6219 = vmatprep.subr.mxu0 0.0
  %6220 = vmatpush2.msra.mxu0 0.0
  %6221 = vmatprep.subr.mxu0 0.0
  %6222 = vmatpush2.msra.mxu0 0.0
  %6223 = vmatprep.subr.mxu0 0.0
  %6224 = vmatpush2.msra.mxu0 0.0
  %6225 = vmatprep.subr.mxu0 0.0
  %6226 = vmatpush2.msra.mxu0 0.0
  %6227 = vmatprep.subr.mxu0 0.0
  %6228 = vmatpush2.msra.mxu0 0.0
  %6229 = vmatprep.subr.mxu0 0.0
  %6230 = vmatpush2.msra.mxu0 0.0
  %6231 = vmatprep.subr.mxu0 0.0
  %6232 = vmatpush2.msra.mxu0 0.0
  %6233 = vmatprep.subr.mxu0 0.0
  %6234 = vmatpush2.msra.mxu0 0.0
  %6235 = vmatprep.subr.mxu0 0.0
  %6236 = vmatpush2.msra.mxu0 0.0
  %6237 = vmatprep.subr.mxu0 0.0
  %6238 = vmatpush2.msra.mxu0 0.0
  %6239 = vmatprep.subr.mxu0 0.0
  %6240 = vmatpush2.msra.mxu0 0.0
  %6241 = vmatprep.mubr.f32.mxu0 0.0
  %6242 = vmatmul.mubr.f32.gmra.mxu0 %v5470
  %v6243 = vpop.f32.mrf.mxu0
  %v6244 = vadd.f32 %v6149, %v6243
  %v6245 = vpop.f32.mrf.mxu0
  %v6246 = vadd.f32 %v6151, %v6245
  %6247 = vmatprep.mubr.f32.mxu0 0.0
  %6248 = vmatmul.mubr.f32.gmra.mxu0 %v5473
  %v6249 = vpop.f32.mrf.mxu0
  %v6250 = vadd.f32 %v6155, %v6249
  %v6251 = vpop.f32.mrf.mxu0
  %v6252 = vadd.f32 %v6157, %v6251
  %6253 = vmatprep.mubr.f32.mxu0 0.0
  %6254 = vmatmul.mubr.f32.gmra.mxu0 %v5476
  %v6255 = vpop.f32.mrf.mxu0
  %v6256 = vadd.f32 %v6161, %v6255
  %v6257 = vpop.f32.mrf.mxu0
  %v6258 = vadd.f32 %v6163, %v6257
  %6259 = vmatprep.mubr.f32.mxu0 0.0
  %6260 = vmatmul.mubr.f32.gmra.mxu0 %v5479
  %v6261 = vpop.f32.mrf.mxu0
  %v6262 = vadd.f32 %v6167, %v6261
  %v6263 = vpop.f32.mrf.mxu0
  %v6264 = vadd.f32 %v6169, %v6263
  %6265 = vmatprep.mubr.f32.mxu0 0.0
  %6266 = vmatmul.mubr.f32.gmra.mxu0 %v5482
  %v6267 = vpop.f32.mrf.mxu0
  %v6268 = vadd.f32 %v6173, %v6267
  %v6269 = vpop.f32.mrf.mxu0
  %v6270 = vadd.f32 %v6175, %v6269
  %6271 = vdwg.mxu0
  %6272 = vmatprep.subr.mxu0 0.0
  %6273 = vmatpush1.msra.mxu0 %v5212
  %6274 = vmatprep.subr.mxu0 0.0
  %6275 = vmatpush1.msra.mxu0 %v5203
  %6276 = vmatprep.subr.mxu0 0.0
  %6277 = vmatpush1.msra.mxu0 %v5194
  %6278 = vmatprep.subr.mxu0 0.0
  %6279 = vmatpush1.msra.mxu0 %v5185
  %6280 = vmatprep.subr.mxu0 0.0
  %6281 = vmatpush1.msra.mxu0 %v5176
  %6282 = vmatprep.subr.mxu0 0.0
  %6283 = vmatpush1.msra.mxu0 %v5167
  %6284 = vmatprep.subr.mxu0 0.0
  %6285 = vmatpush1.msra.mxu0 %v5158
  %6286 = vmatprep.subr.mxu0 0.0
  %6287 = vmatpush1.msra.mxu0 %v5149
  %6288 = vmatprep.subr.mxu0 0.0
  %6289 = vmatpush1.msra.mxu0 %v5140
  %6290 = vmatprep.subr.mxu0 0.0
  %6291 = vmatpush1.msra.mxu0 %v5131
  %6292 = vmatprep.subr.mxu0 0.0
  %6293 = vmatpush1.msra.mxu0 %v5122
  %6294 = vmatprep.subr.mxu0 0.0
  %6295 = vmatpush1.msra.mxu0 %v5113
  %6296 = vmatprep.subr.mxu0 0.0
  %6297 = vmatpush1.msra.mxu0 %v5104
  %6298 = vmatprep.subr.mxu0 0.0
  %6299 = vmatpush1.msra.mxu0 %v5095
  %6300 = vmatprep.subr.mxu0 0.0
  %6301 = vmatpush1.msra.mxu0 %v5086
  %6302 = vmatprep.subr.mxu0 0.0
  %6303 = vmatpush1.msra.mxu0 %v5077
  %6304 = vmatprep.subr.mxu0 0.0
  %6305 = vmatpush2.msra.mxu0 %v5356
  %6306 = vmatprep.subr.mxu0 0.0
  %6307 = vmatpush2.msra.mxu0 %v5347
  %6308 = vmatprep.subr.mxu0 0.0
  %6309 = vmatpush2.msra.mxu0 %v5338
  %6310 = vmatprep.subr.mxu0 0.0
  %6311 = vmatpush2.msra.mxu0 %v5329
  %6312 = vmatprep.subr.mxu0 0.0
  %6313 = vmatpush2.msra.mxu0 %v5320
  %6314 = vmatprep.subr.mxu0 0.0
  %6315 = vmatpush2.msra.mxu0 %v5311
  %6316 = vmatprep.subr.mxu0 0.0
  %6317 = vmatpush2.msra.mxu0 %v5302
  %6318 = vmatprep.subr.mxu0 0.0
  %6319 = vmatpush2.msra.mxu0 %v5293
  %6320 = vmatprep.subr.mxu0 0.0
  %6321 = vmatpush2.msra.mxu0 %v5284
  %6322 = vmatprep.subr.mxu0 0.0
  %6323 = vmatpush2.msra.mxu0 %v5275
  %6324 = vmatprep.subr.mxu0 0.0
  %6325 = vmatpush2.msra.mxu0 %v5266
  %6326 = vmatprep.subr.mxu0 0.0
  %6327 = vmatpush2.msra.mxu0 %v5257
  %6328 = vmatprep.subr.mxu0 0.0
  %6329 = vmatpush2.msra.mxu0 %v5248
  %6330 = vmatprep.subr.mxu0 0.0
  %6331 = vmatpush2.msra.mxu0 %v5239
  %6332 = vmatprep.subr.mxu0 0.0
  %6333 = vmatpush2.msra.mxu0 %v5230
  %6334 = vmatprep.subr.mxu0 0.0
  %6335 = vmatpush2.msra.mxu0 %v5221
  %6336 = vmatprep.mubr.f32.mxu0 %v5055
  %6337 = vmatmul.mubr.f32.gmra.mxu0 %v5054
  %v6338 = vpop.f32.mrf.mxu0
  %v6339 = vadd.f32 %v5446, %v6338
  %v6340 = vpop.f32.mrf.mxu0
  %6341 = vmatprep.mubr.f32.mxu0 %v5058
  %6342 = vmatmul.mubr.f32.gmra.mxu0 %v5057
  %v6343 = vpop.f32.mrf.mxu0
  %v6344 = vadd.f32 %v5451, %v6343
  %v6345 = vpop.f32.mrf.mxu0
  %6346 = vmatprep.mubr.f32.mxu0 %v5061
  %6347 = vmatmul.mubr.f32.gmra.mxu0 %v5060
  %v6348 = vpop.f32.mrf.mxu0
  %v6349 = vadd.f32 %v5456, %v6348
  %v6350 = vpop.f32.mrf.mxu0
  %6351 = vmatprep.mubr.f32.mxu0 %v5064
  %6352 = vmatmul.mubr.f32.gmra.mxu0 %v5063
  %v6353 = vpop.f32.mrf.mxu0
  %v6354 = vadd.f32 %v5461, %v6353
  %v6355 = vpop.f32.mrf.mxu0
  %6356 = vmatprep.mubr.f32.mxu0 %v5067
  %6357 = vmatmul.mubr.f32.gmra.mxu0 %v5066
  %v6358 = vpop.f32.mrf.mxu0
  %v6359 = vadd.f32 %v5466, %v6358
  %v6360 = vpop.f32.mrf.mxu0
  %6361 = vdwg.mxu0
  %6362 = vmatprep.subr.mxu0 0.0
  %6363 = vmatpush1.msra.mxu0 0.0
  %6364 = vmatprep.subr.mxu0 0.0
  %6365 = vmatpush1.msra.mxu0 0.0
  %6366 = vmatprep.subr.mxu0 0.0
  %6367 = vmatpush1.msra.mxu0 0.0
  %6368 = vmatprep.subr.mxu0 0.0
  %6369 = vmatpush1.msra.mxu0 0.0
  %6370 = vmatprep.subr.mxu0 0.0
  %6371 = vmatpush1.msra.mxu0 0.0
  %6372 = vmatprep.subr.mxu0 0.0
  %6373 = vmatpush1.msra.mxu0 0.0
  %6374 = vmatprep.subr.mxu0 0.0
  %6375 = vmatpush1.msra.mxu0 0.0
  %6376 = vmatprep.subr.mxu0 0.0
  %6377 = vmatpush1.msra.mxu0 %v5510
  %6378 = vmatprep.subr.mxu0 0.0
  %6379 = vmatpush1.msra.mxu0 %v5428
  %6380 = vmatprep.subr.mxu0 0.0
  %6381 = vmatpush1.msra.mxu0 %v5419
  %6382 = vmatprep.subr.mxu0 0.0
  %6383 = vmatpush1.msra.mxu0 %v5410
  %6384 = vmatprep.subr.mxu0 0.0
  %6385 = vmatpush1.msra.mxu0 %v5401
  %6386 = vmatprep.subr.mxu0 0.0
  %6387 = vmatpush1.msra.mxu0 %v5392
  %6388 = vmatprep.subr.mxu0 0.0
  %6389 = vmatpush1.msra.mxu0 %v5383
  %6390 = vmatprep.subr.mxu0 0.0
  %6391 = vmatpush1.msra.mxu0 %v5374
  %6392 = vmatprep.subr.mxu0 0.0
  %6393 = vmatpush1.msra.mxu0 %v5365
  %6394 = vmatprep.subr.mxu0 0.0
  %6395 = vmatpush2.msra.mxu0 0.0
  %6396 = vmatprep.subr.mxu0 0.0
  %6397 = vmatpush2.msra.mxu0 0.0
  %6398 = vmatprep.subr.mxu0 0.0
  %6399 = vmatpush2.msra.mxu0 0.0
  %6400 = vmatprep.subr.mxu0 0.0
  %6401 = vmatpush2.msra.mxu0 0.0
  %6402 = vmatprep.subr.mxu0 0.0
  %6403 = vmatpush2.msra.mxu0 0.0
  %6404 = vmatprep.subr.mxu0 0.0
  %6405 = vmatpush2.msra.mxu0 0.0
  %6406 = vmatprep.subr.mxu0 0.0
  %6407 = vmatpush2.msra.mxu0 0.0
  %6408 = vmatprep.subr.mxu0 0.0
  %6409 = vmatpush2.msra.mxu0 0.0
  %6410 = vmatprep.subr.mxu0 0.0
  %6411 = vmatpush2.msra.mxu0 0.0
  %6412 = vmatprep.subr.mxu0 0.0
  %6413 = vmatpush2.msra.mxu0 0.0
  %6414 = vmatprep.subr.mxu0 0.0
  %6415 = vmatpush2.msra.mxu0 0.0
  %6416 = vmatprep.subr.mxu0 0.0
  %6417 = vmatpush2.msra.mxu0 0.0
  %6418 = vmatprep.subr.mxu0 0.0
  %6419 = vmatpush2.msra.mxu0 0.0
  %6420 = vmatprep.subr.mxu0 0.0
  %6421 = vmatpush2.msra.mxu0 0.0
  %6422 = vmatprep.subr.mxu0 0.0
  %6423 = vmatpush2.msra.mxu0 0.0
  %6424 = vmatprep.subr.mxu0 0.0
  %6425 = vmatpush2.msra.mxu0 0.0
  %6426 = vmatprep.mubr.f32.mxu0 0.0
  %6427 = vmatmul.mubr.f32.gmra.mxu0 %v5470
  %v6428 = vpop.f32.mrf.mxu0
  %v6429 = vadd.f32 %v6339, %v6428
  %v6430 = vpop.f32.mrf.mxu0
  %6431 = vmatprep.mubr.f32.mxu0 0.0
  %6432 = vmatmul.mubr.f32.gmra.mxu0 %v5473
  %v6433 = vpop.f32.mrf.mxu0
  %v6434 = vadd.f32 %v6344, %v6433
  %v6435 = vpop.f32.mrf.mxu0
  %6436 = vmatprep.mubr.f32.mxu0 0.0
  %6437 = vmatmul.mubr.f32.gmra.mxu0 %v5476
  %v6438 = vpop.f32.mrf.mxu0
  %v6439 = vadd.f32 %v6349, %v6438
  %v6440 = vpop.f32.mrf.mxu0
  %6441 = vmatprep.mubr.f32.mxu0 0.0
  %6442 = vmatmul.mubr.f32.gmra.mxu0 %v5479
  %v6443 = vpop.f32.mrf.mxu0
  %v6444 = vadd.f32 %v6354, %v6443
  %v6445 = vpop.f32.mrf.mxu0
  %6446 = vmatprep.mubr.f32.mxu0 0.0
  %6447 = vmatmul.mubr.f32.gmra.mxu0 %v5482
  %v6448 = vpop.f32.mrf.mxu0
  %v6449 = vadd.f32 %v6359, %v6448
  %v6450 = vpop.f32.mrf.mxu0
  %6451 = vdwg.mxu0
  %v6452 = vmax.f32 %v5674, 0.0
  %v6453 = vmax.f32 %v5676, 0.0
  %v6454 = vmax.f32 %v5864, 0.0
  %v6455 = vmax.f32 %v5866, 0.0
  %v6456 = vmax.f32 %v6054, 0.0
  %v6457 = vmax.f32 %v6056, 0.0
  %v6458 = vmax.f32 %v6244, 0.0
  %v6459 = vmax.f32 %v6246, 0.0
  %v6460 = vmax.f32 %v6429, 0.0
  %v6461 = vmax.f32 %v5680, 0.0
  %v6462 = vmax.f32 %v5682, 0.0
  %v6463 = vmax.f32 %v5870, 0.0
  %v6464 = vmax.f32 %v5872, 0.0
  %v6465 = vmax.f32 %v6060, 0.0
  %v6466 = vmax.f32 %v6062, 0.0
  %v6467 = vmax.f32 %v6250, 0.0
  %v6468 = vmax.f32 %v6252, 0.0
  %v6469 = vmax.f32 %v6434, 0.0
  %v6470 = vmax.f32 %v5686, 0.0
  %v6471 = vmax.f32 %v5688, 0.0
  %v6472 = vmax.f32 %v5876, 0.0
  %v6473 = vmax.f32 %v5878, 0.0
  %v6474 = vmax.f32 %v6066, 0.0
  %v6475 = vmax.f32 %v6068, 0.0
  %v6476 = vmax.f32 %v6256, 0.0
  %v6477 = vmax.f32 %v6258, 0.0
  %v6478 = vmax.f32 %v6439, 0.0
  %v6479 = vmax.f32 %v5692, 0.0
  %v6480 = vmax.f32 %v5694, 0.0
  %v6481 = vmax.f32 %v5882, 0.0
  %v6482 = vmax.f32 %v5884, 0.0
  %v6483 = vmax.f32 %v6072, 0.0
  %v6484 = vmax.f32 %v6074, 0.0
  %v6485 = vmax.f32 %v6262, 0.0
  %v6486 = vmax.f32 %v6264, 0.0
  %v6487 = vmax.f32 %v6444, 0.0
  %v6488 = vmax.f32 %v5698, 0.0
  %v6489 = vmax.f32 %v5700, 0.0
  %v6490 = vmax.f32 %v5888, 0.0
  %v6491 = vmax.f32 %v5890, 0.0
  %v6492 = vmax.f32 %v6078, 0.0
  %v6493 = vmax.f32 %v6080, 0.0
  %v6494 = vmax.f32 %v6268, 0.0
  %v6495 = vmax.f32 %v6270, 0.0
  %v6496 = vmax.f32 %v6449, 0.0
  %v6497 = vld [vmem:[%s3] sm:$0xff]
  %v6498 = vld [vmem:[%s3 + $0x8] sm:$0xff]
  %v6499 = vld [vmem:[%s3 + $0x10] sm:$0xff]
  %v6500 = vld [vmem:[%s3 + $0x18] sm:$0x1]
  %vm6501 = vcmask 293888
  %v6503 = vsel %vm6501, %v6497, 0
  %v6506 = vsel %vm6501, %v6498, 0
  %v6509 = vsel %vm6501, %v6499, 0
  %v6512 = vsel %vm6501, %v6500, 0
  %v6515 = vsel %vm5484, %v6488, 0
  %v6518 = vsel %vm5484, %v6489, 0
  %v6521 = vsel %vm5484, %v6490, 0
  %v6524 = vsel %vm5484, %v6491, 0
  %v6527 = vsel %vm5484, %v6492, 0
  %v6530 = vsel %vm5484, %v6493, 0
  %v6533 = vsel %vm5484, %v6494, 0
  %v6536 = vsel %vm5484, %v6495, 0
  %v6539 = vsel %vm5484, %v6496, 0
  %6541 = vmatprep.subr.mxu0 0.0
  %6542 = vmatpush1.msra.mxu0 0.0
  %6543 = vmatprep.subr.mxu0 0.0
  %6544 = vmatpush1.msra.mxu0 0.0
  %6545 = vmatprep.subr.mxu0 0.0
  %6546 = vmatpush1.msra.mxu0 0.0
  %6547 = vmatprep.subr.mxu0 0.0
  %6548 = vmatpush1.msra.mxu0 0.0
  %6549 = vmatprep.subr.mxu0 0.0
  %6550 = vmatpush1.msra.mxu0 0.0
  %6551 = vmatprep.subr.mxu0 0.0
  %6552 = vmatpush1.msra.mxu0 0.0
  %6553 = vmatprep.subr.mxu0 0.0
  %6554 = vmatpush1.msra.mxu0 0.0
  %6555 = vmatprep.subr.mxu0 0.0
  %6556 = vmatpush1.msra.mxu0 0.0
  %6557 = vmatprep.subr.mxu0 0.0
  %6558 = vmatpush1.msra.mxu0 0.0
  %6559 = vmatprep.subr.mxu0 0.0
  %6560 = vmatpush1.msra.mxu0 0.0
  %6561 = vmatprep.subr.mxu0 0.0
  %6562 = vmatpush1.msra.mxu0 0.0
  %6563 = vmatprep.subr.mxu0 %v6518
  %6564 = vmatpush1.msra.mxu0 %v6515
  %6565 = vmatprep.subr.mxu0 %v6480
  %6566 = vmatpush1.msra.mxu0 %v6479
  %6567 = vmatprep.subr.mxu0 %v6471
  %6568 = vmatpush1.msra.mxu0 %v6470
  %6569 = vmatprep.subr.mxu0 %v6462
  %6570 = vmatpush1.msra.mxu0 %v6461
  %6571 = vmatprep.subr.mxu0 %v6453
  %6572 = vmatpush1.msra.mxu0 %v6452
  %6573 = vmatprep.subr.mxu0 0.0
  %6574 = vmatpush2.msra.mxu0 0.0
  %6575 = vmatprep.subr.mxu0 0.0
  %6576 = vmatpush2.msra.mxu0 0.0
  %6577 = vmatprep.subr.mxu0 0.0
  %6578 = vmatpush2.msra.mxu0 0.0
  %6579 = vmatprep.subr.mxu0 0.0
  %6580 = vmatpush2.msra.mxu0 0.0
  %6581 = vmatprep.subr.mxu0 0.0
  %6582 = vmatpush2.msra.mxu0 0.0
  %6583 = vmatprep.subr.mxu0 0.0
  %6584 = vmatpush2.msra.mxu0 0.0
  %6585 = vmatprep.subr.mxu0 0.0
  %6586 = vmatpush2.msra.mxu0 0.0
  %6587 = vmatprep.subr.mxu0 0.0
  %6588 = vmatpush2.msra.mxu0 0.0
  %6589 = vmatprep.subr.mxu0 0.0
  %6590 = vmatpush2.msra.mxu0 0.0
  %6591 = vmatprep.subr.mxu0 0.0
  %6592 = vmatpush2.msra.mxu0 0.0
  %6593 = vmatprep.subr.mxu0 0.0
  %6594 = vmatpush2.msra.mxu0 0.0
  %6595 = vmatprep.subr.mxu0 0.0
  %6596 = vmatpush2.msra.mxu0 0.0
  %6597 = vmatprep.subr.mxu0 0.0
  %6598 = vmatpush2.msra.mxu0 0.0
  %6599 = vmatprep.subr.mxu0 0.0
  %6600 = vmatpush2.msra.mxu0 0.0
  %6601 = vmatprep.subr.mxu0 0.0
  %6602 = vmatpush2.msra.mxu0 0.0
  %6603 = vmatprep.subr.mxu0 0.0
  %6604 = vmatpush2.msra.mxu0 0.0
  %6605 = vmatprep.mubr.f32.mxu0 0.0
  %6606 = vmatmul.mubr.f32.gmra.mxu0 %v6503
  %v6607 = vpop.f32.mrf.mxu0
  %v6608 = vadd.f32 0.0, %v6607
  %v6609 = vpop.f32.mrf.mxu0
  %v6610 = vadd.f32 0.0, %v6609
  %6611 = vmatprep.mubr.f32.mxu0 0.0
  %6612 = vmatmul.mubr.f32.gmra.mxu0 %v6506
  %v6613 = vpop.f32.mrf.mxu0
  %v6614 = vadd.f32 0.0, %v6613
  %v6615 = vpop.f32.mrf.mxu0
  %v6616 = vadd.f32 0.0, %v6615
  %6617 = vmatprep.mubr.f32.mxu0 0.0
  %6618 = vmatmul.mubr.f32.gmra.mxu0 %v6509
  %v6619 = vpop.f32.mrf.mxu0
  %v6620 = vadd.f32 0.0, %v6619
  %v6621 = vpop.f32.mrf.mxu0
  %v6622 = vadd.f32 0.0, %v6621
  %6623 = vmatprep.mubr.f32.mxu0 0.0
  %6624 = vmatmul.mubr.f32.gmra.mxu0 %v6512
  %v6625 = vpop.f32.mrf.mxu0
  %v6626 = vadd.f32 0.0, %v6625
  %v6627 = vpop.f32.mrf.mxu0
  %v6628 = vadd.f32 0.0, %v6627
  %6629 = vdwg.mxu0
  %6630 = vmatprep.subr.mxu0 0.0
  %6631 = vmatpush1.msra.mxu0 0.0
  %6632 = vmatprep.subr.mxu0 0.0
  %6633 = vmatpush1.msra.mxu0 0.0
  %6634 = vmatprep.subr.mxu0 0.0
  %6635 = vmatpush1.msra.mxu0 0.0
  %6636 = vmatprep.subr.mxu0 0.0
  %6637 = vmatpush1.msra.mxu0 0.0
  %6638 = vmatprep.subr.mxu0 0.0
  %6639 = vmatpush1.msra.mxu0 0.0
  %6640 = vmatprep.subr.mxu0 0.0
  %6641 = vmatpush1.msra.mxu0 0.0
  %6642 = vmatprep.subr.mxu0 0.0
  %6643 = vmatpush1.msra.mxu0 0.0
  %6644 = vmatprep.subr.mxu0 0.0
  %6645 = vmatpush1.msra.mxu0 0.0
  %6646 = vmatprep.subr.mxu0 0.0
  %6647 = vmatpush1.msra.mxu0 0.0
  %6648 = vmatprep.subr.mxu0 0.0
  %6649 = vmatpush1.msra.mxu0 0.0
  %6650 = vmatprep.subr.mxu0 0.0
  %6651 = vmatpush1.msra.mxu0 0.0
  %6652 = vmatprep.subr.mxu0 %v6524
  %6653 = vmatpush1.msra.mxu0 %v6521
  %6654 = vmatprep.subr.mxu0 %v6482
  %6655 = vmatpush1.msra.mxu0 %v6481
  %6656 = vmatprep.subr.mxu0 %v6473
  %6657 = vmatpush1.msra.mxu0 %v6472
  %6658 = vmatprep.subr.mxu0 %v6464
  %6659 = vmatpush1.msra.mxu0 %v6463
  %6660 = vmatprep.subr.mxu0 %v6455
  %6661 = vmatpush1.msra.mxu0 %v6454
  %6662 = vmatprep.subr.mxu0 0.0
  %6663 = vmatpush2.msra.mxu0 0.0
  %6664 = vmatprep.subr.mxu0 0.0
  %6665 = vmatpush2.msra.mxu0 0.0
  %6666 = vmatprep.subr.mxu0 0.0
  %6667 = vmatpush2.msra.mxu0 0.0
  %6668 = vmatprep.subr.mxu0 0.0
  %6669 = vmatpush2.msra.mxu0 0.0
  %6670 = vmatprep.subr.mxu0 0.0
  %6671 = vmatpush2.msra.mxu0 0.0
  %6672 = vmatprep.subr.mxu0 0.0
  %6673 = vmatpush2.msra.mxu0 0.0
  %6674 = vmatprep.subr.mxu0 0.0
  %6675 = vmatpush2.msra.mxu0 0.0
  %6676 = vmatprep.subr.mxu0 0.0
  %6677 = vmatpush2.msra.mxu0 0.0
  %6678 = vmatprep.subr.mxu0 0.0
  %6679 = vmatpush2.msra.mxu0 0.0
  %6680 = vmatprep.subr.mxu0 0.0
  %6681 = vmatpush2.msra.mxu0 0.0
  %6682 = vmatprep.subr.mxu0 0.0
  %6683 = vmatpush2.msra.mxu0 0.0
  %6684 = vmatprep.subr.mxu0 0.0
  %6685 = vmatpush2.msra.mxu0 0.0
  %6686 = vmatprep.subr.mxu0 0.0
  %6687 = vmatpush2.msra.mxu0 0.0
  %6688 = vmatprep.subr.mxu0 0.0
  %6689 = vmatpush2.msra.mxu0 0.0
  %6690 = vmatprep.subr.mxu0 0.0
  %6691 = vmatpush2.msra.mxu0 0.0
  %6692 = vmatprep.subr.mxu0 0.0
  %6693 = vmatpush2.msra.mxu0 0.0
  %6694 = vmatprep.mubr.f32.mxu0 0.0
  %6695 = vmatmul.mubr.f32.gmra.mxu0 %v6503
  %v6696 = vpop.f32.mrf.mxu0
  %v6697 = vadd.f32 0.0, %v6696
  %v6698 = vpop.f32.mrf.mxu0
  %v6699 = vadd.f32 0.0, %v6698
  %6700 = vmatprep.mubr.f32.mxu0 0.0
  %6701 = vmatmul.mubr.f32.gmra.mxu0 %v6506
  %v6702 = vpop.f32.mrf.mxu0
  %v6703 = vadd.f32 0.0, %v6702
  %v6704 = vpop.f32.mrf.mxu0
  %v6705 = vadd.f32 0.0, %v6704
  %6706 = vmatprep.mubr.f32.mxu0 0.0
  %6707 = vmatmul.mubr.f32.gmra.mxu0 %v6509
  %v6708 = vpop.f32.mrf.mxu0
  %v6709 = vadd.f32 0.0, %v6708
  %v6710 = vpop.f32.mrf.mxu0
  %v6711 = vadd.f32 0.0, %v6710
  %6712 = vmatprep.mubr.f32.mxu0 0.0
  %6713 = vmatmul.mubr.f32.gmra.mxu0 %v6512
  %v6714 = vpop.f32.mrf.mxu0
  %v6715 = vadd.f32 0.0, %v6714
  %v6716 = vpop.f32.mrf.mxu0
  %v6717 = vadd.f32 0.0, %v6716
  %6718 = vdwg.mxu0
  %6719 = vmatprep.subr.mxu0 0.0
  %6720 = vmatpush1.msra.mxu0 0.0
  %6721 = vmatprep.subr.mxu0 0.0
  %6722 = vmatpush1.msra.mxu0 0.0
  %6723 = vmatprep.subr.mxu0 0.0
  %6724 = vmatpush1.msra.mxu0 0.0
  %6725 = vmatprep.subr.mxu0 0.0
  %6726 = vmatpush1.msra.mxu0 0.0
  %6727 = vmatprep.subr.mxu0 0.0
  %6728 = vmatpush1.msra.mxu0 0.0
  %6729 = vmatprep.subr.mxu0 0.0
  %6730 = vmatpush1.msra.mxu0 0.0
  %6731 = vmatprep.subr.mxu0 0.0
  %6732 = vmatpush1.msra.mxu0 0.0
  %6733 = vmatprep.subr.mxu0 0.0
  %6734 = vmatpush1.msra.mxu0 0.0
  %6735 = vmatprep.subr.mxu0 0.0
  %6736 = vmatpush1.msra.mxu0 0.0
  %6737 = vmatprep.subr.mxu0 0.0
  %6738 = vmatpush1.msra.mxu0 0.0
  %6739 = vmatprep.subr.mxu0 0.0
  %6740 = vmatpush1.msra.mxu0 0.0
  %6741 = vmatprep.subr.mxu0 %v6530
  %6742 = vmatpush1.msra.mxu0 %v6527
  %6743 = vmatprep.subr.mxu0 %v6484
  %6744 = vmatpush1.msra.mxu0 %v6483
  %6745 = vmatprep.subr.mxu0 %v6475
  %6746 = vmatpush1.msra.mxu0 %v6474
  %6747 = vmatprep.subr.mxu0 %v6466
  %6748 = vmatpush1.msra.mxu0 %v6465
  %6749 = vmatprep.subr.mxu0 %v6457
  %6750 = vmatpush1.msra.mxu0 %v6456
  %6751 = vmatprep.subr.mxu0 0.0
  %6752 = vmatpush2.msra.mxu0 0.0
  %6753 = vmatprep.subr.mxu0 0.0
  %6754 = vmatpush2.msra.mxu0 0.0
  %6755 = vmatprep.subr.mxu0 0.0
  %6756 = vmatpush2.msra.mxu0 0.0
  %6757 = vmatprep.subr.mxu0 0.0
  %6758 = vmatpush2.msra.mxu0 0.0
  %6759 = vmatprep.subr.mxu0 0.0
  %6760 = vmatpush2.msra.mxu0 0.0
  %6761 = vmatprep.subr.mxu0 0.0
  %6762 = vmatpush2.msra.mxu0 0.0
  %6763 = vmatprep.subr.mxu0 0.0
  %6764 = vmatpush2.msra.mxu0 0.0
  %6765 = vmatprep.subr.mxu0 0.0
  %6766 = vmatpush2.msra.mxu0 0.0
  %6767 = vmatprep.subr.mxu0 0.0
  %6768 = vmatpush2.msra.mxu0 0.0
  %6769 = vmatprep.subr.mxu0 0.0
  %6770 = vmatpush2.msra.mxu0 0.0
  %6771 = vmatprep.subr.mxu0 0.0
  %6772 = vmatpush2.msra.mxu0 0.0
  %6773 = vmatprep.subr.mxu0 0.0
  %6774 = vmatpush2.msra.mxu0 0.0
  %6775 = vmatprep.subr.mxu0 0.0
  %6776 = vmatpush2.msra.mxu0 0.0
  %6777 = vmatprep.subr.mxu0 0.0
  %6778 = vmatpush2.msra.mxu0 0.0
  %6779 = vmatprep.subr.mxu0 0.0
  %6780 = vmatpush2.msra.mxu0 0.0
  %6781 = vmatprep.subr.mxu0 0.0
  %6782 = vmatpush2.msra.mxu0 0.0
  %6783 = vmatprep.mubr.f32.mxu0 0.0
  %6784 = vmatmul.mubr.f32.gmra.mxu0 %v6503
  %v6785 = vpop.f32.mrf.mxu0
  %v6786 = vadd.f32 0.0, %v6785
  %v6787 = vpop.f32.mrf.mxu0
  %v6788 = vadd.f32 0.0, %v6787
  %6789 = vmatprep.mubr.f32.mxu0 0.0
  %6790 = vmatmul.mubr.f32.gmra.mxu0 %v6506
  %v6791 = vpop.f32.mrf.mxu0
  %v6792 = vadd.f32 0.0, %v6791
  %v6793 = vpop.f32.mrf.mxu0
  %v6794 = vadd.f32 0.0, %v6793
  %6795 = vmatprep.mubr.f32.mxu0 0.0
  %6796 = vmatmul.mubr.f32.gmra.mxu0 %v6509
  %v6797 = vpop.f32.mrf.mxu0
  %v6798 = vadd.f32 0.0, %v6797
  %v6799 = vpop.f32.mrf.mxu0
  %v6800 = vadd.f32 0.0, %v6799
  %6801 = vmatprep.mubr.f32.mxu0 0.0
  %6802 = vmatmul.mubr.f32.gmra.mxu0 %v6512
  %v6803 = vpop.f32.mrf.mxu0
  %v6804 = vadd.f32 0.0, %v6803
  %v6805 = vpop.f32.mrf.mxu0
  %v6806 = vadd.f32 0.0, %v6805
  %6807 = vdwg.mxu0
  %6808 = vmatprep.subr.mxu0 0.0
  %6809 = vmatpush1.msra.mxu0 0.0
  %6810 = vmatprep.subr.mxu0 0.0
  %6811 = vmatpush1.msra.mxu0 0.0
  %6812 = vmatprep.subr.mxu0 0.0
  %6813 = vmatpush1.msra.mxu0 0.0
  %6814 = vmatprep.subr.mxu0 0.0
  %6815 = vmatpush1.msra.mxu0 0.0
  %6816 = vmatprep.subr.mxu0 0.0
  %6817 = vmatpush1.msra.mxu0 0.0
  %6818 = vmatprep.subr.mxu0 0.0
  %6819 = vmatpush1.msra.mxu0 0.0
  %6820 = vmatprep.subr.mxu0 0.0
  %6821 = vmatpush1.msra.mxu0 0.0
  %6822 = vmatprep.subr.mxu0 0.0
  %6823 = vmatpush1.msra.mxu0 0.0
  %6824 = vmatprep.subr.mxu0 0.0
  %6825 = vmatpush1.msra.mxu0 0.0
  %6826 = vmatprep.subr.mxu0 0.0
  %6827 = vmatpush1.msra.mxu0 0.0
  %6828 = vmatprep.subr.mxu0 0.0
  %6829 = vmatpush1.msra.mxu0 0.0
  %6830 = vmatprep.subr.mxu0 %v6536
  %6831 = vmatpush1.msra.mxu0 %v6533
  %6832 = vmatprep.subr.mxu0 %v6486
  %6833 = vmatpush1.msra.mxu0 %v6485
  %6834 = vmatprep.subr.mxu0 %v6477
  %6835 = vmatpush1.msra.mxu0 %v6476
  %6836 = vmatprep.subr.mxu0 %v6468
  %6837 = vmatpush1.msra.mxu0 %v6467
  %6838 = vmatprep.subr.mxu0 %v6459
  %6839 = vmatpush1.msra.mxu0 %v6458
  %6840 = vmatprep.subr.mxu0 0.0
  %6841 = vmatpush2.msra.mxu0 0.0
  %6842 = vmatprep.subr.mxu0 0.0
  %6843 = vmatpush2.msra.mxu0 0.0
  %6844 = vmatprep.subr.mxu0 0.0
  %6845 = vmatpush2.msra.mxu0 0.0
  %6846 = vmatprep.subr.mxu0 0.0
  %6847 = vmatpush2.msra.mxu0 0.0
  %6848 = vmatprep.subr.mxu0 0.0
  %6849 = vmatpush2.msra.mxu0 0.0
  %6850 = vmatprep.subr.mxu0 0.0
  %6851 = vmatpush2.msra.mxu0 0.0
  %6852 = vmatprep.subr.mxu0 0.0
  %6853 = vmatpush2.msra.mxu0 0.0
  %6854 = vmatprep.subr.mxu0 0.0
  %6855 = vmatpush2.msra.mxu0 0.0
  %6856 = vmatprep.subr.mxu0 0.0
  %6857 = vmatpush2.msra.mxu0 0.0
  %6858 = vmatprep.subr.mxu0 0.0
  %6859 = vmatpush2.msra.mxu0 0.0
  %6860 = vmatprep.subr.mxu0 0.0
  %6861 = vmatpush2.msra.mxu0 0.0
  %6862 = vmatprep.subr.mxu0 0.0
  %6863 = vmatpush2.msra.mxu0 0.0
  %6864 = vmatprep.subr.mxu0 0.0
  %6865 = vmatpush2.msra.mxu0 0.0
  %6866 = vmatprep.subr.mxu0 0.0
  %6867 = vmatpush2.msra.mxu0 0.0
  %6868 = vmatprep.subr.mxu0 0.0
  %6869 = vmatpush2.msra.mxu0 0.0
  %6870 = vmatprep.subr.mxu0 0.0
  %6871 = vmatpush2.msra.mxu0 0.0
  %6872 = vmatprep.mubr.f32.mxu0 0.0
  %6873 = vmatmul.mubr.f32.gmra.mxu0 %v6503
  %v6874 = vpop.f32.mrf.mxu0
  %v6875 = vadd.f32 0.0, %v6874
  %v6876 = vpop.f32.mrf.mxu0
  %v6877 = vadd.f32 0.0, %v6876
  %6878 = vmatprep.mubr.f32.mxu0 0.0
  %6879 = vmatmul.mubr.f32.gmra.mxu0 %v6506
  %v6880 = vpop.f32.mrf.mxu0
  %v6881 = vadd.f32 0.0, %v6880
  %v6882 = vpop.f32.mrf.mxu0
  %v6883 = vadd.f32 0.0, %v6882
  %6884 = vmatprep.mubr.f32.mxu0 0.0
  %6885 = vmatmul.mubr.f32.gmra.mxu0 %v6509
  %v6886 = vpop.f32.mrf.mxu0
  %v6887 = vadd.f32 0.0, %v6886
  %v6888 = vpop.f32.mrf.mxu0
  %v6889 = vadd.f32 0.0, %v6888
  %6890 = vmatprep.mubr.f32.mxu0 0.0
  %6891 = vmatmul.mubr.f32.gmra.mxu0 %v6512
  %v6892 = vpop.f32.mrf.mxu0
  %v6893 = vadd.f32 0.0, %v6892
  %v6894 = vpop.f32.mrf.mxu0
  %v6895 = vadd.f32 0.0, %v6894
  %6896 = vdwg.mxu0
  %6897 = vmatprep.subr.mxu0 0.0
  %6898 = vmatpush1.msra.mxu0 0.0
  %6899 = vmatprep.subr.mxu0 0.0
  %6900 = vmatpush1.msra.mxu0 0.0
  %6901 = vmatprep.subr.mxu0 0.0
  %6902 = vmatpush1.msra.mxu0 0.0
  %6903 = vmatprep.subr.mxu0 0.0
  %6904 = vmatpush1.msra.mxu0 0.0
  %6905 = vmatprep.subr.mxu0 0.0
  %6906 = vmatpush1.msra.mxu0 0.0
  %6907 = vmatprep.subr.mxu0 0.0
  %6908 = vmatpush1.msra.mxu0 0.0
  %6909 = vmatprep.subr.mxu0 0.0
  %6910 = vmatpush1.msra.mxu0 0.0
  %6911 = vmatprep.subr.mxu0 0.0
  %6912 = vmatpush1.msra.mxu0 0.0
  %6913 = vmatprep.subr.mxu0 0.0
  %6914 = vmatpush1.msra.mxu0 0.0
  %6915 = vmatprep.subr.mxu0 0.0
  %6916 = vmatpush1.msra.mxu0 0.0
  %6917 = vmatprep.subr.mxu0 0.0
  %6918 = vmatpush1.msra.mxu0 0.0
  %6919 = vmatprep.subr.mxu0 0.0
  %6920 = vmatpush1.msra.mxu0 %v6539
  %6921 = vmatprep.subr.mxu0 0.0
  %6922 = vmatpush1.msra.mxu0 %v6487
  %6923 = vmatprep.subr.mxu0 0.0
  %6924 = vmatpush1.msra.mxu0 %v6478
  %6925 = vmatprep.subr.mxu0 0.0
  %6926 = vmatpush1.msra.mxu0 %v6469
  %6927 = vmatprep.subr.mxu0 0.0
  %6928 = vmatpush1.msra.mxu0 %v6460
  %6929 = vmatprep.subr.mxu0 0.0
  %6930 = vmatpush2.msra.mxu0 0.0
  %6931 = vmatprep.subr.mxu0 0.0
  %6932 = vmatpush2.msra.mxu0 0.0
  %6933 = vmatprep.subr.mxu0 0.0
  %6934 = vmatpush2.msra.mxu0 0.0
  %6935 = vmatprep.subr.mxu0 0.0
  %6936 = vmatpush2.msra.mxu0 0.0
  %6937 = vmatprep.subr.mxu0 0.0
  %6938 = vmatpush2.msra.mxu0 0.0
  %6939 = vmatprep.subr.mxu0 0.0
  %6940 = vmatpush2.msra.mxu0 0.0
  %6941 = vmatprep.subr.mxu0 0.0
  %6942 = vmatpush2.msra.mxu0 0.0
  %6943 = vmatprep.subr.mxu0 0.0
  %6944 = vmatpush2.msra.mxu0 0.0
  %6945 = vmatprep.subr.mxu0 0.0
  %6946 = vmatpush2.msra.mxu0 0.0
  %6947 = vmatprep.subr.mxu0 0.0
  %6948 = vmatpush2.msra.mxu0 0.0
  %6949 = vmatprep.subr.mxu0 0.0
  %6950 = vmatpush2.msra.mxu0 0.0
  %6951 = vmatprep.subr.mxu0 0.0
  %6952 = vmatpush2.msra.mxu0 0.0
  %6953 = vmatprep.subr.mxu0 0.0
  %6954 = vmatpush2.msra.mxu0 0.0
  %6955 = vmatprep.subr.mxu0 0.0
  %6956 = vmatpush2.msra.mxu0 0.0
  %6957 = vmatprep.subr.mxu0 0.0
  %6958 = vmatpush2.msra.mxu0 0.0
  %6959 = vmatprep.subr.mxu0 0.0
  %6960 = vmatpush2.msra.mxu0 0.0
  %6961 = vmatprep.mubr.f32.mxu0 0.0
  %6962 = vmatmul.mubr.f32.gmra.mxu0 %v6503
  %v6963 = vpop.f32.mrf.mxu0
  %v6964 = vadd.f32 0.0, %v6963
  %v6965 = vpop.f32.mrf.mxu0
  %6966 = vmatprep.mubr.f32.mxu0 0.0
  %6967 = vmatmul.mubr.f32.gmra.mxu0 %v6506
  %v6968 = vpop.f32.mrf.mxu0
  %v6969 = vadd.f32 0.0, %v6968
  %v6970 = vpop.f32.mrf.mxu0
  %6971 = vmatprep.mubr.f32.mxu0 0.0
  %6972 = vmatmul.mubr.f32.gmra.mxu0 %v6509
  %v6973 = vpop.f32.mrf.mxu0
  %v6974 = vadd.f32 0.0, %v6973
  %v6975 = vpop.f32.mrf.mxu0
  %6976 = vmatprep.mubr.f32.mxu0 0.0
  %6977 = vmatmul.mubr.f32.gmra.mxu0 %v6512
  %v6978 = vpop.f32.mrf.mxu0
  %v6979 = vadd.f32 0.0, %v6978
  %v6980 = vpop.f32.mrf.mxu0
  %6981 = vdwg.mxu0
  %v6982 = vld [vmem:[%s5] sm:$0xff]
  %v6983 = vld [vmem:[%s5 + $0x8] sm:$0x1]
  %v6986 = vlaneseq
  %v6987 = vshrl.u32 %v6986, 7
  %v6988 = vsub.s32 0, %v6987
  %v6989 = vrot.slane %v6982, %v6988
  %v6990 = vlaneseq
  %v6991 = vshrl.u32 %v6990, 7
  %v6992 = vsub.s32 1, %v6991
  %v6993 = vrot.slane %v6982, %v6992
  %v6994 = vlaneseq
  %v6995 = vshrl.u32 %v6994, 7
  %v6996 = vsub.s32 2, %v6995
  %v6997 = vrot.slane %v6982, %v6996
  %v6998 = vlaneseq
  %v6999 = vshrl.u32 %v6998, 7
  %v7000 = vsub.s32 3, %v6999
  %v7001 = vrot.slane %v6982, %v7000
  %v7002 = vlaneseq
  %v7003 = vshrl.u32 %v7002, 7
  %v7004 = vsub.s32 4, %v7003
  %v7005 = vrot.slane %v6982, %v7004
  %v7006 = vlaneseq
  %v7007 = vshrl.u32 %v7006, 7
  %v7008 = vsub.s32 5, %v7007
  %v7009 = vrot.slane %v6982, %v7008
  %v7010 = vlaneseq
  %v7011 = vshrl.u32 %v7010, 7
  %v7012 = vsub.s32 6, %v7011
  %v7013 = vrot.slane %v6982, %v7012
  %v7014 = vlaneseq
  %v7015 = vshrl.u32 %v7014, 7
  %v7016 = vsub.s32 7, %v7015
  %v7017 = vrot.slane %v6982, %v7016
  %v7018 = vlaneseq
  %v7019 = vshrl.u32 %v7018, 7
  %v7020 = vsub.s32 0, %v7019
  %v7021 = vrot.slane %v6983, %v7020
  %v7031 = vmul.f32 %v6608, %v6989
  %v7032 = vmul.f32 %v6610, %v6993
  %v7033 = vmul.f32 %v6697, %v6997
  %v7034 = vmul.f32 %v6699, %v7001
  %v7035 = vmul.f32 %v6786, %v7005
  %v7036 = vmul.f32 %v6788, %v7009
  %v7037 = vmul.f32 %v6875, %v7013
  %v7038 = vmul.f32 %v6877, %v7017
  %v7039 = vmul.f32 %v6964, %v7021
  %v7040 = vmul.f32 %v6614, %v6989
  %v7041 = vmul.f32 %v6616, %v6993
  %v7042 = vmul.f32 %v6703, %v6997
  %v7043 = vmul.f32 %v6705, %v7001
  %v7044 = vmul.f32 %v6792, %v7005
  %v7045 = vmul.f32 %v6794, %v7009
  %v7046 = vmul.f32 %v6881, %v7013
  %v7047 = vmul.f32 %v6883, %v7017
  %v7048 = vmul.f32 %v6969, %v7021
  %v7049 = vmul.f32 %v6620, %v6989
  %v7050 = vmul.f32 %v6622, %v6993
  %v7051 = vmul.f32 %v6709, %v6997
  %v7052 = vmul.f32 %v6711, %v7001
  %v7053 = vmul.f32 %v6798, %v7005
  %v7054 = vmul.f32 %v6800, %v7009
  %v7055 = vmul.f32 %v6887, %v7013
  %v7056 = vmul.f32 %v6889, %v7017
  %v7057 = vmul.f32 %v6974, %v7021
  %v7058 = vmul.f32 %v6626, %v6989
  %v7059 = vmul.f32 %v6628, %v6993
  %v7060 = vmul.f32 %v6715, %v6997
  %v7061 = vmul.f32 %v6717, %v7001
  %v7062 = vmul.f32 %v6804, %v7005
  %v7063 = vmul.f32 %v6806, %v7009
  %v7064 = vmul.f32 %v6893, %v7013
  %v7065 = vmul.f32 %v6895, %v7017
  %v7066 = vmul.f32 %v6979, %v7021
  %7067 = vst [vmem:[#allocation3] sm:$0xff] 0.0
  %7068 = vst [vmem:[#allocation3 + $0x58] sm:$0xff] 0.0
  %7069 = vst [vmem:[#allocation3 + $0xb0] sm:$0xff] 0.0
  %7070 = vst [vmem:[#allocation3 + $0x108] sm:$0x1] 0.0
  %7071 = vst [vmem:[#allocation3 + $0x50] sm:$0xff] 0.0
  %7072 = vst [vmem:[#allocation3 + $0xa8] sm:$0xff] 0.0
  %7073 = vst [vmem:[#allocation3 + $0x100] sm:$0xff] 0.0
  %7074 = vst [vmem:[#allocation3 + $0x158] sm:$0x1] 0.0
  %7075 = vst [vmem:[#allocation3 + $0x8] sm:$0xff] %v7031
  %7076 = vst [vmem:[#allocation3 + $0x10] sm:$0xff] %v7032
  %7077 = vst [vmem:[#allocation3 + $0x18] sm:$0xff] %v7033
  %7078 = vst [vmem:[#allocation3 + $0x20] sm:$0xff] %v7034
  %7079 = vst [vmem:[#allocation3 + $0x28] sm:$0xff] %v7035
  %7080 = vst [vmem:[#allocation3 + $0x30] sm:$0xff] %v7036
  %7081 = vst [vmem:[#allocation3 + $0x38] sm:$0xff] %v7037
  %7082 = vst [vmem:[#allocation3 + $0x40] sm:$0xff] %v7038
  %7083 = vst [vmem:[#allocation3 + $0x48] sm:$0xff] %v7039
  %7084 = vst [vmem:[#allocation3 + $0x60] sm:$0xff] %v7040
  %7085 = vst [vmem:[#allocation3 + $0x68] sm:$0xff] %v7041
  %7086 = vst [vmem:[#allocation3 + $0x70] sm:$0xff] %v7042
  %7087 = vst [vmem:[#allocation3 + $0x78] sm:$0xff] %v7043
  %7088 = vst [vmem:[#allocation3 + $0x80] sm:$0xff] %v7044
  %7089 = vst [vmem:[#allocation3 + $0x88] sm:$0xff] %v7045
  %7090 = vst [vmem:[#allocation3 + $0x90] sm:$0xff] %v7046
  %7091 = vst [vmem:[#allocation3 + $0x98] sm:$0xff] %v7047
  %7092 = vst [vmem:[#allocation3 + $0xa0] sm:$0xff] %v7048
  %7093 = vst [vmem:[#allocation3 + $0xb8] sm:$0xff] %v7049
  %7094 = vst [vmem:[#allocation3 + $0xc0] sm:$0xff] %v7050
  %7095 = vst [vmem:[#allocation3 + $0xc8] sm:$0xff] %v7051
  %7096 = vst [vmem:[#allocation3 + $0xd0] sm:$0xff] %v7052
  %7097 = vst [vmem:[#allocation3 + $0xd8] sm:$0xff] %v7053
  %7098 = vst [vmem:[#allocation3 + $0xe0] sm:$0xff] %v7054
  %7099 = vst [vmem:[#allocation3 + $0xe8] sm:$0xff] %v7055
  %7100 = vst [vmem:[#allocation3 + $0xf0] sm:$0xff] %v7056
  %7101 = vst [vmem:[#allocation3 + $0xf8] sm:$0xff] %v7057
  %7102 = vst [vmem:[#allocation3 + $0x110] sm:$0x1] %v7058
  %7103 = vst [vmem:[#allocation3 + $0x118] sm:$0x1] %v7059
  %7104 = vst [vmem:[#allocation3 + $0x120] sm:$0x1] %v7060
  %7105 = vst [vmem:[#allocation3 + $0x128] sm:$0x1] %v7061
  %7106 = vst [vmem:[#allocation3 + $0x130] sm:$0x1] %v7062
  %7107 = vst [vmem:[#allocation3 + $0x138] sm:$0x1] %v7063
  %7108 = vst [vmem:[#allocation3 + $0x140] sm:$0x1] %v7064
  %7109 = vst [vmem:[#allocation3 + $0x148] sm:$0x1] %v7065
  %7110 = vst [vmem:[#allocation3 + $0x150] sm:$0x1] %v7066
  %v7111 = vld [vmem:[#allocation3] ss:$8 sm:$0xf]
  %v7112 = vld [vmem:[#allocation3] ss:$8 sm:$0xf0]
  %v7113 = vor.u32 %v7111, %v7112
  %s7114 = scalar_lea.vmem [#allocation3], 64
  %v7115 = vld [vmem:[%s7114] ss:$8 sm:$0x3]
  %v7116 = vadd.f32 %v7113, 0.0
  %v7117 = vadd.f32 %v7115, 0.0
  %s7118 = scalar_lea.vmem [#allocation3], 1
  %v7119 = vld [vmem:[%s7118] ss:$8 sm:$0xf]
  %v7120 = vld [vmem:[%s7118] ss:$8 sm:$0xf0]
  %v7121 = vor.u32 %v7119, %v7120
  %s7122 = scalar_lea.vmem [#allocation3], 65
  %v7123 = vld [vmem:[%s7122] ss:$8 sm:$0x3]
  %7126 = vrot.lane.b32.xlu0 %v7121, 127
  %v7127 = vpop.permute.xlu0 %7126
  %7128 = vrot.lane.b32.xlu0 %v7123, 127
  %v7129 = vpop.permute.xlu0 %7128
  %v7130 = vrot.slane %v7127, 1
  %v7131 = vrot.slane %v7129, 1
  %vm7132 = vcmask 1046528
  %v7133 = vsel %vm7132, %v7130, %v7131
  %v7134 = vsel %vm86, %v7127, %v7133
  %v7135 = vsel %vm86, %v7129, %v7131
  %v7138 = vadd.f32 %v7116, %v7134
  %v7139 = vadd.f32 %v7117, %v7135
  %s7140 = scalar_lea.vmem [#allocation3], 2
  %v7141 = vld [vmem:[%s7140] ss:$8 sm:$0xf]
  %v7142 = vld [vmem:[%s7140] ss:$8 sm:$0xf0]
  %v7143 = vor.u32 %v7141, %v7142
  %s7144 = scalar_lea.vmem [#allocation3], 66
  %v7145 = vld [vmem:[%s7144] ss:$8 sm:$0x3]
  %7148 = vrot.lane.b32.xlu0 %v7143, 126
  %v7149 = vpop.permute.xlu0 %7148
  %7150 = vrot.lane.b32.xlu0 %v7145, 126
  %v7151 = vpop.permute.xlu0 %7150
  %v7152 = vrot.slane %v7149, 1
  %v7153 = vrot.slane %v7151, 1
  %v7154 = vsel %vm7132, %v7152, %v7153
  %v7155 = vsel %vm149, %v7149, %v7154
  %v7156 = vsel %vm149, %v7151, %v7153
  %v7159 = vadd.f32 %v7138, %v7155
  %v7160 = vadd.f32 %v7139, %v7156
  %s7161 = scalar_lea.vmem [#allocation3], 3
  %v7162 = vld [vmem:[%s7161] ss:$8 sm:$0xf]
  %v7163 = vld [vmem:[%s7161] ss:$8 sm:$0xf0]
  %v7164 = vor.u32 %v7162, %v7163
  %s7165 = scalar_lea.vmem [#allocation3], 67
  %v7166 = vld [vmem:[%s7165] ss:$8 sm:$0x3]
  %7169 = vrot.lane.b32.xlu0 %v7164, 125
  %v7170 = vpop.permute.xlu0 %7169
  %7171 = vrot.lane.b32.xlu0 %v7166, 125
  %v7172 = vpop.permute.xlu0 %7171
  %v7173 = vrot.slane %v7170, 1
  %v7174 = vrot.slane %v7172, 1
  %v7175 = vsel %vm7132, %v7173, %v7174
  %v7176 = vsel %vm212, %v7170, %v7175
  %v7177 = vsel %vm212, %v7172, %v7174
  %v7180 = vadd.f32 %v7159, %v7176
  %v7181 = vadd.f32 %v7160, %v7177
  %s7182 = scalar_lea.vmem [#allocation3], 4
  %v7183 = vld [vmem:[%s7182] ss:$8 sm:$0xf]
  %v7184 = vld [vmem:[%s7182] ss:$8 sm:$0xf0]
  %v7185 = vor.u32 %v7183, %v7184
  %s7186 = scalar_lea.vmem [#allocation3], 68
  %v7187 = vld [vmem:[%s7186] ss:$8 sm:$0x3]
  %7190 = vrot.lane.b32.xlu0 %v7185, 124
  %v7191 = vpop.permute.xlu0 %7190
  %7192 = vrot.lane.b32.xlu0 %v7187, 124
  %v7193 = vpop.permute.xlu0 %7192
  %v7194 = vrot.slane %v7191, 1
  %v7195 = vrot.slane %v7193, 1
  %v7196 = vsel %vm7132, %v7194, %v7195
  %v7197 = vsel %vm275, %v7191, %v7196
  %v7198 = vsel %vm275, %v7193, %v7195
  %v7201 = vadd.f32 %v7180, %v7197
  %v7202 = vadd.f32 %v7181, %v7198
  %s7203 = scalar_lea.vmem [#allocation3], 5
  %v7204 = vld [vmem:[%s7203] ss:$8 sm:$0xf]
  %v7205 = vld [vmem:[%s7203] ss:$8 sm:$0xf0]
  %v7206 = vor.u32 %v7204, %v7205
  %s7207 = scalar_lea.vmem [#allocation3], 69
  %v7208 = vld [vmem:[%s7207] ss:$8 sm:$0x3]
  %7211 = vrot.lane.b32.xlu0 %v7206, 104
  %v7212 = vpop.permute.xlu0 %7211
  %7213 = vrot.lane.b32.xlu0 %v7208, 104
  %v7214 = vpop.permute.xlu0 %7213
  %v7215 = vrot.slane %v7212, 1
  %v7216 = vrot.slane %v7214, 1
  %v7217 = vsel %vm7132, %v7215, %v7216
  %v7218 = vsel %vm590, %v7212, %v7217
  %v7219 = vsel %vm590, %v7214, %v7216
  %v7222 = vadd.f32 %v7201, %v7218
  %v7223 = vadd.f32 %v7202, %v7219
  %s7224 = scalar_lea.vmem [#allocation3], 6
  %v7225 = vld [vmem:[%s7224] ss:$8 sm:$0xf]
  %v7226 = vld [vmem:[%s7224] ss:$8 sm:$0xf0]
  %v7227 = vor.u32 %v7225, %v7226
  %s7228 = scalar_lea.vmem [#allocation3], 70
  %v7229 = vld [vmem:[%s7228] ss:$8 sm:$0x3]
  %7232 = vrot.lane.b32.xlu0 %v7227, 103
  %v7233 = vpop.permute.xlu0 %7232
  %7234 = vrot.lane.b32.xlu0 %v7229, 103
  %v7235 = vpop.permute.xlu0 %7234
  %v7236 = vrot.slane %v7233, 1
  %v7237 = vrot.slane %v7235, 1
  %v7238 = vsel %vm7132, %v7236, %v7237
  %v7239 = vsel %vm653, %v7233, %v7238
  %v7240 = vsel %vm653, %v7235, %v7237
  %v7243 = vadd.f32 %v7222, %v7239
  %v7244 = vadd.f32 %v7223, %v7240
  %s7245 = scalar_lea.vmem [#allocation3], 7
  %v7246 = vld [vmem:[%s7245] ss:$8 sm:$0xf]
  %v7247 = vld [vmem:[%s7245] ss:$8 sm:$0xf0]
  %v7248 = vor.u32 %v7246, %v7247
  %s7249 = scalar_lea.vmem [#allocation3], 71
  %v7250 = vld [vmem:[%s7249] ss:$8 sm:$0x3]
  %7253 = vrot.lane.b32.xlu0 %v7248, 102
  %v7254 = vpop.permute.xlu0 %7253
  %7255 = vrot.lane.b32.xlu0 %v7250, 102
  %v7256 = vpop.permute.xlu0 %7255
  %v7257 = vrot.slane %v7254, 1
  %v7258 = vrot.slane %v7256, 1
  %v7259 = vsel %vm7132, %v7257, %v7258
  %v7260 = vsel %vm716, %v7254, %v7259
  %v7261 = vsel %vm716, %v7256, %v7258
  %v7264 = vadd.f32 %v7243, %v7260
  %v7265 = vadd.f32 %v7244, %v7261
  %s7266 = scalar_lea.vmem [#allocation3], 88
  %v7267 = vld [vmem:[%s7266] ss:$8 sm:$0xf]
  %v7268 = vld [vmem:[%s7266] ss:$8 sm:$0xf0]
  %v7269 = vor.u32 %v7267, %v7268
  %s7270 = scalar_lea.vmem [#allocation3], 152
  %v7271 = vld [vmem:[%s7270] ss:$8 sm:$0x3]
  %7274 = vrot.lane.b32.xlu0 %v7269, 101
  %v7275 = vpop.permute.xlu0 %7274
  %7276 = vrot.lane.b32.xlu0 %v7271, 101
  %v7277 = vpop.permute.xlu0 %7276
  %v7278 = vrot.slane %v7275, 1
  %v7279 = vrot.slane %v7277, 1
  %v7280 = vsel %vm7132, %v7278, %v7279
  %v7281 = vsel %vm779, %v7275, %v7280
  %v7282 = vsel %vm779, %v7277, %v7279
  %v7285 = vadd.f32 %v7264, %v7281
  %v7286 = vadd.f32 %v7265, %v7282
  %s7287 = scalar_lea.vmem [#allocation3], 89
  %v7288 = vld [vmem:[%s7287] ss:$8 sm:$0xf]
  %v7289 = vld [vmem:[%s7287] ss:$8 sm:$0xf0]
  %v7290 = vor.u32 %v7288, %v7289
  %s7291 = scalar_lea.vmem [#allocation3], 153
  %v7292 = vld [vmem:[%s7291] ss:$8 sm:$0x3]
  %7295 = vrot.lane.b32.xlu0 %v7290, 100
  %v7296 = vpop.permute.xlu0 %7295
  %7297 = vrot.lane.b32.xlu0 %v7292, 100
  %v7298 = vpop.permute.xlu0 %7297
  %v7299 = vrot.slane %v7296, 1
  %v7300 = vrot.slane %v7298, 1
  %v7301 = vsel %vm7132, %v7299, %v7300
  %v7302 = vsel %vm842, %v7296, %v7301
  %v7303 = vsel %vm842, %v7298, %v7300
  %v7306 = vadd.f32 %v7285, %v7302
  %v7307 = vadd.f32 %v7286, %v7303
  %s7308 = scalar_lea.vmem [#allocation3], 90
  %v7309 = vld [vmem:[%s7308] ss:$8 sm:$0xf]
  %v7310 = vld [vmem:[%s7308] ss:$8 sm:$0xf0]
  %v7311 = vor.u32 %v7309, %v7310
  %s7312 = scalar_lea.vmem [#allocation3], 154
  %v7313 = vld [vmem:[%s7312] ss:$8 sm:$0x3]
  %7316 = vrot.lane.b32.xlu0 %v7311, 80
  %v7317 = vpop.permute.xlu0 %7316
  %7318 = vrot.lane.b32.xlu0 %v7313, 80
  %v7319 = vpop.permute.xlu0 %7318
  %v7320 = vrot.slane %v7317, 1
  %v7321 = vrot.slane %v7319, 1
  %v7322 = vsel %vm7132, %v7320, %v7321
  %v7323 = vsel %vm1157, %v7317, %v7322
  %v7324 = vsel %vm1157, %v7319, %v7321
  %v7327 = vadd.f32 %v7306, %v7323
  %v7328 = vadd.f32 %v7307, %v7324
  %s7329 = scalar_lea.vmem [#allocation3], 91
  %v7330 = vld [vmem:[%s7329] ss:$8 sm:$0xf]
  %v7331 = vld [vmem:[%s7329] ss:$8 sm:$0xf0]
  %v7332 = vor.u32 %v7330, %v7331
  %s7333 = scalar_lea.vmem [#allocation3], 155
  %v7334 = vld [vmem:[%s7333] ss:$8 sm:$0x3]
  %7337 = vrot.lane.b32.xlu0 %v7332, 79
  %v7338 = vpop.permute.xlu0 %7337
  %7339 = vrot.lane.b32.xlu0 %v7334, 79
  %v7340 = vpop.permute.xlu0 %7339
  %v7341 = vrot.slane %v7338, 1
  %v7342 = vrot.slane %v7340, 1
  %v7343 = vsel %vm7132, %v7341, %v7342
  %v7344 = vsel %vm1220, %v7338, %v7343
  %v7345 = vsel %vm1220, %v7340, %v7342
  %v7348 = vadd.f32 %v7327, %v7344
  %v7349 = vadd.f32 %v7328, %v7345
  %s7350 = scalar_lea.vmem [#allocation3], 100
  %v7351 = vld [vmem:[%s7350] ss:$8 sm:$0xf]
  %v7352 = vld [vmem:[%s7350] ss:$8 sm:$0xf0]
  %v7353 = vor.u32 %v7351, %v7352
  %s7354 = scalar_lea.vmem [#allocation3], 164
  %v7355 = vld [vmem:[%s7354] ss:$8 sm:$0x1]
  %7358 = vrot.lane.b32.xlu0 %v7353, 78
  %v7359 = vpop.permute.xlu0 %7358
  %7360 = vrot.lane.b32.xlu0 %v7355, 78
  %v7361 = vpop.permute.xlu0 %7360
  %v7362 = vrot.slane %v7359, 7
  %v7363 = vrot.slane %v7361, 7
  %v7364 = vsel %vm1283, %v7362, %v7359
  %vm7365 = vcmask 1040384
  %v7366 = vsel %vm7365, %v7362, %v7363
  %v7367 = vsel %vm1283, %v7366, %v7361
  %v7370 = vadd.f32 %v7348, %v7364
  %v7371 = vadd.f32 %v7349, %v7367
  %s7372 = scalar_lea.vmem [#allocation3], 101
  %v7373 = vld [vmem:[%s7372] ss:$8 sm:$0xf]
  %v7374 = vld [vmem:[%s7372] ss:$8 sm:$0xf0]
  %v7375 = vor.u32 %v7373, %v7374
  %s7376 = scalar_lea.vmem [#allocation3], 165
  %v7377 = vld [vmem:[%s7376] ss:$8 sm:$0x3]
  %7380 = vrot.lane.b32.xlu0 %v7375, 77
  %v7381 = vpop.permute.xlu0 %7380
  %7382 = vrot.lane.b32.xlu0 %v7377, 77
  %v7383 = vpop.permute.xlu0 %7382
  %v7384 = vrot.slane %v7381, 7
  %v7385 = vrot.slane %v7383, 7
  %v7386 = vsel %vm1346, %v7384, %v7381
  %v7387 = vsel %vm7365, %v7384, %v7385
  %v7388 = vsel %vm1346, %v7387, %v7383
  %v7391 = vadd.f32 %v7370, %v7386
  %v7392 = vadd.f32 %v7371, %v7388
  %s7393 = scalar_lea.vmem [#allocation3], 102
  %v7394 = vld [vmem:[%s7393] ss:$8 sm:$0xf]
  %v7395 = vld [vmem:[%s7393] ss:$8 sm:$0xf0]
  %v7396 = vor.u32 %v7394, %v7395
  %s7397 = scalar_lea.vmem [#allocation3], 166
  %v7398 = vld [vmem:[%s7397] ss:$8 sm:$0x3]
  %7401 = vrot.lane.b32.xlu0 %v7396, 76
  %v7402 = vpop.permute.xlu0 %7401
  %7403 = vrot.lane.b32.xlu0 %v7398, 76
  %v7404 = vpop.permute.xlu0 %7403
  %v7405 = vrot.slane %v7402, 7
  %v7406 = vrot.slane %v7404, 7
  %v7407 = vsel %vm1409, %v7405, %v7402
  %v7408 = vsel %vm7365, %v7405, %v7406
  %v7409 = vsel %vm1409, %v7408, %v7404
  %v7412 = vadd.f32 %v7391, %v7407
  %v7413 = vadd.f32 %v7392, %v7409
  %s7414 = scalar_lea.vmem [#allocation3], 103
  %v7415 = vld [vmem:[%s7414] ss:$8 sm:$0xf]
  %v7416 = vld [vmem:[%s7414] ss:$8 sm:$0xf0]
  %v7417 = vor.u32 %v7415, %v7416
  %s7418 = scalar_lea.vmem [#allocation3], 167
  %v7419 = vld [vmem:[%s7418] ss:$8 sm:$0x3]
  %7422 = vrot.lane.b32.xlu0 %v7417, 56
  %v7423 = vpop.permute.xlu0 %7422
  %7424 = vrot.lane.b32.xlu0 %v7419, 56
  %v7425 = vpop.permute.xlu0 %7424
  %v7426 = vrot.slane %v7423, 7
  %v7427 = vrot.slane %v7425, 7
  %v7428 = vsel %vm1724, %v7426, %v7423
  %v7429 = vsel %vm7365, %v7426, %v7427
  %v7430 = vsel %vm1724, %v7429, %v7425
  %v7433 = vadd.f32 %v7412, %v7428
  %v7434 = vadd.f32 %v7413, %v7430
  %s7435 = scalar_lea.vmem [#allocation3], 184
  %v7436 = vld [vmem:[%s7435] ss:$8 sm:$0xf]
  %v7437 = vld [vmem:[%s7435] ss:$8 sm:$0xf0]
  %v7438 = vor.u32 %v7436, %v7437
  %s7439 = scalar_lea.vmem [#allocation3], 248
  %v7440 = vld [vmem:[%s7439] ss:$8 sm:$0x3]
  %7443 = vrot.lane.b32.xlu0 %v7438, 55
  %v7444 = vpop.permute.xlu0 %7443
  %7445 = vrot.lane.b32.xlu0 %v7440, 55
  %v7446 = vpop.permute.xlu0 %7445
  %v7447 = vrot.slane %v7444, 7
  %v7448 = vrot.slane %v7446, 7
  %v7449 = vsel %vm1787, %v7447, %v7444
  %v7450 = vsel %vm7365, %v7447, %v7448
  %v7451 = vsel %vm1787, %v7450, %v7446
  %v7454 = vadd.f32 %v7433, %v7449
  %v7455 = vadd.f32 %v7434, %v7451
  %s7456 = scalar_lea.vmem [#allocation3], 185
  %v7457 = vld [vmem:[%s7456] ss:$8 sm:$0xf]
  %v7458 = vld [vmem:[%s7456] ss:$8 sm:$0xf0]
  %v7459 = vor.u32 %v7457, %v7458
  %s7460 = scalar_lea.vmem [#allocation3], 249
  %v7461 = vld [vmem:[%s7460] ss:$8 sm:$0x3]
  %7464 = vrot.lane.b32.xlu0 %v7459, 54
  %v7465 = vpop.permute.xlu0 %7464
  %7466 = vrot.lane.b32.xlu0 %v7461, 54
  %v7467 = vpop.permute.xlu0 %7466
  %v7468 = vrot.slane %v7465, 7
  %v7469 = vrot.slane %v7467, 7
  %v7470 = vsel %vm1850, %v7468, %v7465
  %v7471 = vsel %vm7365, %v7468, %v7469
  %v7472 = vsel %vm1850, %v7471, %v7467
  %v7475 = vadd.f32 %v7454, %v7470
  %v7476 = vadd.f32 %v7455, %v7472
  %s7477 = scalar_lea.vmem [#allocation3], 186
  %v7478 = vld [vmem:[%s7477] ss:$8 sm:$0xf]
  %v7479 = vld [vmem:[%s7477] ss:$8 sm:$0xf0]
  %v7480 = vor.u32 %v7478, %v7479
  %s7481 = scalar_lea.vmem [#allocation3], 250
  %v7482 = vld [vmem:[%s7481] ss:$8 sm:$0x3]
  %7485 = vrot.lane.b32.xlu0 %v7480, 53
  %v7486 = vpop.permute.xlu0 %7485
  %7487 = vrot.lane.b32.xlu0 %v7482, 53
  %v7488 = vpop.permute.xlu0 %7487
  %v7489 = vrot.slane %v7486, 7
  %v7490 = vrot.slane %v7488, 7
  %v7491 = vsel %vm1913, %v7489, %v7486
  %v7492 = vsel %vm7365, %v7489, %v7490
  %v7493 = vsel %vm1913, %v7492, %v7488
  %v7496 = vadd.f32 %v7475, %v7491
  %v7497 = vadd.f32 %v7476, %v7493
  %s7498 = scalar_lea.vmem [#allocation3], 187
  %v7499 = vld [vmem:[%s7498] ss:$8 sm:$0xf]
  %v7500 = vld [vmem:[%s7498] ss:$8 sm:$0xf0]
  %v7501 = vor.u32 %v7499, %v7500
  %s7502 = scalar_lea.vmem [#allocation3], 251
  %v7503 = vld [vmem:[%s7502] ss:$8 sm:$0x3]
  %7506 = vrot.lane.b32.xlu0 %v7501, 52
  %v7507 = vpop.permute.xlu0 %7506
  %7508 = vrot.lane.b32.xlu0 %v7503, 52
  %v7509 = vpop.permute.xlu0 %7508
  %v7510 = vrot.slane %v7507, 7
  %v7511 = vrot.slane %v7509, 7
  %v7512 = vsel %vm1976, %v7510, %v7507
  %v7513 = vsel %vm7365, %v7510, %v7511
  %v7514 = vsel %vm1976, %v7513, %v7509
  %v7517 = vadd.f32 %v7496, %v7512
  %v7518 = vadd.f32 %v7497, %v7514
  %s7519 = scalar_lea.vmem [#allocation3], 188
  %v7520 = vld [vmem:[%s7519] ss:$8 sm:$0xf]
  %v7521 = vld [vmem:[%s7519] ss:$8 sm:$0xf0]
  %v7522 = vor.u32 %v7520, %v7521
  %s7523 = scalar_lea.vmem [#allocation3], 252
  %v7524 = vld [vmem:[%s7523] ss:$8 sm:$0x3]
  %7527 = vrot.lane.b32.xlu0 %v7522, 32
  %v7528 = vpop.permute.xlu0 %7527
  %7529 = vrot.lane.b32.xlu0 %v7524, 32
  %v7530 = vpop.permute.xlu0 %7529
  %v7531 = vrot.slane %v7528, 7
  %v7532 = vrot.slane %v7530, 7
  %v7533 = vsel %vm2291, %v7531, %v7528
  %v7534 = vsel %vm7365, %v7531, %v7532
  %v7535 = vsel %vm2291, %v7534, %v7530
  %v7538 = vadd.f32 %v7517, %v7533
  %v7539 = vadd.f32 %v7518, %v7535
  %s7540 = scalar_lea.vmem [#allocation3], 189
  %v7541 = vld [vmem:[%s7540] ss:$8 sm:$0xf]
  %v7542 = vld [vmem:[%s7540] ss:$8 sm:$0xf0]
  %v7543 = vor.u32 %v7541, %v7542
  %s7544 = scalar_lea.vmem [#allocation3], 253
  %v7545 = vld [vmem:[%s7544] ss:$8 sm:$0x3]
  %7548 = vrot.lane.b32.xlu0 %v7543, 31
  %v7549 = vpop.permute.xlu0 %7548
  %7550 = vrot.lane.b32.xlu0 %v7545, 31
  %v7551 = vpop.permute.xlu0 %7550
  %v7552 = vrot.slane %v7549, 7
  %v7553 = vrot.slane %v7551, 7
  %v7554 = vsel %vm2354, %v7552, %v7549
  %v7555 = vsel %vm7365, %v7552, %v7553
  %v7556 = vsel %vm2354, %v7555, %v7551
  %v7559 = vadd.f32 %v7538, %v7554
  %v7560 = vadd.f32 %v7539, %v7556
  %s7561 = scalar_lea.vmem [#allocation3], 190
  %v7562 = vld [vmem:[%s7561] ss:$8 sm:$0xf]
  %v7563 = vld [vmem:[%s7561] ss:$8 sm:$0xf0]
  %v7564 = vor.u32 %v7562, %v7563
  %s7565 = scalar_lea.vmem [#allocation3], 254
  %v7566 = vld [vmem:[%s7565] ss:$8 sm:$0x3]
  %7569 = vrot.lane.b32.xlu0 %v7564, 30
  %v7570 = vpop.permute.xlu0 %7569
  %7571 = vrot.lane.b32.xlu0 %v7566, 30
  %v7572 = vpop.permute.xlu0 %7571
  %v7573 = vrot.slane %v7570, 7
  %v7574 = vrot.slane %v7572, 7
  %v7575 = vsel %vm2417, %v7573, %v7570
  %v7576 = vsel %vm7365, %v7573, %v7574
  %v7577 = vsel %vm2417, %v7576, %v7572
  %v7580 = vadd.f32 %v7559, %v7575
  %v7581 = vadd.f32 %v7560, %v7577
  %s7582 = scalar_lea.vmem [#allocation3], 191
  %v7583 = vld [vmem:[%s7582] ss:$8 sm:$0xf]
  %v7584 = vld [vmem:[%s7582] ss:$8 sm:$0xf0]
  %v7585 = vor.u32 %v7583, %v7584
  %s7586 = scalar_lea.vmem [#allocation3], 255
  %v7587 = vld [vmem:[%s7586] ss:$8 sm:$0x3]
  %7590 = vrot.lane.b32.xlu0 %v7585, 29
  %v7591 = vpop.permute.xlu0 %7590
  %7592 = vrot.lane.b32.xlu0 %v7587, 29
  %v7593 = vpop.permute.xlu0 %7592
  %v7594 = vrot.slane %v7591, 7
  %v7595 = vrot.slane %v7593, 7
  %v7596 = vsel %vm2480, %v7594, %v7591
  %v7597 = vsel %vm7365, %v7594, %v7595
  %v7598 = vsel %vm2480, %v7597, %v7593
  %v7601 = vadd.f32 %v7580, %v7596
  %v7602 = vadd.f32 %v7581, %v7598
  %s7603 = scalar_lea.vmem [#allocation3], 272
  %v7604 = vld [vmem:[%s7603] ss:$8 sm:$0xf]
  %v7605 = vld [vmem:[%s7603] ss:$8 sm:$0xf0]
  %v7606 = vor.u32 %v7604, %v7605
  %s7607 = scalar_lea.vmem [#allocation3], 336
  %v7608 = vld [vmem:[%s7607] ss:$8 sm:$0x3]
  %7611 = vrot.lane.b32.xlu0 %v7606, 28
  %v7612 = vpop.permute.xlu0 %7611
  %7613 = vrot.lane.b32.xlu0 %v7608, 28
  %v7614 = vpop.permute.xlu0 %7613
  %v7615 = vrot.slane %v7612, 7
  %v7616 = vrot.slane %v7614, 7
  %v7617 = vsel %vm2543, %v7615, %v7612
  %v7618 = vsel %vm7365, %v7615, %v7616
  %v7619 = vsel %vm2543, %v7618, %v7614
  %v7622 = vadd.f32 %v7601, %v7617
  %v7623 = vadd.f32 %v7602, %v7619
  %v7624 = vld [vmem:[#allocation4] sm:$0x1]
  %7626 = vset.pattern.permute.xlu0 0
  %7627 = vperm.xlu0 %7626, %v7624
  %v7628 = vpop.permute.xlu0 %7627
  %v7630 = vlaneseq
  %v7631 = vshrl.u32 %v7630, 7
  %v7632 = vsub.s32 0, %v7631
  %v7633 = vrot.slane %v7628, %v7632
  %v7634 = vadd.f32 %v7622, %v7633
  %v7635 = vadd.f32 %v7623, %v7633
  %7638 = vrot.lane.b32.xlu0 %v7634, 50
  %v7639 = vpop.permute.xlu0 %7638
  %7640 = vrot.lane.b32.xlu0 %v7635, 50
  %v7641 = vpop.permute.xlu0 %7640
  %v7642 = vrot.slane %v7639, 1
  %v7643 = vrot.slane %v7641, 1
  %v7644 = vsel %vm7132, %v7642, %v7643
  %v7645 = vsel %vm2102, %v7639, %v7644
  %v7646 = vsel %vm2102, %v7641, %v7643
  %7649 = vst [vmem:[%s6] sm:$0xff] %v7645
  %v7650 = vlaneseq
  %vm7651 = vcmp.ge.s32.totalorder %v7650, 0
  %vm7652 = vcmp.lt.s32.totalorder %v7650, 128
  %vm7653 = vmand %vm7651, %vm7652
  %7654 = vst.msk [vmem:[%s6 + $0x8] sm:$0x1] %vm7653, %v7646
  // Predicated region
  $region26: #{snet_forward.1} parent=0 // pred_check
    _
  $region27: #{snet_forward.1} parent=0 // pred_check_branch
    %7656 = sbr.rel (0) target = $region29
  $region28: #{snet_forward.1} parent=0 // pred_region
    _
  $region29: #{snet_forward.1} parent=0 // pred_fallthru
    _
  // Predicated region
  $region30: #{snet_forward.1} parent=0 // pred_check
    _
  $region31: #{snet_forward.1} parent=0 // pred_check_branch
    %7658 = sbr.rel (0) target = $region33
  $region32: #{snet_forward.1} parent=0 // pred_region
    _
  $region33: #{snet_forward.1} parent=0 // pred_fallthru
    _

</llo_original>
